<compile_context>
chip_gen: v5e
topology: v5e:2x2
jax: 0.10.0
libtpu: 0.0.40
codegen_flags: <defaults>
</compile_context>

<pallas_src>
import jax
import jax.numpy as jnp
from jax.experimental import pallas as pl
from jax.experimental.pallas import tpu as pltpu


# Layer geometry (fixed by the module: 16x16 input, two 2x2 pools).
_H1, _W1, _C0, _C1 = 16, 16, 6, 32
_H2, _W2, _C2 = 8, 8, 64
_H3, _W3, _C3 = 4, 4, 128
# Row-padded flat scratch: image of H*W rows stored starting at row OFF,
# zeros elsewhere.  Requirements: OFF >= W + 1 and NP >= OFF + H*W + W + 1.
# OFF chosen as a multiple of 16 so the interior store is bf16-tile aligned.
_OFF1, _NP1 = 32, 320
_OFF2, _NP2 = 16, 96
_OFF3, _NP3 = 16, 48


# ----------------------------------------------------------------------------
# In-kernel building blocks
# ----------------------------------------------------------------------------
def _conv3x3_relu(p_ref, x_bf16, w_ref, b_ref, h, w, off):
    """3x3 conv (pad=1, stride=1) + bias + ReLU over a whole flat image.

    p_ref : (NP, cin) bf16 VMEM scratch (row-padded flat activation).
    x_bf16: (h*w, cin) bf16 activation, raster order (row-major H, W).
    w_ref : (9, cin, cout) bf16, tap index k = kh*3 + kw.
    b_ref : (1, cout) f32.
    Returns (h*w, cout) f32, post-ReLU.
    """
    hw = h * w
    # Build the row-padded flat copy: p[off + q] = x[q], zeros elsewhere.
    # The zero rows absorb the out-of-image *row* shifts of the taps.
    p_ref[...] = jnp.zeros_like(p_ref)
    p_ref[off:off + hw, :] = x_bf16
    # Column masks kill the horizontal wrap-around of the flat layout
    # (hoisted once per layer, applied only to the 6 shifted-column taps).
    col = jax.lax.broadcasted_iota(jnp.int32, (hw, 1), 0) % w
    m_left = (col != 0).astype(x_bf16.dtype)          # tap kw == 0 (dx = -1)
    m_right = (col != (w - 1)).astype(x_bf16.dtype)   # tap kw == 2 (dx = +1)

    cout = w_ref.shape[2]
    acc = jnp.zeros((hw, cout), jnp.float32)
    for k in range(9):                                 # 9 whole-image matmuls
        dy, dx = divmod(k, 3)
        start = off - w - 1 + dy * w + dx              # static slice offset
        tap = p_ref[start:start + hw, :]               # (hw, cin) bf16
        if dx == 0:
            tap = tap * m_left
        elif dx == 2:
            tap = tap * m_right
        acc = acc + jnp.dot(tap, w_ref[k], preferred_element_type=jnp.float32)
    return jnp.maximum(acc + b_ref[...], 0.0)


def _maxpool2(y_f32, sel_ref, h, w):
    """2x2 max-pool of a flat (h*w, c) raster image -> (h*w//4, c) f32."""
    hw = h * w
    yb = y_f32.astype(jnp.bfloat16)
    # Vertical 2-max via aligned slices (offsets 0 and w) -- pure VPU work.
    yv = jnp.maximum(yb[:hw - w, :], yb[w:, :])        # (hw - w, c)
    # Horizontal max + compaction: pair of exact 0/1 selection matmuls.
    pe = jnp.dot(sel_ref[0], yv, preferred_element_type=jnp.float32)
    po = jnp.dot(sel_ref[1], yv, preferred_element_type=jnp.float32)
    return jnp.maximum(pe, po)                         # (hw//4, c)


def _gafnet_kernel(x_ref, w1_ref, b1_ref, w2_ref, b2_ref, w3_ref, b3_ref,
                   w4_ref, b4_ref, sel1_ref, sel2_ref, o_ref,
                   p1_ref, p2_ref, p3_ref):
    """Fused GAFNet forward for one batch element (grid = (batch,))."""
    # Stage 1: conv1 + ReLU + 2x2 max-pool            (256, 6)  -> (64, 32)
    y1 = _conv3x3_relu(p1_ref, x_ref[0], w1_ref, b1_ref, _H1, _W1, _OFF1)
    a2 = _maxpool2(y1, sel1_ref, _H1, _W1)
    # Stage 2: conv2 + ReLU + 2x2 max-pool            (64, 32)  -> (16, 64)
    y2 = _conv3x3_relu(p2_ref, a2.astype(jnp.bfloat16), w2_ref, b2_ref,
                       _H2, _W2, _OFF2)
    a3 = _maxpool2(y2, sel2_ref, _H2, _W2)
    # Stage 3: conv3 + ReLU + global average pool     (16, 64)  -> (1, 128)
    y3 = _conv3x3_relu(p3_ref, a3.astype(jnp.bfloat16), w3_ref, b3_ref,
                       _H3, _W3, _OFF3)
    g = jnp.sum(y3, axis=0, keepdims=True) * (1.0 / (_H3 * _W3))
    # Head: (1, 128) @ (128, 1) + bias (kept in f32).
    out = (jnp.dot(g, w4_ref[...], preferred_element_type=jnp.float32)
           + b4_ref[...])
    o_ref[0] = out.astype(o_ref.dtype)


# ----------------------------------------------------------------------------
# Wrapper (glue: layout, BlockSpecs, constants)
# ----------------------------------------------------------------------------
def _pool_select(h, w):
    """0/1 matrices selecting the (even, odd) columns of the vertically pooled
    image: shape (2, h*w//4, h*w - w), bf16 (exact)."""
    hw, w2 = h * w, w // 2
    q = jnp.arange(hw // 4)
    base = 2 * (q // w2) * w + 2 * (q % w2)            # flat index of block TL
    p = jnp.arange(hw - w)[None, :]
    s_even = (p == base[:, None]).astype(jnp.bfloat16)
    s_odd = (p == base[:, None] + 1).astype(jnp.bfloat16)
    return jnp.stack([s_even, s_odd], axis=0)


@jax.jit
def gafnet_forward(params, x_nchw):
    bsz = x_nchw.shape[0]
    # PyTorch-style NCHW -> NHWC -> flat (B, H*W, C) raster order; bf16 for MXU.
    x = jnp.transpose(x_nchw, (0, 2, 3, 1)).astype(jnp.float32)
    x_flat = x.reshape(bsz, _H1 * _W1, _C0).astype(jnp.bfloat16)

    bf = jnp.bfloat16
    w1, w2, w3 = (params["w1"].astype(bf), params["w2"].astype(bf),
                  params["w3"].astype(bf))
    sel1 = _pool_select(_H1, _W1)                      # (2, 64, 240)
    sel2 = _pool_select(_H2, _W2)                      # (2, 16, 56)

    out = pl.pallas_call(
        _gafnet_kernel,
        out_shape=jax.ShapeDtypeStruct((bsz, 1, 1), jnp.float32),
        grid_spec=pltpu.PrefetchScalarGridSpec(
            num_scalar_prefetch=0,
            grid=(bsz,),
            in_specs=[
                pl.BlockSpec((1, _H1 * _W1, _C0), lambda b: (b, 0, 0)),  # x
                pl.BlockSpec((9, _C0, _C1), lambda b: (0, 0, 0)),        # w1
                pl.BlockSpec((1, _C1), lambda b: (0, 0)),                # b1
                pl.BlockSpec((9, _C1, _C2), lambda b: (0, 0, 0)),        # w2
                pl.BlockSpec((1, _C2), lambda b: (0, 0)),                # b2
                pl.BlockSpec((9, _C2, _C3), lambda b: (0, 0, 0)),        # w3
                pl.BlockSpec((1, _C3), lambda b: (0, 0)),                # b3
                pl.BlockSpec((_C3, 1), lambda b: (0, 0)),                # w4
                pl.BlockSpec((1, 1), lambda b: (0, 0)),                  # b4
                pl.BlockSpec(sel1.shape, lambda b: (0, 0, 0)),           # sel1
                pl.BlockSpec(sel2.shape, lambda b: (0, 0, 0)),           # sel2
            ],
            out_specs=pl.BlockSpec((1, 1, 1), lambda b: (b, 0, 0)),
            scratch_shapes=[
                pltpu.VMEM((_NP1, _C0), jnp.bfloat16),   # padded layer-1 input
                pltpu.VMEM((_NP2, _C1), jnp.bfloat16),   # padded layer-2 input
                pltpu.VMEM((_NP3, _C2), jnp.bfloat16),   # padded layer-3 input
            ],
        ),
        compiler_params=pltpu.CompilerParams(
            dimension_semantics=("parallel",)),
    )(x_flat, w1, params["b1"], w2, params["b2"], w3, params["b3"],
      params["w4"], params["b4"], sel1, sel2)
    return out.reshape(bsz, 1)


# ----------------------------------------------------------------------------
# Deterministic parameter init + pure-JAX reference
# ----------------------------------------------------------------------------
def init_params(key, in_ch=6):
    ks = jax.random.split(key, 8)

    def conv_param(kw, kb, cin, cout):
        std = (2.0 / (cin * 9)) ** 0.5
        w_torch = std * jax.random.normal(kw, (cout, cin, 3, 3), jnp.float32)
        w = jnp.transpose(w_torch, (2, 3, 1, 0)).reshape(9, cin, cout)
        b = 0.01 * jax.random.normal(kb, (1, cout), jnp.float32)
        return w, b

    w1, b1 = conv_param(ks[0], ks[1], in_ch, _C1)
    w2, b2 = conv_param(ks[2], ks[3], _C1, _C2)
    w3, b3 = conv_param(ks[4], ks[5], _C2, _C3)
    w4 = (1.0 / _C3 ** 0.5) * jax.random.normal(ks[6], (_C3, 1), jnp.float32)
    b4 = 0.01 * jax.random.normal(ks[7], (1, 1), jnp.float32)
    return dict(w1=w1, b1=b1, w2=w2, b2=b2, w3=w3, b3=b3, w4=w4, b4=b4)


def gafnet_reference(params, x_nchw):
    """Pure-JAX f32 reference (the spec) for a numerical sanity check."""
    x = jnp.transpose(x_nchw, (0, 2, 3, 1)).astype(jnp.float32)

    def conv(h, w, b):
        wh = w.reshape(3, 3, w.shape[1], w.shape[2])       # HWIO
        y = jax.lax.conv_general_dilated(
            h, wh, window_strides=(1, 1), padding="SAME",
            dimension_numbers=("NHWC", "HWIO", "NHWC"),
            precision=jax.lax.Precision.HIGHEST)
        return jnp.maximum(y + b[0][None, None, None, :], 0.0)

    def maxpool2(h):
        return jax.lax.reduce_window(h, -jnp.inf, jax.lax.max,
                                     (1, 2, 2, 1), (1, 2, 2, 1), "VALID")

    h = maxpool2(conv(x, params["w1"], params["b1"]))
    h = maxpool2(conv(h, params["w2"], params["b2"]))
    h = conv(h, params["w3"], params["b3"])
    h = jnp.mean(h, axis=(1, 2))
    return h @ params["w4"] + params["b4"]


if __name__ == "__main__":
    key = jax.random.PRNGKey(0)
    pkey, xkey = jax.random.split(key)
    params = init_params(pkey, in_ch=6)
    # Small GAF-image batch: (batch=2, channels=6, 16x16), NCHW like PyTorch.
    x = jax.random.normal(xkey, (2, 6, 16, 16), jnp.float32)

    out = gafnet_forward(params, x)
    out = jax.block_until_ready(out)
    assert out.shape == (2, 1), out.shape

    ref = gafnet_reference(params, x)
    # Conv matmuls use bf16 MXU inputs (f32 accumulation), so compare against
    # the pure-f32 reference with a mixed-precision tolerance.  Structural
    # bugs would produce O(1) errors, far above this threshold.
    if not jnp.allclose(out, ref, atol=5e-2, rtol=5e-2):
        raise SystemExit(f"kernel/reference mismatch:\n{out}\nvs\n{ref}")
    print("KERNEL_OK")
</pallas_src>

<mosaic_0001>
module attributes {stable_mosaic.version = 11 : i64} {
  func.func @_gafnet_kernel(%arg0: i32, %arg1: memref<1x256x6xbf16, #tpu.memory_space<vmem>>, %arg2: memref<9x6x32xbf16, #tpu.memory_space<vmem>>, %arg3: memref<1x32xf32, #tpu.memory_space<vmem>>, %arg4: memref<9x32x64xbf16, #tpu.memory_space<vmem>>, %arg5: memref<1x64xf32, #tpu.memory_space<vmem>>, %arg6: memref<9x64x128xbf16, #tpu.memory_space<vmem>>, %arg7: memref<1x128xf32, #tpu.memory_space<vmem>>, %arg8: memref<128x1xf32, #tpu.memory_space<vmem>>, %arg9: memref<1x1xf32, #tpu.memory_space<vmem>>, %arg10: memref<2x64x240xbf16, #tpu.memory_space<vmem>>, %arg11: memref<2x16x56xbf16, #tpu.memory_space<vmem>>, %arg12: memref<1x1x1xf32, #tpu.memory_space<vmem>>, %arg13: memref<320x6xbf16, #tpu.memory_space<vmem>>, %arg14: memref<96x32xbf16, #tpu.memory_space<vmem>>, %arg15: memref<48x64xbf16, #tpu.memory_space<vmem>>) attributes {dimension_semantics = [#tpu.dimension_semantics<parallel>], iteration_bounds = array<i64: 2>, scalar_prefetch = 0 : i64, scratch_operands = 3 : i64, tpu.core_type = #tpu.core_type<tc>, window_params = [{transform_indices = @transform_0, window_bounds = array<i64: 1, 256, 6>}, {pipeline_mode = #tpu.pipeline_mode<synchronous>, transform_indices = @transform_1, window_bounds = array<i64: 9, 6, 32>}, {pipeline_mode = #tpu.pipeline_mode<synchronous>, transform_indices = @transform_2, window_bounds = array<i64: 1, 32>}, {pipeline_mode = #tpu.pipeline_mode<synchronous>, transform_indices = @transform_3, window_bounds = array<i64: 9, 32, 64>}, {pipeline_mode = #tpu.pipeline_mode<synchronous>, transform_indices = @transform_4, window_bounds = array<i64: 1, 64>}, {pipeline_mode = #tpu.pipeline_mode<synchronous>, transform_indices = @transform_5, window_bounds = array<i64: 9, 64, 128>}, {pipeline_mode = #tpu.pipeline_mode<synchronous>, transform_indices = @transform_6, window_bounds = array<i64: 1, 128>}, {pipeline_mode = #tpu.pipeline_mode<synchronous>, transform_indices = @transform_7, window_bounds = array<i64: 128, 1>}, {pipeline_mode = #tpu.pipeline_mode<synchronous>, transform_indices = @transform_8, window_bounds = array<i64: 1, 1>}, {pipeline_mode = #tpu.pipeline_mode<synchronous>, transform_indices = @transform_9, window_bounds = array<i64: 2, 64, 240>}, {pipeline_mode = #tpu.pipeline_mode<synchronous>, transform_indices = @transform_10, window_bounds = array<i64: 2, 16, 56>}, {transform_indices = @transform_11, window_bounds = array<i64: 1, 1, 1>}]} {
    %c0 = arith.constant 0 : index
    %c0_0 = arith.constant 0 : index
    %c0_1 = arith.constant 0 : index
    %0 = vector.load %arg1[%c0, %c0_0, %c0_1] : memref<1x256x6xbf16, #tpu.memory_space<vmem>>, vector<1x256x6xbf16>
    %1 = vector.shape_cast %0 : vector<1x256x6xbf16> to vector<256x6xbf16>
    %cst = arith.constant 0.000000e+00 : bf16
    %2 = vector.broadcast %cst : bf16 to vector<320x6xbf16>
    %c0_2 = arith.constant 0 : index
    %c0_3 = arith.constant 0 : index
    %3 = vector.load %arg13[%c0_2, %c0_3] : memref<320x6xbf16, #tpu.memory_space<vmem>>, vector<320x6xbf16>
    tpu.vector_store %arg13[%c0_2, %c0_3], %2 {strides = array<i32>} : memref<320x6xbf16, #tpu.memory_space<vmem>>, vector<320x6xbf16>,
    %c32 = arith.constant 32 : index
    %c0_4 = arith.constant 0 : index
    %4 = vector.load %arg13[%c32, %c0_4] : memref<320x6xbf16, #tpu.memory_space<vmem>>, vector<256x6xbf16>
    tpu.vector_store %arg13[%c32, %c0_4], %1 {strides = array<i32>} : memref<320x6xbf16, #tpu.memory_space<vmem>>, vector<256x6xbf16>,
    %5 = tpu.iota {dimensions = array<i32: 0>} : vector<256x1xi32>
    %c16_i32 = arith.constant 16 : i32
    %c0_i32 = arith.constant 0 : i32
    %6 = arith.cmpi eq, %c16_i32, %c0_i32 : i32
    %c1_i32 = arith.constant 1 : i32
    %7 = arith.select %6, %c1_i32, %c16_i32 : i32
    %8 = vector.broadcast %7 : i32 to vector<256x1xi32>
    %9 = arith.remsi %5, %8 : vector<256x1xi32>
    %c0_i32_5 = arith.constant 0 : i32
    %10 = vector.broadcast %c0_i32_5 : i32 to vector<256x1xi32>
    %11 = arith.cmpi ne, %9, %10 : vector<256x1xi32>
    %c0_i32_6 = arith.constant 0 : i32
    %12 = vector.broadcast %c0_i32_6 : i32 to vector<256x1xi32>
    %13 = arith.cmpi slt, %9, %12 : vector<256x1xi32>
    %c0_i32_7 = arith.constant 0 : i32
    %14 = arith.cmpi slt, %7, %c0_i32_7 : i32
    %15 = vector.broadcast %14 : i1 to vector<256x1xi1>
    %16 = vector.broadcast %15 : vector<256x1xi1> to vector<256x1xi1>
    %17 = arith.xori %13, %16 : vector<256x1xi1>
    %18 = arith.andi %17, %11 : vector<256x1xi1>
    %19 = vector.broadcast %7 : i32 to vector<256x1xi32>
    %20 = arith.addi %9, %19 : vector<256x1xi32>
    %21 = arith.select %18, %20, %9 : vector<256x1xi1>, vector<256x1xi32>
    %c0_i32_8 = arith.constant 0 : i32
    %22 = vector.broadcast %c0_i32_8 : i32 to vector<256x1xi32>
    %23 = arith.cmpi ne, %21, %22 : vector<256x1xi32>
    %24 = arith.extui %23 : vector<256x1xi1> to vector<256x1xi32>
    %25 = arith.sitofp %24 : vector<256x1xi32> to vector<256x1xf32>
    %26 = arith.truncf %25 : vector<256x1xf32> to vector<256x1xbf16>
    %c15_i32 = arith.constant 15 : i32
    %27 = vector.broadcast %c15_i32 : i32 to vector<256x1xi32>
    %28 = arith.cmpi ne, %21, %27 : vector<256x1xi32>
    %29 = arith.extui %28 : vector<256x1xi1> to vector<256x1xi32>
    %30 = arith.sitofp %29 : vector<256x1xi32> to vector<256x1xf32>
    %31 = arith.truncf %30 : vector<256x1xf32> to vector<256x1xbf16>
    %cst_9 = arith.constant 0.000000e+00 : f32
    %32 = vector.broadcast %cst_9 : f32 to vector<256x32xf32>
    %c15 = arith.constant 15 : index
    %c0_10 = arith.constant 0 : index
    %33 = vector.load %arg13[%c15, %c0_10] : memref<320x6xbf16, #tpu.memory_space<vmem>>, vector<256x6xbf16>
    %34 = vector.broadcast %26 : vector<256x1xbf16> to vector<256x6xbf16>
    %35 = arith.mulf %33, %34 : vector<256x6xbf16>
    %c0_11 = arith.constant 0 : index
    %c0_12 = arith.constant 0 : index
    %c0_13 = arith.constant 0 : index
    %36 = vector.load %arg2[%c0_11, %c0_12, %c0_13] : memref<9x6x32xbf16, #tpu.memory_space<vmem>>, vector<1x6x32xbf16>
    %37 = vector.shape_cast %36 : vector<1x6x32xbf16> to vector<6x32xbf16>
    %cst_14 = arith.constant dense<0.000000e+00> : vector<256x32xf32>
    %38 = tpu.matmul %35, %37, %cst_14 {dimension_numbers = #tpu.dot_dimension_numbers<[1], [0], [0], [1], [0, 0, 1, 1], [], []>} : vector<256x6xbf16>, vector<6x32xbf16>, vector<256x32xf32> -> vector<256x32xf32>
    %39 = arith.addf %32, %38 : vector<256x32xf32>
    %c16 = arith.constant 16 : index
    %c0_15 = arith.constant 0 : index
    %40 = vector.load %arg13[%c16, %c0_15] : memref<320x6xbf16, #tpu.memory_space<vmem>>, vector<256x6xbf16>
    %c1 = arith.constant 1 : index
    %c0_16 = arith.constant 0 : index
    %c0_17 = arith.constant 0 : index
    %41 = vector.load %arg2[%c1, %c0_16, %c0_17] : memref<9x6x32xbf16, #tpu.memory_space<vmem>>, vector<1x6x32xbf16>
    %42 = vector.shape_cast %41 : vector<1x6x32xbf16> to vector<6x32xbf16>
    %cst_18 = arith.constant dense<0.000000e+00> : vector<256x32xf32>
    %43 = tpu.matmul %40, %42, %cst_18 {dimension_numbers = #tpu.dot_dimension_numbers<[1], [0], [0], [1], [0, 0, 1, 1], [], []>} : vector<256x6xbf16>, vector<6x32xbf16>, vector<256x32xf32> -> vector<256x32xf32>
    %44 = arith.addf %39, %43 : vector<256x32xf32>
    %c17 = arith.constant 17 : index
    %c0_19 = arith.constant 0 : index
    %45 = vector.load %arg13[%c17, %c0_19] : memref<320x6xbf16, #tpu.memory_space<vmem>>, vector<256x6xbf16>
    %46 = vector.broadcast %31 : vector<256x1xbf16> to vector<256x6xbf16>
    %47 = arith.mulf %45, %46 : vector<256x6xbf16>
    %c2 = arith.constant 2 : index
    %c0_20 = arith.constant 0 : index
    %c0_21 = arith.constant 0 : index
    %48 = vector.load %arg2[%c2, %c0_20, %c0_21] : memref<9x6x32xbf16, #tpu.memory_space<vmem>>, vector<1x6x32xbf16>
    %49 = vector.shape_cast %48 : vector<1x6x32xbf16> to vector<6x32xbf16>
    %cst_22 = arith.constant dense<0.000000e+00> : vector<256x32xf32>
    %50 = tpu.matmul %47, %49, %cst_22 {dimension_numbers = #tpu.dot_dimension_numbers<[1], [0], [0], [1], [0, 0, 1, 1], [], []>} : vector<256x6xbf16>, vector<6x32xbf16>, vector<256x32xf32> -> vector<256x32xf32>
    %51 = arith.addf %44, %50 : vector<256x32xf32>
    %c31 = arith.constant 31 : index
    %c0_23 = arith.constant 0 : index
    %52 = vector.load %arg13[%c31, %c0_23] : memref<320x6xbf16, #tpu.memory_space<vmem>>, vector<256x6xbf16>
    %53 = vector.broadcast %26 : vector<256x1xbf16> to vector<256x6xbf16>
    %54 = arith.mulf %52, %53 : vector<256x6xbf16>
    %c3 = arith.constant 3 : index
    %c0_24 = arith.constant 0 : index
    %c0_25 = arith.constant 0 : index
    %55 = vector.load %arg2[%c3, %c0_24, %c0_25] : memref<9x6x32xbf16, #tpu.memory_space<vmem>>, vector<1x6x32xbf16>
    %56 = vector.shape_cast %55 : vector<1x6x32xbf16> to vector<6x32xbf16>
    %cst_26 = arith.constant dense<0.000000e+00> : vector<256x32xf32>
    %57 = tpu.matmul %54, %56, %cst_26 {dimension_numbers = #tpu.dot_dimension_numbers<[1], [0], [0], [1], [0, 0, 1, 1], [], []>} : vector<256x6xbf16>, vector<6x32xbf16>, vector<256x32xf32> -> vector<256x32xf32>
    %58 = arith.addf %51, %57 : vector<256x32xf32>
    %c32_27 = arith.constant 32 : index
    %c0_28 = arith.constant 0 : index
    %59 = vector.load %arg13[%c32_27, %c0_28] : memref<320x6xbf16, #tpu.memory_space<vmem>>, vector<256x6xbf16>
    %c4 = arith.constant 4 : index
    %c0_29 = arith.constant 0 : index
    %c0_30 = arith.constant 0 : index
    %60 = vector.load %arg2[%c4, %c0_29, %c0_30] : memref<9x6x32xbf16, #tpu.memory_space<vmem>>, vector<1x6x32xbf16>
    %61 = vector.shape_cast %60 : vector<1x6x32xbf16> to vector<6x32xbf16>
    %cst_31 = arith.constant dense<0.000000e+00> : vector<256x32xf32>
    %62 = tpu.matmul %59, %61, %cst_31 {dimension_numbers = #tpu.dot_dimension_numbers<[1], [0], [0], [1], [0, 0, 1, 1], [], []>} : vector<256x6xbf16>, vector<6x32xbf16>, vector<256x32xf32> -> vector<256x32xf32>
    %63 = arith.addf %58, %62 : vector<256x32xf32>
    %c33 = arith.constant 33 : index
    %c0_32 = arith.constant 0 : index
    %64 = vector.load %arg13[%c33, %c0_32] : memref<320x6xbf16, #tpu.memory_space<vmem>>, vector<256x6xbf16>
    %65 = vector.broadcast %31 : vector<256x1xbf16> to vector<256x6xbf16>
    %66 = arith.mulf %64, %65 : vector<256x6xbf16>
    %c5 = arith.constant 5 : index
    %c0_33 = arith.constant 0 : index
    %c0_34 = arith.constant 0 : index
    %67 = vector.load %arg2[%c5, %c0_33, %c0_34] : memref<9x6x32xbf16, #tpu.memory_space<vmem>>, vector<1x6x32xbf16>
    %68 = vector.shape_cast %67 : vector<1x6x32xbf16> to vector<6x32xbf16>
    %cst_35 = arith.constant dense<0.000000e+00> : vector<256x32xf32>
    %69 = tpu.matmul %66, %68, %cst_35 {dimension_numbers = #tpu.dot_dimension_numbers<[1], [0], [0], [1], [0, 0, 1, 1], [], []>} : vector<256x6xbf16>, vector<6x32xbf16>, vector<256x32xf32> -> vector<256x32xf32>
    %70 = arith.addf %63, %69 : vector<256x32xf32>
    %c47 = arith.constant 47 : index
    %c0_36 = arith.constant 0 : index
    %71 = vector.load %arg13[%c47, %c0_36] : memref<320x6xbf16, #tpu.memory_space<vmem>>, vector<256x6xbf16>
    %72 = vector.broadcast %26 : vector<256x1xbf16> to vector<256x6xbf16>
    %73 = arith.mulf %71, %72 : vector<256x6xbf16>
    %c6 = arith.constant 6 : index
    %c0_37 = arith.constant 0 : index
    %c0_38 = arith.constant 0 : index
    %74 = vector.load %arg2[%c6, %c0_37, %c0_38] : memref<9x6x32xbf16, #tpu.memory_space<vmem>>, vector<1x6x32xbf16>
    %75 = vector.shape_cast %74 : vector<1x6x32xbf16> to vector<6x32xbf16>
    %cst_39 = arith.constant dense<0.000000e+00> : vector<256x32xf32>
    %76 = tpu.matmul %73, %75, %cst_39 {dimension_numbers = #tpu.dot_dimension_numbers<[1], [0], [0], [1], [0, 0, 1, 1], [], []>} : vector<256x6xbf16>, vector<6x32xbf16>, vector<256x32xf32> -> vector<256x32xf32>
    %77 = arith.addf %70, %76 : vector<256x32xf32>
    %c48 = arith.constant 48 : index
    %c0_40 = arith.constant 0 : index
    %78 = vector.load %arg13[%c48, %c0_40] : memref<320x6xbf16, #tpu.memory_space<vmem>>, vector<256x6xbf16>
    %c7 = arith.constant 7 : index
    %c0_41 = arith.constant 0 : index
    %c0_42 = arith.constant 0 : index
    %79 = vector.load %arg2[%c7, %c0_41, %c0_42] : memref<9x6x32xbf16, #tpu.memory_space<vmem>>, vector<1x6x32xbf16>
    %80 = vector.shape_cast %79 : vector<1x6x32xbf16> to vector<6x32xbf16>
    %cst_43 = arith.constant dense<0.000000e+00> : vector<256x32xf32>
    %81 = tpu.matmul %78, %80, %cst_43 {dimension_numbers = #tpu.dot_dimension_numbers<[1], [0], [0], [1], [0, 0, 1, 1], [], []>} : vector<256x6xbf16>, vector<6x32xbf16>, vector<256x32xf32> -> vector<256x32xf32>
    %82 = arith.addf %77, %81 : vector<256x32xf32>
    %c49 = arith.constant 49 : index
    %c0_44 = arith.constant 0 : index
    %83 = vector.load %arg13[%c49, %c0_44] : memref<320x6xbf16, #tpu.memory_space<vmem>>, vector<256x6xbf16>
    %84 = vector.broadcast %31 : vector<256x1xbf16> to vector<256x6xbf16>
    %85 = arith.mulf %83, %84 : vector<256x6xbf16>
    %c8 = arith.constant 8 : index
    %c0_45 = arith.constant 0 : index
    %c0_46 = arith.constant 0 : index
    %86 = vector.load %arg2[%c8, %c0_45, %c0_46] : memref<9x6x32xbf16, #tpu.memory_space<vmem>>, vector<1x6x32xbf16>
    %87 = vector.shape_cast %86 : vector<1x6x32xbf16> to vector<6x32xbf16>
    %cst_47 = arith.constant dense<0.000000e+00> : vector<256x32xf32>
    %88 = tpu.matmul %85, %87, %cst_47 {dimension_numbers = #tpu.dot_dimension_numbers<[1], [0], [0], [1], [0, 0, 1, 1], [], []>} : vector<256x6xbf16>, vector<6x32xbf16>, vector<256x32xf32> -> vector<256x32xf32>
    %89 = arith.addf %82, %88 : vector<256x32xf32>
    %c0_48 = arith.constant 0 : index
    %c0_49 = arith.constant 0 : index
    %90 = vector.load %arg3[%c0_48, %c0_49] : memref<1x32xf32, #tpu.memory_space<vmem>>, vector<1x32xf32>
    %91 = vector.broadcast %90 : vector<1x32xf32> to vector<256x32xf32>
    %92 = arith.addf %89, %91 : vector<256x32xf32>
    %cst_50 = arith.constant 0.000000e+00 : f32
    %93 = vector.broadcast %cst_50 : f32 to vector<256x32xf32>
    %94 = arith.maximumf %92, %93 : vector<256x32xf32>
    %95 = arith.truncf %94 : vector<256x32xf32> to vector<256x32xbf16>
    %96 = vector.extract_strided_slice %95 {offsets = [0, 0], sizes = [240, 32], strides = [1, 1]} : vector<256x32xbf16> to vector<240x32xbf16>
    %97 = vector.extract_strided_slice %95 {offsets = [16, 0], sizes = [240, 32], strides = [1, 1]} : vector<256x32xbf16> to vector<240x32xbf16>
    %98 = arith.maximumf %96, %97 : vector<240x32xbf16>
    %c0_51 = arith.constant 0 : index
    %c0_52 = arith.constant 0 : index
    %c0_53 = arith.constant 0 : index
    %99 = vector.load %arg10[%c0_51, %c0_52, %c0_53] : memref<2x64x240xbf16, #tpu.memory_space<vmem>>, vector<1x64x240xbf16>
    %100 = vector.shape_cast %99 : vector<1x64x240xbf16> to vector<64x240xbf16>
    %cst_54 = arith.constant dense<0.000000e+00> : vector<64x32xf32>
    %101 = tpu.matmul %100, %98, %cst_54 {dimension_numbers = #tpu.dot_dimension_numbers<[1], [0], [0], [1], [0, 0, 1, 1], [], []>} : vector<64x240xbf16>, vector<240x32xbf16>, vector<64x32xf32> -> vector<64x32xf32>
    %c1_55 = arith.constant 1 : index
    %c0_56 = arith.constant 0 : index
    %c0_57 = arith.constant 0 : index
    %102 = vector.load %arg10[%c1_55, %c0_56, %c0_57] : memref<2x64x240xbf16, #tpu.memory_space<vmem>>, vector<1x64x240xbf16>
    %103 = vector.shape_cast %102 : vector<1x64x240xbf16> to vector<64x240xbf16>
    %cst_58 = arith.constant dense<0.000000e+00> : vector<64x32xf32>
    %104 = tpu.matmul %103, %98, %cst_58 {dimension_numbers = #tpu.dot_dimension_numbers<[1], [0], [0], [1], [0, 0, 1, 1], [], []>} : vector<64x240xbf16>, vector<240x32xbf16>, vector<64x32xf32> -> vector<64x32xf32>
    %105 = arith.maximumf %101, %104 : vector<64x32xf32>
    %106 = arith.truncf %105 : vector<64x32xf32> to vector<64x32xbf16>
    %cst_59 = arith.constant 0.000000e+00 : bf16
    %107 = vector.broadcast %cst_59 : bf16 to vector<96x32xbf16>
    %c0_60 = arith.constant 0 : index
    %c0_61 = arith.constant 0 : index
    %108 = vector.load %arg14[%c0_60, %c0_61] : memref<96x32xbf16, #tpu.memory_space<vmem>>, vector<96x32xbf16>
    tpu.vector_store %arg14[%c0_60, %c0_61], %107 {strides = array<i32>} : memref<96x32xbf16, #tpu.memory_space<vmem>>, vector<96x32xbf16>,
    %c16_62 = arith.constant 16 : index
    %c0_63 = arith.constant 0 : index
    %109 = vector.load %arg14[%c16_62, %c0_63] : memref<96x32xbf16, #tpu.memory_space<vmem>>, vector<64x32xbf16>
    tpu.vector_store %arg14[%c16_62, %c0_63], %106 {strides = array<i32>} : memref<96x32xbf16, #tpu.memory_space<vmem>>, vector<64x32xbf16>,
    %110 = tpu.iota {dimensions = array<i32: 0>} : vector<64x1xi32>
    %c8_i32 = arith.constant 8 : i32
    %c0_i32_64 = arith.constant 0 : i32
    %111 = arith.cmpi eq, %c8_i32, %c0_i32_64 : i32
    %c1_i32_65 = arith.constant 1 : i32
    %112 = arith.select %111, %c1_i32_65, %c8_i32 : i32
    %113 = vector.broadcast %112 : i32 to vector<64x1xi32>
    %114 = arith.remsi %110, %113 : vector<64x1xi32>
    %c0_i32_66 = arith.constant 0 : i32
    %115 = vector.broadcast %c0_i32_66 : i32 to vector<64x1xi32>
    %116 = arith.cmpi ne, %114, %115 : vector<64x1xi32>
    %c0_i32_67 = arith.constant 0 : i32
    %117 = vector.broadcast %c0_i32_67 : i32 to vector<64x1xi32>
    %118 = arith.cmpi slt, %114, %117 : vector<64x1xi32>
    %c0_i32_68 = arith.constant 0 : i32
    %119 = arith.cmpi slt, %112, %c0_i32_68 : i32
    %120 = vector.broadcast %119 : i1 to vector<64x1xi1>
    %121 = vector.broadcast %120 : vector<64x1xi1> to vector<64x1xi1>
    %122 = arith.xori %118, %121 : vector<64x1xi1>
    %123 = arith.andi %122, %116 : vector<64x1xi1>
    %124 = vector.broadcast %112 : i32 to vector<64x1xi32>
    %125 = arith.addi %114, %124 : vector<64x1xi32>
    %126 = arith.select %123, %125, %114 : vector<64x1xi1>, vector<64x1xi32>
    %c0_i32_69 = arith.constant 0 : i32
    %127 = vector.broadcast %c0_i32_69 : i32 to vector<64x1xi32>
    %128 = arith.cmpi ne, %126, %127 : vector<64x1xi32>
    %129 = arith.extui %128 : vector<64x1xi1> to vector<64x1xi32>
    %130 = arith.sitofp %129 : vector<64x1xi32> to vector<64x1xf32>
    %131 = arith.truncf %130 : vector<64x1xf32> to vector<64x1xbf16>
    %c7_i32 = arith.constant 7 : i32
    %132 = vector.broadcast %c7_i32 : i32 to vector<64x1xi32>
    %133 = arith.cmpi ne, %126, %132 : vector<64x1xi32>
    %134 = arith.extui %133 : vector<64x1xi1> to vector<64x1xi32>
    %135 = arith.sitofp %134 : vector<64x1xi32> to vector<64x1xf32>
    %136 = arith.truncf %135 : vector<64x1xf32> to vector<64x1xbf16>
    %cst_70 = arith.constant 0.000000e+00 : f32
    %137 = vector.broadcast %cst_70 : f32 to vector<64x64xf32>
    %c7_71 = arith.constant 7 : index
    %c0_72 = arith.constant 0 : index
    %138 = vector.load %arg14[%c7_71, %c0_72] : memref<96x32xbf16, #tpu.memory_space<vmem>>, vector<64x32xbf16>
    %139 = vector.broadcast %131 : vector<64x1xbf16> to vector<64x32xbf16>
    %140 = arith.mulf %138, %139 : vector<64x32xbf16>
    %c0_73 = arith.constant 0 : index
    %c0_74 = arith.constant 0 : index
    %c0_75 = arith.constant 0 : index
    %141 = vector.load %arg4[%c0_73, %c0_74, %c0_75] : memref<9x32x64xbf16, #tpu.memory_space<vmem>>, vector<1x32x64xbf16>
    %142 = vector.shape_cast %141 : vector<1x32x64xbf16> to vector<32x64xbf16>
    %cst_76 = arith.constant dense<0.000000e+00> : vector<64x64xf32>
    %143 = tpu.matmul %140, %142, %cst_76 {dimension_numbers = #tpu.dot_dimension_numbers<[1], [0], [0], [1], [0, 0, 1, 1], [], []>} : vector<64x32xbf16>, vector<32x64xbf16>, vector<64x64xf32> -> vector<64x64xf32>
    %144 = arith.addf %137, %143 : vector<64x64xf32>
    %c8_77 = arith.constant 8 : index
    %c0_78 = arith.constant 0 : index
    %145 = vector.load %arg14[%c8_77, %c0_78] : memref<96x32xbf16, #tpu.memory_space<vmem>>, vector<64x32xbf16>
    %c1_79 = arith.constant 1 : index
    %c0_80 = arith.constant 0 : index
    %c0_81 = arith.constant 0 : index
    %146 = vector.load %arg4[%c1_79, %c0_80, %c0_81] : memref<9x32x64xbf16, #tpu.memory_space<vmem>>, vector<1x32x64xbf16>
    %147 = vector.shape_cast %146 : vector<1x32x64xbf16> to vector<32x64xbf16>
    %cst_82 = arith.constant dense<0.000000e+00> : vector<64x64xf32>
    %148 = tpu.matmul %145, %147, %cst_82 {dimension_numbers = #tpu.dot_dimension_numbers<[1], [0], [0], [1], [0, 0, 1, 1], [], []>} : vector<64x32xbf16>, vector<32x64xbf16>, vector<64x64xf32> -> vector<64x64xf32>
    %149 = arith.addf %144, %148 : vector<64x64xf32>
    %c9 = arith.constant 9 : index
    %c0_83 = arith.constant 0 : index
    %150 = vector.load %arg14[%c9, %c0_83] : memref<96x32xbf16, #tpu.memory_space<vmem>>, vector<64x32xbf16>
    %151 = vector.broadcast %136 : vector<64x1xbf16> to vector<64x32xbf16>
    %152 = arith.mulf %150, %151 : vector<64x32xbf16>
    %c2_84 = arith.constant 2 : index
    %c0_85 = arith.constant 0 : index
    %c0_86 = arith.constant 0 : index
    %153 = vector.load %arg4[%c2_84, %c0_85, %c0_86] : memref<9x32x64xbf16, #tpu.memory_space<vmem>>, vector<1x32x64xbf16>
    %154 = vector.shape_cast %153 : vector<1x32x64xbf16> to vector<32x64xbf16>
    %cst_87 = arith.constant dense<0.000000e+00> : vector<64x64xf32>
    %155 = tpu.matmul %152, %154, %cst_87 {dimension_numbers = #tpu.dot_dimension_numbers<[1], [0], [0], [1], [0, 0, 1, 1], [], []>} : vector<64x32xbf16>, vector<32x64xbf16>, vector<64x64xf32> -> vector<64x64xf32>
    %156 = arith.addf %149, %155 : vector<64x64xf32>
    %c15_88 = arith.constant 15 : index
    %c0_89 = arith.constant 0 : index
    %157 = vector.load %arg14[%c15_88, %c0_89] : memref<96x32xbf16, #tpu.memory_space<vmem>>, vector<64x32xbf16>
    %158 = vector.broadcast %131 : vector<64x1xbf16> to vector<64x32xbf16>
    %159 = arith.mulf %157, %158 : vector<64x32xbf16>
    %c3_90 = arith.constant 3 : index
    %c0_91 = arith.constant 0 : index
    %c0_92 = arith.constant 0 : index
    %160 = vector.load %arg4[%c3_90, %c0_91, %c0_92] : memref<9x32x64xbf16, #tpu.memory_space<vmem>>, vector<1x32x64xbf16>
    %161 = vector.shape_cast %160 : vector<1x32x64xbf16> to vector<32x64xbf16>
    %cst_93 = arith.constant dense<0.000000e+00> : vector<64x64xf32>
    %162 = tpu.matmul %159, %161, %cst_93 {dimension_numbers = #tpu.dot_dimension_numbers<[1], [0], [0], [1], [0, 0, 1, 1], [], []>} : vector<64x32xbf16>, vector<32x64xbf16>, vector<64x64xf32> -> vector<64x64xf32>
    %163 = arith.addf %156, %162 : vector<64x64xf32>
    %c16_94 = arith.constant 16 : index
    %c0_95 = arith.constant 0 : index
    %164 = vector.load %arg14[%c16_94, %c0_95] : memref<96x32xbf16, #tpu.memory_space<vmem>>, vector<64x32xbf16>
    %c4_96 = arith.constant 4 : index
    %c0_97 = arith.constant 0 : index
    %c0_98 = arith.constant 0 : index
    %165 = vector.load %arg4[%c4_96, %c0_97, %c0_98] : memref<9x32x64xbf16, #tpu.memory_space<vmem>>, vector<1x32x64xbf16>
    %166 = vector.shape_cast %165 : vector<1x32x64xbf16> to vector<32x64xbf16>
    %cst_99 = arith.constant dense<0.000000e+00> : vector<64x64xf32>
    %167 = tpu.matmul %164, %166, %cst_99 {dimension_numbers = #tpu.dot_dimension_numbers<[1], [0], [0], [1], [0, 0, 1, 1], [], []>} : vector<64x32xbf16>, vector<32x64xbf16>, vector<64x64xf32> -> vector<64x64xf32>
    %168 = arith.addf %163, %167 : vector<64x64xf32>
    %c17_100 = arith.constant 17 : index
    %c0_101 = arith.constant 0 : index
    %169 = vector.load %arg14[%c17_100, %c0_101] : memref<96x32xbf16, #tpu.memory_space<vmem>>, vector<64x32xbf16>
    %170 = vector.broadcast %136 : vector<64x1xbf16> to vector<64x32xbf16>
    %171 = arith.mulf %169, %170 : vector<64x32xbf16>
    %c5_102 = arith.constant 5 : index
    %c0_103 = arith.constant 0 : index
    %c0_104 = arith.constant 0 : index
    %172 = vector.load %arg4[%c5_102, %c0_103, %c0_104] : memref<9x32x64xbf16, #tpu.memory_space<vmem>>, vector<1x32x64xbf16>
    %173 = vector.shape_cast %172 : vector<1x32x64xbf16> to vector<32x64xbf16>
    %cst_105 = arith.constant dense<0.000000e+00> : vector<64x64xf32>
    %174 = tpu.matmul %171, %173, %cst_105 {dimension_numbers = #tpu.dot_dimension_numbers<[1], [0], [0], [1], [0, 0, 1, 1], [], []>} : vector<64x32xbf16>, vector<32x64xbf16>, vector<64x64xf32> -> vector<64x64xf32>
    %175 = arith.addf %168, %174 : vector<64x64xf32>
    %c23 = arith.constant 23 : index
    %c0_106 = arith.constant 0 : index
    %176 = vector.load %arg14[%c23, %c0_106] : memref<96x32xbf16, #tpu.memory_space<vmem>>, vector<64x32xbf16>
    %177 = vector.broadcast %131 : vector<64x1xbf16> to vector<64x32xbf16>
    %178 = arith.mulf %176, %177 : vector<64x32xbf16>
    %c6_107 = arith.constant 6 : index
    %c0_108 = arith.constant 0 : index
    %c0_109 = arith.constant 0 : index
    %179 = vector.load %arg4[%c6_107, %c0_108, %c0_109] : memref<9x32x64xbf16, #tpu.memory_space<vmem>>, vector<1x32x64xbf16>
    %180 = vector.shape_cast %179 : vector<1x32x64xbf16> to vector<32x64xbf16>
    %cst_110 = arith.constant dense<0.000000e+00> : vector<64x64xf32>
    %181 = tpu.matmul %178, %180, %cst_110 {dimension_numbers = #tpu.dot_dimension_numbers<[1], [0], [0], [1], [0, 0, 1, 1], [], []>} : vector<64x32xbf16>, vector<32x64xbf16>, vector<64x64xf32> -> vector<64x64xf32>
    %182 = arith.addf %175, %181 : vector<64x64xf32>
    %c24 = arith.constant 24 : index
    %c0_111 = arith.constant 0 : index
    %183 = vector.load %arg14[%c24, %c0_111] : memref<96x32xbf16, #tpu.memory_space<vmem>>, vector<64x32xbf16>
    %c7_112 = arith.constant 7 : index
    %c0_113 = arith.constant 0 : index
    %c0_114 = arith.constant 0 : index
    %184 = vector.load %arg4[%c7_112, %c0_113, %c0_114] : memref<9x32x64xbf16, #tpu.memory_space<vmem>>, vector<1x32x64xbf16>
    %185 = vector.shape_cast %184 : vector<1x32x64xbf16> to vector<32x64xbf16>
    %cst_115 = arith.constant dense<0.000000e+00> : vector<64x64xf32>
    %186 = tpu.matmul %183, %185, %cst_115 {dimension_numbers = #tpu.dot_dimension_numbers<[1], [0], [0], [1], [0, 0, 1, 1], [], []>} : vector<64x32xbf16>, vector<32x64xbf16>, vector<64x64xf32> -> vector<64x64xf32>
    %187 = arith.addf %182, %186 : vector<64x64xf32>
    %c25 = arith.constant 25 : index
    %c0_116 = arith.constant 0 : index
    %188 = vector.load %arg14[%c25, %c0_116] : memref<96x32xbf16, #tpu.memory_space<vmem>>, vector<64x32xbf16>
    %189 = vector.broadcast %136 : vector<64x1xbf16> to vector<64x32xbf16>
    %190 = arith.mulf %188, %189 : vector<64x32xbf16>
    %c8_117 = arith.constant 8 : index
    %c0_118 = arith.constant 0 : index
    %c0_119 = arith.constant 0 : index
    %191 = vector.load %arg4[%c8_117, %c0_118, %c0_119] : memref<9x32x64xbf16, #tpu.memory_space<vmem>>, vector<1x32x64xbf16>
    %192 = vector.shape_cast %191 : vector<1x32x64xbf16> to vector<32x64xbf16>
    %cst_120 = arith.constant dense<0.000000e+00> : vector<64x64xf32>
    %193 = tpu.matmul %190, %192, %cst_120 {dimension_numbers = #tpu.dot_dimension_numbers<[1], [0], [0], [1], [0, 0, 1, 1], [], []>} : vector<64x32xbf16>, vector<32x64xbf16>, vector<64x64xf32> -> vector<64x64xf32>
    %194 = arith.addf %187, %193 : vector<64x64xf32>
    %c0_121 = arith.constant 0 : index
    %c0_122 = arith.constant 0 : index
    %195 = vector.load %arg5[%c0_121, %c0_122] : memref<1x64xf32, #tpu.memory_space<vmem>>, vector<1x64xf32>
    %196 = vector.broadcast %195 : vector<1x64xf32> to vector<64x64xf32>
    %197 = arith.addf %194, %196 : vector<64x64xf32>
    %cst_123 = arith.constant 0.000000e+00 : f32
    %198 = vector.broadcast %cst_123 : f32 to vector<64x64xf32>
    %199 = arith.maximumf %197, %198 : vector<64x64xf32>
    %200 = arith.truncf %199 : vector<64x64xf32> to vector<64x64xbf16>
    %201 = vector.extract_strided_slice %200 {offsets = [0, 0], sizes = [56, 64], strides = [1, 1]} : vector<64x64xbf16> to vector<56x64xbf16>
    %202 = vector.extract_strided_slice %200 {offsets = [8, 0], sizes = [56, 64], strides = [1, 1]} : vector<64x64xbf16> to vector<56x64xbf16>
    %203 = arith.maximumf %201, %202 : vector<56x64xbf16>
    %c0_124 = arith.constant 0 : index
    %c0_125 = arith.constant 0 : index
    %c0_126 = arith.constant 0 : index
    %204 = vector.load %arg11[%c0_124, %c0_125, %c0_126] : memref<2x16x56xbf16, #tpu.memory_space<vmem>>, vector<1x16x56xbf16>
    %205 = vector.shape_cast %204 : vector<1x16x56xbf16> to vector<16x56xbf16>
    %cst_127 = arith.constant dense<0.000000e+00> : vector<16x64xf32>
    %206 = tpu.matmul %205, %203, %cst_127 {dimension_numbers = #tpu.dot_dimension_numbers<[1], [0], [0], [1], [0, 0, 1, 1], [], []>} : vector<16x56xbf16>, vector<56x64xbf16>, vector<16x64xf32> -> vector<16x64xf32>
    %c1_128 = arith.constant 1 : index
    %c0_129 = arith.constant 0 : index
    %c0_130 = arith.constant 0 : index
    %207 = vector.load %arg11[%c1_128, %c0_129, %c0_130] : memref<2x16x56xbf16, #tpu.memory_space<vmem>>, vector<1x16x56xbf16>
    %208 = vector.shape_cast %207 : vector<1x16x56xbf16> to vector<16x56xbf16>
    %cst_131 = arith.constant dense<0.000000e+00> : vector<16x64xf32>
    %209 = tpu.matmul %208, %203, %cst_131 {dimension_numbers = #tpu.dot_dimension_numbers<[1], [0], [0], [1], [0, 0, 1, 1], [], []>} : vector<16x56xbf16>, vector<56x64xbf16>, vector<16x64xf32> -> vector<16x64xf32>
    %210 = arith.maximumf %206, %209 : vector<16x64xf32>
    %211 = arith.truncf %210 : vector<16x64xf32> to vector<16x64xbf16>
    %cst_132 = arith.constant 0.000000e+00 : bf16
    %212 = vector.broadcast %cst_132 : bf16 to vector<48x64xbf16>
    %c0_133 = arith.constant 0 : index
    %c0_134 = arith.constant 0 : index
    %213 = vector.load %arg15[%c0_133, %c0_134] : memref<48x64xbf16, #tpu.memory_space<vmem>>, vector<48x64xbf16>
    tpu.vector_store %arg15[%c0_133, %c0_134], %212 {strides = array<i32>} : memref<48x64xbf16, #tpu.memory_space<vmem>>, vector<48x64xbf16>,
    %c16_135 = arith.constant 16 : index
    %c0_136 = arith.constant 0 : index
    %214 = vector.load %arg15[%c16_135, %c0_136] : memref<48x64xbf16, #tpu.memory_space<vmem>>, vector<16x64xbf16>
    tpu.vector_store %arg15[%c16_135, %c0_136], %211 {strides = array<i32>} : memref<48x64xbf16, #tpu.memory_space<vmem>>, vector<16x64xbf16>,
    %215 = tpu.iota {dimensions = array<i32: 0>} : vector<16x1xi32>
    %c4_i32 = arith.constant 4 : i32
    %c0_i32_137 = arith.constant 0 : i32
    %216 = arith.cmpi eq, %c4_i32, %c0_i32_137 : i32
    %c1_i32_138 = arith.constant 1 : i32
    %217 = arith.select %216, %c1_i32_138, %c4_i32 : i32
    %218 = vector.broadcast %217 : i32 to vector<16x1xi32>
    %219 = arith.remsi %215, %218 : vector<16x1xi32>
    %c0_i32_139 = arith.constant 0 : i32
    %220 = vector.broadcast %c0_i32_139 : i32 to vector<16x1xi32>
    %221 = arith.cmpi ne, %219, %220 : vector<16x1xi32>
    %c0_i32_140 = arith.constant 0 : i32
    %222 = vector.broadcast %c0_i32_140 : i32 to vector<16x1xi32>
    %223 = arith.cmpi slt, %219, %222 : vector<16x1xi32>
    %c0_i32_141 = arith.constant 0 : i32
    %224 = arith.cmpi slt, %217, %c0_i32_141 : i32
    %225 = vector.broadcast %224 : i1 to vector<16x1xi1>
    %226 = vector.broadcast %225 : vector<16x1xi1> to vector<16x1xi1>
    %227 = arith.xori %223, %226 : vector<16x1xi1>
    %228 = arith.andi %227, %221 : vector<16x1xi1>
    %229 = vector.broadcast %217 : i32 to vector<16x1xi32>
    %230 = arith.addi %219, %229 : vector<16x1xi32>
    %231 = arith.select %228, %230, %219 : vector<16x1xi1>, vector<16x1xi32>
    %c0_i32_142 = arith.constant 0 : i32
    %232 = vector.broadcast %c0_i32_142 : i32 to vector<16x1xi32>
    %233 = arith.cmpi ne, %231, %232 : vector<16x1xi32>
    %234 = arith.extui %233 : vector<16x1xi1> to vector<16x1xi32>
    %235 = arith.sitofp %234 : vector<16x1xi32> to vector<16x1xf32>
    %236 = arith.truncf %235 : vector<16x1xf32> to vector<16x1xbf16>
    %c3_i32 = arith.constant 3 : i32
    %237 = vector.broadcast %c3_i32 : i32 to vector<16x1xi32>
    %238 = arith.cmpi ne, %231, %237 : vector<16x1xi32>
    %239 = arith.extui %238 : vector<16x1xi1> to vector<16x1xi32>
    %240 = arith.sitofp %239 : vector<16x1xi32> to vector<16x1xf32>
    %241 = arith.truncf %240 : vector<16x1xf32> to vector<16x1xbf16>
    %cst_143 = arith.constant 0.000000e+00 : f32
    %242 = vector.broadcast %cst_143 : f32 to vector<16x128xf32>
    %c11 = arith.constant 11 : index
    %c0_144 = arith.constant 0 : index
    %243 = vector.load %arg15[%c11, %c0_144] : memref<48x64xbf16, #tpu.memory_space<vmem>>, vector<16x64xbf16>
    %244 = vector.broadcast %236 : vector<16x1xbf16> to vector<16x64xbf16>
    %245 = arith.mulf %243, %244 : vector<16x64xbf16>
    %c0_145 = arith.constant 0 : index
    %c0_146 = arith.constant 0 : index
    %c0_147 = arith.constant 0 : index
    %246 = vector.load %arg6[%c0_145, %c0_146, %c0_147] : memref<9x64x128xbf16, #tpu.memory_space<vmem>>, vector<1x64x128xbf16>
    %247 = vector.shape_cast %246 : vector<1x64x128xbf16> to vector<64x128xbf16>
    %cst_148 = arith.constant dense<0.000000e+00> : vector<16x128xf32>
    %248 = tpu.matmul %245, %247, %cst_148 {dimension_numbers = #tpu.dot_dimension_numbers<[1], [0], [0], [1], [0, 0, 1, 1], [], []>} : vector<16x64xbf16>, vector<64x128xbf16>, vector<16x128xf32> -> vector<16x128xf32>
    %249 = arith.addf %242, %248 : vector<16x128xf32>
    %c12 = arith.constant 12 : index
    %c0_149 = arith.constant 0 : index
    %250 = vector.load %arg15[%c12, %c0_149] : memref<48x64xbf16, #tpu.memory_space<vmem>>, vector<16x64xbf16>
    %c1_150 = arith.constant 1 : index
    %c0_151 = arith.constant 0 : index
    %c0_152 = arith.constant 0 : index
    %251 = vector.load %arg6[%c1_150, %c0_151, %c0_152] : memref<9x64x128xbf16, #tpu.memory_space<vmem>>, vector<1x64x128xbf16>
    %252 = vector.shape_cast %251 : vector<1x64x128xbf16> to vector<64x128xbf16>
    %cst_153 = arith.constant dense<0.000000e+00> : vector<16x128xf32>
    %253 = tpu.matmul %250, %252, %cst_153 {dimension_numbers = #tpu.dot_dimension_numbers<[1], [0], [0], [1], [0, 0, 1, 1], [], []>} : vector<16x64xbf16>, vector<64x128xbf16>, vector<16x128xf32> -> vector<16x128xf32>
    %254 = arith.addf %249, %253 : vector<16x128xf32>
    %c13 = arith.constant 13 : index
    %c0_154 = arith.constant 0 : index
    %255 = vector.load %arg15[%c13, %c0_154] : memref<48x64xbf16, #tpu.memory_space<vmem>>, vector<16x64xbf16>
    %256 = vector.broadcast %241 : vector<16x1xbf16> to vector<16x64xbf16>
    %257 = arith.mulf %255, %256 : vector<16x64xbf16>
    %c2_155 = arith.constant 2 : index
    %c0_156 = arith.constant 0 : index
    %c0_157 = arith.constant 0 : index
    %258 = vector.load %arg6[%c2_155, %c0_156, %c0_157] : memref<9x64x128xbf16, #tpu.memory_space<vmem>>, vector<1x64x128xbf16>
    %259 = vector.shape_cast %258 : vector<1x64x128xbf16> to vector<64x128xbf16>
    %cst_158 = arith.constant dense<0.000000e+00> : vector<16x128xf32>
    %260 = tpu.matmul %257, %259, %cst_158 {dimension_numbers = #tpu.dot_dimension_numbers<[1], [0], [0], [1], [0, 0, 1, 1], [], []>} : vector<16x64xbf16>, vector<64x128xbf16>, vector<16x128xf32> -> vector<16x128xf32>
    %261 = arith.addf %254, %260 : vector<16x128xf32>
    %c15_159 = arith.constant 15 : index
    %c0_160 = arith.constant 0 : index
    %262 = vector.load %arg15[%c15_159, %c0_160] : memref<48x64xbf16, #tpu.memory_space<vmem>>, vector<16x64xbf16>
    %263 = vector.broadcast %236 : vector<16x1xbf16> to vector<16x64xbf16>
    %264 = arith.mulf %262, %263 : vector<16x64xbf16>
    %c3_161 = arith.constant 3 : index
    %c0_162 = arith.constant 0 : index
    %c0_163 = arith.constant 0 : index
    %265 = vector.load %arg6[%c3_161, %c0_162, %c0_163] : memref<9x64x128xbf16, #tpu.memory_space<vmem>>, vector<1x64x128xbf16>
    %266 = vector.shape_cast %265 : vector<1x64x128xbf16> to vector<64x128xbf16>
    %cst_164 = arith.constant dense<0.000000e+00> : vector<16x128xf32>
    %267 = tpu.matmul %264, %266, %cst_164 {dimension_numbers = #tpu.dot_dimension_numbers<[1], [0], [0], [1], [0, 0, 1, 1], [], []>} : vector<16x64xbf16>, vector<64x128xbf16>, vector<16x128xf32> -> vector<16x128xf32>
    %268 = arith.addf %261, %267 : vector<16x128xf32>
    %c16_165 = arith.constant 16 : index
    %c0_166 = arith.constant 0 : index
    %269 = vector.load %arg15[%c16_165, %c0_166] : memref<48x64xbf16, #tpu.memory_space<vmem>>, vector<16x64xbf16>
    %c4_167 = arith.constant 4 : index
    %c0_168 = arith.constant 0 : index
    %c0_169 = arith.constant 0 : index
    %270 = vector.load %arg6[%c4_167, %c0_168, %c0_169] : memref<9x64x128xbf16, #tpu.memory_space<vmem>>, vector<1x64x128xbf16>
    %271 = vector.shape_cast %270 : vector<1x64x128xbf16> to vector<64x128xbf16>
    %cst_170 = arith.constant dense<0.000000e+00> : vector<16x128xf32>
    %272 = tpu.matmul %269, %271, %cst_170 {dimension_numbers = #tpu.dot_dimension_numbers<[1], [0], [0], [1], [0, 0, 1, 1], [], []>} : vector<16x64xbf16>, vector<64x128xbf16>, vector<16x128xf32> -> vector<16x128xf32>
    %273 = arith.addf %268, %272 : vector<16x128xf32>
    %c17_171 = arith.constant 17 : index
    %c0_172 = arith.constant 0 : index
    %274 = vector.load %arg15[%c17_171, %c0_172] : memref<48x64xbf16, #tpu.memory_space<vmem>>, vector<16x64xbf16>
    %275 = vector.broadcast %241 : vector<16x1xbf16> to vector<16x64xbf16>
    %276 = arith.mulf %274, %275 : vector<16x64xbf16>
    %c5_173 = arith.constant 5 : index
    %c0_174 = arith.constant 0 : index
    %c0_175 = arith.constant 0 : index
    %277 = vector.load %arg6[%c5_173, %c0_174, %c0_175] : memref<9x64x128xbf16, #tpu.memory_space<vmem>>, vector<1x64x128xbf16>
    %278 = vector.shape_cast %277 : vector<1x64x128xbf16> to vector<64x128xbf16>
    %cst_176 = arith.constant dense<0.000000e+00> : vector<16x128xf32>
    %279 = tpu.matmul %276, %278, %cst_176 {dimension_numbers = #tpu.dot_dimension_numbers<[1], [0], [0], [1], [0, 0, 1, 1], [], []>} : vector<16x64xbf16>, vector<64x128xbf16>, vector<16x128xf32> -> vector<16x128xf32>
    %280 = arith.addf %273, %279 : vector<16x128xf32>
    %c19 = arith.constant 19 : index
    %c0_177 = arith.constant 0 : index
    %281 = vector.load %arg15[%c19, %c0_177] : memref<48x64xbf16, #tpu.memory_space<vmem>>, vector<16x64xbf16>
    %282 = vector.broadcast %236 : vector<16x1xbf16> to vector<16x64xbf16>
    %283 = arith.mulf %281, %282 : vector<16x64xbf16>
    %c6_178 = arith.constant 6 : index
    %c0_179 = arith.constant 0 : index
    %c0_180 = arith.constant 0 : index
    %284 = vector.load %arg6[%c6_178, %c0_179, %c0_180] : memref<9x64x128xbf16, #tpu.memory_space<vmem>>, vector<1x64x128xbf16>
    %285 = vector.shape_cast %284 : vector<1x64x128xbf16> to vector<64x128xbf16>
    %cst_181 = arith.constant dense<0.000000e+00> : vector<16x128xf32>
    %286 = tpu.matmul %283, %285, %cst_181 {dimension_numbers = #tpu.dot_dimension_numbers<[1], [0], [0], [1], [0, 0, 1, 1], [], []>} : vector<16x64xbf16>, vector<64x128xbf16>, vector<16x128xf32> -> vector<16x128xf32>
    %287 = arith.addf %280, %286 : vector<16x128xf32>
    %c20 = arith.constant 20 : index
    %c0_182 = arith.constant 0 : index
    %288 = vector.load %arg15[%c20, %c0_182] : memref<48x64xbf16, #tpu.memory_space<vmem>>, vector<16x64xbf16>
    %c7_183 = arith.constant 7 : index
    %c0_184 = arith.constant 0 : index
    %c0_185 = arith.constant 0 : index
    %289 = vector.load %arg6[%c7_183, %c0_184, %c0_185] : memref<9x64x128xbf16, #tpu.memory_space<vmem>>, vector<1x64x128xbf16>
    %290 = vector.shape_cast %289 : vector<1x64x128xbf16> to vector<64x128xbf16>
    %cst_186 = arith.constant dense<0.000000e+00> : vector<16x128xf32>
    %291 = tpu.matmul %288, %290, %cst_186 {dimension_numbers = #tpu.dot_dimension_numbers<[1], [0], [0], [1], [0, 0, 1, 1], [], []>} : vector<16x64xbf16>, vector<64x128xbf16>, vector<16x128xf32> -> vector<16x128xf32>
    %292 = arith.addf %287, %291 : vector<16x128xf32>
    %c21 = arith.constant 21 : index
    %c0_187 = arith.constant 0 : index
    %293 = vector.load %arg15[%c21, %c0_187] : memref<48x64xbf16, #tpu.memory_space<vmem>>, vector<16x64xbf16>
    %294 = vector.broadcast %241 : vector<16x1xbf16> to vector<16x64xbf16>
    %295 = arith.mulf %293, %294 : vector<16x64xbf16>
    %c8_188 = arith.constant 8 : index
    %c0_189 = arith.constant 0 : index
    %c0_190 = arith.constant 0 : index
    %296 = vector.load %arg6[%c8_188, %c0_189, %c0_190] : memref<9x64x128xbf16, #tpu.memory_space<vmem>>, vector<1x64x128xbf16>
    %297 = vector.shape_cast %296 : vector<1x64x128xbf16> to vector<64x128xbf16>
    %cst_191 = arith.constant dense<0.000000e+00> : vector<16x128xf32>
    %298 = tpu.matmul %295, %297, %cst_191 {dimension_numbers = #tpu.dot_dimension_numbers<[1], [0], [0], [1], [0, 0, 1, 1], [], []>} : vector<16x64xbf16>, vector<64x128xbf16>, vector<16x128xf32> -> vector<16x128xf32>
    %299 = arith.addf %292, %298 : vector<16x128xf32>
    %c0_192 = arith.constant 0 : index
    %c0_193 = arith.constant 0 : index
    %300 = vector.load %arg7[%c0_192, %c0_193] : memref<1x128xf32, #tpu.memory_space<vmem>>, vector<1x128xf32>
    %301 = vector.broadcast %300 : vector<1x128xf32> to vector<16x128xf32>
    %302 = arith.addf %299, %301 : vector<16x128xf32>
    %cst_194 = arith.constant 0.000000e+00 : f32
    %303 = vector.broadcast %cst_194 : f32 to vector<16x128xf32>
    %304 = arith.maximumf %302, %303 : vector<16x128xf32>
    %cst_195 = arith.constant dense<0.000000e+00> : vector<128xf32>
    %305 = vector.multi_reduction <add>, %304, %cst_195 [0] : vector<16x128xf32> to vector<128xf32>
    %306 = vector.shape_cast %305 : vector<128xf32> to vector<1x128xf32>
    %cst_196 = arith.constant 6.250000e-02 : f32
    %307 = vector.broadcast %cst_196 : f32 to vector<1x128xf32>
    %308 = arith.mulf %306, %307 : vector<1x128xf32>
    %c0_197 = arith.constant 0 : index
    %c0_198 = arith.constant 0 : index
    %309 = vector.load %arg8[%c0_197, %c0_198] : memref<128x1xf32, #tpu.memory_space<vmem>>, vector<128x1xf32>
    %cst_199 = arith.constant dense<0.000000e+00> : vector<1x1xf32>
    %310 = tpu.matmul %308, %309, %cst_199 {dimension_numbers = #tpu.dot_dimension_numbers<[1], [0], [0], [1], [0, 0, 1, 1], [], []>} : vector<1x128xf32>, vector<128x1xf32>, vector<1x1xf32> -> vector<1x1xf32>
    %c0_200 = arith.constant 0 : index
    %c0_201 = arith.constant 0 : index
    %311 = vector.load %arg9[%c0_200, %c0_201] : memref<1x1xf32, #tpu.memory_space<vmem>>, vector<1x1xf32>
    %312 = arith.addf %310, %311 : vector<1x1xf32>
    %c0_202 = arith.constant 0 : index
    %c0_203 = arith.constant 0 : index
    %c0_204 = arith.constant 0 : index
    %313 = vector.load %arg12[%c0_202, %c0_203, %c0_204] : memref<1x1x1xf32, #tpu.memory_space<vmem>>, vector<1x1x1xf32>
    %314 = vector.shape_cast %313 : vector<1x1x1xf32> to vector<1x1xf32>
    %315 = vector.shape_cast %312 : vector<1x1xf32> to vector<1x1x1xf32>
    tpu.vector_store %arg12[%c0_202, %c0_203, %c0_204], %315 {strides = array<i32>} : memref<1x1x1xf32, #tpu.memory_space<vmem>>, vector<1x1x1xf32>,
    return
  }
  func.func @transform_0(%arg0: i32) -> (i32, i32, i32) {
    %c0_i32 = arith.constant 0 : i32
    %c0_i32_0 = arith.constant 0 : i32
    %c0_i32_1 = arith.constant 0 : i32
    return %arg0, %c0_i32, %c0_i32_0 : i32, i32, i32
  }
  func.func @transform_1(%arg0: i32) -> (i32, i32, i32) {
    %c0_i32 = arith.constant 0 : i32
    %c0_i32_0 = arith.constant 0 : i32
    %c0_i32_1 = arith.constant 0 : i32
    %c0_i32_2 = arith.constant 0 : i32
    return %c0_i32, %c0_i32_0, %c0_i32_1 : i32, i32, i32
  }
  func.func @transform_2(%arg0: i32) -> (i32, i32) {
    %c0_i32 = arith.constant 0 : i32
    %c0_i32_0 = arith.constant 0 : i32
    %c0_i32_1 = arith.constant 0 : i32
    return %c0_i32, %c0_i32_0 : i32, i32
  }
  func.func @transform_3(%arg0: i32) -> (i32, i32, i32) {
    %c0_i32 = arith.constant 0 : i32
    %c0_i32_0 = arith.constant 0 : i32
    %c0_i32_1 = arith.constant 0 : i32
    %c0_i32_2 = arith.constant 0 : i32
    return %c0_i32, %c0_i32_0, %c0_i32_1 : i32, i32, i32
  }
  func.func @transform_4(%arg0: i32) -> (i32, i32) {
    %c0_i32 = arith.constant 0 : i32
    %c0_i32_0 = arith.constant 0 : i32
    %c0_i32_1 = arith.constant 0 : i32
    return %c0_i32, %c0_i32_0 : i32, i32
  }
  func.func @transform_5(%arg0: i32) -> (i32, i32, i32) {
    %c0_i32 = arith.constant 0 : i32
    %c0_i32_0 = arith.constant 0 : i32
    %c0_i32_1 = arith.constant 0 : i32
    %c0_i32_2 = arith.constant 0 : i32
    return %c0_i32, %c0_i32_0, %c0_i32_1 : i32, i32, i32
  }
  func.func @transform_6(%arg0: i32) -> (i32, i32) {
    %c0_i32 = arith.constant 0 : i32
    %c0_i32_0 = arith.constant 0 : i32
    %c0_i32_1 = arith.constant 0 : i32
    return %c0_i32, %c0_i32_0 : i32, i32
  }
  func.func @transform_7(%arg0: i32) -> (i32, i32) {
    %c0_i32 = arith.constant 0 : i32
    %c0_i32_0 = arith.constant 0 : i32
    %c0_i32_1 = arith.constant 0 : i32
    return %c0_i32, %c0_i32_0 : i32, i32
  }
  func.func @transform_8(%arg0: i32) -> (i32, i32) {
    %c0_i32 = arith.constant 0 : i32
    %c0_i32_0 = arith.constant 0 : i32
    %c0_i32_1 = arith.constant 0 : i32
    return %c0_i32, %c0_i32_0 : i32, i32
  }
  func.func @transform_9(%arg0: i32) -> (i32, i32, i32) {
    %c0_i32 = arith.constant 0 : i32
    %c0_i32_0 = arith.constant 0 : i32
    %c0_i32_1 = arith.constant 0 : i32
    %c0_i32_2 = arith.constant 0 : i32
    return %c0_i32, %c0_i32_0, %c0_i32_1 : i32, i32, i32
  }
  func.func @transform_10(%arg0: i32) -> (i32, i32, i32) {
    %c0_i32 = arith.constant 0 : i32
    %c0_i32_0 = arith.constant 0 : i32
    %c0_i32_1 = arith.constant 0 : i32
    %c0_i32_2 = arith.constant 0 : i32
    return %c0_i32, %c0_i32_0, %c0_i32_1 : i32, i32, i32
  }
  func.func @transform_11(%arg0: i32) -> (i32, i32, i32) {
    %c0_i32 = arith.constant 0 : i32
    %c0_i32_0 = arith.constant 0 : i32
    %c0_i32_1 = arith.constant 0 : i32
    return %arg0, %c0_i32, %c0_i32_0 : i32, i32, i32
  }
}

</mosaic_0001>

<llo_original>
// kernel: gafnet_forward.1
$region0: #{gafnet_forward.1}
  #allocation0 [shape = 'u32[]', space=smem, size = 0x4, offset = 0x4, fixed_abs, tag = 'smem constant byte address 0x4 - core index']
  #allocation1 [shape = 'u32[72,128]{1,0:T(1,128)}', space=vmem, size = 0x9000, scoped, tag = 'internal scratch']
  #allocation2 [shape = 'bf16[320,6]{1,0:T(8,128)(2,1)}', space=vmem, size = 0x14000, scoped, tag = 'scratch operand']
  #allocation3 [shape = 'bf16[96,32]{1,0:T(8,128)(2,1)}', space=vmem, size = 0x6000, scoped, tag = 'scratch operand']
  #allocation4 [shape = 'bf16[48,64]{1,0:T(8,128)(2,1)}', space=vmem, size = 0x3000, scoped, tag = 'scratch operand']
  #allocation5 [shape = 'f32[1,1]{1,0:T(1,128)S(1)}', space=vmem, size = 0x200, scoped, tag = 'scoped memory for gafnet_forward.1']
  %s0 = inlined_call_operand.vmem [shape: bf16[2,256,6], index: 0, kind: input, shape index: {}]
  %s1 = inlined_call_operand.vmem [shape: bf16[9,6,32], index: 1, kind: input, shape index: {}]
  %s2 = inlined_call_operand.vmem [shape: f32[1,32], index: 2, kind: input, shape index: {}]
  %s3 = inlined_call_operand.vmem [shape: bf16[9,32,64], index: 3, kind: input, shape index: {}]
  %s4 = inlined_call_operand.vmem [shape: f32[1,64], index: 4, kind: input, shape index: {}]
  %s5 = inlined_call_operand.vmem [shape: bf16[9,64,128], index: 5, kind: input, shape index: {}]
  %s6 = inlined_call_operand.vmem [shape: f32[1,128], index: 6, kind: input, shape index: {}]
  %s7 = inlined_call_operand.vmem [shape: f32[128,1], index: 7, kind: input, shape index: {}]
  %s8 = inlined_call_operand.<no memory space> [shape: f32[1,1], index: 8, kind: input, shape index: {}]
  %s9 = inlined_call_operand.vmem [shape: bf16[2,64,240], index: 9, kind: input, shape index: {}]
  %s10 = inlined_call_operand.vmem [shape: bf16[2,16,56], index: 10, kind: input, shape index: {}]
  %s11 = inlined_call_operand.vmem [shape: f32[2,1,1], index: 11, kind: output, shape index: {}]
  %s12 = sld [smem:[#allocation0]]
  $region77: #{gafnet_forward.1} parent=0
    _
  %s14 = ssub.s32 1, %s12
  %s15 = scalar_select 0, %s14, %s12
  %v16 = vstv %s8
  %17 = vst [vmem:[#allocation5] sm:$0x1] %v16
  loop: start=0, step=1, limit=4
  $region2: #{gafnet_forward.1} parent=0 // loop_pre_header
    _
  $region3: #{gafnet_forward.1} parent=0 // loop_header
    %s19 = sphi 0, %s23
    %p20 = scmp.ge.s32.totalorder %s19, 4
    %s29 = sphi 0, %s31
    %s32 = sphi 0, %s29
    %s33 = sphi 0, %s32
    %s49 = sphi 0, %s33
    %s53 = sphi 0, %s53
    %s55 = sphi 0, %s53
    %s56 = sphi 0, %s55
    %s70 = sphi 0, %s56
    %s74 = sphi 0, %s74
    %s76 = sphi 0, %s74
    %s77 = sphi 0, %s76
    %s91 = sphi 0, %s77
    %s95 = sphi 0, %s95
    %s97 = sphi 0, %s95
    %s98 = sphi 0, %s97
    %s112 = sphi 0, %s98
    %s116 = sphi 0, %s116
    %s118 = sphi 0, %s116
    %s119 = sphi 0, %s118
    %s133 = sphi 0, %s119
    %s137 = sphi 0, %s137
    %s139 = sphi 0, %s137
    %s140 = sphi 0, %s139
    %s154 = sphi 0, %s140
    %s158 = sphi 0, %s158
    %s160 = sphi 0, %s158
    %s161 = sphi 0, %s160
    %s175 = sphi 0, %s161
    %s179 = sphi 0, %s179
    %s181 = sphi 0, %s179
    %s182 = sphi 0, %s181
    %s196 = sphi 0, %s182
    %s200 = sphi 0, %s200
    %s202 = sphi 0, %s200
    %s203 = sphi 0, %s202
    %s217 = sphi 0, %s203
    %s221 = sphi 0, %s221
    %s223 = sphi 0, %s221
    %s224 = sphi 0, %s223
    %s238 = sphi 0, %s224
    %s242 = sphi 0, %s242
    %s244 = sphi 0, %s242
    %s245 = sphi 0, %s244
    %s259 = sphi 0, %s245
    %s265 = sphi 0, %s267
    %s268 = sphi 0, %s265
    %s269 = sphi 0, %s268
    %s285 = sphi 0, %s269
  $region4: #{gafnet_forward.1} parent=0 // loop_header_branch
    %22 = sbr.rel (%p20) target = $region8
  $region5: #{gafnet_forward.1} parent=0 // loop_body
    %s24 = ssub.s32 %s19, 1
    %s25 = ssub.s32 %s19, 2
    %s26 = sadd.s32 %s19, 1
    %s27 = ssub.s32 %s19, %s26
    %p28 = scmp.eq.s32.totalorder %s27, 0
    %s30 = sadd.s32 %s29, 1
    %s31 = scalar_select %p28, %s29, %s30
    %p34 = pneg %p28
    %p35 = scmp.eq.s32.totalorder %s19, 1
    %p36 = por %p34, %p35
    %p37 = scmp.ne.s32.totalorder %s29, %s32
    %p38 = scmp.eq.s32.totalorder %s19, 0
    %p39 = por %p37, %p38
    %p40 = scmp.ne.s32.totalorder %s29, %s32
    %p41 = scmp.eq.s32.totalorder %s24, 1
    %p42 = por %p40, %p41
    %p43 = scmp.ne.s32.totalorder %s32, %s33
    %p44 = scmp.eq.s32.totalorder %s24, 0
    %p45 = por %p43, %p44
    %p46 = scmp.ne.s32.totalorder %s32, %s33
    %p47 = scmp.eq.s32.totalorder %s25, 1
    %p48 = por %p46, %p47
    %p50 = scmp.ne.s32.totalorder %s33, %s49
    %p51 = scmp.eq.s32.totalorder %s25, 0
    %p52 = por %p50, %p51
    %s54 = sadd.s32 %s53, 1
    %p57 = scmp.eq.s32.totalorder %s19, 1
    %p58 = scmp.ne.s32.totalorder %s53, %s55
    %p59 = scmp.eq.s32.totalorder %s19, 0
    %p60 = por %p58, %p59
    %p61 = scmp.ne.s32.totalorder %s53, %s55
    %p62 = scmp.eq.s32.totalorder %s24, 1
    %p63 = por %p61, %p62
    %p64 = scmp.ne.s32.totalorder %s55, %s56
    %p65 = scmp.eq.s32.totalorder %s24, 0
    %p66 = por %p64, %p65
    %p67 = scmp.ne.s32.totalorder %s55, %s56
    %p68 = scmp.eq.s32.totalorder %s25, 1
    %p69 = por %p67, %p68
    %p71 = scmp.ne.s32.totalorder %s56, %s70
    %p72 = scmp.eq.s32.totalorder %s25, 0
    %p73 = por %p71, %p72
    %s75 = sadd.s32 %s74, 1
    %p78 = scmp.eq.s32.totalorder %s19, 1
    %p79 = scmp.ne.s32.totalorder %s74, %s76
    %p80 = scmp.eq.s32.totalorder %s19, 0
    %p81 = por %p79, %p80
    %p82 = scmp.ne.s32.totalorder %s74, %s76
    %p83 = scmp.eq.s32.totalorder %s24, 1
    %p84 = por %p82, %p83
    %p85 = scmp.ne.s32.totalorder %s76, %s77
    %p86 = scmp.eq.s32.totalorder %s24, 0
    %p87 = por %p85, %p86
    %p88 = scmp.ne.s32.totalorder %s76, %s77
    %p89 = scmp.eq.s32.totalorder %s25, 1
    %p90 = por %p88, %p89
    %p92 = scmp.ne.s32.totalorder %s77, %s91
    %p93 = scmp.eq.s32.totalorder %s25, 0
    %p94 = por %p92, %p93
    %s96 = sadd.s32 %s95, 1
    %p99 = scmp.eq.s32.totalorder %s19, 1
    %p100 = scmp.ne.s32.totalorder %s95, %s97
    %p101 = scmp.eq.s32.totalorder %s19, 0
    %p102 = por %p100, %p101
    %p103 = scmp.ne.s32.totalorder %s95, %s97
    %p104 = scmp.eq.s32.totalorder %s24, 1
    %p105 = por %p103, %p104
    %p106 = scmp.ne.s32.totalorder %s97, %s98
    %p107 = scmp.eq.s32.totalorder %s24, 0
    %p108 = por %p106, %p107
    %p109 = scmp.ne.s32.totalorder %s97, %s98
    %p110 = scmp.eq.s32.totalorder %s25, 1
    %p111 = por %p109, %p110
    %p113 = scmp.ne.s32.totalorder %s98, %s112
    %p114 = scmp.eq.s32.totalorder %s25, 0
    %p115 = por %p113, %p114
    %s117 = sadd.s32 %s116, 1
    %p120 = scmp.eq.s32.totalorder %s19, 1
    %p121 = scmp.ne.s32.totalorder %s116, %s118
    %p122 = scmp.eq.s32.totalorder %s19, 0
    %p123 = por %p121, %p122
    %p124 = scmp.ne.s32.totalorder %s116, %s118
    %p125 = scmp.eq.s32.totalorder %s24, 1
    %p126 = por %p124, %p125
    %p127 = scmp.ne.s32.totalorder %s118, %s119
    %p128 = scmp.eq.s32.totalorder %s24, 0
    %p129 = por %p127, %p128
    %p130 = scmp.ne.s32.totalorder %s118, %s119
    %p131 = scmp.eq.s32.totalorder %s25, 1
    %p132 = por %p130, %p131
    %p134 = scmp.ne.s32.totalorder %s119, %s133
    %p135 = scmp.eq.s32.totalorder %s25, 0
    %p136 = por %p134, %p135
    %s138 = sadd.s32 %s137, 1
    %p141 = scmp.eq.s32.totalorder %s19, 1
    %p142 = scmp.ne.s32.totalorder %s137, %s139
    %p143 = scmp.eq.s32.totalorder %s19, 0
    %p144 = por %p142, %p143
    %p145 = scmp.ne.s32.totalorder %s137, %s139
    %p146 = scmp.eq.s32.totalorder %s24, 1
    %p147 = por %p145, %p146
    %p148 = scmp.ne.s32.totalorder %s139, %s140
    %p149 = scmp.eq.s32.totalorder %s24, 0
    %p150 = por %p148, %p149
    %p151 = scmp.ne.s32.totalorder %s139, %s140
    %p152 = scmp.eq.s32.totalorder %s25, 1
    %p153 = por %p151, %p152
    %p155 = scmp.ne.s32.totalorder %s140, %s154
    %p156 = scmp.eq.s32.totalorder %s25, 0
    %p157 = por %p155, %p156
    %s159 = sadd.s32 %s158, 1
    %p162 = scmp.eq.s32.totalorder %s19, 1
    %p163 = scmp.ne.s32.totalorder %s158, %s160
    %p164 = scmp.eq.s32.totalorder %s19, 0
    %p165 = por %p163, %p164
    %p166 = scmp.ne.s32.totalorder %s158, %s160
    %p167 = scmp.eq.s32.totalorder %s24, 1
    %p168 = por %p166, %p167
    %p169 = scmp.ne.s32.totalorder %s160, %s161
    %p170 = scmp.eq.s32.totalorder %s24, 0
    %p171 = por %p169, %p170
    %p172 = scmp.ne.s32.totalorder %s160, %s161
    %p173 = scmp.eq.s32.totalorder %s25, 1
    %p174 = por %p172, %p173
    %p176 = scmp.ne.s32.totalorder %s161, %s175
    %p177 = scmp.eq.s32.totalorder %s25, 0
    %p178 = por %p176, %p177
    %s180 = sadd.s32 %s179, 1
    %p183 = scmp.eq.s32.totalorder %s19, 1
    %p184 = scmp.ne.s32.totalorder %s179, %s181
    %p185 = scmp.eq.s32.totalorder %s19, 0
    %p186 = por %p184, %p185
    %p187 = scmp.ne.s32.totalorder %s179, %s181
    %p188 = scmp.eq.s32.totalorder %s24, 1
    %p189 = por %p187, %p188
    %p190 = scmp.ne.s32.totalorder %s181, %s182
    %p191 = scmp.eq.s32.totalorder %s24, 0
    %p192 = por %p190, %p191
    %p193 = scmp.ne.s32.totalorder %s181, %s182
    %p194 = scmp.eq.s32.totalorder %s25, 1
    %p195 = por %p193, %p194
    %p197 = scmp.ne.s32.totalorder %s182, %s196
    %p198 = scmp.eq.s32.totalorder %s25, 0
    %p199 = por %p197, %p198
    %s201 = sadd.s32 %s200, 1
    %p204 = scmp.eq.s32.totalorder %s19, 1
    %p205 = scmp.ne.s32.totalorder %s200, %s202
    %p206 = scmp.eq.s32.totalorder %s19, 0
    %p207 = por %p205, %p206
    %p208 = scmp.ne.s32.totalorder %s200, %s202
    %p209 = scmp.eq.s32.totalorder %s24, 1
    %p210 = por %p208, %p209
    %p211 = scmp.ne.s32.totalorder %s202, %s203
    %p212 = scmp.eq.s32.totalorder %s24, 0
    %p213 = por %p211, %p212
    %p214 = scmp.ne.s32.totalorder %s202, %s203
    %p215 = scmp.eq.s32.totalorder %s25, 1
    %p216 = por %p214, %p215
    %p218 = scmp.ne.s32.totalorder %s203, %s217
    %p219 = scmp.eq.s32.totalorder %s25, 0
    %p220 = por %p218, %p219
    %s222 = sadd.s32 %s221, 1
    %p225 = scmp.eq.s32.totalorder %s19, 1
    %p226 = scmp.ne.s32.totalorder %s221, %s223
    %p227 = scmp.eq.s32.totalorder %s19, 0
    %p228 = por %p226, %p227
    %p229 = scmp.ne.s32.totalorder %s221, %s223
    %p230 = scmp.eq.s32.totalorder %s24, 1
    %p231 = por %p229, %p230
    %p232 = scmp.ne.s32.totalorder %s223, %s224
    %p233 = scmp.eq.s32.totalorder %s24, 0
    %p234 = por %p232, %p233
    %p235 = scmp.ne.s32.totalorder %s223, %s224
    %p236 = scmp.eq.s32.totalorder %s25, 1
    %p237 = por %p235, %p236
    %p239 = scmp.ne.s32.totalorder %s224, %s238
    %p240 = scmp.eq.s32.totalorder %s25, 0
    %p241 = por %p239, %p240
    %s243 = sadd.s32 %s242, 1
    %p246 = scmp.eq.s32.totalorder %s19, 1
    %p247 = scmp.ne.s32.totalorder %s242, %s244
    %p248 = scmp.eq.s32.totalorder %s19, 0
    %p249 = por %p247, %p248
    %p250 = scmp.ne.s32.totalorder %s242, %s244
    %p251 = scmp.eq.s32.totalorder %s24, 1
    %p252 = por %p250, %p251
    %p253 = scmp.ne.s32.totalorder %s244, %s245
    %p254 = scmp.eq.s32.totalorder %s24, 0
    %p255 = por %p253, %p254
    %p256 = scmp.ne.s32.totalorder %s244, %s245
    %p257 = scmp.eq.s32.totalorder %s25, 1
    %p258 = por %p256, %p257
    %p260 = scmp.ne.s32.totalorder %s245, %s259
    %p261 = scmp.eq.s32.totalorder %s25, 0
    %p262 = por %p260, %p261
    %s263 = ssub.s32 %s19, %s26
    %p264 = scmp.eq.s32.totalorder %s263, 0
    %s266 = sadd.s32 %s265, 1
    %s267 = scalar_select %p264, %s265, %s266
    %p270 = pneg %p264
    %p271 = scmp.eq.s32.totalorder %s19, 1
    %p272 = por %p270, %p271
    %p273 = scmp.ne.s32.totalorder %s265, %s268
    %p274 = scmp.eq.s32.totalorder %s19, 0
    %p275 = por %p273, %p274
    %p276 = scmp.ne.s32.totalorder %s265, %s268
    %p277 = scmp.eq.s32.totalorder %s24, 1
    %p278 = por %p276, %p277
    %p279 = scmp.ne.s32.totalorder %s268, %s269
    %p280 = scmp.eq.s32.totalorder %s24, 0
    %p281 = por %p279, %p280
    %p282 = scmp.ne.s32.totalorder %s268, %s269
    %p283 = scmp.eq.s32.totalorder %s25, 1
    %p284 = por %p282, %p283
    %p286 = scmp.ne.s32.totalorder %s269, %s285
    %p287 = scmp.eq.s32.totalorder %s25, 0
    %p288 = por %p286, %p287
    %p289 = scmp.le.s32.totalorder 1, %s19
    %p290 = scmp.lt.s32.totalorder %s19, 3
    %p291 = pnand %p289, %p290
    %p292 = pneg %p291
    // Predicated region
    $region9: #{gafnet_forward.1} parent=5 // pred_check
      _
    $region10: #{gafnet_forward.1} parent=5 // pred_check_branch
      %294 = sbr.rel (%p291) target = $region12
    $region11: #{gafnet_forward.1} parent=5 // pred_region
      %s295 = ssub.s32 %s19, 1
      // Predicated region
      $region13: #{gafnet_forward.1} parent=11 // pred_check
        %p296 = pneg %p66
      $region14: #{gafnet_forward.1} parent=11 // pred_check_branch
        %298 = sbr.rel (%p296) target = $region16
      $region15: #{gafnet_forward.1} parent=11 // pred_region
        _
      $region16: #{gafnet_forward.1} parent=11 // pred_fallthru
        _
      // Predicated region
      $region17: #{gafnet_forward.1} parent=11 // pred_check
        %p299 = pneg %p87
      $region18: #{gafnet_forward.1} parent=11 // pred_check_branch
        %301 = sbr.rel (%p299) target = $region20
      $region19: #{gafnet_forward.1} parent=11 // pred_region
        _
      $region20: #{gafnet_forward.1} parent=11 // pred_fallthru
        _
      // Predicated region
      $region21: #{gafnet_forward.1} parent=11 // pred_check
        %p302 = pneg %p108
      $region22: #{gafnet_forward.1} parent=11 // pred_check_branch
        %304 = sbr.rel (%p302) target = $region24
      $region23: #{gafnet_forward.1} parent=11 // pred_region
        _
      $region24: #{gafnet_forward.1} parent=11 // pred_fallthru
        _
      // Predicated region
      $region25: #{gafnet_forward.1} parent=11 // pred_check
        %p305 = pneg %p129
      $region26: #{gafnet_forward.1} parent=11 // pred_check_branch
        %307 = sbr.rel (%p305) target = $region28
      $region27: #{gafnet_forward.1} parent=11 // pred_region
        _
      $region28: #{gafnet_forward.1} parent=11 // pred_fallthru
        _
      // Predicated region
      $region29: #{gafnet_forward.1} parent=11 // pred_check
        %p308 = pneg %p150
      $region30: #{gafnet_forward.1} parent=11 // pred_check_branch
        %310 = sbr.rel (%p308) target = $region32
      $region31: #{gafnet_forward.1} parent=11 // pred_region
        _
      $region32: #{gafnet_forward.1} parent=11 // pred_fallthru
        _
      // Predicated region
      $region33: #{gafnet_forward.1} parent=11 // pred_check
        %p311 = pneg %p171
      $region34: #{gafnet_forward.1} parent=11 // pred_check_branch
        %313 = sbr.rel (%p311) target = $region36
      $region35: #{gafnet_forward.1} parent=11 // pred_region
        _
      $region36: #{gafnet_forward.1} parent=11 // pred_fallthru
        _
      // Predicated region
      $region37: #{gafnet_forward.1} parent=11 // pred_check
        %p314 = pneg %p192
      $region38: #{gafnet_forward.1} parent=11 // pred_check_branch
        %316 = sbr.rel (%p314) target = $region40
      $region39: #{gafnet_forward.1} parent=11 // pred_region
        _
      $region40: #{gafnet_forward.1} parent=11 // pred_fallthru
        _
      // Predicated region
      $region41: #{gafnet_forward.1} parent=11 // pred_check
        %p317 = pneg %p213
      $region42: #{gafnet_forward.1} parent=11 // pred_check_branch
        %319 = sbr.rel (%p317) target = $region44
      $region43: #{gafnet_forward.1} parent=11 // pred_region
        _
      $region44: #{gafnet_forward.1} parent=11 // pred_fallthru
        _
      // Predicated region
      $region45: #{gafnet_forward.1} parent=11 // pred_check
        %p320 = pneg %p234
      $region46: #{gafnet_forward.1} parent=11 // pred_check_branch
        %322 = sbr.rel (%p320) target = $region48
      $region47: #{gafnet_forward.1} parent=11 // pred_region
        _
      $region48: #{gafnet_forward.1} parent=11 // pred_fallthru
        _
      // Predicated region
      $region49: #{gafnet_forward.1} parent=11 // pred_check
        %p323 = pneg %p255
      $region50: #{gafnet_forward.1} parent=11 // pred_check_branch
        %325 = sbr.rel (%p323) target = $region52
      $region51: #{gafnet_forward.1} parent=11 // pred_region
        _
      $region52: #{gafnet_forward.1} parent=11 // pred_fallthru
        _
    $region12: #{gafnet_forward.1} parent=5 // pred_fallthru
      _
    %p326 = scmp.lt.s32.totalorder %s19, 2
    // Predicated region
    $region53: #{gafnet_forward.1} parent=5 // pred_check
      %p327 = pneg %p326
    $region54: #{gafnet_forward.1} parent=5 // pred_check_branch
      %329 = sbr.rel (%p327) target = $region56
    $region55: #{gafnet_forward.1} parent=5 // pred_region
      // Predicated region
      $region57: #{gafnet_forward.1} parent=55 // pred_check
        %p330 = pneg %p39
      $region58: #{gafnet_forward.1} parent=55 // pred_check_branch
        %332 = sbr.rel (%p330) target = $region60
      $region59: #{gafnet_forward.1} parent=55 // pred_region
        %p333 = scmp.lt.s32.totalorder %s19, 1
        %s334 = scalar_select %p333, %s19, 1
        %s335 = smul.addr %s334, 32
        %s336 = smul.addr %s335, 4
        %s337 = scalar_lea.vmem %s0, %s336
      $region60: #{gafnet_forward.1} parent=55 // pred_fallthru
        _
    $region56: #{gafnet_forward.1} parent=5 // pred_fallthru
      _
    %p338 = scmp.le.s32.totalorder 1, %s19
    %p339 = scmp.lt.s32.totalorder %s19, 3
    %p340 = pnand %p338, %p339
    %p341 = pneg %p340
    // Predicated region
    $region61: #{gafnet_forward.1} parent=5 // pred_check
      _
    $region62: #{gafnet_forward.1} parent=5 // pred_check_branch
      %343 = sbr.rel (%p340) target = $region64
    $region63: #{gafnet_forward.1} parent=5 // pred_region
      %s344 = ssub.s32 %s19, 1
      %p345 = scmp.lt.s32.totalorder %s24, 1
      %s346 = scalar_select %p345, %s24, 1
      %s347 = smul.addr %s346, 32
      %s348 = smul.addr %s347, 4
      %s349 = scalar_lea.vmem %s0, %s348
      %p350 = pneg %p45
      %p351 = pneg %p42
      %p352 = pneg %p66
      %p353 = pneg %p63
      %p354 = pneg %p87
      %p355 = pneg %p84
      %p356 = pneg %p108
      %p357 = pneg %p105
      %p358 = pneg %p129
      %p359 = pneg %p126
      %p360 = pneg %p150
      %p361 = pneg %p147
      %p362 = pneg %p171
      %p363 = pneg %p168
      %p364 = pneg %p192
      %p365 = pneg %p189
      %p366 = pneg %p213
      %p367 = pneg %p210
      %p368 = pneg %p234
      %p369 = pneg %p231
      %p370 = pneg %p255
      %p371 = pneg %p252
      %p372 = pneg %p281
      %p373 = pneg %p278
      %p374 = scmp.lt.s32.totalorder %s24, 1
      %s375 = scalar_select %p374, %s24, 1
      %s376 = scalar_lea.vmem %s11, %s375
      %p377 = scmp.lt.s32.totalorder %s24, 1
      %s378 = scalar_select %p377, %s24, 1
      %s379 = smul.addr %s378, 32
      %s380 = smul.addr %s379, 4
      %s381 = scalar_lea.vmem %s0, %s380
      %p382 = scmp.lt.s32.totalorder %s24, 1
      %s383 = scalar_select %p382, %s24, 1
      %s384 = scalar_lea.vmem %s11, %s383
      %v386 = vld [vmem:[%s381] sm:$0xf]
      %v387 = vld [vmem:[%s381 + $0x4] sm:$0xf]
      %v388 = vld [vmem:[%s381 + $0x8] sm:$0xf]
      %v389 = vld [vmem:[%s381 + $0xc] sm:$0xf]
      %v390 = vld [vmem:[%s381 + $0x10] sm:$0xf]
      %v391 = vld [vmem:[%s381 + $0x14] sm:$0xf]
      %v392 = vld [vmem:[%s381 + $0x18] sm:$0xf]
      %v393 = vld [vmem:[%s381 + $0x1c] sm:$0xf]
      %v394 = vld [vmem:[%s381 + $0x20] sm:$0xf]
      %v395 = vld [vmem:[%s381 + $0x24] sm:$0xf]
      %v396 = vld [vmem:[%s381 + $0x28] sm:$0xf]
      %v397 = vld [vmem:[%s381 + $0x2c] sm:$0xf]
      %v398 = vld [vmem:[%s381 + $0x30] sm:$0xf]
      %v399 = vld [vmem:[%s381 + $0x34] sm:$0xf]
      %v400 = vld [vmem:[%s381 + $0x38] sm:$0xf]
      %v401 = vld [vmem:[%s381 + $0x3c] sm:$0xf]
      %v402 = vld [vmem:[%s381 + $0x40] sm:$0xf]
      %v403 = vld [vmem:[%s381 + $0x44] sm:$0xf]
      %v404 = vld [vmem:[%s381 + $0x48] sm:$0xf]
      %v405 = vld [vmem:[%s381 + $0x4c] sm:$0xf]
      %v406 = vld [vmem:[%s381 + $0x50] sm:$0xf]
      %v407 = vld [vmem:[%s381 + $0x54] sm:$0xf]
      %v408 = vld [vmem:[%s381 + $0x58] sm:$0xf]
      %v409 = vld [vmem:[%s381 + $0x5c] sm:$0xf]
      %v410 = vld [vmem:[%s381 + $0x60] sm:$0xf]
      %v411 = vld [vmem:[%s381 + $0x64] sm:$0xf]
      %v412 = vld [vmem:[%s381 + $0x68] sm:$0xf]
      %v413 = vld [vmem:[%s381 + $0x6c] sm:$0xf]
      %v414 = vld [vmem:[%s381 + $0x70] sm:$0xf]
      %v415 = vld [vmem:[%s381 + $0x74] sm:$0xf]
      %v416 = vld [vmem:[%s381 + $0x78] sm:$0xf]
      %v417 = vld [vmem:[%s381 + $0x7c] sm:$0xf]
      %vm418 = vcmask 44032
      %419 = vst.msk [vmem:[#allocation2] sm:$0xf] %vm418, 0
      %420 = vst.msk [vmem:[#allocation2 + $0x4] sm:$0xf] %vm418, 0
      %421 = vst.msk [vmem:[#allocation2 + $0x8] sm:$0xf] %vm418, 0
      %422 = vst.msk [vmem:[#allocation2 + $0xc] sm:$0xf] %vm418, 0
      %423 = vst.msk [vmem:[#allocation2 + $0x10] sm:$0xf] %vm418, 0
      %424 = vst.msk [vmem:[#allocation2 + $0x14] sm:$0xf] %vm418, 0
      %425 = vst.msk [vmem:[#allocation2 + $0x18] sm:$0xf] %vm418, 0
      %426 = vst.msk [vmem:[#allocation2 + $0x1c] sm:$0xf] %vm418, 0
      %427 = vst.msk [vmem:[#allocation2 + $0x20] sm:$0xf] %vm418, 0
      %428 = vst.msk [vmem:[#allocation2 + $0x24] sm:$0xf] %vm418, 0
      %429 = vst.msk [vmem:[#allocation2 + $0x28] sm:$0xf] %vm418, 0
      %430 = vst.msk [vmem:[#allocation2 + $0x2c] sm:$0xf] %vm418, 0
      %431 = vst.msk [vmem:[#allocation2 + $0x30] sm:$0xf] %vm418, 0
      %432 = vst.msk [vmem:[#allocation2 + $0x34] sm:$0xf] %vm418, 0
      %433 = vst.msk [vmem:[#allocation2 + $0x38] sm:$0xf] %vm418, 0
      %434 = vst.msk [vmem:[#allocation2 + $0x3c] sm:$0xf] %vm418, 0
      %435 = vst.msk [vmem:[#allocation2 + $0x40] sm:$0xf] %vm418, 0
      %436 = vst.msk [vmem:[#allocation2 + $0x44] sm:$0xf] %vm418, 0
      %437 = vst.msk [vmem:[#allocation2 + $0x48] sm:$0xf] %vm418, 0
      %438 = vst.msk [vmem:[#allocation2 + $0x4c] sm:$0xf] %vm418, 0
      %439 = vst.msk [vmem:[#allocation2 + $0x50] sm:$0xf] %vm418, 0
      %440 = vst.msk [vmem:[#allocation2 + $0x54] sm:$0xf] %vm418, 0
      %441 = vst.msk [vmem:[#allocation2 + $0x58] sm:$0xf] %vm418, 0
      %442 = vst.msk [vmem:[#allocation2 + $0x5c] sm:$0xf] %vm418, 0
      %443 = vst.msk [vmem:[#allocation2 + $0x60] sm:$0xf] %vm418, 0
      %444 = vst.msk [vmem:[#allocation2 + $0x64] sm:$0xf] %vm418, 0
      %445 = vst.msk [vmem:[#allocation2 + $0x68] sm:$0xf] %vm418, 0
      %446 = vst.msk [vmem:[#allocation2 + $0x6c] sm:$0xf] %vm418, 0
      %447 = vst.msk [vmem:[#allocation2 + $0x70] sm:$0xf] %vm418, 0
      %448 = vst.msk [vmem:[#allocation2 + $0x74] sm:$0xf] %vm418, 0
      %449 = vst.msk [vmem:[#allocation2 + $0x78] sm:$0xf] %vm418, 0
      %450 = vst.msk [vmem:[#allocation2 + $0x7c] sm:$0xf] %vm418, 0
      %451 = vst.msk [vmem:[#allocation2 + $0x80] sm:$0xf] %vm418, 0
      %452 = vst.msk [vmem:[#allocation2 + $0x84] sm:$0xf] %vm418, 0
      %453 = vst.msk [vmem:[#allocation2 + $0x88] sm:$0xf] %vm418, 0
      %454 = vst.msk [vmem:[#allocation2 + $0x8c] sm:$0xf] %vm418, 0
      %455 = vst.msk [vmem:[#allocation2 + $0x90] sm:$0xf] %vm418, 0
      %456 = vst.msk [vmem:[#allocation2 + $0x94] sm:$0xf] %vm418, 0
      %457 = vst.msk [vmem:[#allocation2 + $0x98] sm:$0xf] %vm418, 0
      %458 = vst.msk [vmem:[#allocation2 + $0x9c] sm:$0xf] %vm418, 0
      %459 = vst.msk [vmem:[#allocation2 + $0x10] sm:$0xf] %vm418, %v386
      %460 = vst.msk [vmem:[#allocation2 + $0x14] sm:$0xf] %vm418, %v387
      %461 = vst.msk [vmem:[#allocation2 + $0x18] sm:$0xf] %vm418, %v388
      %462 = vst.msk [vmem:[#allocation2 + $0x1c] sm:$0xf] %vm418, %v389
      %463 = vst.msk [vmem:[#allocation2 + $0x20] sm:$0xf] %vm418, %v390
      %464 = vst.msk [vmem:[#allocation2 + $0x24] sm:$0xf] %vm418, %v391
      %465 = vst.msk [vmem:[#allocation2 + $0x28] sm:$0xf] %vm418, %v392
      %466 = vst.msk [vmem:[#allocation2 + $0x2c] sm:$0xf] %vm418, %v393
      %467 = vst.msk [vmem:[#allocation2 + $0x30] sm:$0xf] %vm418, %v394
      %468 = vst.msk [vmem:[#allocation2 + $0x34] sm:$0xf] %vm418, %v395
      %469 = vst.msk [vmem:[#allocation2 + $0x38] sm:$0xf] %vm418, %v396
      %470 = vst.msk [vmem:[#allocation2 + $0x3c] sm:$0xf] %vm418, %v397
      %471 = vst.msk [vmem:[#allocation2 + $0x40] sm:$0xf] %vm418, %v398
      %472 = vst.msk [vmem:[#allocation2 + $0x44] sm:$0xf] %vm418, %v399
      %473 = vst.msk [vmem:[#allocation2 + $0x48] sm:$0xf] %vm418, %v400
      %474 = vst.msk [vmem:[#allocation2 + $0x4c] sm:$0xf] %vm418, %v401
      %475 = vst.msk [vmem:[#allocation2 + $0x50] sm:$0xf] %vm418, %v402
      %476 = vst.msk [vmem:[#allocation2 + $0x54] sm:$0xf] %vm418, %v403
      %477 = vst.msk [vmem:[#allocation2 + $0x58] sm:$0xf] %vm418, %v404
      %478 = vst.msk [vmem:[#allocation2 + $0x5c] sm:$0xf] %vm418, %v405
      %479 = vst.msk [vmem:[#allocation2 + $0x60] sm:$0xf] %vm418, %v406
      %480 = vst.msk [vmem:[#allocation2 + $0x64] sm:$0xf] %vm418, %v407
      %481 = vst.msk [vmem:[#allocation2 + $0x68] sm:$0xf] %vm418, %v408
      %482 = vst.msk [vmem:[#allocation2 + $0x6c] sm:$0xf] %vm418, %v409
      %483 = vst.msk [vmem:[#allocation2 + $0x70] sm:$0xf] %vm418, %v410
      %484 = vst.msk [vmem:[#allocation2 + $0x74] sm:$0xf] %vm418, %v411
      %485 = vst.msk [vmem:[#allocation2 + $0x78] sm:$0xf] %vm418, %v412
      %486 = vst.msk [vmem:[#allocation2 + $0x7c] sm:$0xf] %vm418, %v413
      %487 = vst.msk [vmem:[#allocation2 + $0x80] sm:$0xf] %vm418, %v414
      %488 = vst.msk [vmem:[#allocation2 + $0x84] sm:$0xf] %vm418, %v415
      %489 = vst.msk [vmem:[#allocation2 + $0x88] sm:$0xf] %vm418, %v416
      %490 = vst.msk [vmem:[#allocation2 + $0x8c] sm:$0xf] %vm418, %v417
      %v491 = vlaneseq
      %v492 = vshrl.u32 %v491, 7
      %v493 = vadd.s32 %v492, 8
      %v494 = vadd.s32 %v492, 16
      %v495 = vadd.s32 %v492, 24
      %v496 = vadd.s32 %v492, 32
      %v497 = vadd.s32 %v492, 40
      %v498 = vadd.s32 %v492, 48
      %v499 = vadd.s32 %v492, 56
      %v500 = vadd.s32 %v492, 64
      %v501 = vadd.s32 %v492, 72
      %v502 = vadd.s32 %v492, 80
      %v503 = vadd.s32 %v492, 88
      %v504 = vadd.s32 %v492, 96
      %v505 = vadd.s32 %v492, 104
      %v506 = vadd.s32 %v492, 112
      %v507 = vadd.s32 %v492, 120
      %v508 = vadd.s32 %v492, 128
      %v509 = vadd.s32 %v492, 136
      %v510 = vadd.s32 %v492, 144
      %v511 = vadd.s32 %v492, 152
      %v512 = vadd.s32 %v492, 160
      %v513 = vadd.s32 %v492, 168
      %v514 = vadd.s32 %v492, 176
      %v515 = vadd.s32 %v492, 184
      %v516 = vadd.s32 %v492, 192
      %v517 = vadd.s32 %v492, 200
      %v518 = vadd.s32 %v492, 208
      %v519 = vadd.s32 %v492, 216
      %v520 = vadd.s32 %v492, 224
      %v521 = vadd.s32 %v492, 232
      %v522 = vadd.s32 %v492, 240
      %v523 = vadd.s32 %v492, 248
      %vm524 = vcmp.lt.s32.totalorder %v492, 0
      %v525 = vsub.s32 0, %v492
      %v526 = vsel %vm524, %v525, %v492
      %v527 = vshrl.u32 %v526, 4
      %v528 = vand.u32 %v526, 15
      %v529 = vsub.s32 0, %v528
      %v530 = vsel %vm524, %v529, %v528
      %vm531 = vcmp.lt.s32.totalorder %v493, 0
      %v532 = vsub.s32 0, %v493
      %v533 = vsel %vm531, %v532, %v493
      %v534 = vshrl.u32 %v533, 4
      %v535 = vand.u32 %v533, 15
      %v536 = vsub.s32 0, %v535
      %v537 = vsel %vm531, %v536, %v535
      %vm538 = vcmp.lt.s32.totalorder %v494, 0
      %v539 = vsub.s32 0, %v494
      %v540 = vsel %vm538, %v539, %v494
      %v541 = vshrl.u32 %v540, 4
      %v542 = vand.u32 %v540, 15
      %v543 = vsub.s32 0, %v542
      %v544 = vsel %vm538, %v543, %v542
      %vm545 = vcmp.lt.s32.totalorder %v495, 0
      %v546 = vsub.s32 0, %v495
      %v547 = vsel %vm545, %v546, %v495
      %v548 = vshrl.u32 %v547, 4
      %v549 = vand.u32 %v547, 15
      %v550 = vsub.s32 0, %v549
      %v551 = vsel %vm545, %v550, %v549
      %vm552 = vcmp.lt.s32.totalorder %v496, 0
      %v553 = vsub.s32 0, %v496
      %v554 = vsel %vm552, %v553, %v496
      %v555 = vshrl.u32 %v554, 4
      %v556 = vand.u32 %v554, 15
      %v557 = vsub.s32 0, %v556
      %v558 = vsel %vm552, %v557, %v556
      %vm559 = vcmp.lt.s32.totalorder %v497, 0
      %v560 = vsub.s32 0, %v497
      %v561 = vsel %vm559, %v560, %v497
      %v562 = vshrl.u32 %v561, 4
      %v563 = vand.u32 %v561, 15
      %v564 = vsub.s32 0, %v563
      %v565 = vsel %vm559, %v564, %v563
      %vm566 = vcmp.lt.s32.totalorder %v498, 0
      %v567 = vsub.s32 0, %v498
      %v568 = vsel %vm566, %v567, %v498
      %v569 = vshrl.u32 %v568, 4
      %v570 = vand.u32 %v568, 15
      %v571 = vsub.s32 0, %v570
      %v572 = vsel %vm566, %v571, %v570
      %vm573 = vcmp.lt.s32.totalorder %v499, 0
      %v574 = vsub.s32 0, %v499
      %v575 = vsel %vm573, %v574, %v499
      %v576 = vshrl.u32 %v575, 4
      %v577 = vand.u32 %v575, 15
      %v578 = vsub.s32 0, %v577
      %v579 = vsel %vm573, %v578, %v577
      %vm580 = vcmp.lt.s32.totalorder %v500, 0
      %v581 = vsub.s32 0, %v500
      %v582 = vsel %vm580, %v581, %v500
      %v583 = vshrl.u32 %v582, 4
      %v584 = vand.u32 %v582, 15
      %v585 = vsub.s32 0, %v584
      %v586 = vsel %vm580, %v585, %v584
      %vm587 = vcmp.lt.s32.totalorder %v501, 0
      %v588 = vsub.s32 0, %v501
      %v589 = vsel %vm587, %v588, %v501
      %v590 = vshrl.u32 %v589, 4
      %v591 = vand.u32 %v589, 15
      %v592 = vsub.s32 0, %v591
      %v593 = vsel %vm587, %v592, %v591
      %vm594 = vcmp.lt.s32.totalorder %v502, 0
      %v595 = vsub.s32 0, %v502
      %v596 = vsel %vm594, %v595, %v502
      %v597 = vshrl.u32 %v596, 4
      %v598 = vand.u32 %v596, 15
      %v599 = vsub.s32 0, %v598
      %v600 = vsel %vm594, %v599, %v598
      %vm601 = vcmp.lt.s32.totalorder %v503, 0
      %v602 = vsub.s32 0, %v503
      %v603 = vsel %vm601, %v602, %v503
      %v604 = vshrl.u32 %v603, 4
      %v605 = vand.u32 %v603, 15
      %v606 = vsub.s32 0, %v605
      %v607 = vsel %vm601, %v606, %v605
      %vm608 = vcmp.lt.s32.totalorder %v504, 0
      %v609 = vsub.s32 0, %v504
      %v610 = vsel %vm608, %v609, %v504
      %v611 = vshrl.u32 %v610, 4
      %v612 = vand.u32 %v610, 15
      %v613 = vsub.s32 0, %v612
      %v614 = vsel %vm608, %v613, %v612
      %vm615 = vcmp.lt.s32.totalorder %v505, 0
      %v616 = vsub.s32 0, %v505
      %v617 = vsel %vm615, %v616, %v505
      %v618 = vshrl.u32 %v617, 4
      %v619 = vand.u32 %v617, 15
      %v620 = vsub.s32 0, %v619
      %v621 = vsel %vm615, %v620, %v619
      %vm622 = vcmp.lt.s32.totalorder %v506, 0
      %v623 = vsub.s32 0, %v506
      %v624 = vsel %vm622, %v623, %v506
      %v625 = vshrl.u32 %v624, 4
      %v626 = vand.u32 %v624, 15
      %v627 = vsub.s32 0, %v626
      %v628 = vsel %vm622, %v627, %v626
      %vm629 = vcmp.lt.s32.totalorder %v507, 0
      %v630 = vsub.s32 0, %v507
      %v631 = vsel %vm629, %v630, %v507
      %v632 = vshrl.u32 %v631, 4
      %v633 = vand.u32 %v631, 15
      %v634 = vsub.s32 0, %v633
      %v635 = vsel %vm629, %v634, %v633
      %vm636 = vcmp.lt.s32.totalorder %v508, 0
      %v637 = vsub.s32 0, %v508
      %v638 = vsel %vm636, %v637, %v508
      %v639 = vshrl.u32 %v638, 4
      %v640 = vand.u32 %v638, 15
      %v641 = vsub.s32 0, %v640
      %v642 = vsel %vm636, %v641, %v640
      %vm643 = vcmp.lt.s32.totalorder %v509, 0
      %v644 = vsub.s32 0, %v509
      %v645 = vsel %vm643, %v644, %v509
      %v646 = vshrl.u32 %v645, 4
      %v647 = vand.u32 %v645, 15
      %v648 = vsub.s32 0, %v647
      %v649 = vsel %vm643, %v648, %v647
      %vm650 = vcmp.lt.s32.totalorder %v510, 0
      %v651 = vsub.s32 0, %v510
      %v652 = vsel %vm650, %v651, %v510
      %v653 = vshrl.u32 %v652, 4
      %v654 = vand.u32 %v652, 15
      %v655 = vsub.s32 0, %v654
      %v656 = vsel %vm650, %v655, %v654
      %vm657 = vcmp.lt.s32.totalorder %v511, 0
      %v658 = vsub.s32 0, %v511
      %v659 = vsel %vm657, %v658, %v511
      %v660 = vshrl.u32 %v659, 4
      %v661 = vand.u32 %v659, 15
      %v662 = vsub.s32 0, %v661
      %v663 = vsel %vm657, %v662, %v661
      %vm664 = vcmp.lt.s32.totalorder %v512, 0
      %v665 = vsub.s32 0, %v512
      %v666 = vsel %vm664, %v665, %v512
      %v667 = vshrl.u32 %v666, 4
      %v668 = vand.u32 %v666, 15
      %v669 = vsub.s32 0, %v668
      %v670 = vsel %vm664, %v669, %v668
      %vm671 = vcmp.lt.s32.totalorder %v513, 0
      %v672 = vsub.s32 0, %v513
      %v673 = vsel %vm671, %v672, %v513
      %v674 = vshrl.u32 %v673, 4
      %v675 = vand.u32 %v673, 15
      %v676 = vsub.s32 0, %v675
      %v677 = vsel %vm671, %v676, %v675
      %vm678 = vcmp.lt.s32.totalorder %v514, 0
      %v679 = vsub.s32 0, %v514
      %v680 = vsel %vm678, %v679, %v514
      %v681 = vshrl.u32 %v680, 4
      %v682 = vand.u32 %v680, 15
      %v683 = vsub.s32 0, %v682
      %v684 = vsel %vm678, %v683, %v682
      %vm685 = vcmp.lt.s32.totalorder %v515, 0
      %v686 = vsub.s32 0, %v515
      %v687 = vsel %vm685, %v686, %v515
      %v688 = vshrl.u32 %v687, 4
      %v689 = vand.u32 %v687, 15
      %v690 = vsub.s32 0, %v689
      %v691 = vsel %vm685, %v690, %v689
      %vm692 = vcmp.lt.s32.totalorder %v516, 0
      %v693 = vsub.s32 0, %v516
      %v694 = vsel %vm692, %v693, %v516
      %v695 = vshrl.u32 %v694, 4
      %v696 = vand.u32 %v694, 15
      %v697 = vsub.s32 0, %v696
      %v698 = vsel %vm692, %v697, %v696
      %vm699 = vcmp.lt.s32.totalorder %v517, 0
      %v700 = vsub.s32 0, %v517
      %v701 = vsel %vm699, %v700, %v517
      %v702 = vshrl.u32 %v701, 4
      %v703 = vand.u32 %v701, 15
      %v704 = vsub.s32 0, %v703
      %v705 = vsel %vm699, %v704, %v703
      %vm706 = vcmp.lt.s32.totalorder %v518, 0
      %v707 = vsub.s32 0, %v518
      %v708 = vsel %vm706, %v707, %v518
      %v709 = vshrl.u32 %v708, 4
      %v710 = vand.u32 %v708, 15
      %v711 = vsub.s32 0, %v710
      %v712 = vsel %vm706, %v711, %v710
      %vm713 = vcmp.lt.s32.totalorder %v519, 0
      %v714 = vsub.s32 0, %v519
      %v715 = vsel %vm713, %v714, %v519
      %v716 = vshrl.u32 %v715, 4
      %v717 = vand.u32 %v715, 15
      %v718 = vsub.s32 0, %v717
      %v719 = vsel %vm713, %v718, %v717
      %vm720 = vcmp.lt.s32.totalorder %v520, 0
      %v721 = vsub.s32 0, %v520
      %v722 = vsel %vm720, %v721, %v520
      %v723 = vshrl.u32 %v722, 4
      %v724 = vand.u32 %v722, 15
      %v725 = vsub.s32 0, %v724
      %v726 = vsel %vm720, %v725, %v724
      %vm727 = vcmp.lt.s32.totalorder %v521, 0
      %v728 = vsub.s32 0, %v521
      %v729 = vsel %vm727, %v728, %v521
      %v730 = vshrl.u32 %v729, 4
      %v731 = vand.u32 %v729, 15
      %v732 = vsub.s32 0, %v731
      %v733 = vsel %vm727, %v732, %v731
      %vm734 = vcmp.lt.s32.totalorder %v522, 0
      %v735 = vsub.s32 0, %v522
      %v736 = vsel %vm734, %v735, %v522
      %v737 = vshrl.u32 %v736, 4
      %v738 = vand.u32 %v736, 15
      %v739 = vsub.s32 0, %v738
      %v740 = vsel %vm734, %v739, %v738
      %vm741 = vcmp.lt.s32.totalorder %v523, 0
      %v742 = vsub.s32 0, %v523
      %v743 = vsel %vm741, %v742, %v523
      %v744 = vshrl.u32 %v743, 4
      %v745 = vand.u32 %v743, 15
      %v746 = vsub.s32 0, %v745
      %v747 = vsel %vm741, %v746, %v745
      %vm748 = vcmp.ne.s32.totalorder %v530, 0
      %vm749 = vcmp.ne.s32.totalorder %v537, 0
      %vm750 = vcmp.ne.s32.totalorder %v544, 0
      %vm751 = vcmp.ne.s32.totalorder %v551, 0
      %vm752 = vcmp.ne.s32.totalorder %v558, 0
      %vm753 = vcmp.ne.s32.totalorder %v565, 0
      %vm754 = vcmp.ne.s32.totalorder %v572, 0
      %vm755 = vcmp.ne.s32.totalorder %v579, 0
      %vm756 = vcmp.ne.s32.totalorder %v586, 0
      %vm757 = vcmp.ne.s32.totalorder %v593, 0
      %vm758 = vcmp.ne.s32.totalorder %v600, 0
      %vm759 = vcmp.ne.s32.totalorder %v607, 0
      %vm760 = vcmp.ne.s32.totalorder %v614, 0
      %vm761 = vcmp.ne.s32.totalorder %v621, 0
      %vm762 = vcmp.ne.s32.totalorder %v628, 0
      %vm763 = vcmp.ne.s32.totalorder %v635, 0
      %vm764 = vcmp.ne.s32.totalorder %v642, 0
      %vm765 = vcmp.ne.s32.totalorder %v649, 0
      %vm766 = vcmp.ne.s32.totalorder %v656, 0
      %vm767 = vcmp.ne.s32.totalorder %v663, 0
      %vm768 = vcmp.ne.s32.totalorder %v670, 0
      %vm769 = vcmp.ne.s32.totalorder %v677, 0
      %vm770 = vcmp.ne.s32.totalorder %v684, 0
      %vm771 = vcmp.ne.s32.totalorder %v691, 0
      %vm772 = vcmp.ne.s32.totalorder %v698, 0
      %vm773 = vcmp.ne.s32.totalorder %v705, 0
      %vm774 = vcmp.ne.s32.totalorder %v712, 0
      %vm775 = vcmp.ne.s32.totalorder %v719, 0
      %vm776 = vcmp.ne.s32.totalorder %v726, 0
      %vm777 = vcmp.ne.s32.totalorder %v733, 0
      %vm778 = vcmp.ne.s32.totalorder %v740, 0
      %vm779 = vcmp.ne.s32.totalorder %v747, 0
      %vm780 = vcmp.lt.s32.totalorder %v530, 0
      %vm781 = vcmp.lt.s32.totalorder %v537, 0
      %vm782 = vcmp.lt.s32.totalorder %v544, 0
      %vm783 = vcmp.lt.s32.totalorder %v551, 0
      %vm784 = vcmp.lt.s32.totalorder %v558, 0
      %vm785 = vcmp.lt.s32.totalorder %v565, 0
      %vm786 = vcmp.lt.s32.totalorder %v572, 0
      %vm787 = vcmp.lt.s32.totalorder %v579, 0
      %vm788 = vcmp.lt.s32.totalorder %v586, 0
      %vm789 = vcmp.lt.s32.totalorder %v593, 0
      %vm790 = vcmp.lt.s32.totalorder %v600, 0
      %vm791 = vcmp.lt.s32.totalorder %v607, 0
      %vm792 = vcmp.lt.s32.totalorder %v614, 0
      %vm793 = vcmp.lt.s32.totalorder %v621, 0
      %vm794 = vcmp.lt.s32.totalorder %v628, 0
      %vm795 = vcmp.lt.s32.totalorder %v635, 0
      %vm796 = vcmp.lt.s32.totalorder %v642, 0
      %vm797 = vcmp.lt.s32.totalorder %v649, 0
      %vm798 = vcmp.lt.s32.totalorder %v656, 0
      %vm799 = vcmp.lt.s32.totalorder %v663, 0
      %vm800 = vcmp.lt.s32.totalorder %v670, 0
      %vm801 = vcmp.lt.s32.totalorder %v677, 0
      %vm802 = vcmp.lt.s32.totalorder %v684, 0
      %vm803 = vcmp.lt.s32.totalorder %v691, 0
      %vm804 = vcmp.lt.s32.totalorder %v698, 0
      %vm805 = vcmp.lt.s32.totalorder %v705, 0
      %vm806 = vcmp.lt.s32.totalorder %v712, 0
      %vm807 = vcmp.lt.s32.totalorder %v719, 0
      %vm808 = vcmp.lt.s32.totalorder %v726, 0
      %vm809 = vcmp.lt.s32.totalorder %v733, 0
      %vm810 = vcmp.lt.s32.totalorder %v740, 0
      %vm811 = vcmp.lt.s32.totalorder %v747, 0
      %vm812 = vmand %vm780, %vm748
      %vm813 = vmand %vm781, %vm749
      %vm814 = vmand %vm782, %vm750
      %vm815 = vmand %vm783, %vm751
      %vm816 = vmand %vm784, %vm752
      %vm817 = vmand %vm785, %vm753
      %vm818 = vmand %vm786, %vm754
      %vm819 = vmand %vm787, %vm755
      %vm820 = vmand %vm788, %vm756
      %vm821 = vmand %vm789, %vm757
      %vm822 = vmand %vm790, %vm758
      %vm823 = vmand %vm791, %vm759
      %vm824 = vmand %vm792, %vm760
      %vm825 = vmand %vm793, %vm761
      %vm826 = vmand %vm794, %vm762
      %vm827 = vmand %vm795, %vm763
      %vm828 = vmand %vm796, %vm764
      %vm829 = vmand %vm797, %vm765
      %vm830 = vmand %vm798, %vm766
      %vm831 = vmand %vm799, %vm767
      %vm832 = vmand %vm800, %vm768
      %vm833 = vmand %vm801, %vm769
      %vm834 = vmand %vm802, %vm770
      %vm835 = vmand %vm803, %vm771
      %vm836 = vmand %vm804, %vm772
      %vm837 = vmand %vm805, %vm773
      %vm838 = vmand %vm806, %vm774
      %vm839 = vmand %vm807, %vm775
      %vm840 = vmand %vm808, %vm776
      %vm841 = vmand %vm809, %vm777
      %vm842 = vmand %vm810, %vm778
      %vm843 = vmand %vm811, %vm779
      %v844 = vadd.s32 %v530, 16
      %v845 = vadd.s32 %v537, 16
      %v846 = vadd.s32 %v544, 16
      %v847 = vadd.s32 %v551, 16
      %v848 = vadd.s32 %v558, 16
      %v849 = vadd.s32 %v565, 16
      %v850 = vadd.s32 %v572, 16
      %v851 = vadd.s32 %v579, 16
      %v852 = vadd.s32 %v586, 16
      %v853 = vadd.s32 %v593, 16
      %v854 = vadd.s32 %v600, 16
      %v855 = vadd.s32 %v607, 16
      %v856 = vadd.s32 %v614, 16
      %v857 = vadd.s32 %v621, 16
      %v858 = vadd.s32 %v628, 16
      %v859 = vadd.s32 %v635, 16
      %v860 = vadd.s32 %v642, 16
      %v861 = vadd.s32 %v649, 16
      %v862 = vadd.s32 %v656, 16
      %v863 = vadd.s32 %v663, 16
      %v864 = vadd.s32 %v670, 16
      %v865 = vadd.s32 %v677, 16
      %v866 = vadd.s32 %v684, 16
      %v867 = vadd.s32 %v691, 16
      %v868 = vadd.s32 %v698, 16
      %v869 = vadd.s32 %v705, 16
      %v870 = vadd.s32 %v712, 16
      %v871 = vadd.s32 %v719, 16
      %v872 = vadd.s32 %v726, 16
      %v873 = vadd.s32 %v733, 16
      %v874 = vadd.s32 %v740, 16
      %v875 = vadd.s32 %v747, 16
      %v876 = vsel %vm812, %v844, %v530
      %v877 = vsel %vm813, %v845, %v537
      %v878 = vsel %vm814, %v846, %v544
      %v879 = vsel %vm815, %v847, %v551
      %v880 = vsel %vm816, %v848, %v558
      %v881 = vsel %vm817, %v849, %v565
      %v882 = vsel %vm818, %v850, %v572
      %v883 = vsel %vm819, %v851, %v579
      %v884 = vsel %vm820, %v852, %v586
      %v885 = vsel %vm821, %v853, %v593
      %v886 = vsel %vm822, %v854, %v600
      %v887 = vsel %vm823, %v855, %v607
      %v888 = vsel %vm824, %v856, %v614
      %v889 = vsel %vm825, %v857, %v621
      %v890 = vsel %vm826, %v858, %v628
      %v891 = vsel %vm827, %v859, %v635
      %v892 = vsel %vm828, %v860, %v642
      %v893 = vsel %vm829, %v861, %v649
      %v894 = vsel %vm830, %v862, %v656
      %v895 = vsel %vm831, %v863, %v663
      %v896 = vsel %vm832, %v864, %v670
      %v897 = vsel %vm833, %v865, %v677
      %v898 = vsel %vm834, %v866, %v684
      %v899 = vsel %vm835, %v867, %v691
      %v900 = vsel %vm836, %v868, %v698
      %v901 = vsel %vm837, %v869, %v705
      %v902 = vsel %vm838, %v870, %v712
      %v903 = vsel %vm839, %v871, %v719
      %v904 = vsel %vm840, %v872, %v726
      %v905 = vsel %vm841, %v873, %v733
      %v906 = vsel %vm842, %v874, %v740
      %v907 = vsel %vm843, %v875, %v747
      %vm908 = vcmp.ne.s32.totalorder %v876, 0
      %vm909 = vcmp.ne.s32.totalorder %v877, 0
      %vm910 = vcmp.ne.s32.totalorder %v878, 0
      %vm911 = vcmp.ne.s32.totalorder %v879, 0
      %vm912 = vcmp.ne.s32.totalorder %v880, 0
      %vm913 = vcmp.ne.s32.totalorder %v881, 0
      %vm914 = vcmp.ne.s32.totalorder %v882, 0
      %vm915 = vcmp.ne.s32.totalorder %v883, 0
      %vm916 = vcmp.ne.s32.totalorder %v884, 0
      %vm917 = vcmp.ne.s32.totalorder %v885, 0
      %vm918 = vcmp.ne.s32.totalorder %v886, 0
      %vm919 = vcmp.ne.s32.totalorder %v887, 0
      %vm920 = vcmp.ne.s32.totalorder %v888, 0
      %vm921 = vcmp.ne.s32.totalorder %v889, 0
      %vm922 = vcmp.ne.s32.totalorder %v890, 0
      %vm923 = vcmp.ne.s32.totalorder %v891, 0
      %vm924 = vcmp.ne.s32.totalorder %v892, 0
      %vm925 = vcmp.ne.s32.totalorder %v893, 0
      %vm926 = vcmp.ne.s32.totalorder %v894, 0
      %vm927 = vcmp.ne.s32.totalorder %v895, 0
      %vm928 = vcmp.ne.s32.totalorder %v896, 0
      %vm929 = vcmp.ne.s32.totalorder %v897, 0
      %vm930 = vcmp.ne.s32.totalorder %v898, 0
      %vm931 = vcmp.ne.s32.totalorder %v899, 0
      %vm932 = vcmp.ne.s32.totalorder %v900, 0
      %vm933 = vcmp.ne.s32.totalorder %v901, 0
      %vm934 = vcmp.ne.s32.totalorder %v902, 0
      %vm935 = vcmp.ne.s32.totalorder %v903, 0
      %vm936 = vcmp.ne.s32.totalorder %v904, 0
      %vm937 = vcmp.ne.s32.totalorder %v905, 0
      %vm938 = vcmp.ne.s32.totalorder %v906, 0
      %vm939 = vcmp.ne.s32.totalorder %v907, 0
      %v940 = vsel %vm908, 1, 0
      %v941 = vsel %vm909, 1, 0
      %v942 = vsel %vm910, 1, 0
      %v943 = vsel %vm911, 1, 0
      %v944 = vsel %vm912, 1, 0
      %v945 = vsel %vm913, 1, 0
      %v946 = vsel %vm914, 1, 0
      %v947 = vsel %vm915, 1, 0
      %v948 = vsel %vm916, 1, 0
      %v949 = vsel %vm917, 1, 0
      %v950 = vsel %vm918, 1, 0
      %v951 = vsel %vm919, 1, 0
      %v952 = vsel %vm920, 1, 0
      %v953 = vsel %vm921, 1, 0
      %v954 = vsel %vm922, 1, 0
      %v955 = vsel %vm923, 1, 0
      %v956 = vsel %vm924, 1, 0
      %v957 = vsel %vm925, 1, 0
      %v958 = vsel %vm926, 1, 0
      %v959 = vsel %vm927, 1, 0
      %v960 = vsel %vm928, 1, 0
      %v961 = vsel %vm929, 1, 0
      %v962 = vsel %vm930, 1, 0
      %v963 = vsel %vm931, 1, 0
      %v964 = vsel %vm932, 1, 0
      %v965 = vsel %vm933, 1, 0
      %v966 = vsel %vm934, 1, 0
      %v967 = vsel %vm935, 1, 0
      %v968 = vsel %vm936, 1, 0
      %v969 = vsel %vm937, 1, 0
      %v970 = vsel %vm938, 1, 0
      %v971 = vsel %vm939, 1, 0
      %v972 = vcvt.s32.f32 %v940
      %v973 = vcvt.s32.f32 %v941
      %v974 = vcvt.s32.f32 %v942
      %v975 = vcvt.s32.f32 %v943
      %v976 = vcvt.s32.f32 %v944
      %v977 = vcvt.s32.f32 %v945
      %v978 = vcvt.s32.f32 %v946
      %v979 = vcvt.s32.f32 %v947
      %v980 = vcvt.s32.f32 %v948
      %v981 = vcvt.s32.f32 %v949
      %v982 = vcvt.s32.f32 %v950
      %v983 = vcvt.s32.f32 %v951
      %v984 = vcvt.s32.f32 %v952
      %v985 = vcvt.s32.f32 %v953
      %v986 = vcvt.s32.f32 %v954
      %v987 = vcvt.s32.f32 %v955
      %v988 = vcvt.s32.f32 %v956
      %v989 = vcvt.s32.f32 %v957
      %v990 = vcvt.s32.f32 %v958
      %v991 = vcvt.s32.f32 %v959
      %v992 = vcvt.s32.f32 %v960
      %v993 = vcvt.s32.f32 %v961
      %v994 = vcvt.s32.f32 %v962
      %v995 = vcvt.s32.f32 %v963
      %v996 = vcvt.s32.f32 %v964
      %v997 = vcvt.s32.f32 %v965
      %v998 = vcvt.s32.f32 %v966
      %v999 = vcvt.s32.f32 %v967
      %v1000 = vcvt.s32.f32 %v968
      %v1001 = vcvt.s32.f32 %v969
      %v1002 = vcvt.s32.f32 %v970
      %v1003 = vcvt.s32.f32 %v971
      %v1004 = vpack.c.bf16 %v972, %v972
      %v1005 = vpack.c.bf16 %v973, %v973
      %v1006 = vpack.c.bf16 %v974, %v974
      %v1007 = vpack.c.bf16 %v975, %v975
      %v1008 = vpack.c.bf16 %v976, %v976
      %v1009 = vpack.c.bf16 %v977, %v977
      %v1010 = vpack.c.bf16 %v978, %v978
      %v1011 = vpack.c.bf16 %v979, %v979
      %v1012 = vpack.c.bf16 %v980, %v980
      %v1013 = vpack.c.bf16 %v981, %v981
      %v1014 = vpack.c.bf16 %v982, %v982
      %v1015 = vpack.c.bf16 %v983, %v983
      %v1016 = vpack.c.bf16 %v984, %v984
      %v1017 = vpack.c.bf16 %v985, %v985
      %v1018 = vpack.c.bf16 %v986, %v986
      %v1019 = vpack.c.bf16 %v987, %v987
      %v1020 = vpack.c.bf16 %v988, %v988
      %v1021 = vpack.c.bf16 %v989, %v989
      %v1022 = vpack.c.bf16 %v990, %v990
      %v1023 = vpack.c.bf16 %v991, %v991
      %v1024 = vpack.c.bf16 %v992, %v992
      %v1025 = vpack.c.bf16 %v993, %v993
      %v1026 = vpack.c.bf16 %v994, %v994
      %v1027 = vpack.c.bf16 %v995, %v995
      %v1028 = vpack.c.bf16 %v996, %v996
      %v1029 = vpack.c.bf16 %v997, %v997
      %v1030 = vpack.c.bf16 %v998, %v998
      %v1031 = vpack.c.bf16 %v999, %v999
      %v1032 = vpack.c.bf16 %v1000, %v1000
      %v1033 = vpack.c.bf16 %v1001, %v1001
      %v1034 = vpack.c.bf16 %v1002, %v1002
      %v1035 = vpack.c.bf16 %v1003, %v1003
      %vm1036 = vcmp.ne.s32.totalorder %v876, 15
      %vm1037 = vcmp.ne.s32.totalorder %v877, 15
      %vm1038 = vcmp.ne.s32.totalorder %v878, 15
      %vm1039 = vcmp.ne.s32.totalorder %v879, 15
      %vm1040 = vcmp.ne.s32.totalorder %v880, 15
      %vm1041 = vcmp.ne.s32.totalorder %v881, 15
      %vm1042 = vcmp.ne.s32.totalorder %v882, 15
      %vm1043 = vcmp.ne.s32.totalorder %v883, 15
      %vm1044 = vcmp.ne.s32.totalorder %v884, 15
      %vm1045 = vcmp.ne.s32.totalorder %v885, 15
      %vm1046 = vcmp.ne.s32.totalorder %v886, 15
      %vm1047 = vcmp.ne.s32.totalorder %v887, 15
      %vm1048 = vcmp.ne.s32.totalorder %v888, 15
      %vm1049 = vcmp.ne.s32.totalorder %v889, 15
      %vm1050 = vcmp.ne.s32.totalorder %v890, 15
      %vm1051 = vcmp.ne.s32.totalorder %v891, 15
      %vm1052 = vcmp.ne.s32.totalorder %v892, 15
      %vm1053 = vcmp.ne.s32.totalorder %v893, 15
      %vm1054 = vcmp.ne.s32.totalorder %v894, 15
      %vm1055 = vcmp.ne.s32.totalorder %v895, 15
      %vm1056 = vcmp.ne.s32.totalorder %v896, 15
      %vm1057 = vcmp.ne.s32.totalorder %v897, 15
      %vm1058 = vcmp.ne.s32.totalorder %v898, 15
      %vm1059 = vcmp.ne.s32.totalorder %v899, 15
      %vm1060 = vcmp.ne.s32.totalorder %v900, 15
      %vm1061 = vcmp.ne.s32.totalorder %v901, 15
      %vm1062 = vcmp.ne.s32.totalorder %v902, 15
      %vm1063 = vcmp.ne.s32.totalorder %v903, 15
      %vm1064 = vcmp.ne.s32.totalorder %v904, 15
      %vm1065 = vcmp.ne.s32.totalorder %v905, 15
      %vm1066 = vcmp.ne.s32.totalorder %v906, 15
      %vm1067 = vcmp.ne.s32.totalorder %v907, 15
      %v1068 = vsel %vm1036, 1, 0
      %v1069 = vsel %vm1037, 1, 0
      %v1070 = vsel %vm1038, 1, 0
      %v1071 = vsel %vm1039, 1, 0
      %v1072 = vsel %vm1040, 1, 0
      %v1073 = vsel %vm1041, 1, 0
      %v1074 = vsel %vm1042, 1, 0
      %v1075 = vsel %vm1043, 1, 0
      %v1076 = vsel %vm1044, 1, 0
      %v1077 = vsel %vm1045, 1, 0
      %v1078 = vsel %vm1046, 1, 0
      %v1079 = vsel %vm1047, 1, 0
      %v1080 = vsel %vm1048, 1, 0
      %v1081 = vsel %vm1049, 1, 0
      %v1082 = vsel %vm1050, 1, 0
      %v1083 = vsel %vm1051, 1, 0
      %v1084 = vsel %vm1052, 1, 0
      %v1085 = vsel %vm1053, 1, 0
      %v1086 = vsel %vm1054, 1, 0
      %v1087 = vsel %vm1055, 1, 0
      %v1088 = vsel %vm1056, 1, 0
      %v1089 = vsel %vm1057, 1, 0
      %v1090 = vsel %vm1058, 1, 0
      %v1091 = vsel %vm1059, 1, 0
      %v1092 = vsel %vm1060, 1, 0
      %v1093 = vsel %vm1061, 1, 0
      %v1094 = vsel %vm1062, 1, 0
      %v1095 = vsel %vm1063, 1, 0
      %v1096 = vsel %vm1064, 1, 0
      %v1097 = vsel %vm1065, 1, 0
      %v1098 = vsel %vm1066, 1, 0
      %v1099 = vsel %vm1067, 1, 0
      %v1100 = vcvt.s32.f32 %v1068
      %v1101 = vcvt.s32.f32 %v1069
      %v1102 = vcvt.s32.f32 %v1070
      %v1103 = vcvt.s32.f32 %v1071
      %v1104 = vcvt.s32.f32 %v1072
      %v1105 = vcvt.s32.f32 %v1073
      %v1106 = vcvt.s32.f32 %v1074
      %v1107 = vcvt.s32.f32 %v1075
      %v1108 = vcvt.s32.f32 %v1076
      %v1109 = vcvt.s32.f32 %v1077
      %v1110 = vcvt.s32.f32 %v1078
      %v1111 = vcvt.s32.f32 %v1079
      %v1112 = vcvt.s32.f32 %v1080
      %v1113 = vcvt.s32.f32 %v1081
      %v1114 = vcvt.s32.f32 %v1082
      %v1115 = vcvt.s32.f32 %v1083
      %v1116 = vcvt.s32.f32 %v1084
      %v1117 = vcvt.s32.f32 %v1085
      %v1118 = vcvt.s32.f32 %v1086
      %v1119 = vcvt.s32.f32 %v1087
      %v1120 = vcvt.s32.f32 %v1088
      %v1121 = vcvt.s32.f32 %v1089
      %v1122 = vcvt.s32.f32 %v1090
      %v1123 = vcvt.s32.f32 %v1091
      %v1124 = vcvt.s32.f32 %v1092
      %v1125 = vcvt.s32.f32 %v1093
      %v1126 = vcvt.s32.f32 %v1094
      %v1127 = vcvt.s32.f32 %v1095
      %v1128 = vcvt.s32.f32 %v1096
      %v1129 = vcvt.s32.f32 %v1097
      %v1130 = vcvt.s32.f32 %v1098
      %v1131 = vcvt.s32.f32 %v1099
      %v1132 = vpack.c.bf16 %v1100, %v1100
      %v1133 = vpack.c.bf16 %v1101, %v1101
      %v1134 = vpack.c.bf16 %v1102, %v1102
      %v1135 = vpack.c.bf16 %v1103, %v1103
      %v1136 = vpack.c.bf16 %v1104, %v1104
      %v1137 = vpack.c.bf16 %v1105, %v1105
      %v1138 = vpack.c.bf16 %v1106, %v1106
      %v1139 = vpack.c.bf16 %v1107, %v1107
      %v1140 = vpack.c.bf16 %v1108, %v1108
      %v1141 = vpack.c.bf16 %v1109, %v1109
      %v1142 = vpack.c.bf16 %v1110, %v1110
      %v1143 = vpack.c.bf16 %v1111, %v1111
      %v1144 = vpack.c.bf16 %v1112, %v1112
      %v1145 = vpack.c.bf16 %v1113, %v1113
      %v1146 = vpack.c.bf16 %v1114, %v1114
      %v1147 = vpack.c.bf16 %v1115, %v1115
      %v1148 = vpack.c.bf16 %v1116, %v1116
      %v1149 = vpack.c.bf16 %v1117, %v1117
      %v1150 = vpack.c.bf16 %v1118, %v1118
      %v1151 = vpack.c.bf16 %v1119, %v1119
      %v1152 = vpack.c.bf16 %v1120, %v1120
      %v1153 = vpack.c.bf16 %v1121, %v1121
      %v1154 = vpack.c.bf16 %v1122, %v1122
      %v1155 = vpack.c.bf16 %v1123, %v1123
      %v1156 = vpack.c.bf16 %v1124, %v1124
      %v1157 = vpack.c.bf16 %v1125, %v1125
      %v1158 = vpack.c.bf16 %v1126, %v1126
      %v1159 = vpack.c.bf16 %v1127, %v1127
      %v1160 = vpack.c.bf16 %v1128, %v1128
      %v1161 = vpack.c.bf16 %v1129, %v1129
      %v1162 = vpack.c.bf16 %v1130, %v1130
      %v1163 = vpack.c.bf16 %v1131, %v1131
      %v1164 = vld [vmem:[#allocation2 + $0x4] sm:$0x8]
      %v1165 = vld [vmem:[#allocation2 + $0x8] sm:$0xf]
      %v1166 = vld [vmem:[#allocation2 + $0xc] sm:$0xf]
      %v1167 = vld [vmem:[#allocation2 + $0x10] sm:$0xf]
      %v1168 = vld [vmem:[#allocation2 + $0x14] sm:$0xf]
      %v1169 = vld [vmem:[#allocation2 + $0x18] sm:$0xf]
      %v1170 = vld [vmem:[#allocation2 + $0x1c] sm:$0xf]
      %v1171 = vld [vmem:[#allocation2 + $0x20] sm:$0xf]
      %v1172 = vld [vmem:[#allocation2 + $0x24] sm:$0xf]
      %v1173 = vld [vmem:[#allocation2 + $0x28] sm:$0xf]
      %v1174 = vld [vmem:[#allocation2 + $0x2c] sm:$0xf]
      %v1175 = vld [vmem:[#allocation2 + $0x30] sm:$0xf]
      %v1176 = vld [vmem:[#allocation2 + $0x34] sm:$0xf]
      %v1177 = vld [vmem:[#allocation2 + $0x38] sm:$0xf]
      %v1178 = vld [vmem:[#allocation2 + $0x3c] sm:$0xf]
      %v1179 = vld [vmem:[#allocation2 + $0x40] sm:$0xf]
      %v1180 = vld [vmem:[#allocation2 + $0x44] sm:$0xf]
      %v1181 = vld [vmem:[#allocation2 + $0x48] sm:$0xf]
      %v1182 = vld [vmem:[#allocation2 + $0x4c] sm:$0xf]
      %v1183 = vld [vmem:[#allocation2 + $0x50] sm:$0xf]
      %v1184 = vld [vmem:[#allocation2 + $0x54] sm:$0xf]
      %v1185 = vld [vmem:[#allocation2 + $0x58] sm:$0xf]
      %v1186 = vld [vmem:[#allocation2 + $0x5c] sm:$0xf]
      %v1187 = vld [vmem:[#allocation2 + $0x60] sm:$0xf]
      %v1188 = vld [vmem:[#allocation2 + $0x64] sm:$0xf]
      %v1189 = vld [vmem:[#allocation2 + $0x68] sm:$0xf]
      %v1190 = vld [vmem:[#allocation2 + $0x6c] sm:$0xf]
      %v1191 = vld [vmem:[#allocation2 + $0x70] sm:$0xf]
      %v1192 = vld [vmem:[#allocation2 + $0x74] sm:$0xf]
      %v1193 = vld [vmem:[#allocation2 + $0x78] sm:$0xf]
      %v1194 = vld [vmem:[#allocation2 + $0x7c] sm:$0xf]
      %v1195 = vld [vmem:[#allocation2 + $0x80] sm:$0xf]
      %v1196 = vld [vmem:[#allocation2 + $0x84] sm:$0xf]
      %v1197 = vunpack.c.l.bf16 %v1164
      %v1198 = vunpack.c.l.bf16 %v1165
      %v1199 = vunpack.c.l.bf16 %v1166
      %v1200 = vunpack.c.l.bf16 %v1167
      %v1201 = vunpack.c.l.bf16 %v1168
      %v1202 = vunpack.c.l.bf16 %v1169
      %v1203 = vunpack.c.l.bf16 %v1170
      %v1204 = vunpack.c.l.bf16 %v1171
      %v1205 = vunpack.c.l.bf16 %v1172
      %v1206 = vunpack.c.l.bf16 %v1173
      %v1207 = vunpack.c.l.bf16 %v1174
      %v1208 = vunpack.c.l.bf16 %v1175
      %v1209 = vunpack.c.l.bf16 %v1176
      %v1210 = vunpack.c.l.bf16 %v1177
      %v1211 = vunpack.c.l.bf16 %v1178
      %v1212 = vunpack.c.l.bf16 %v1179
      %v1213 = vunpack.c.l.bf16 %v1180
      %v1214 = vunpack.c.l.bf16 %v1181
      %v1215 = vunpack.c.l.bf16 %v1182
      %v1216 = vunpack.c.l.bf16 %v1183
      %v1217 = vunpack.c.l.bf16 %v1184
      %v1218 = vunpack.c.l.bf16 %v1185
      %v1219 = vunpack.c.l.bf16 %v1186
      %v1220 = vunpack.c.l.bf16 %v1187
      %v1221 = vunpack.c.l.bf16 %v1188
      %v1222 = vunpack.c.l.bf16 %v1189
      %v1223 = vunpack.c.l.bf16 %v1190
      %v1224 = vunpack.c.l.bf16 %v1191
      %v1225 = vunpack.c.l.bf16 %v1192
      %v1226 = vunpack.c.l.bf16 %v1193
      %v1227 = vunpack.c.l.bf16 %v1194
      %v1228 = vunpack.c.l.bf16 %v1195
      %v1229 = vunpack.c.l.bf16 %v1196
      %v1230 = vunpack.c.l.bf16 %v1004
      %v1231 = vunpack.c.l.bf16 %v1005
      %v1232 = vunpack.c.l.bf16 %v1006
      %v1233 = vunpack.c.l.bf16 %v1007
      %v1234 = vunpack.c.l.bf16 %v1008
      %v1235 = vunpack.c.l.bf16 %v1009
      %v1236 = vunpack.c.l.bf16 %v1010
      %v1237 = vunpack.c.l.bf16 %v1011
      %v1238 = vunpack.c.l.bf16 %v1012
      %v1239 = vunpack.c.l.bf16 %v1013
      %v1240 = vunpack.c.l.bf16 %v1014
      %v1241 = vunpack.c.l.bf16 %v1015
      %v1242 = vunpack.c.l.bf16 %v1016
      %v1243 = vunpack.c.l.bf16 %v1017
      %v1244 = vunpack.c.l.bf16 %v1018
      %v1245 = vunpack.c.l.bf16 %v1019
      %v1246 = vunpack.c.l.bf16 %v1020
      %v1247 = vunpack.c.l.bf16 %v1021
      %v1248 = vunpack.c.l.bf16 %v1022
      %v1249 = vunpack.c.l.bf16 %v1023
      %v1250 = vunpack.c.l.bf16 %v1024
      %v1251 = vunpack.c.l.bf16 %v1025
      %v1252 = vunpack.c.l.bf16 %v1026
      %v1253 = vunpack.c.l.bf16 %v1027
      %v1254 = vunpack.c.l.bf16 %v1028
      %v1255 = vunpack.c.l.bf16 %v1029
      %v1256 = vunpack.c.l.bf16 %v1030
      %v1257 = vunpack.c.l.bf16 %v1031
      %v1258 = vunpack.c.l.bf16 %v1032
      %v1259 = vunpack.c.l.bf16 %v1033
      %v1260 = vunpack.c.l.bf16 %v1034
      %v1261 = vunpack.c.l.bf16 %v1035
      %vm1294 = vcmask 1046528
      %v1295 = vrot.slane %v1230, 1
      %v1296 = vrot.slane %v1231, 1
      %v1297 = vsel %vm1294, %v1295, %v1296
      %v1298 = vrot.slane %v1232, 1
      %v1299 = vsel %vm1294, %v1296, %v1298
      %v1300 = vrot.slane %v1233, 1
      %v1301 = vsel %vm1294, %v1298, %v1300
      %v1302 = vrot.slane %v1234, 1
      %v1303 = vsel %vm1294, %v1300, %v1302
      %v1304 = vrot.slane %v1235, 1
      %v1305 = vsel %vm1294, %v1302, %v1304
      %v1306 = vrot.slane %v1236, 1
      %v1307 = vsel %vm1294, %v1304, %v1306
      %v1308 = vrot.slane %v1237, 1
      %v1309 = vsel %vm1294, %v1306, %v1308
      %v1310 = vrot.slane %v1238, 1
      %v1311 = vsel %vm1294, %v1308, %v1310
      %v1312 = vrot.slane %v1239, 1
      %v1313 = vsel %vm1294, %v1310, %v1312
      %v1314 = vrot.slane %v1240, 1
      %v1315 = vsel %vm1294, %v1312, %v1314
      %v1316 = vrot.slane %v1241, 1
      %v1317 = vsel %vm1294, %v1314, %v1316
      %v1318 = vrot.slane %v1242, 1
      %v1319 = vsel %vm1294, %v1316, %v1318
      %v1320 = vrot.slane %v1243, 1
      %v1321 = vsel %vm1294, %v1318, %v1320
      %v1322 = vrot.slane %v1244, 1
      %v1323 = vsel %vm1294, %v1320, %v1322
      %v1324 = vrot.slane %v1245, 1
      %v1325 = vsel %vm1294, %v1322, %v1324
      %v1326 = vrot.slane %v1246, 1
      %v1327 = vsel %vm1294, %v1324, %v1326
      %v1328 = vrot.slane %v1247, 1
      %v1329 = vsel %vm1294, %v1326, %v1328
      %v1330 = vrot.slane %v1248, 1
      %v1331 = vsel %vm1294, %v1328, %v1330
      %v1332 = vrot.slane %v1249, 1
      %v1333 = vsel %vm1294, %v1330, %v1332
      %v1334 = vrot.slane %v1250, 1
      %v1335 = vsel %vm1294, %v1332, %v1334
      %v1336 = vrot.slane %v1251, 1
      %v1337 = vsel %vm1294, %v1334, %v1336
      %v1338 = vrot.slane %v1252, 1
      %v1339 = vsel %vm1294, %v1336, %v1338
      %v1340 = vrot.slane %v1253, 1
      %v1341 = vsel %vm1294, %v1338, %v1340
      %v1342 = vrot.slane %v1254, 1
      %v1343 = vsel %vm1294, %v1340, %v1342
      %v1344 = vrot.slane %v1255, 1
      %v1345 = vsel %vm1294, %v1342, %v1344
      %v1346 = vrot.slane %v1256, 1
      %v1347 = vsel %vm1294, %v1344, %v1346
      %v1348 = vrot.slane %v1257, 1
      %v1349 = vsel %vm1294, %v1346, %v1348
      %v1350 = vrot.slane %v1258, 1
      %v1351 = vsel %vm1294, %v1348, %v1350
      %v1352 = vrot.slane %v1259, 1
      %v1353 = vsel %vm1294, %v1350, %v1352
      %v1354 = vrot.slane %v1260, 1
      %v1355 = vsel %vm1294, %v1352, %v1354
      %v1356 = vrot.slane %v1261, 1
      %v1357 = vsel %vm1294, %v1354, %v1356
      %v1391 = vmul.f32 %v1197, %v1295
      %v1392 = vmul.f32 %v1198, %v1297
      %v1393 = vmul.f32 %v1199, %v1299
      %v1394 = vmul.f32 %v1200, %v1301
      %v1395 = vmul.f32 %v1201, %v1303
      %v1396 = vmul.f32 %v1202, %v1305
      %v1397 = vmul.f32 %v1203, %v1307
      %v1398 = vmul.f32 %v1204, %v1309
      %v1399 = vmul.f32 %v1205, %v1311
      %v1400 = vmul.f32 %v1206, %v1313
      %v1401 = vmul.f32 %v1207, %v1315
      %v1402 = vmul.f32 %v1208, %v1317
      %v1403 = vmul.f32 %v1209, %v1319
      %v1404 = vmul.f32 %v1210, %v1321
      %v1405 = vmul.f32 %v1211, %v1323
      %v1406 = vmul.f32 %v1212, %v1325
      %v1407 = vmul.f32 %v1213, %v1327
      %v1408 = vmul.f32 %v1214, %v1329
      %v1409 = vmul.f32 %v1215, %v1331
      %v1410 = vmul.f32 %v1216, %v1333
      %v1411 = vmul.f32 %v1217, %v1335
      %v1412 = vmul.f32 %v1218, %v1337
      %v1413 = vmul.f32 %v1219, %v1339
      %v1414 = vmul.f32 %v1220, %v1341
      %v1415 = vmul.f32 %v1221, %v1343
      %v1416 = vmul.f32 %v1222, %v1345
      %v1417 = vmul.f32 %v1223, %v1347
      %v1418 = vmul.f32 %v1224, %v1349
      %v1419 = vmul.f32 %v1225, %v1351
      %v1420 = vmul.f32 %v1226, %v1353
      %v1421 = vmul.f32 %v1227, %v1355
      %v1422 = vmul.f32 %v1228, %v1357
      %v1423 = vmul.f32 %v1229, %v1356
      %v1424 = vpack.c.bf16 %v1392, %v1391
      %v1425 = vpack.c.bf16 %v1394, %v1393
      %v1426 = vpack.c.bf16 %v1396, %v1395
      %v1427 = vpack.c.bf16 %v1398, %v1397
      %v1428 = vpack.c.bf16 %v1400, %v1399
      %v1429 = vpack.c.bf16 %v1402, %v1401
      %v1430 = vpack.c.bf16 %v1404, %v1403
      %v1431 = vpack.c.bf16 %v1406, %v1405
      %v1432 = vpack.c.bf16 %v1408, %v1407
      %v1433 = vpack.c.bf16 %v1410, %v1409
      %v1434 = vpack.c.bf16 %v1412, %v1411
      %v1435 = vpack.c.bf16 %v1414, %v1413
      %v1436 = vpack.c.bf16 %v1416, %v1415
      %v1437 = vpack.c.bf16 %v1418, %v1417
      %v1438 = vpack.c.bf16 %v1420, %v1419
      %v1439 = vpack.c.bf16 %v1422, %v1421
      %v1440 = vpack.c.bf16 %v1423, %v1423
      %v1441 = vld [vmem:[%s1] sm:$0x7]
      %s1442 = scalar_lea.vmem %s1, 4
      %v1443 = vld [vmem:[%s1442] sm:$0x7]
      %v1476 = vunpack.c.l.b16 %v1165
      %v1477 = vunpack.c.l.b16 %v1166
      %v1478 = vunpack.c.l.b16 %v1167
      %v1479 = vunpack.c.l.b16 %v1168
      %v1480 = vunpack.c.l.b16 %v1169
      %v1481 = vunpack.c.l.b16 %v1170
      %v1482 = vunpack.c.l.b16 %v1171
      %v1483 = vunpack.c.l.b16 %v1172
      %v1484 = vunpack.c.l.b16 %v1173
      %v1485 = vunpack.c.l.b16 %v1174
      %v1486 = vunpack.c.l.b16 %v1175
      %v1487 = vunpack.c.l.b16 %v1176
      %v1488 = vunpack.c.l.b16 %v1177
      %v1489 = vunpack.c.l.b16 %v1178
      %v1490 = vunpack.c.l.b16 %v1179
      %v1491 = vunpack.c.l.b16 %v1180
      %v1492 = vunpack.c.l.b16 %v1181
      %v1493 = vunpack.c.l.b16 %v1182
      %v1494 = vunpack.c.l.b16 %v1183
      %v1495 = vunpack.c.l.b16 %v1184
      %v1496 = vunpack.c.l.b16 %v1185
      %v1497 = vunpack.c.l.b16 %v1186
      %v1498 = vunpack.c.l.b16 %v1187
      %v1499 = vunpack.c.l.b16 %v1188
      %v1500 = vunpack.c.l.b16 %v1189
      %v1501 = vunpack.c.l.b16 %v1190
      %v1502 = vunpack.c.l.b16 %v1191
      %v1503 = vunpack.c.l.b16 %v1192
      %v1504 = vunpack.c.l.b16 %v1193
      %v1505 = vunpack.c.l.b16 %v1194
      %v1506 = vunpack.c.l.b16 %v1195
      %v1507 = vunpack.c.l.b16 %v1196
      %v1508 = vpack.c.b16 %v1477, %v1476
      %v1509 = vpack.c.b16 %v1479, %v1478
      %v1510 = vpack.c.b16 %v1481, %v1480
      %v1511 = vpack.c.b16 %v1483, %v1482
      %v1512 = vpack.c.b16 %v1485, %v1484
      %v1513 = vpack.c.b16 %v1487, %v1486
      %v1514 = vpack.c.b16 %v1489, %v1488
      %v1515 = vpack.c.b16 %v1491, %v1490
      %v1516 = vpack.c.b16 %v1493, %v1492
      %v1517 = vpack.c.b16 %v1495, %v1494
      %v1518 = vpack.c.b16 %v1497, %v1496
      %v1519 = vpack.c.b16 %v1499, %v1498
      %v1520 = vpack.c.b16 %v1501, %v1500
      %v1521 = vpack.c.b16 %v1503, %v1502
      %v1522 = vpack.c.b16 %v1505, %v1504
      %v1523 = vpack.c.b16 %v1507, %v1506
      %vm1524 = vcmask 48128
      %v1526 = vsel %vm1524, %v1508, 0
      %v1529 = vsel %vm1524, %v1509, 0
      %v1532 = vsel %vm1524, %v1510, 0
      %v1535 = vsel %vm1524, %v1511, 0
      %v1538 = vsel %vm1524, %v1512, 0
      %v1541 = vsel %vm1524, %v1513, 0
      %v1544 = vsel %vm1524, %v1514, 0
      %v1547 = vsel %vm1524, %v1515, 0
      %v1550 = vsel %vm1524, %v1516, 0
      %v1553 = vsel %vm1524, %v1517, 0
      %v1556 = vsel %vm1524, %v1518, 0
      %v1559 = vsel %vm1524, %v1519, 0
      %v1562 = vsel %vm1524, %v1520, 0
      %v1565 = vsel %vm1524, %v1521, 0
      %v1568 = vsel %vm1524, %v1522, 0
      %v1571 = vsel %vm1524, %v1523, 0
      %vm1573 = vcmask 1042432
      %v1575 = vsel %vm1573, %v1443, 0
      %1577 = vmatpush.bf16.msra.mxu0 0
      %1578 = vmatpush.bf16.msra.mxu0 0
      %1579 = vmatpush.bf16.msra.mxu0 0
      %1580 = vmatpush.bf16.msra.mxu0 0
      %1581 = vmatpush.bf16.msra.mxu0 0
      %1582 = vmatpush.bf16.msra.mxu0 0
      %1583 = vmatpush.bf16.msra.mxu0 0
      %1584 = vmatpush.bf16.msra.mxu0 %v1575
      %1585 = vmatmul.bf16.gmra.mxu0 %v1526
      %v1586 = vpop.f32.mrf.mxu0
      %v1587 = vadd.f32 0.0, %v1586
      %v1588 = vpop.f32.mrf.mxu0
      %v1589 = vadd.f32 0.0, %v1588
      %1590 = vmatmul.bf16.gmra.mxu0 %v1529
      %v1591 = vpop.f32.mrf.mxu0
      %v1592 = vadd.f32 0.0, %v1591
      %v1593 = vpop.f32.mrf.mxu0
      %v1594 = vadd.f32 0.0, %v1593
      %1595 = vmatmul.bf16.gmra.mxu0 %v1532
      %v1596 = vpop.f32.mrf.mxu0
      %v1597 = vadd.f32 0.0, %v1596
      %v1598 = vpop.f32.mrf.mxu0
      %v1599 = vadd.f32 0.0, %v1598
      %1600 = vmatmul.bf16.gmra.mxu0 %v1535
      %v1601 = vpop.f32.mrf.mxu0
      %v1602 = vadd.f32 0.0, %v1601
      %v1603 = vpop.f32.mrf.mxu0
      %v1604 = vadd.f32 0.0, %v1603
      %1605 = vmatmul.bf16.gmra.mxu0 %v1538
      %v1606 = vpop.f32.mrf.mxu0
      %v1607 = vadd.f32 0.0, %v1606
      %v1608 = vpop.f32.mrf.mxu0
      %v1609 = vadd.f32 0.0, %v1608
      %1610 = vmatmul.bf16.gmra.mxu0 %v1541
      %v1611 = vpop.f32.mrf.mxu0
      %v1612 = vadd.f32 0.0, %v1611
      %v1613 = vpop.f32.mrf.mxu0
      %v1614 = vadd.f32 0.0, %v1613
      %1615 = vmatmul.bf16.gmra.mxu0 %v1544
      %v1616 = vpop.f32.mrf.mxu0
      %v1617 = vadd.f32 0.0, %v1616
      %v1618 = vpop.f32.mrf.mxu0
      %v1619 = vadd.f32 0.0, %v1618
      %1620 = vmatmul.bf16.gmra.mxu0 %v1547
      %v1621 = vpop.f32.mrf.mxu0
      %v1622 = vadd.f32 0.0, %v1621
      %v1623 = vpop.f32.mrf.mxu0
      %v1624 = vadd.f32 0.0, %v1623
      %1625 = vmatmul.bf16.gmra.mxu0 %v1550
      %v1626 = vpop.f32.mrf.mxu0
      %v1627 = vadd.f32 0.0, %v1626
      %v1628 = vpop.f32.mrf.mxu0
      %v1629 = vadd.f32 0.0, %v1628
      %1630 = vmatmul.bf16.gmra.mxu0 %v1553
      %v1631 = vpop.f32.mrf.mxu0
      %v1632 = vadd.f32 0.0, %v1631
      %v1633 = vpop.f32.mrf.mxu0
      %v1634 = vadd.f32 0.0, %v1633
      %1635 = vmatmul.bf16.gmra.mxu0 %v1556
      %v1636 = vpop.f32.mrf.mxu0
      %v1637 = vadd.f32 0.0, %v1636
      %v1638 = vpop.f32.mrf.mxu0
      %v1639 = vadd.f32 0.0, %v1638
      %1640 = vmatmul.bf16.gmra.mxu0 %v1559
      %v1641 = vpop.f32.mrf.mxu0
      %v1642 = vadd.f32 0.0, %v1641
      %v1643 = vpop.f32.mrf.mxu0
      %v1644 = vadd.f32 0.0, %v1643
      %1645 = vmatmul.bf16.gmra.mxu0 %v1562
      %v1646 = vpop.f32.mrf.mxu0
      %v1647 = vadd.f32 0.0, %v1646
      %v1648 = vpop.f32.mrf.mxu0
      %v1649 = vadd.f32 0.0, %v1648
      %1650 = vmatmul.bf16.gmra.mxu0 %v1565
      %v1651 = vpop.f32.mrf.mxu0
      %v1652 = vadd.f32 0.0, %v1651
      %v1653 = vpop.f32.mrf.mxu0
      %v1654 = vadd.f32 0.0, %v1653
      %1655 = vmatmul.bf16.gmra.mxu0 %v1568
      %v1656 = vpop.f32.mrf.mxu0
      %v1657 = vadd.f32 0.0, %v1656
      %v1658 = vpop.f32.mrf.mxu0
      %v1659 = vadd.f32 0.0, %v1658
      %1660 = vmatmul.bf16.gmra.mxu0 %v1571
      %v1661 = vpop.f32.mrf.mxu0
      %v1662 = vadd.f32 0.0, %v1661
      %v1663 = vpop.f32.mrf.mxu0
      %v1664 = vadd.f32 0.0, %v1663
      %1665 = vdwg.mxu0
      %vm1666 = vsmask.f32 4352
      %v1668 = vshrl.u32 %v1424, 16
      %v1670 = vrot.slane %v1668, 3
      %v1671 = vshll.u32 %v1424, 16
      %v1673 = vrot.slane %v1671, 4
      %v1674 = vor.u32 %v1670, %v1673
      %v1676 = vshrl.u32 %v1425, 16
      %v1678 = vrot.slane %v1676, 3
      %v1679 = vshll.u32 %v1425, 16
      %v1681 = vrot.slane %v1679, 4
      %v1682 = vor.u32 %v1678, %v1681
      %v1683 = vsel %vm1666, %v1674, %v1682
      %v1685 = vshrl.u32 %v1426, 16
      %v1687 = vrot.slane %v1685, 3
      %v1688 = vshll.u32 %v1426, 16
      %v1690 = vrot.slane %v1688, 4
      %v1691 = vor.u32 %v1687, %v1690
      %v1692 = vsel %vm1666, %v1682, %v1691
      %v1694 = vshrl.u32 %v1427, 16
      %v1696 = vrot.slane %v1694, 3
      %v1697 = vshll.u32 %v1427, 16
      %v1699 = vrot.slane %v1697, 4
      %v1700 = vor.u32 %v1696, %v1699
      %v1701 = vsel %vm1666, %v1691, %v1700
      %v1703 = vshrl.u32 %v1428, 16
      %v1705 = vrot.slane %v1703, 3
      %v1706 = vshll.u32 %v1428, 16
      %v1708 = vrot.slane %v1706, 4
      %v1709 = vor.u32 %v1705, %v1708
      %v1710 = vsel %vm1666, %v1700, %v1709
      %v1712 = vshrl.u32 %v1429, 16
      %v1714 = vrot.slane %v1712, 3
      %v1715 = vshll.u32 %v1429, 16
      %v1717 = vrot.slane %v1715, 4
      %v1718 = vor.u32 %v1714, %v1717
      %v1719 = vsel %vm1666, %v1709, %v1718
      %v1721 = vshrl.u32 %v1430, 16
      %v1723 = vrot.slane %v1721, 3
      %v1724 = vshll.u32 %v1430, 16
      %v1726 = vrot.slane %v1724, 4
      %v1727 = vor.u32 %v1723, %v1726
      %v1728 = vsel %vm1666, %v1718, %v1727
      %v1730 = vshrl.u32 %v1431, 16
      %v1732 = vrot.slane %v1730, 3
      %v1733 = vshll.u32 %v1431, 16
      %v1735 = vrot.slane %v1733, 4
      %v1736 = vor.u32 %v1732, %v1735
      %v1737 = vsel %vm1666, %v1727, %v1736
      %v1739 = vshrl.u32 %v1432, 16
      %v1741 = vrot.slane %v1739, 3
      %v1742 = vshll.u32 %v1432, 16
      %v1744 = vrot.slane %v1742, 4
      %v1745 = vor.u32 %v1741, %v1744
      %v1746 = vsel %vm1666, %v1736, %v1745
      %v1748 = vshrl.u32 %v1433, 16
      %v1750 = vrot.slane %v1748, 3
      %v1751 = vshll.u32 %v1433, 16
      %v1753 = vrot.slane %v1751, 4
      %v1754 = vor.u32 %v1750, %v1753
      %v1755 = vsel %vm1666, %v1745, %v1754
      %v1757 = vshrl.u32 %v1434, 16
      %v1759 = vrot.slane %v1757, 3
      %v1760 = vshll.u32 %v1434, 16
      %v1762 = vrot.slane %v1760, 4
      %v1763 = vor.u32 %v1759, %v1762
      %v1764 = vsel %vm1666, %v1754, %v1763
      %v1766 = vshrl.u32 %v1435, 16
      %v1768 = vrot.slane %v1766, 3
      %v1769 = vshll.u32 %v1435, 16
      %v1771 = vrot.slane %v1769, 4
      %v1772 = vor.u32 %v1768, %v1771
      %v1773 = vsel %vm1666, %v1763, %v1772
      %v1775 = vshrl.u32 %v1436, 16
      %v1777 = vrot.slane %v1775, 3
      %v1778 = vshll.u32 %v1436, 16
      %v1780 = vrot.slane %v1778, 4
      %v1781 = vor.u32 %v1777, %v1780
      %v1782 = vsel %vm1666, %v1772, %v1781
      %v1784 = vshrl.u32 %v1437, 16
      %v1786 = vrot.slane %v1784, 3
      %v1787 = vshll.u32 %v1437, 16
      %v1789 = vrot.slane %v1787, 4
      %v1790 = vor.u32 %v1786, %v1789
      %v1791 = vsel %vm1666, %v1781, %v1790
      %v1793 = vshrl.u32 %v1438, 16
      %v1795 = vrot.slane %v1793, 3
      %v1796 = vshll.u32 %v1438, 16
      %v1798 = vrot.slane %v1796, 4
      %v1799 = vor.u32 %v1795, %v1798
      %v1800 = vsel %vm1666, %v1790, %v1799
      %v1802 = vshrl.u32 %v1439, 16
      %v1804 = vrot.slane %v1802, 3
      %v1805 = vshll.u32 %v1439, 16
      %v1807 = vrot.slane %v1805, 4
      %v1808 = vor.u32 %v1804, %v1807
      %v1809 = vsel %vm1666, %v1799, %v1808
      %v1811 = vshrl.u32 %v1440, 16
      %v1813 = vrot.slane %v1811, 3
      %v1814 = vshll.u32 %v1440, 16
      %v1816 = vrot.slane %v1814, 4
      %v1817 = vor.u32 %v1813, %v1816
      %v1818 = vsel %vm1666, %v1808, %v1817
      %v1820 = vsel %vm1524, %v1683, 0
      %v1823 = vsel %vm1524, %v1692, 0
      %v1826 = vsel %vm1524, %v1701, 0
      %v1829 = vsel %vm1524, %v1710, 0
      %v1832 = vsel %vm1524, %v1719, 0
      %v1835 = vsel %vm1524, %v1728, 0
      %v1838 = vsel %vm1524, %v1737, 0
      %v1841 = vsel %vm1524, %v1746, 0
      %v1844 = vsel %vm1524, %v1755, 0
      %v1847 = vsel %vm1524, %v1764, 0
      %v1850 = vsel %vm1524, %v1773, 0
      %v1853 = vsel %vm1524, %v1782, 0
      %v1856 = vsel %vm1524, %v1791, 0
      %v1859 = vsel %vm1524, %v1800, 0
      %v1862 = vsel %vm1524, %v1809, 0
      %v1865 = vsel %vm1524, %v1818, 0
      %v1868 = vsel %vm1573, %v1441, 0
      %1870 = vmatpush.bf16.msra.mxu0 0
      %1871 = vmatpush.bf16.msra.mxu0 0
      %1872 = vmatpush.bf16.msra.mxu0 0
      %1873 = vmatpush.bf16.msra.mxu0 0
      %1874 = vmatpush.bf16.msra.mxu0 0
      %1875 = vmatpush.bf16.msra.mxu0 0
      %1876 = vmatpush.bf16.msra.mxu0 0
      %1877 = vmatpush.bf16.msra.mxu0 %v1868
      %1878 = vmatmul.bf16.gmra.mxu0 %v1820
      %v1879 = vpop.f32.mrf.mxu0
      %v1880 = vadd.f32 %v1587, %v1879
      %v1881 = vpop.f32.mrf.mxu0
      %v1882 = vadd.f32 %v1589, %v1881
      %1883 = vmatmul.bf16.gmra.mxu0 %v1823
      %v1884 = vpop.f32.mrf.mxu0
      %v1885 = vadd.f32 %v1592, %v1884
      %v1886 = vpop.f32.mrf.mxu0
      %v1887 = vadd.f32 %v1594, %v1886
      %1888 = vmatmul.bf16.gmra.mxu0 %v1826
      %v1889 = vpop.f32.mrf.mxu0
      %v1890 = vadd.f32 %v1597, %v1889
      %v1891 = vpop.f32.mrf.mxu0
      %v1892 = vadd.f32 %v1599, %v1891
      %1893 = vmatmul.bf16.gmra.mxu0 %v1829
      %v1894 = vpop.f32.mrf.mxu0
      %v1895 = vadd.f32 %v1602, %v1894
      %v1896 = vpop.f32.mrf.mxu0
      %v1897 = vadd.f32 %v1604, %v1896
      %1898 = vmatmul.bf16.gmra.mxu0 %v1832
      %v1899 = vpop.f32.mrf.mxu0
      %v1900 = vadd.f32 %v1607, %v1899
      %v1901 = vpop.f32.mrf.mxu0
      %v1902 = vadd.f32 %v1609, %v1901
      %1903 = vmatmul.bf16.gmra.mxu0 %v1835
      %v1904 = vpop.f32.mrf.mxu0
      %v1905 = vadd.f32 %v1612, %v1904
      %v1906 = vpop.f32.mrf.mxu0
      %v1907 = vadd.f32 %v1614, %v1906
      %1908 = vmatmul.bf16.gmra.mxu0 %v1838
      %v1909 = vpop.f32.mrf.mxu0
      %v1910 = vadd.f32 %v1617, %v1909
      %v1911 = vpop.f32.mrf.mxu0
      %v1912 = vadd.f32 %v1619, %v1911
      %1913 = vmatmul.bf16.gmra.mxu0 %v1841
      %v1914 = vpop.f32.mrf.mxu0
      %v1915 = vadd.f32 %v1622, %v1914
      %v1916 = vpop.f32.mrf.mxu0
      %v1917 = vadd.f32 %v1624, %v1916
      %1918 = vmatmul.bf16.gmra.mxu0 %v1844
      %v1919 = vpop.f32.mrf.mxu0
      %v1920 = vadd.f32 %v1627, %v1919
      %v1921 = vpop.f32.mrf.mxu0
      %v1922 = vadd.f32 %v1629, %v1921
      %1923 = vmatmul.bf16.gmra.mxu0 %v1847
      %v1924 = vpop.f32.mrf.mxu0
      %v1925 = vadd.f32 %v1632, %v1924
      %v1926 = vpop.f32.mrf.mxu0
      %v1927 = vadd.f32 %v1634, %v1926
      %1928 = vmatmul.bf16.gmra.mxu0 %v1850
      %v1929 = vpop.f32.mrf.mxu0
      %v1930 = vadd.f32 %v1637, %v1929
      %v1931 = vpop.f32.mrf.mxu0
      %v1932 = vadd.f32 %v1639, %v1931
      %1933 = vmatmul.bf16.gmra.mxu0 %v1853
      %v1934 = vpop.f32.mrf.mxu0
      %v1935 = vadd.f32 %v1642, %v1934
      %v1936 = vpop.f32.mrf.mxu0
      %v1937 = vadd.f32 %v1644, %v1936
      %1938 = vmatmul.bf16.gmra.mxu0 %v1856
      %v1939 = vpop.f32.mrf.mxu0
      %v1940 = vadd.f32 %v1647, %v1939
      %v1941 = vpop.f32.mrf.mxu0
      %v1942 = vadd.f32 %v1649, %v1941
      %1943 = vmatmul.bf16.gmra.mxu0 %v1859
      %v1944 = vpop.f32.mrf.mxu0
      %v1945 = vadd.f32 %v1652, %v1944
      %v1946 = vpop.f32.mrf.mxu0
      %v1947 = vadd.f32 %v1654, %v1946
      %1948 = vmatmul.bf16.gmra.mxu0 %v1862
      %v1949 = vpop.f32.mrf.mxu0
      %v1950 = vadd.f32 %v1657, %v1949
      %v1951 = vpop.f32.mrf.mxu0
      %v1952 = vadd.f32 %v1659, %v1951
      %1953 = vmatmul.bf16.gmra.mxu0 %v1865
      %v1954 = vpop.f32.mrf.mxu0
      %v1955 = vadd.f32 %v1662, %v1954
      %v1956 = vpop.f32.mrf.mxu0
      %v1957 = vadd.f32 %v1664, %v1956
      %1958 = vdwg.mxu0
      %v1959 = vld [vmem:[#allocation2 + $0x8] sm:$0xf]
      %v1960 = vld [vmem:[#allocation2 + $0xc] sm:$0xf]
      %v1961 = vld [vmem:[#allocation2 + $0x10] sm:$0xf]
      %v1962 = vld [vmem:[#allocation2 + $0x14] sm:$0xf]
      %v1963 = vld [vmem:[#allocation2 + $0x18] sm:$0xf]
      %v1964 = vld [vmem:[#allocation2 + $0x1c] sm:$0xf]
      %v1965 = vld [vmem:[#allocation2 + $0x20] sm:$0xf]
      %v1966 = vld [vmem:[#allocation2 + $0x24] sm:$0xf]
      %v1967 = vld [vmem:[#allocation2 + $0x28] sm:$0xf]
      %v1968 = vld [vmem:[#allocation2 + $0x2c] sm:$0xf]
      %v1969 = vld [vmem:[#allocation2 + $0x30] sm:$0xf]
      %v1970 = vld [vmem:[#allocation2 + $0x34] sm:$0xf]
      %v1971 = vld [vmem:[#allocation2 + $0x38] sm:$0xf]
      %v1972 = vld [vmem:[#allocation2 + $0x3c] sm:$0xf]
      %v1973 = vld [vmem:[#allocation2 + $0x40] sm:$0xf]
      %v1974 = vld [vmem:[#allocation2 + $0x44] sm:$0xf]
      %v1975 = vld [vmem:[#allocation2 + $0x48] sm:$0xf]
      %v1976 = vld [vmem:[#allocation2 + $0x4c] sm:$0xf]
      %v1977 = vld [vmem:[#allocation2 + $0x50] sm:$0xf]
      %v1978 = vld [vmem:[#allocation2 + $0x54] sm:$0xf]
      %v1979 = vld [vmem:[#allocation2 + $0x58] sm:$0xf]
      %v1980 = vld [vmem:[#allocation2 + $0x5c] sm:$0xf]
      %v1981 = vld [vmem:[#allocation2 + $0x60] sm:$0xf]
      %v1982 = vld [vmem:[#allocation2 + $0x64] sm:$0xf]
      %v1983 = vld [vmem:[#allocation2 + $0x68] sm:$0xf]
      %v1984 = vld [vmem:[#allocation2 + $0x6c] sm:$0xf]
      %v1985 = vld [vmem:[#allocation2 + $0x70] sm:$0xf]
      %v1986 = vld [vmem:[#allocation2 + $0x74] sm:$0xf]
      %v1987 = vld [vmem:[#allocation2 + $0x78] sm:$0xf]
      %v1988 = vld [vmem:[#allocation2 + $0x7c] sm:$0xf]
      %v1989 = vld [vmem:[#allocation2 + $0x80] sm:$0xf]
      %v1990 = vld [vmem:[#allocation2 + $0x84] sm:$0xf]
      %v1991 = vld [vmem:[#allocation2 + $0x88] sm:$0x1]
      %v1992 = vunpack.c.l.bf16 %v1959
      %v1993 = vunpack.c.l.bf16 %v1960
      %v1994 = vunpack.c.l.bf16 %v1961
      %v1995 = vunpack.c.l.bf16 %v1962
      %v1996 = vunpack.c.l.bf16 %v1963
      %v1997 = vunpack.c.l.bf16 %v1964
      %v1998 = vunpack.c.l.bf16 %v1965
      %v1999 = vunpack.c.l.bf16 %v1966
      %v2000 = vunpack.c.l.bf16 %v1967
      %v2001 = vunpack.c.l.bf16 %v1968
      %v2002 = vunpack.c.l.bf16 %v1969
      %v2003 = vunpack.c.l.bf16 %v1970
      %v2004 = vunpack.c.l.bf16 %v1971
      %v2005 = vunpack.c.l.bf16 %v1972
      %v2006 = vunpack.c.l.bf16 %v1973
      %v2007 = vunpack.c.l.bf16 %v1974
      %v2008 = vunpack.c.l.bf16 %v1975
      %v2009 = vunpack.c.l.bf16 %v1976
      %v2010 = vunpack.c.l.bf16 %v1977
      %v2011 = vunpack.c.l.bf16 %v1978
      %v2012 = vunpack.c.l.bf16 %v1979
      %v2013 = vunpack.c.l.bf16 %v1980
      %v2014 = vunpack.c.l.bf16 %v1981
      %v2015 = vunpack.c.l.bf16 %v1982
      %v2016 = vunpack.c.l.bf16 %v1983
      %v2017 = vunpack.c.l.bf16 %v1984
      %v2018 = vunpack.c.l.bf16 %v1985
      %v2019 = vunpack.c.l.bf16 %v1986
      %v2020 = vunpack.c.l.bf16 %v1987
      %v2021 = vunpack.c.l.bf16 %v1988
      %v2022 = vunpack.c.l.bf16 %v1989
      %v2023 = vunpack.c.l.bf16 %v1990
      %v2024 = vunpack.c.l.bf16 %v1991
      %v2025 = vunpack.c.l.bf16 %v1132
      %v2026 = vunpack.c.l.bf16 %v1133
      %v2027 = vunpack.c.l.bf16 %v1134
      %v2028 = vunpack.c.l.bf16 %v1135
      %v2029 = vunpack.c.l.bf16 %v1136
      %v2030 = vunpack.c.l.bf16 %v1137
      %v2031 = vunpack.c.l.bf16 %v1138
      %v2032 = vunpack.c.l.bf16 %v1139
      %v2033 = vunpack.c.l.bf16 %v1140
      %v2034 = vunpack.c.l.bf16 %v1141
      %v2035 = vunpack.c.l.bf16 %v1142
      %v2036 = vunpack.c.l.bf16 %v1143
      %v2037 = vunpack.c.l.bf16 %v1144
      %v2038 = vunpack.c.l.bf16 %v1145
      %v2039 = vunpack.c.l.bf16 %v1146
      %v2040 = vunpack.c.l.bf16 %v1147
      %v2041 = vunpack.c.l.bf16 %v1148
      %v2042 = vunpack.c.l.bf16 %v1149
      %v2043 = vunpack.c.l.bf16 %v1150
      %v2044 = vunpack.c.l.bf16 %v1151
      %v2045 = vunpack.c.l.bf16 %v1152
      %v2046 = vunpack.c.l.bf16 %v1153
      %v2047 = vunpack.c.l.bf16 %v1154
      %v2048 = vunpack.c.l.bf16 %v1155
      %v2049 = vunpack.c.l.bf16 %v1156
      %v2050 = vunpack.c.l.bf16 %v1157
      %v2051 = vunpack.c.l.bf16 %v1158
      %v2052 = vunpack.c.l.bf16 %v1159
      %v2053 = vunpack.c.l.bf16 %v1160
      %v2054 = vunpack.c.l.bf16 %v1161
      %v2055 = vunpack.c.l.bf16 %v1162
      %v2056 = vunpack.c.l.bf16 %v1163
      %vm2089 = vcmask 1040384
      %v2090 = vrot.slane %v2025, 7
      %v2091 = vrot.slane %v2026, 7
      %v2092 = vsel %vm2089, %v2090, %v2091
      %v2093 = vrot.slane %v2027, 7
      %v2094 = vsel %vm2089, %v2091, %v2093
      %v2095 = vrot.slane %v2028, 7
      %v2096 = vsel %vm2089, %v2093, %v2095
      %v2097 = vrot.slane %v2029, 7
      %v2098 = vsel %vm2089, %v2095, %v2097
      %v2099 = vrot.slane %v2030, 7
      %v2100 = vsel %vm2089, %v2097, %v2099
      %v2101 = vrot.slane %v2031, 7
      %v2102 = vsel %vm2089, %v2099, %v2101
      %v2103 = vrot.slane %v2032, 7
      %v2104 = vsel %vm2089, %v2101, %v2103
      %v2105 = vrot.slane %v2033, 7
      %v2106 = vsel %vm2089, %v2103, %v2105
      %v2107 = vrot.slane %v2034, 7
      %v2108 = vsel %vm2089, %v2105, %v2107
      %v2109 = vrot.slane %v2035, 7
      %v2110 = vsel %vm2089, %v2107, %v2109
      %v2111 = vrot.slane %v2036, 7
      %v2112 = vsel %vm2089, %v2109, %v2111
      %v2113 = vrot.slane %v2037, 7
      %v2114 = vsel %vm2089, %v2111, %v2113
      %v2115 = vrot.slane %v2038, 7
      %v2116 = vsel %vm2089, %v2113, %v2115
      %v2117 = vrot.slane %v2039, 7
      %v2118 = vsel %vm2089, %v2115, %v2117
      %v2119 = vrot.slane %v2040, 7
      %v2120 = vsel %vm2089, %v2117, %v2119
      %v2121 = vrot.slane %v2041, 7
      %v2122 = vsel %vm2089, %v2119, %v2121
      %v2123 = vrot.slane %v2042, 7
      %v2124 = vsel %vm2089, %v2121, %v2123
      %v2125 = vrot.slane %v2043, 7
      %v2126 = vsel %vm2089, %v2123, %v2125
      %v2127 = vrot.slane %v2044, 7
      %v2128 = vsel %vm2089, %v2125, %v2127
      %v2129 = vrot.slane %v2045, 7
      %v2130 = vsel %vm2089, %v2127, %v2129
      %v2131 = vrot.slane %v2046, 7
      %v2132 = vsel %vm2089, %v2129, %v2131
      %v2133 = vrot.slane %v2047, 7
      %v2134 = vsel %vm2089, %v2131, %v2133
      %v2135 = vrot.slane %v2048, 7
      %v2136 = vsel %vm2089, %v2133, %v2135
      %v2137 = vrot.slane %v2049, 7
      %v2138 = vsel %vm2089, %v2135, %v2137
      %v2139 = vrot.slane %v2050, 7
      %v2140 = vsel %vm2089, %v2137, %v2139
      %v2141 = vrot.slane %v2051, 7
      %v2142 = vsel %vm2089, %v2139, %v2141
      %v2143 = vrot.slane %v2052, 7
      %v2144 = vsel %vm2089, %v2141, %v2143
      %v2145 = vrot.slane %v2053, 7
      %v2146 = vsel %vm2089, %v2143, %v2145
      %v2147 = vrot.slane %v2054, 7
      %v2148 = vsel %vm2089, %v2145, %v2147
      %v2149 = vrot.slane %v2055, 7
      %v2150 = vsel %vm2089, %v2147, %v2149
      %v2151 = vrot.slane %v2056, 7
      %v2152 = vsel %vm2089, %v2149, %v2151
      %v2186 = vmul.f32 %v1992, %v2090
      %v2187 = vmul.f32 %v1993, %v2092
      %v2188 = vmul.f32 %v1994, %v2094
      %v2189 = vmul.f32 %v1995, %v2096
      %v2190 = vmul.f32 %v1996, %v2098
      %v2191 = vmul.f32 %v1997, %v2100
      %v2192 = vmul.f32 %v1998, %v2102
      %v2193 = vmul.f32 %v1999, %v2104
      %v2194 = vmul.f32 %v2000, %v2106
      %v2195 = vmul.f32 %v2001, %v2108
      %v2196 = vmul.f32 %v2002, %v2110
      %v2197 = vmul.f32 %v2003, %v2112
      %v2198 = vmul.f32 %v2004, %v2114
      %v2199 = vmul.f32 %v2005, %v2116
      %v2200 = vmul.f32 %v2006, %v2118
      %v2201 = vmul.f32 %v2007, %v2120
      %v2202 = vmul.f32 %v2008, %v2122
      %v2203 = vmul.f32 %v2009, %v2124
      %v2204 = vmul.f32 %v2010, %v2126
      %v2205 = vmul.f32 %v2011, %v2128
      %v2206 = vmul.f32 %v2012, %v2130
      %v2207 = vmul.f32 %v2013, %v2132
      %v2208 = vmul.f32 %v2014, %v2134
      %v2209 = vmul.f32 %v2015, %v2136
      %v2210 = vmul.f32 %v2016, %v2138
      %v2211 = vmul.f32 %v2017, %v2140
      %v2212 = vmul.f32 %v2018, %v2142
      %v2213 = vmul.f32 %v2019, %v2144
      %v2214 = vmul.f32 %v2020, %v2146
      %v2215 = vmul.f32 %v2021, %v2148
      %v2216 = vmul.f32 %v2022, %v2150
      %v2217 = vmul.f32 %v2023, %v2152
      %v2218 = vmul.f32 %v2024, %v2151
      %v2219 = vpack.c.bf16 %v2187, %v2186
      %v2220 = vpack.c.bf16 %v2189, %v2188
      %v2221 = vpack.c.bf16 %v2191, %v2190
      %v2222 = vpack.c.bf16 %v2193, %v2192
      %v2223 = vpack.c.bf16 %v2195, %v2194
      %v2224 = vpack.c.bf16 %v2197, %v2196
      %v2225 = vpack.c.bf16 %v2199, %v2198
      %v2226 = vpack.c.bf16 %v2201, %v2200
      %v2227 = vpack.c.bf16 %v2203, %v2202
      %v2228 = vpack.c.bf16 %v2205, %v2204
      %v2229 = vpack.c.bf16 %v2207, %v2206
      %v2230 = vpack.c.bf16 %v2209, %v2208
      %v2231 = vpack.c.bf16 %v2211, %v2210
      %v2232 = vpack.c.bf16 %v2213, %v2212
      %v2233 = vpack.c.bf16 %v2215, %v2214
      %v2234 = vpack.c.bf16 %v2217, %v2216
      %v2235 = vpack.c.bf16 %v2218, %v2218
      %s2236 = scalar_lea.vmem %s1, 8
      %v2237 = vld [vmem:[%s2236] sm:$0x7]
      %vm2238 = vsmask.f32 7424
      %v2240 = vshrl.u32 %v2219, 16
      %v2242 = vshll.u32 %v2219, 16
      %v2244 = vrot.slane %v2242, 1
      %v2245 = vor.u32 %v2240, %v2244
      %v2247 = vshll.u32 %v2220, 16
      %v2249 = vrot.slane %v2247, 1
      %v2250 = vsel %vm2238, %v2245, %v2249
      %v2251 = vshrl.u32 %v2220, 16
      %v2253 = vor.u32 %v2251, %v2249
      %v2255 = vshll.u32 %v2221, 16
      %v2257 = vrot.slane %v2255, 1
      %v2258 = vsel %vm2238, %v2253, %v2257
      %v2259 = vshrl.u32 %v2221, 16
      %v2261 = vor.u32 %v2259, %v2257
      %v2263 = vshll.u32 %v2222, 16
      %v2265 = vrot.slane %v2263, 1
      %v2266 = vsel %vm2238, %v2261, %v2265
      %v2267 = vshrl.u32 %v2222, 16
      %v2269 = vor.u32 %v2267, %v2265
      %v2271 = vshll.u32 %v2223, 16
      %v2273 = vrot.slane %v2271, 1
      %v2274 = vsel %vm2238, %v2269, %v2273
      %v2275 = vshrl.u32 %v2223, 16
      %v2277 = vor.u32 %v2275, %v2273
      %v2279 = vshll.u32 %v2224, 16
      %v2281 = vrot.slane %v2279, 1
      %v2282 = vsel %vm2238, %v2277, %v2281
      %v2283 = vshrl.u32 %v2224, 16
      %v2285 = vor.u32 %v2283, %v2281
      %v2287 = vshll.u32 %v2225, 16
      %v2289 = vrot.slane %v2287, 1
      %v2290 = vsel %vm2238, %v2285, %v2289
      %v2291 = vshrl.u32 %v2225, 16
      %v2293 = vor.u32 %v2291, %v2289
      %v2295 = vshll.u32 %v2226, 16
      %v2297 = vrot.slane %v2295, 1
      %v2298 = vsel %vm2238, %v2293, %v2297
      %v2299 = vshrl.u32 %v2226, 16
      %v2301 = vor.u32 %v2299, %v2297
      %v2303 = vshll.u32 %v2227, 16
      %v2305 = vrot.slane %v2303, 1
      %v2306 = vsel %vm2238, %v2301, %v2305
      %v2307 = vshrl.u32 %v2227, 16
      %v2309 = vor.u32 %v2307, %v2305
      %v2311 = vshll.u32 %v2228, 16
      %v2313 = vrot.slane %v2311, 1
      %v2314 = vsel %vm2238, %v2309, %v2313
      %v2315 = vshrl.u32 %v2228, 16
      %v2317 = vor.u32 %v2315, %v2313
      %v2319 = vshll.u32 %v2229, 16
      %v2321 = vrot.slane %v2319, 1
      %v2322 = vsel %vm2238, %v2317, %v2321
      %v2323 = vshrl.u32 %v2229, 16
      %v2325 = vor.u32 %v2323, %v2321
      %v2327 = vshll.u32 %v2230, 16
      %v2329 = vrot.slane %v2327, 1
      %v2330 = vsel %vm2238, %v2325, %v2329
      %v2331 = vshrl.u32 %v2230, 16
      %v2333 = vor.u32 %v2331, %v2329
      %v2335 = vshll.u32 %v2231, 16
      %v2337 = vrot.slane %v2335, 1
      %v2338 = vsel %vm2238, %v2333, %v2337
      %v2339 = vshrl.u32 %v2231, 16
      %v2341 = vor.u32 %v2339, %v2337
      %v2343 = vshll.u32 %v2232, 16
      %v2345 = vrot.slane %v2343, 1
      %v2346 = vsel %vm2238, %v2341, %v2345
      %v2347 = vshrl.u32 %v2232, 16
      %v2349 = vor.u32 %v2347, %v2345
      %v2351 = vshll.u32 %v2233, 16
      %v2353 = vrot.slane %v2351, 1
      %v2354 = vsel %vm2238, %v2349, %v2353
      %v2355 = vshrl.u32 %v2233, 16
      %v2357 = vor.u32 %v2355, %v2353
      %v2359 = vshll.u32 %v2234, 16
      %v2361 = vrot.slane %v2359, 1
      %v2362 = vsel %vm2238, %v2357, %v2361
      %v2363 = vshrl.u32 %v2234, 16
      %v2365 = vor.u32 %v2363, %v2361
      %v2367 = vshll.u32 %v2235, 16
      %v2369 = vrot.slane %v2367, 1
      %v2370 = vsel %vm2238, %v2365, %v2369
      %v2372 = vsel %vm1524, %v2250, 0
      %v2375 = vsel %vm1524, %v2258, 0
      %v2378 = vsel %vm1524, %v2266, 0
      %v2381 = vsel %vm1524, %v2274, 0
      %v2384 = vsel %vm1524, %v2282, 0
      %v2387 = vsel %vm1524, %v2290, 0
      %v2390 = vsel %vm1524, %v2298, 0
      %v2393 = vsel %vm1524, %v2306, 0
      %v2396 = vsel %vm1524, %v2314, 0
      %v2399 = vsel %vm1524, %v2322, 0
      %v2402 = vsel %vm1524, %v2330, 0
      %v2405 = vsel %vm1524, %v2338, 0
      %v2408 = vsel %vm1524, %v2346, 0
      %v2411 = vsel %vm1524, %v2354, 0
      %v2414 = vsel %vm1524, %v2362, 0
      %v2417 = vsel %vm1524, %v2370, 0
      %v2420 = vsel %vm1573, %v2237, 0
      %2422 = vmatpush.bf16.msra.mxu0 0
      %2423 = vmatpush.bf16.msra.mxu0 0
      %2424 = vmatpush.bf16.msra.mxu0 0
      %2425 = vmatpush.bf16.msra.mxu0 0
      %2426 = vmatpush.bf16.msra.mxu0 0
      %2427 = vmatpush.bf16.msra.mxu0 0
      %2428 = vmatpush.bf16.msra.mxu0 0
      %2429 = vmatpush.bf16.msra.mxu0 %v2420
      %2430 = vmatmul.bf16.gmra.mxu0 %v2372
      %v2431 = vpop.f32.mrf.mxu0
      %v2432 = vadd.f32 0.0, %v2431
      %v2433 = vpop.f32.mrf.mxu0
      %v2434 = vadd.f32 0.0, %v2433
      %2435 = vmatmul.bf16.gmra.mxu0 %v2375
      %v2436 = vpop.f32.mrf.mxu0
      %v2437 = vadd.f32 0.0, %v2436
      %v2438 = vpop.f32.mrf.mxu0
      %v2439 = vadd.f32 0.0, %v2438
      %2440 = vmatmul.bf16.gmra.mxu0 %v2378
      %v2441 = vpop.f32.mrf.mxu0
      %v2442 = vadd.f32 0.0, %v2441
      %v2443 = vpop.f32.mrf.mxu0
      %v2444 = vadd.f32 0.0, %v2443
      %2445 = vmatmul.bf16.gmra.mxu0 %v2381
      %v2446 = vpop.f32.mrf.mxu0
      %v2447 = vadd.f32 0.0, %v2446
      %v2448 = vpop.f32.mrf.mxu0
      %v2449 = vadd.f32 0.0, %v2448
      %2450 = vmatmul.bf16.gmra.mxu0 %v2384
      %v2451 = vpop.f32.mrf.mxu0
      %v2452 = vadd.f32 0.0, %v2451
      %v2453 = vpop.f32.mrf.mxu0
      %v2454 = vadd.f32 0.0, %v2453
      %2455 = vmatmul.bf16.gmra.mxu0 %v2387
      %v2456 = vpop.f32.mrf.mxu0
      %v2457 = vadd.f32 0.0, %v2456
      %v2458 = vpop.f32.mrf.mxu0
      %v2459 = vadd.f32 0.0, %v2458
      %2460 = vmatmul.bf16.gmra.mxu0 %v2390
      %v2461 = vpop.f32.mrf.mxu0
      %v2462 = vadd.f32 0.0, %v2461
      %v2463 = vpop.f32.mrf.mxu0
      %v2464 = vadd.f32 0.0, %v2463
      %2465 = vmatmul.bf16.gmra.mxu0 %v2393
      %v2466 = vpop.f32.mrf.mxu0
      %v2467 = vadd.f32 0.0, %v2466
      %v2468 = vpop.f32.mrf.mxu0
      %v2469 = vadd.f32 0.0, %v2468
      %2470 = vmatmul.bf16.gmra.mxu0 %v2396
      %v2471 = vpop.f32.mrf.mxu0
      %v2472 = vadd.f32 0.0, %v2471
      %v2473 = vpop.f32.mrf.mxu0
      %v2474 = vadd.f32 0.0, %v2473
      %2475 = vmatmul.bf16.gmra.mxu0 %v2399
      %v2476 = vpop.f32.mrf.mxu0
      %v2477 = vadd.f32 0.0, %v2476
      %v2478 = vpop.f32.mrf.mxu0
      %v2479 = vadd.f32 0.0, %v2478
      %2480 = vmatmul.bf16.gmra.mxu0 %v2402
      %v2481 = vpop.f32.mrf.mxu0
      %v2482 = vadd.f32 0.0, %v2481
      %v2483 = vpop.f32.mrf.mxu0
      %v2484 = vadd.f32 0.0, %v2483
      %2485 = vmatmul.bf16.gmra.mxu0 %v2405
      %v2486 = vpop.f32.mrf.mxu0
      %v2487 = vadd.f32 0.0, %v2486
      %v2488 = vpop.f32.mrf.mxu0
      %v2489 = vadd.f32 0.0, %v2488
      %2490 = vmatmul.bf16.gmra.mxu0 %v2408
      %v2491 = vpop.f32.mrf.mxu0
      %v2492 = vadd.f32 0.0, %v2491
      %v2493 = vpop.f32.mrf.mxu0
      %v2494 = vadd.f32 0.0, %v2493
      %2495 = vmatmul.bf16.gmra.mxu0 %v2411
      %v2496 = vpop.f32.mrf.mxu0
      %v2497 = vadd.f32 0.0, %v2496
      %v2498 = vpop.f32.mrf.mxu0
      %v2499 = vadd.f32 0.0, %v2498
      %2500 = vmatmul.bf16.gmra.mxu0 %v2414
      %v2501 = vpop.f32.mrf.mxu0
      %v2502 = vadd.f32 0.0, %v2501
      %v2503 = vpop.f32.mrf.mxu0
      %v2504 = vadd.f32 0.0, %v2503
      %2505 = vmatmul.bf16.gmra.mxu0 %v2417
      %v2506 = vpop.f32.mrf.mxu0
      %v2507 = vadd.f32 0.0, %v2506
      %v2508 = vpop.f32.mrf.mxu0
      %v2509 = vadd.f32 0.0, %v2508
      %2510 = vdwg.mxu0
      %v2511 = vadd.f32 %v1880, %v2432
      %v2512 = vadd.f32 %v1882, %v2434
      %v2513 = vadd.f32 %v1885, %v2437
      %v2514 = vadd.f32 %v1887, %v2439
      %v2515 = vadd.f32 %v1890, %v2442
      %v2516 = vadd.f32 %v1892, %v2444
      %v2517 = vadd.f32 %v1895, %v2447
      %v2518 = vadd.f32 %v1897, %v2449
      %v2519 = vadd.f32 %v1900, %v2452
      %v2520 = vadd.f32 %v1902, %v2454
      %v2521 = vadd.f32 %v1905, %v2457
      %v2522 = vadd.f32 %v1907, %v2459
      %v2523 = vadd.f32 %v1910, %v2462
      %v2524 = vadd.f32 %v1912, %v2464
      %v2525 = vadd.f32 %v1915, %v2467
      %v2526 = vadd.f32 %v1917, %v2469
      %v2527 = vadd.f32 %v1920, %v2472
      %v2528 = vadd.f32 %v1922, %v2474
      %v2529 = vadd.f32 %v1925, %v2477
      %v2530 = vadd.f32 %v1927, %v2479
      %v2531 = vadd.f32 %v1930, %v2482
      %v2532 = vadd.f32 %v1932, %v2484
      %v2533 = vadd.f32 %v1935, %v2487
      %v2534 = vadd.f32 %v1937, %v2489
      %v2535 = vadd.f32 %v1940, %v2492
      %v2536 = vadd.f32 %v1942, %v2494
      %v2537 = vadd.f32 %v1945, %v2497
      %v2538 = vadd.f32 %v1947, %v2499
      %v2539 = vadd.f32 %v1950, %v2502
      %v2540 = vadd.f32 %v1952, %v2504
      %v2541 = vadd.f32 %v1955, %v2507
      %v2542 = vadd.f32 %v1957, %v2509
      %v2543 = vld [vmem:[#allocation2 + $0xc] sm:$0x8]
      %v2544 = vld [vmem:[#allocation2 + $0x10] sm:$0xf]
      %v2545 = vld [vmem:[#allocation2 + $0x14] sm:$0xf]
      %v2546 = vld [vmem:[#allocation2 + $0x18] sm:$0xf]
      %v2547 = vld [vmem:[#allocation2 + $0x1c] sm:$0xf]
      %v2548 = vld [vmem:[#allocation2 + $0x20] sm:$0xf]
      %v2549 = vld [vmem:[#allocation2 + $0x24] sm:$0xf]
      %v2550 = vld [vmem:[#allocation2 + $0x28] sm:$0xf]
      %v2551 = vld [vmem:[#allocation2 + $0x2c] sm:$0xf]
      %v2552 = vld [vmem:[#allocation2 + $0x30] sm:$0xf]
      %v2553 = vld [vmem:[#allocation2 + $0x34] sm:$0xf]
      %v2554 = vld [vmem:[#allocation2 + $0x38] sm:$0xf]
      %v2555 = vld [vmem:[#allocation2 + $0x3c] sm:$0xf]
      %v2556 = vld [vmem:[#allocation2 + $0x40] sm:$0xf]
      %v2557 = vld [vmem:[#allocation2 + $0x44] sm:$0xf]
      %v2558 = vld [vmem:[#allocation2 + $0x48] sm:$0xf]
      %v2559 = vld [vmem:[#allocation2 + $0x4c] sm:$0xf]
      %v2560 = vld [vmem:[#allocation2 + $0x50] sm:$0xf]
      %v2561 = vld [vmem:[#allocation2 + $0x54] sm:$0xf]
      %v2562 = vld [vmem:[#allocation2 + $0x58] sm:$0xf]
      %v2563 = vld [vmem:[#allocation2 + $0x5c] sm:$0xf]
      %v2564 = vld [vmem:[#allocation2 + $0x60] sm:$0xf]
      %v2565 = vld [vmem:[#allocation2 + $0x64] sm:$0xf]
      %v2566 = vld [vmem:[#allocation2 + $0x68] sm:$0xf]
      %v2567 = vld [vmem:[#allocation2 + $0x6c] sm:$0xf]
      %v2568 = vld [vmem:[#allocation2 + $0x70] sm:$0xf]
      %v2569 = vld [vmem:[#allocation2 + $0x74] sm:$0xf]
      %v2570 = vld [vmem:[#allocation2 + $0x78] sm:$0xf]
      %v2571 = vld [vmem:[#allocation2 + $0x7c] sm:$0xf]
      %v2572 = vld [vmem:[#allocation2 + $0x80] sm:$0xf]
      %v2573 = vld [vmem:[#allocation2 + $0x84] sm:$0xf]
      %v2574 = vld [vmem:[#allocation2 + $0x88] sm:$0xf]
      %v2575 = vld [vmem:[#allocation2 + $0x8c] sm:$0xf]
      %v2576 = vunpack.c.l.bf16 %v2543
      %v2577 = vunpack.c.l.bf16 %v2544
      %v2578 = vunpack.c.l.bf16 %v2545
      %v2579 = vunpack.c.l.bf16 %v2546
      %v2580 = vunpack.c.l.bf16 %v2547
      %v2581 = vunpack.c.l.bf16 %v2548
      %v2582 = vunpack.c.l.bf16 %v2549
      %v2583 = vunpack.c.l.bf16 %v2550
      %v2584 = vunpack.c.l.bf16 %v2551
      %v2585 = vunpack.c.l.bf16 %v2552
      %v2586 = vunpack.c.l.bf16 %v2553
      %v2587 = vunpack.c.l.bf16 %v2554
      %v2588 = vunpack.c.l.bf16 %v2555
      %v2589 = vunpack.c.l.bf16 %v2556
      %v2590 = vunpack.c.l.bf16 %v2557
      %v2591 = vunpack.c.l.bf16 %v2558
      %v2592 = vunpack.c.l.bf16 %v2559
      %v2593 = vunpack.c.l.bf16 %v2560
      %v2594 = vunpack.c.l.bf16 %v2561
      %v2595 = vunpack.c.l.bf16 %v2562
      %v2596 = vunpack.c.l.bf16 %v2563
      %v2597 = vunpack.c.l.bf16 %v2564
      %v2598 = vunpack.c.l.bf16 %v2565
      %v2599 = vunpack.c.l.bf16 %v2566
      %v2600 = vunpack.c.l.bf16 %v2567
      %v2601 = vunpack.c.l.bf16 %v2568
      %v2602 = vunpack.c.l.bf16 %v2569
      %v2603 = vunpack.c.l.bf16 %v2570
      %v2604 = vunpack.c.l.bf16 %v2571
      %v2605 = vunpack.c.l.bf16 %v2572
      %v2606 = vunpack.c.l.bf16 %v2573
      %v2607 = vunpack.c.l.bf16 %v2574
      %v2608 = vunpack.c.l.bf16 %v2575
      %v2609 = vmul.f32 %v2576, %v1295
      %v2610 = vmul.f32 %v2577, %v1297
      %v2611 = vmul.f32 %v2578, %v1299
      %v2612 = vmul.f32 %v2579, %v1301
      %v2613 = vmul.f32 %v2580, %v1303
      %v2614 = vmul.f32 %v2581, %v1305
      %v2615 = vmul.f32 %v2582, %v1307
      %v2616 = vmul.f32 %v2583, %v1309
      %v2617 = vmul.f32 %v2584, %v1311
      %v2618 = vmul.f32 %v2585, %v1313
      %v2619 = vmul.f32 %v2586, %v1315
      %v2620 = vmul.f32 %v2587, %v1317
      %v2621 = vmul.f32 %v2588, %v1319
      %v2622 = vmul.f32 %v2589, %v1321
      %v2623 = vmul.f32 %v2590, %v1323
      %v2624 = vmul.f32 %v2591, %v1325
      %v2625 = vmul.f32 %v2592, %v1327
      %v2626 = vmul.f32 %v2593, %v1329
      %v2627 = vmul.f32 %v2594, %v1331
      %v2628 = vmul.f32 %v2595, %v1333
      %v2629 = vmul.f32 %v2596, %v1335
      %v2630 = vmul.f32 %v2597, %v1337
      %v2631 = vmul.f32 %v2598, %v1339
      %v2632 = vmul.f32 %v2599, %v1341
      %v2633 = vmul.f32 %v2600, %v1343
      %v2634 = vmul.f32 %v2601, %v1345
      %v2635 = vmul.f32 %v2602, %v1347
      %v2636 = vmul.f32 %v2603, %v1349
      %v2637 = vmul.f32 %v2604, %v1351
      %v2638 = vmul.f32 %v2605, %v1353
      %v2639 = vmul.f32 %v2606, %v1355
      %v2640 = vmul.f32 %v2607, %v1357
      %v2641 = vmul.f32 %v2608, %v1356
      %v2642 = vpack.c.bf16 %v2610, %v2609
      %v2643 = vpack.c.bf16 %v2612, %v2611
      %v2644 = vpack.c.bf16 %v2614, %v2613
      %v2645 = vpack.c.bf16 %v2616, %v2615
      %v2646 = vpack.c.bf16 %v2618, %v2617
      %v2647 = vpack.c.bf16 %v2620, %v2619
      %v2648 = vpack.c.bf16 %v2622, %v2621
      %v2649 = vpack.c.bf16 %v2624, %v2623
      %v2650 = vpack.c.bf16 %v2626, %v2625
      %v2651 = vpack.c.bf16 %v2628, %v2627
      %v2652 = vpack.c.bf16 %v2630, %v2629
      %v2653 = vpack.c.bf16 %v2632, %v2631
      %v2654 = vpack.c.bf16 %v2634, %v2633
      %v2655 = vpack.c.bf16 %v2636, %v2635
      %v2656 = vpack.c.bf16 %v2638, %v2637
      %v2657 = vpack.c.bf16 %v2640, %v2639
      %v2658 = vpack.c.bf16 %v2641, %v2641
      %s2659 = scalar_lea.vmem %s1, 12
      %v2660 = vld [vmem:[%s2659] sm:$0x7]
      %v2662 = vshrl.u32 %v2642, 16
      %v2664 = vrot.slane %v2662, 3
      %v2665 = vshll.u32 %v2642, 16
      %v2667 = vrot.slane %v2665, 4
      %v2668 = vor.u32 %v2664, %v2667
      %v2670 = vshrl.u32 %v2643, 16
      %v2672 = vrot.slane %v2670, 3
      %v2673 = vshll.u32 %v2643, 16
      %v2675 = vrot.slane %v2673, 4
      %v2676 = vor.u32 %v2672, %v2675
      %v2677 = vsel %vm1666, %v2668, %v2676
      %v2679 = vshrl.u32 %v2644, 16
      %v2681 = vrot.slane %v2679, 3
      %v2682 = vshll.u32 %v2644, 16
      %v2684 = vrot.slane %v2682, 4
      %v2685 = vor.u32 %v2681, %v2684
      %v2686 = vsel %vm1666, %v2676, %v2685
      %v2688 = vshrl.u32 %v2645, 16
      %v2690 = vrot.slane %v2688, 3
      %v2691 = vshll.u32 %v2645, 16
      %v2693 = vrot.slane %v2691, 4
      %v2694 = vor.u32 %v2690, %v2693
      %v2695 = vsel %vm1666, %v2685, %v2694
      %v2697 = vshrl.u32 %v2646, 16
      %v2699 = vrot.slane %v2697, 3
      %v2700 = vshll.u32 %v2646, 16
      %v2702 = vrot.slane %v2700, 4
      %v2703 = vor.u32 %v2699, %v2702
      %v2704 = vsel %vm1666, %v2694, %v2703
      %v2706 = vshrl.u32 %v2647, 16
      %v2708 = vrot.slane %v2706, 3
      %v2709 = vshll.u32 %v2647, 16
      %v2711 = vrot.slane %v2709, 4
      %v2712 = vor.u32 %v2708, %v2711
      %v2713 = vsel %vm1666, %v2703, %v2712
      %v2715 = vshrl.u32 %v2648, 16
      %v2717 = vrot.slane %v2715, 3
      %v2718 = vshll.u32 %v2648, 16
      %v2720 = vrot.slane %v2718, 4
      %v2721 = vor.u32 %v2717, %v2720
      %v2722 = vsel %vm1666, %v2712, %v2721
      %v2724 = vshrl.u32 %v2649, 16
      %v2726 = vrot.slane %v2724, 3
      %v2727 = vshll.u32 %v2649, 16
      %v2729 = vrot.slane %v2727, 4
      %v2730 = vor.u32 %v2726, %v2729
      %v2731 = vsel %vm1666, %v2721, %v2730
      %v2733 = vshrl.u32 %v2650, 16
      %v2735 = vrot.slane %v2733, 3
      %v2736 = vshll.u32 %v2650, 16
      %v2738 = vrot.slane %v2736, 4
      %v2739 = vor.u32 %v2735, %v2738
      %v2740 = vsel %vm1666, %v2730, %v2739
      %v2742 = vshrl.u32 %v2651, 16
      %v2744 = vrot.slane %v2742, 3
      %v2745 = vshll.u32 %v2651, 16
      %v2747 = vrot.slane %v2745, 4
      %v2748 = vor.u32 %v2744, %v2747
      %v2749 = vsel %vm1666, %v2739, %v2748
      %v2751 = vshrl.u32 %v2652, 16
      %v2753 = vrot.slane %v2751, 3
      %v2754 = vshll.u32 %v2652, 16
      %v2756 = vrot.slane %v2754, 4
      %v2757 = vor.u32 %v2753, %v2756
      %v2758 = vsel %vm1666, %v2748, %v2757
      %v2760 = vshrl.u32 %v2653, 16
      %v2762 = vrot.slane %v2760, 3
      %v2763 = vshll.u32 %v2653, 16
      %v2765 = vrot.slane %v2763, 4
      %v2766 = vor.u32 %v2762, %v2765
      %v2767 = vsel %vm1666, %v2757, %v2766
      %v2769 = vshrl.u32 %v2654, 16
      %v2771 = vrot.slane %v2769, 3
      %v2772 = vshll.u32 %v2654, 16
      %v2774 = vrot.slane %v2772, 4
      %v2775 = vor.u32 %v2771, %v2774
      %v2776 = vsel %vm1666, %v2766, %v2775
      %v2778 = vshrl.u32 %v2655, 16
      %v2780 = vrot.slane %v2778, 3
      %v2781 = vshll.u32 %v2655, 16
      %v2783 = vrot.slane %v2781, 4
      %v2784 = vor.u32 %v2780, %v2783
      %v2785 = vsel %vm1666, %v2775, %v2784
      %v2787 = vshrl.u32 %v2656, 16
      %v2789 = vrot.slane %v2787, 3
      %v2790 = vshll.u32 %v2656, 16
      %v2792 = vrot.slane %v2790, 4
      %v2793 = vor.u32 %v2789, %v2792
      %v2794 = vsel %vm1666, %v2784, %v2793
      %v2796 = vshrl.u32 %v2657, 16
      %v2798 = vrot.slane %v2796, 3
      %v2799 = vshll.u32 %v2657, 16
      %v2801 = vrot.slane %v2799, 4
      %v2802 = vor.u32 %v2798, %v2801
      %v2803 = vsel %vm1666, %v2793, %v2802
      %v2805 = vshrl.u32 %v2658, 16
      %v2807 = vrot.slane %v2805, 3
      %v2808 = vshll.u32 %v2658, 16
      %v2810 = vrot.slane %v2808, 4
      %v2811 = vor.u32 %v2807, %v2810
      %v2812 = vsel %vm1666, %v2802, %v2811
      %v2814 = vsel %vm1524, %v2677, 0
      %v2817 = vsel %vm1524, %v2686, 0
      %v2820 = vsel %vm1524, %v2695, 0
      %v2823 = vsel %vm1524, %v2704, 0
      %v2826 = vsel %vm1524, %v2713, 0
      %v2829 = vsel %vm1524, %v2722, 0
      %v2832 = vsel %vm1524, %v2731, 0
      %v2835 = vsel %vm1524, %v2740, 0
      %v2838 = vsel %vm1524, %v2749, 0
      %v2841 = vsel %vm1524, %v2758, 0
      %v2844 = vsel %vm1524, %v2767, 0
      %v2847 = vsel %vm1524, %v2776, 0
      %v2850 = vsel %vm1524, %v2785, 0
      %v2853 = vsel %vm1524, %v2794, 0
      %v2856 = vsel %vm1524, %v2803, 0
      %v2859 = vsel %vm1524, %v2812, 0
      %v2862 = vsel %vm1573, %v2660, 0
      %2864 = vmatpush.bf16.msra.mxu0 0
      %2865 = vmatpush.bf16.msra.mxu0 0
      %2866 = vmatpush.bf16.msra.mxu0 0
      %2867 = vmatpush.bf16.msra.mxu0 0
      %2868 = vmatpush.bf16.msra.mxu0 0
      %2869 = vmatpush.bf16.msra.mxu0 0
      %2870 = vmatpush.bf16.msra.mxu0 0
      %2871 = vmatpush.bf16.msra.mxu0 %v2862
      %2872 = vmatmul.bf16.gmra.mxu0 %v2814
      %v2873 = vpop.f32.mrf.mxu0
      %v2874 = vadd.f32 0.0, %v2873
      %v2875 = vpop.f32.mrf.mxu0
      %v2876 = vadd.f32 0.0, %v2875
      %2877 = vmatmul.bf16.gmra.mxu0 %v2817
      %v2878 = vpop.f32.mrf.mxu0
      %v2879 = vadd.f32 0.0, %v2878
      %v2880 = vpop.f32.mrf.mxu0
      %v2881 = vadd.f32 0.0, %v2880
      %2882 = vmatmul.bf16.gmra.mxu0 %v2820
      %v2883 = vpop.f32.mrf.mxu0
      %v2884 = vadd.f32 0.0, %v2883
      %v2885 = vpop.f32.mrf.mxu0
      %v2886 = vadd.f32 0.0, %v2885
      %2887 = vmatmul.bf16.gmra.mxu0 %v2823
      %v2888 = vpop.f32.mrf.mxu0
      %v2889 = vadd.f32 0.0, %v2888
      %v2890 = vpop.f32.mrf.mxu0
      %v2891 = vadd.f32 0.0, %v2890
      %2892 = vmatmul.bf16.gmra.mxu0 %v2826
      %v2893 = vpop.f32.mrf.mxu0
      %v2894 = vadd.f32 0.0, %v2893
      %v2895 = vpop.f32.mrf.mxu0
      %v2896 = vadd.f32 0.0, %v2895
      %2897 = vmatmul.bf16.gmra.mxu0 %v2829
      %v2898 = vpop.f32.mrf.mxu0
      %v2899 = vadd.f32 0.0, %v2898
      %v2900 = vpop.f32.mrf.mxu0
      %v2901 = vadd.f32 0.0, %v2900
      %2902 = vmatmul.bf16.gmra.mxu0 %v2832
      %v2903 = vpop.f32.mrf.mxu0
      %v2904 = vadd.f32 0.0, %v2903
      %v2905 = vpop.f32.mrf.mxu0
      %v2906 = vadd.f32 0.0, %v2905
      %2907 = vmatmul.bf16.gmra.mxu0 %v2835
      %v2908 = vpop.f32.mrf.mxu0
      %v2909 = vadd.f32 0.0, %v2908
      %v2910 = vpop.f32.mrf.mxu0
      %v2911 = vadd.f32 0.0, %v2910
      %2912 = vmatmul.bf16.gmra.mxu0 %v2838
      %v2913 = vpop.f32.mrf.mxu0
      %v2914 = vadd.f32 0.0, %v2913
      %v2915 = vpop.f32.mrf.mxu0
      %v2916 = vadd.f32 0.0, %v2915
      %2917 = vmatmul.bf16.gmra.mxu0 %v2841
      %v2918 = vpop.f32.mrf.mxu0
      %v2919 = vadd.f32 0.0, %v2918
      %v2920 = vpop.f32.mrf.mxu0
      %v2921 = vadd.f32 0.0, %v2920
      %2922 = vmatmul.bf16.gmra.mxu0 %v2844
      %v2923 = vpop.f32.mrf.mxu0
      %v2924 = vadd.f32 0.0, %v2923
      %v2925 = vpop.f32.mrf.mxu0
      %v2926 = vadd.f32 0.0, %v2925
      %2927 = vmatmul.bf16.gmra.mxu0 %v2847
      %v2928 = vpop.f32.mrf.mxu0
      %v2929 = vadd.f32 0.0, %v2928
      %v2930 = vpop.f32.mrf.mxu0
      %v2931 = vadd.f32 0.0, %v2930
      %2932 = vmatmul.bf16.gmra.mxu0 %v2850
      %v2933 = vpop.f32.mrf.mxu0
      %v2934 = vadd.f32 0.0, %v2933
      %v2935 = vpop.f32.mrf.mxu0
      %v2936 = vadd.f32 0.0, %v2935
      %2937 = vmatmul.bf16.gmra.mxu0 %v2853
      %v2938 = vpop.f32.mrf.mxu0
      %v2939 = vadd.f32 0.0, %v2938
      %v2940 = vpop.f32.mrf.mxu0
      %v2941 = vadd.f32 0.0, %v2940
      %2942 = vmatmul.bf16.gmra.mxu0 %v2856
      %v2943 = vpop.f32.mrf.mxu0
      %v2944 = vadd.f32 0.0, %v2943
      %v2945 = vpop.f32.mrf.mxu0
      %v2946 = vadd.f32 0.0, %v2945
      %2947 = vmatmul.bf16.gmra.mxu0 %v2859
      %v2948 = vpop.f32.mrf.mxu0
      %v2949 = vadd.f32 0.0, %v2948
      %v2950 = vpop.f32.mrf.mxu0
      %v2951 = vadd.f32 0.0, %v2950
      %2952 = vdwg.mxu0
      %v2953 = vadd.f32 %v2511, %v2874
      %v2954 = vadd.f32 %v2512, %v2876
      %v2955 = vadd.f32 %v2513, %v2879
      %v2956 = vadd.f32 %v2514, %v2881
      %v2957 = vadd.f32 %v2515, %v2884
      %v2958 = vadd.f32 %v2516, %v2886
      %v2959 = vadd.f32 %v2517, %v2889
      %v2960 = vadd.f32 %v2518, %v2891
      %v2961 = vadd.f32 %v2519, %v2894
      %v2962 = vadd.f32 %v2520, %v2896
      %v2963 = vadd.f32 %v2521, %v2899
      %v2964 = vadd.f32 %v2522, %v2901
      %v2965 = vadd.f32 %v2523, %v2904
      %v2966 = vadd.f32 %v2524, %v2906
      %v2967 = vadd.f32 %v2525, %v2909
      %v2968 = vadd.f32 %v2526, %v2911
      %v2969 = vadd.f32 %v2527, %v2914
      %v2970 = vadd.f32 %v2528, %v2916
      %v2971 = vadd.f32 %v2529, %v2919
      %v2972 = vadd.f32 %v2530, %v2921
      %v2973 = vadd.f32 %v2531, %v2924
      %v2974 = vadd.f32 %v2532, %v2926
      %v2975 = vadd.f32 %v2533, %v2929
      %v2976 = vadd.f32 %v2534, %v2931
      %v2977 = vadd.f32 %v2535, %v2934
      %v2978 = vadd.f32 %v2536, %v2936
      %v2979 = vadd.f32 %v2537, %v2939
      %v2980 = vadd.f32 %v2538, %v2941
      %v2981 = vadd.f32 %v2539, %v2944
      %v2982 = vadd.f32 %v2540, %v2946
      %v2983 = vadd.f32 %v2541, %v2949
      %v2984 = vadd.f32 %v2542, %v2951
      %s2985 = scalar_lea.vmem %s1, 16
      %v2986 = vld [vmem:[%s2985] sm:$0x7]
      %v3019 = vunpack.c.l.b16 %v2544
      %v3020 = vunpack.c.l.b16 %v2545
      %v3021 = vunpack.c.l.b16 %v2546
      %v3022 = vunpack.c.l.b16 %v2547
      %v3023 = vunpack.c.l.b16 %v2548
      %v3024 = vunpack.c.l.b16 %v2549
      %v3025 = vunpack.c.l.b16 %v2550
      %v3026 = vunpack.c.l.b16 %v2551
      %v3027 = vunpack.c.l.b16 %v2552
      %v3028 = vunpack.c.l.b16 %v2553
      %v3029 = vunpack.c.l.b16 %v2554
      %v3030 = vunpack.c.l.b16 %v2555
      %v3031 = vunpack.c.l.b16 %v2556
      %v3032 = vunpack.c.l.b16 %v2557
      %v3033 = vunpack.c.l.b16 %v2558
      %v3034 = vunpack.c.l.b16 %v2559
      %v3035 = vunpack.c.l.b16 %v2560
      %v3036 = vunpack.c.l.b16 %v2561
      %v3037 = vunpack.c.l.b16 %v2562
      %v3038 = vunpack.c.l.b16 %v2563
      %v3039 = vunpack.c.l.b16 %v2564
      %v3040 = vunpack.c.l.b16 %v2565
      %v3041 = vunpack.c.l.b16 %v2566
      %v3042 = vunpack.c.l.b16 %v2567
      %v3043 = vunpack.c.l.b16 %v2568
      %v3044 = vunpack.c.l.b16 %v2569
      %v3045 = vunpack.c.l.b16 %v2570
      %v3046 = vunpack.c.l.b16 %v2571
      %v3047 = vunpack.c.l.b16 %v2572
      %v3048 = vunpack.c.l.b16 %v2573
      %v3049 = vunpack.c.l.b16 %v2574
      %v3050 = vunpack.c.l.b16 %v2575
      %v3051 = vpack.c.b16 %v3020, %v3019
      %v3052 = vpack.c.b16 %v3022, %v3021
      %v3053 = vpack.c.b16 %v3024, %v3023
      %v3054 = vpack.c.b16 %v3026, %v3025
      %v3055 = vpack.c.b16 %v3028, %v3027
      %v3056 = vpack.c.b16 %v3030, %v3029
      %v3057 = vpack.c.b16 %v3032, %v3031
      %v3058 = vpack.c.b16 %v3034, %v3033
      %v3059 = vpack.c.b16 %v3036, %v3035
      %v3060 = vpack.c.b16 %v3038, %v3037
      %v3061 = vpack.c.b16 %v3040, %v3039
      %v3062 = vpack.c.b16 %v3042, %v3041
      %v3063 = vpack.c.b16 %v3044, %v3043
      %v3064 = vpack.c.b16 %v3046, %v3045
      %v3065 = vpack.c.b16 %v3048, %v3047
      %v3066 = vpack.c.b16 %v3050, %v3049
      %v3068 = vsel %vm1524, %v3051, 0
      %v3071 = vsel %vm1524, %v3052, 0
      %v3074 = vsel %vm1524, %v3053, 0
      %v3077 = vsel %vm1524, %v3054, 0
      %v3080 = vsel %vm1524, %v3055, 0
      %v3083 = vsel %vm1524, %v3056, 0
      %v3086 = vsel %vm1524, %v3057, 0
      %v3089 = vsel %vm1524, %v3058, 0
      %v3092 = vsel %vm1524, %v3059, 0
      %v3095 = vsel %vm1524, %v3060, 0
      %v3098 = vsel %vm1524, %v3061, 0
      %v3101 = vsel %vm1524, %v3062, 0
      %v3104 = vsel %vm1524, %v3063, 0
      %v3107 = vsel %vm1524, %v3064, 0
      %v3110 = vsel %vm1524, %v3065, 0
      %v3113 = vsel %vm1524, %v3066, 0
      %v3116 = vsel %vm1573, %v2986, 0
      %3118 = vmatpush.bf16.msra.mxu0 0
      %3119 = vmatpush.bf16.msra.mxu0 0
      %3120 = vmatpush.bf16.msra.mxu0 0
      %3121 = vmatpush.bf16.msra.mxu0 0
      %3122 = vmatpush.bf16.msra.mxu0 0
      %3123 = vmatpush.bf16.msra.mxu0 0
      %3124 = vmatpush.bf16.msra.mxu0 0
      %3125 = vmatpush.bf16.msra.mxu0 %v3116
      %3126 = vmatmul.bf16.gmra.mxu0 %v3068
      %v3127 = vpop.f32.mrf.mxu0
      %v3128 = vadd.f32 0.0, %v3127
      %v3129 = vpop.f32.mrf.mxu0
      %v3130 = vadd.f32 0.0, %v3129
      %3131 = vmatmul.bf16.gmra.mxu0 %v3071
      %v3132 = vpop.f32.mrf.mxu0
      %v3133 = vadd.f32 0.0, %v3132
      %v3134 = vpop.f32.mrf.mxu0
      %v3135 = vadd.f32 0.0, %v3134
      %3136 = vmatmul.bf16.gmra.mxu0 %v3074
      %v3137 = vpop.f32.mrf.mxu0
      %v3138 = vadd.f32 0.0, %v3137
      %v3139 = vpop.f32.mrf.mxu0
      %v3140 = vadd.f32 0.0, %v3139
      %3141 = vmatmul.bf16.gmra.mxu0 %v3077
      %v3142 = vpop.f32.mrf.mxu0
      %v3143 = vadd.f32 0.0, %v3142
      %v3144 = vpop.f32.mrf.mxu0
      %v3145 = vadd.f32 0.0, %v3144
      %3146 = vmatmul.bf16.gmra.mxu0 %v3080
      %v3147 = vpop.f32.mrf.mxu0
      %v3148 = vadd.f32 0.0, %v3147
      %v3149 = vpop.f32.mrf.mxu0
      %v3150 = vadd.f32 0.0, %v3149
      %3151 = vmatmul.bf16.gmra.mxu0 %v3083
      %v3152 = vpop.f32.mrf.mxu0
      %v3153 = vadd.f32 0.0, %v3152
      %v3154 = vpop.f32.mrf.mxu0
      %v3155 = vadd.f32 0.0, %v3154
      %3156 = vmatmul.bf16.gmra.mxu0 %v3086
      %v3157 = vpop.f32.mrf.mxu0
      %v3158 = vadd.f32 0.0, %v3157
      %v3159 = vpop.f32.mrf.mxu0
      %v3160 = vadd.f32 0.0, %v3159
      %3161 = vmatmul.bf16.gmra.mxu0 %v3089
      %v3162 = vpop.f32.mrf.mxu0
      %v3163 = vadd.f32 0.0, %v3162
      %v3164 = vpop.f32.mrf.mxu0
      %v3165 = vadd.f32 0.0, %v3164
      %3166 = vmatmul.bf16.gmra.mxu0 %v3092
      %v3167 = vpop.f32.mrf.mxu0
      %v3168 = vadd.f32 0.0, %v3167
      %v3169 = vpop.f32.mrf.mxu0
      %v3170 = vadd.f32 0.0, %v3169
      %3171 = vmatmul.bf16.gmra.mxu0 %v3095
      %v3172 = vpop.f32.mrf.mxu0
      %v3173 = vadd.f32 0.0, %v3172
      %v3174 = vpop.f32.mrf.mxu0
      %v3175 = vadd.f32 0.0, %v3174
      %3176 = vmatmul.bf16.gmra.mxu0 %v3098
      %v3177 = vpop.f32.mrf.mxu0
      %v3178 = vadd.f32 0.0, %v3177
      %v3179 = vpop.f32.mrf.mxu0
      %v3180 = vadd.f32 0.0, %v3179
      %3181 = vmatmul.bf16.gmra.mxu0 %v3101
      %v3182 = vpop.f32.mrf.mxu0
      %v3183 = vadd.f32 0.0, %v3182
      %v3184 = vpop.f32.mrf.mxu0
      %v3185 = vadd.f32 0.0, %v3184
      %3186 = vmatmul.bf16.gmra.mxu0 %v3104
      %v3187 = vpop.f32.mrf.mxu0
      %v3188 = vadd.f32 0.0, %v3187
      %v3189 = vpop.f32.mrf.mxu0
      %v3190 = vadd.f32 0.0, %v3189
      %3191 = vmatmul.bf16.gmra.mxu0 %v3107
      %v3192 = vpop.f32.mrf.mxu0
      %v3193 = vadd.f32 0.0, %v3192
      %v3194 = vpop.f32.mrf.mxu0
      %v3195 = vadd.f32 0.0, %v3194
      %3196 = vmatmul.bf16.gmra.mxu0 %v3110
      %v3197 = vpop.f32.mrf.mxu0
      %v3198 = vadd.f32 0.0, %v3197
      %v3199 = vpop.f32.mrf.mxu0
      %v3200 = vadd.f32 0.0, %v3199
      %3201 = vmatmul.bf16.gmra.mxu0 %v3113
      %v3202 = vpop.f32.mrf.mxu0
      %v3203 = vadd.f32 0.0, %v3202
      %v3204 = vpop.f32.mrf.mxu0
      %v3205 = vadd.f32 0.0, %v3204
      %3206 = vdwg.mxu0
      %v3207 = vadd.f32 %v2953, %v3128
      %v3208 = vadd.f32 %v2954, %v3130
      %v3209 = vadd.f32 %v2955, %v3133
      %v3210 = vadd.f32 %v2956, %v3135
      %v3211 = vadd.f32 %v2957, %v3138
      %v3212 = vadd.f32 %v2958, %v3140
      %v3213 = vadd.f32 %v2959, %v3143
      %v3214 = vadd.f32 %v2960, %v3145
      %v3215 = vadd.f32 %v2961, %v3148
      %v3216 = vadd.f32 %v2962, %v3150
      %v3217 = vadd.f32 %v2963, %v3153
      %v3218 = vadd.f32 %v2964, %v3155
      %v3219 = vadd.f32 %v2965, %v3158
      %v3220 = vadd.f32 %v2966, %v3160
      %v3221 = vadd.f32 %v2967, %v3163
      %v3222 = vadd.f32 %v2968, %v3165
      %v3223 = vadd.f32 %v2969, %v3168
      %v3224 = vadd.f32 %v2970, %v3170
      %v3225 = vadd.f32 %v2971, %v3173
      %v3226 = vadd.f32 %v2972, %v3175
      %v3227 = vadd.f32 %v2973, %v3178
      %v3228 = vadd.f32 %v2974, %v3180
      %v3229 = vadd.f32 %v2975, %v3183
      %v3230 = vadd.f32 %v2976, %v3185
      %v3231 = vadd.f32 %v2977, %v3188
      %v3232 = vadd.f32 %v2978, %v3190
      %v3233 = vadd.f32 %v2979, %v3193
      %v3234 = vadd.f32 %v2980, %v3195
      %v3235 = vadd.f32 %v2981, %v3198
      %v3236 = vadd.f32 %v2982, %v3200
      %v3237 = vadd.f32 %v2983, %v3203
      %v3238 = vadd.f32 %v2984, %v3205
      %v3239 = vld [vmem:[#allocation2 + $0x10] sm:$0xf]
      %v3240 = vld [vmem:[#allocation2 + $0x14] sm:$0xf]
      %v3241 = vld [vmem:[#allocation2 + $0x18] sm:$0xf]
      %v3242 = vld [vmem:[#allocation2 + $0x1c] sm:$0xf]
      %v3243 = vld [vmem:[#allocation2 + $0x20] sm:$0xf]
      %v3244 = vld [vmem:[#allocation2 + $0x24] sm:$0xf]
      %v3245 = vld [vmem:[#allocation2 + $0x28] sm:$0xf]
      %v3246 = vld [vmem:[#allocation2 + $0x2c] sm:$0xf]
      %v3247 = vld [vmem:[#allocation2 + $0x30] sm:$0xf]
      %v3248 = vld [vmem:[#allocation2 + $0x34] sm:$0xf]
      %v3249 = vld [vmem:[#allocation2 + $0x38] sm:$0xf]
      %v3250 = vld [vmem:[#allocation2 + $0x3c] sm:$0xf]
      %v3251 = vld [vmem:[#allocation2 + $0x40] sm:$0xf]
      %v3252 = vld [vmem:[#allocation2 + $0x44] sm:$0xf]
      %v3253 = vld [vmem:[#allocation2 + $0x48] sm:$0xf]
      %v3254 = vld [vmem:[#allocation2 + $0x4c] sm:$0xf]
      %v3255 = vld [vmem:[#allocation2 + $0x50] sm:$0xf]
      %v3256 = vld [vmem:[#allocation2 + $0x54] sm:$0xf]
      %v3257 = vld [vmem:[#allocation2 + $0x58] sm:$0xf]
      %v3258 = vld [vmem:[#allocation2 + $0x5c] sm:$0xf]
      %v3259 = vld [vmem:[#allocation2 + $0x60] sm:$0xf]
      %v3260 = vld [vmem:[#allocation2 + $0x64] sm:$0xf]
      %v3261 = vld [vmem:[#allocation2 + $0x68] sm:$0xf]
      %v3262 = vld [vmem:[#allocation2 + $0x6c] sm:$0xf]
      %v3263 = vld [vmem:[#allocation2 + $0x70] sm:$0xf]
      %v3264 = vld [vmem:[#allocation2 + $0x74] sm:$0xf]
      %v3265 = vld [vmem:[#allocation2 + $0x78] sm:$0xf]
      %v3266 = vld [vmem:[#allocation2 + $0x7c] sm:$0xf]
      %v3267 = vld [vmem:[#allocation2 + $0x80] sm:$0xf]
      %v3268 = vld [vmem:[#allocation2 + $0x84] sm:$0xf]
      %v3269 = vld [vmem:[#allocation2 + $0x88] sm:$0xf]
      %v3270 = vld [vmem:[#allocation2 + $0x8c] sm:$0xf]
      %v3271 = vld [vmem:[#allocation2 + $0x90] sm:$0x1]
      %v3272 = vunpack.c.l.bf16 %v3239
      %v3273 = vunpack.c.l.bf16 %v3240
      %v3274 = vunpack.c.l.bf16 %v3241
      %v3275 = vunpack.c.l.bf16 %v3242
      %v3276 = vunpack.c.l.bf16 %v3243
      %v3277 = vunpack.c.l.bf16 %v3244
      %v3278 = vunpack.c.l.bf16 %v3245
      %v3279 = vunpack.c.l.bf16 %v3246
      %v3280 = vunpack.c.l.bf16 %v3247
      %v3281 = vunpack.c.l.bf16 %v3248
      %v3282 = vunpack.c.l.bf16 %v3249
      %v3283 = vunpack.c.l.bf16 %v3250
      %v3284 = vunpack.c.l.bf16 %v3251
      %v3285 = vunpack.c.l.bf16 %v3252
      %v3286 = vunpack.c.l.bf16 %v3253
      %v3287 = vunpack.c.l.bf16 %v3254
      %v3288 = vunpack.c.l.bf16 %v3255
      %v3289 = vunpack.c.l.bf16 %v3256
      %v3290 = vunpack.c.l.bf16 %v3257
      %v3291 = vunpack.c.l.bf16 %v3258
      %v3292 = vunpack.c.l.bf16 %v3259
      %v3293 = vunpack.c.l.bf16 %v3260
      %v3294 = vunpack.c.l.bf16 %v3261
      %v3295 = vunpack.c.l.bf16 %v3262
      %v3296 = vunpack.c.l.bf16 %v3263
      %v3297 = vunpack.c.l.bf16 %v3264
      %v3298 = vunpack.c.l.bf16 %v3265
      %v3299 = vunpack.c.l.bf16 %v3266
      %v3300 = vunpack.c.l.bf16 %v3267
      %v3301 = vunpack.c.l.bf16 %v3268
      %v3302 = vunpack.c.l.bf16 %v3269
      %v3303 = vunpack.c.l.bf16 %v3270
      %v3304 = vunpack.c.l.bf16 %v3271
      %v3305 = vmul.f32 %v3272, %v2090
      %v3306 = vmul.f32 %v3273, %v2092
      %v3307 = vmul.f32 %v3274, %v2094
      %v3308 = vmul.f32 %v3275, %v2096
      %v3309 = vmul.f32 %v3276, %v2098
      %v3310 = vmul.f32 %v3277, %v2100
      %v3311 = vmul.f32 %v3278, %v2102
      %v3312 = vmul.f32 %v3279, %v2104
      %v3313 = vmul.f32 %v3280, %v2106
      %v3314 = vmul.f32 %v3281, %v2108
      %v3315 = vmul.f32 %v3282, %v2110
      %v3316 = vmul.f32 %v3283, %v2112
      %v3317 = vmul.f32 %v3284, %v2114
      %v3318 = vmul.f32 %v3285, %v2116
      %v3319 = vmul.f32 %v3286, %v2118
      %v3320 = vmul.f32 %v3287, %v2120
      %v3321 = vmul.f32 %v3288, %v2122
      %v3322 = vmul.f32 %v3289, %v2124
      %v3323 = vmul.f32 %v3290, %v2126
      %v3324 = vmul.f32 %v3291, %v2128
      %v3325 = vmul.f32 %v3292, %v2130
      %v3326 = vmul.f32 %v3293, %v2132
      %v3327 = vmul.f32 %v3294, %v2134
      %v3328 = vmul.f32 %v3295, %v2136
      %v3329 = vmul.f32 %v3296, %v2138
      %v3330 = vmul.f32 %v3297, %v2140
      %v3331 = vmul.f32 %v3298, %v2142
      %v3332 = vmul.f32 %v3299, %v2144
      %v3333 = vmul.f32 %v3300, %v2146
      %v3334 = vmul.f32 %v3301, %v2148
      %v3335 = vmul.f32 %v3302, %v2150
      %v3336 = vmul.f32 %v3303, %v2152
      %v3337 = vmul.f32 %v3304, %v2151
      %v3338 = vpack.c.bf16 %v3306, %v3305
      %v3339 = vpack.c.bf16 %v3308, %v3307
      %v3340 = vpack.c.bf16 %v3310, %v3309
      %v3341 = vpack.c.bf16 %v3312, %v3311
      %v3342 = vpack.c.bf16 %v3314, %v3313
      %v3343 = vpack.c.bf16 %v3316, %v3315
      %v3344 = vpack.c.bf16 %v3318, %v3317
      %v3345 = vpack.c.bf16 %v3320, %v3319
      %v3346 = vpack.c.bf16 %v3322, %v3321
      %v3347 = vpack.c.bf16 %v3324, %v3323
      %v3348 = vpack.c.bf16 %v3326, %v3325
      %v3349 = vpack.c.bf16 %v3328, %v3327
      %v3350 = vpack.c.bf16 %v3330, %v3329
      %v3351 = vpack.c.bf16 %v3332, %v3331
      %v3352 = vpack.c.bf16 %v3334, %v3333
      %v3353 = vpack.c.bf16 %v3336, %v3335
      %v3354 = vpack.c.bf16 %v3337, %v3337
      %s3355 = scalar_lea.vmem %s1, 20
      %v3356 = vld [vmem:[%s3355] sm:$0x7]
      %v3358 = vshrl.u32 %v3338, 16
      %v3360 = vshll.u32 %v3338, 16
      %v3362 = vrot.slane %v3360, 1
      %v3363 = vor.u32 %v3358, %v3362
      %v3365 = vshll.u32 %v3339, 16
      %v3367 = vrot.slane %v3365, 1
      %v3368 = vsel %vm2238, %v3363, %v3367
      %v3369 = vshrl.u32 %v3339, 16
      %v3371 = vor.u32 %v3369, %v3367
      %v3373 = vshll.u32 %v3340, 16
      %v3375 = vrot.slane %v3373, 1
      %v3376 = vsel %vm2238, %v3371, %v3375
      %v3377 = vshrl.u32 %v3340, 16
      %v3379 = vor.u32 %v3377, %v3375
      %v3381 = vshll.u32 %v3341, 16
      %v3383 = vrot.slane %v3381, 1
      %v3384 = vsel %vm2238, %v3379, %v3383
      %v3385 = vshrl.u32 %v3341, 16
      %v3387 = vor.u32 %v3385, %v3383
      %v3389 = vshll.u32 %v3342, 16
      %v3391 = vrot.slane %v3389, 1
      %v3392 = vsel %vm2238, %v3387, %v3391
      %v3393 = vshrl.u32 %v3342, 16
      %v3395 = vor.u32 %v3393, %v3391
      %v3397 = vshll.u32 %v3343, 16
      %v3399 = vrot.slane %v3397, 1
      %v3400 = vsel %vm2238, %v3395, %v3399
      %v3401 = vshrl.u32 %v3343, 16
      %v3403 = vor.u32 %v3401, %v3399
      %v3405 = vshll.u32 %v3344, 16
      %v3407 = vrot.slane %v3405, 1
      %v3408 = vsel %vm2238, %v3403, %v3407
      %v3409 = vshrl.u32 %v3344, 16
      %v3411 = vor.u32 %v3409, %v3407
      %v3413 = vshll.u32 %v3345, 16
      %v3415 = vrot.slane %v3413, 1
      %v3416 = vsel %vm2238, %v3411, %v3415
      %v3417 = vshrl.u32 %v3345, 16
      %v3419 = vor.u32 %v3417, %v3415
      %v3421 = vshll.u32 %v3346, 16
      %v3423 = vrot.slane %v3421, 1
      %v3424 = vsel %vm2238, %v3419, %v3423
      %v3425 = vshrl.u32 %v3346, 16
      %v3427 = vor.u32 %v3425, %v3423
      %v3429 = vshll.u32 %v3347, 16
      %v3431 = vrot.slane %v3429, 1
      %v3432 = vsel %vm2238, %v3427, %v3431
      %v3433 = vshrl.u32 %v3347, 16
      %v3435 = vor.u32 %v3433, %v3431
      %v3437 = vshll.u32 %v3348, 16
      %v3439 = vrot.slane %v3437, 1
      %v3440 = vsel %vm2238, %v3435, %v3439
      %v3441 = vshrl.u32 %v3348, 16
      %v3443 = vor.u32 %v3441, %v3439
      %v3445 = vshll.u32 %v3349, 16
      %v3447 = vrot.slane %v3445, 1
      %v3448 = vsel %vm2238, %v3443, %v3447
      %v3449 = vshrl.u32 %v3349, 16
      %v3451 = vor.u32 %v3449, %v3447
      %v3453 = vshll.u32 %v3350, 16
      %v3455 = vrot.slane %v3453, 1
      %v3456 = vsel %vm2238, %v3451, %v3455
      %v3457 = vshrl.u32 %v3350, 16
      %v3459 = vor.u32 %v3457, %v3455
      %v3461 = vshll.u32 %v3351, 16
      %v3463 = vrot.slane %v3461, 1
      %v3464 = vsel %vm2238, %v3459, %v3463
      %v3465 = vshrl.u32 %v3351, 16
      %v3467 = vor.u32 %v3465, %v3463
      %v3469 = vshll.u32 %v3352, 16
      %v3471 = vrot.slane %v3469, 1
      %v3472 = vsel %vm2238, %v3467, %v3471
      %v3473 = vshrl.u32 %v3352, 16
      %v3475 = vor.u32 %v3473, %v3471
      %v3477 = vshll.u32 %v3353, 16
      %v3479 = vrot.slane %v3477, 1
      %v3480 = vsel %vm2238, %v3475, %v3479
      %v3481 = vshrl.u32 %v3353, 16
      %v3483 = vor.u32 %v3481, %v3479
      %v3485 = vshll.u32 %v3354, 16
      %v3487 = vrot.slane %v3485, 1
      %v3488 = vsel %vm2238, %v3483, %v3487
      %v3490 = vsel %vm1524, %v3368, 0
      %v3493 = vsel %vm1524, %v3376, 0
      %v3496 = vsel %vm1524, %v3384, 0
      %v3499 = vsel %vm1524, %v3392, 0
      %v3502 = vsel %vm1524, %v3400, 0
      %v3505 = vsel %vm1524, %v3408, 0
      %v3508 = vsel %vm1524, %v3416, 0
      %v3511 = vsel %vm1524, %v3424, 0
      %v3514 = vsel %vm1524, %v3432, 0
      %v3517 = vsel %vm1524, %v3440, 0
      %v3520 = vsel %vm1524, %v3448, 0
      %v3523 = vsel %vm1524, %v3456, 0
      %v3526 = vsel %vm1524, %v3464, 0
      %v3529 = vsel %vm1524, %v3472, 0
      %v3532 = vsel %vm1524, %v3480, 0
      %v3535 = vsel %vm1524, %v3488, 0
      %v3538 = vsel %vm1573, %v3356, 0
      %3540 = vmatpush.bf16.msra.mxu0 0
      %3541 = vmatpush.bf16.msra.mxu0 0
      %3542 = vmatpush.bf16.msra.mxu0 0
      %3543 = vmatpush.bf16.msra.mxu0 0
      %3544 = vmatpush.bf16.msra.mxu0 0
      %3545 = vmatpush.bf16.msra.mxu0 0
      %3546 = vmatpush.bf16.msra.mxu0 0
      %3547 = vmatpush.bf16.msra.mxu0 %v3538
      %3548 = vmatmul.bf16.gmra.mxu0 %v3490
      %v3549 = vpop.f32.mrf.mxu0
      %v3550 = vadd.f32 0.0, %v3549
      %v3551 = vpop.f32.mrf.mxu0
      %v3552 = vadd.f32 0.0, %v3551
      %3553 = vmatmul.bf16.gmra.mxu0 %v3493
      %v3554 = vpop.f32.mrf.mxu0
      %v3555 = vadd.f32 0.0, %v3554
      %v3556 = vpop.f32.mrf.mxu0
      %v3557 = vadd.f32 0.0, %v3556
      %3558 = vmatmul.bf16.gmra.mxu0 %v3496
      %v3559 = vpop.f32.mrf.mxu0
      %v3560 = vadd.f32 0.0, %v3559
      %v3561 = vpop.f32.mrf.mxu0
      %v3562 = vadd.f32 0.0, %v3561
      %3563 = vmatmul.bf16.gmra.mxu0 %v3499
      %v3564 = vpop.f32.mrf.mxu0
      %v3565 = vadd.f32 0.0, %v3564
      %v3566 = vpop.f32.mrf.mxu0
      %v3567 = vadd.f32 0.0, %v3566
      %3568 = vmatmul.bf16.gmra.mxu0 %v3502
      %v3569 = vpop.f32.mrf.mxu0
      %v3570 = vadd.f32 0.0, %v3569
      %v3571 = vpop.f32.mrf.mxu0
      %v3572 = vadd.f32 0.0, %v3571
      %3573 = vmatmul.bf16.gmra.mxu0 %v3505
      %v3574 = vpop.f32.mrf.mxu0
      %v3575 = vadd.f32 0.0, %v3574
      %v3576 = vpop.f32.mrf.mxu0
      %v3577 = vadd.f32 0.0, %v3576
      %3578 = vmatmul.bf16.gmra.mxu0 %v3508
      %v3579 = vpop.f32.mrf.mxu0
      %v3580 = vadd.f32 0.0, %v3579
      %v3581 = vpop.f32.mrf.mxu0
      %v3582 = vadd.f32 0.0, %v3581
      %3583 = vmatmul.bf16.gmra.mxu0 %v3511
      %v3584 = vpop.f32.mrf.mxu0
      %v3585 = vadd.f32 0.0, %v3584
      %v3586 = vpop.f32.mrf.mxu0
      %v3587 = vadd.f32 0.0, %v3586
      %3588 = vmatmul.bf16.gmra.mxu0 %v3514
      %v3589 = vpop.f32.mrf.mxu0
      %v3590 = vadd.f32 0.0, %v3589
      %v3591 = vpop.f32.mrf.mxu0
      %v3592 = vadd.f32 0.0, %v3591
      %3593 = vmatmul.bf16.gmra.mxu0 %v3517
      %v3594 = vpop.f32.mrf.mxu0
      %v3595 = vadd.f32 0.0, %v3594
      %v3596 = vpop.f32.mrf.mxu0
      %v3597 = vadd.f32 0.0, %v3596
      %3598 = vmatmul.bf16.gmra.mxu0 %v3520
      %v3599 = vpop.f32.mrf.mxu0
      %v3600 = vadd.f32 0.0, %v3599
      %v3601 = vpop.f32.mrf.mxu0
      %v3602 = vadd.f32 0.0, %v3601
      %3603 = vmatmul.bf16.gmra.mxu0 %v3523
      %v3604 = vpop.f32.mrf.mxu0
      %v3605 = vadd.f32 0.0, %v3604
      %v3606 = vpop.f32.mrf.mxu0
      %v3607 = vadd.f32 0.0, %v3606
      %3608 = vmatmul.bf16.gmra.mxu0 %v3526
      %v3609 = vpop.f32.mrf.mxu0
      %v3610 = vadd.f32 0.0, %v3609
      %v3611 = vpop.f32.mrf.mxu0
      %v3612 = vadd.f32 0.0, %v3611
      %3613 = vmatmul.bf16.gmra.mxu0 %v3529
      %v3614 = vpop.f32.mrf.mxu0
      %v3615 = vadd.f32 0.0, %v3614
      %v3616 = vpop.f32.mrf.mxu0
      %v3617 = vadd.f32 0.0, %v3616
      %3618 = vmatmul.bf16.gmra.mxu0 %v3532
      %v3619 = vpop.f32.mrf.mxu0
      %v3620 = vadd.f32 0.0, %v3619
      %v3621 = vpop.f32.mrf.mxu0
      %v3622 = vadd.f32 0.0, %v3621
      %3623 = vmatmul.bf16.gmra.mxu0 %v3535
      %v3624 = vpop.f32.mrf.mxu0
      %v3625 = vadd.f32 0.0, %v3624
      %v3626 = vpop.f32.mrf.mxu0
      %v3627 = vadd.f32 0.0, %v3626
      %3628 = vdwg.mxu0
      %v3629 = vadd.f32 %v3207, %v3550
      %v3630 = vadd.f32 %v3208, %v3552
      %v3631 = vadd.f32 %v3209, %v3555
      %v3632 = vadd.f32 %v3210, %v3557
      %v3633 = vadd.f32 %v3211, %v3560
      %v3634 = vadd.f32 %v3212, %v3562
      %v3635 = vadd.f32 %v3213, %v3565
      %v3636 = vadd.f32 %v3214, %v3567
      %v3637 = vadd.f32 %v3215, %v3570
      %v3638 = vadd.f32 %v3216, %v3572
      %v3639 = vadd.f32 %v3217, %v3575
      %v3640 = vadd.f32 %v3218, %v3577
      %v3641 = vadd.f32 %v3219, %v3580
      %v3642 = vadd.f32 %v3220, %v3582
      %v3643 = vadd.f32 %v3221, %v3585
      %v3644 = vadd.f32 %v3222, %v3587
      %v3645 = vadd.f32 %v3223, %v3590
      %v3646 = vadd.f32 %v3224, %v3592
      %v3647 = vadd.f32 %v3225, %v3595
      %v3648 = vadd.f32 %v3226, %v3597
      %v3649 = vadd.f32 %v3227, %v3600
      %v3650 = vadd.f32 %v3228, %v3602
      %v3651 = vadd.f32 %v3229, %v3605
      %v3652 = vadd.f32 %v3230, %v3607
      %v3653 = vadd.f32 %v3231, %v3610
      %v3654 = vadd.f32 %v3232, %v3612
      %v3655 = vadd.f32 %v3233, %v3615
      %v3656 = vadd.f32 %v3234, %v3617
      %v3657 = vadd.f32 %v3235, %v3620
      %v3658 = vadd.f32 %v3236, %v3622
      %v3659 = vadd.f32 %v3237, %v3625
      %v3660 = vadd.f32 %v3238, %v3627
      %v3661 = vld [vmem:[#allocation2 + $0x14] sm:$0x8]
      %v3662 = vld [vmem:[#allocation2 + $0x18] sm:$0xf]
      %v3663 = vld [vmem:[#allocation2 + $0x1c] sm:$0xf]
      %v3664 = vld [vmem:[#allocation2 + $0x20] sm:$0xf]
      %v3665 = vld [vmem:[#allocation2 + $0x24] sm:$0xf]
      %v3666 = vld [vmem:[#allocation2 + $0x28] sm:$0xf]
      %v3667 = vld [vmem:[#allocation2 + $0x2c] sm:$0xf]
      %v3668 = vld [vmem:[#allocation2 + $0x30] sm:$0xf]
      %v3669 = vld [vmem:[#allocation2 + $0x34] sm:$0xf]
      %v3670 = vld [vmem:[#allocation2 + $0x38] sm:$0xf]
      %v3671 = vld [vmem:[#allocation2 + $0x3c] sm:$0xf]
      %v3672 = vld [vmem:[#allocation2 + $0x40] sm:$0xf]
      %v3673 = vld [vmem:[#allocation2 + $0x44] sm:$0xf]
      %v3674 = vld [vmem:[#allocation2 + $0x48] sm:$0xf]
      %v3675 = vld [vmem:[#allocation2 + $0x4c] sm:$0xf]
      %v3676 = vld [vmem:[#allocation2 + $0x50] sm:$0xf]
      %v3677 = vld [vmem:[#allocation2 + $0x54] sm:$0xf]
      %v3678 = vld [vmem:[#allocation2 + $0x58] sm:$0xf]
      %v3679 = vld [vmem:[#allocation2 + $0x5c] sm:$0xf]
      %v3680 = vld [vmem:[#allocation2 + $0x60] sm:$0xf]
      %v3681 = vld [vmem:[#allocation2 + $0x64] sm:$0xf]
      %v3682 = vld [vmem:[#allocation2 + $0x68] sm:$0xf]
      %v3683 = vld [vmem:[#allocation2 + $0x6c] sm:$0xf]
      %v3684 = vld [vmem:[#allocation2 + $0x70] sm:$0xf]
      %v3685 = vld [vmem:[#allocation2 + $0x74] sm:$0xf]
      %v3686 = vld [vmem:[#allocation2 + $0x78] sm:$0xf]
      %v3687 = vld [vmem:[#allocation2 + $0x7c] sm:$0xf]
      %v3688 = vld [vmem:[#allocation2 + $0x80] sm:$0xf]
      %v3689 = vld [vmem:[#allocation2 + $0x84] sm:$0xf]
      %v3690 = vld [vmem:[#allocation2 + $0x88] sm:$0xf]
      %v3691 = vld [vmem:[#allocation2 + $0x8c] sm:$0xf]
      %v3692 = vld [vmem:[#allocation2 + $0x90] sm:$0xf]
      %v3693 = vld [vmem:[#allocation2 + $0x94] sm:$0xf]
      %v3694 = vunpack.c.l.bf16 %v3661
      %v3695 = vunpack.c.l.bf16 %v3662
      %v3696 = vunpack.c.l.bf16 %v3663
      %v3697 = vunpack.c.l.bf16 %v3664
      %v3698 = vunpack.c.l.bf16 %v3665
      %v3699 = vunpack.c.l.bf16 %v3666
      %v3700 = vunpack.c.l.bf16 %v3667
      %v3701 = vunpack.c.l.bf16 %v3668
      %v3702 = vunpack.c.l.bf16 %v3669
      %v3703 = vunpack.c.l.bf16 %v3670
      %v3704 = vunpack.c.l.bf16 %v3671
      %v3705 = vunpack.c.l.bf16 %v3672
      %v3706 = vunpack.c.l.bf16 %v3673
      %v3707 = vunpack.c.l.bf16 %v3674
      %v3708 = vunpack.c.l.bf16 %v3675
      %v3709 = vunpack.c.l.bf16 %v3676
      %v3710 = vunpack.c.l.bf16 %v3677
      %v3711 = vunpack.c.l.bf16 %v3678
      %v3712 = vunpack.c.l.bf16 %v3679
      %v3713 = vunpack.c.l.bf16 %v3680
      %v3714 = vunpack.c.l.bf16 %v3681
      %v3715 = vunpack.c.l.bf16 %v3682
      %v3716 = vunpack.c.l.bf16 %v3683
      %v3717 = vunpack.c.l.bf16 %v3684
      %v3718 = vunpack.c.l.bf16 %v3685
      %v3719 = vunpack.c.l.bf16 %v3686
      %v3720 = vunpack.c.l.bf16 %v3687
      %v3721 = vunpack.c.l.bf16 %v3688
      %v3722 = vunpack.c.l.bf16 %v3689
      %v3723 = vunpack.c.l.bf16 %v3690
      %v3724 = vunpack.c.l.bf16 %v3691
      %v3725 = vunpack.c.l.bf16 %v3692
      %v3726 = vunpack.c.l.bf16 %v3693
      %v3727 = vmul.f32 %v3694, %v1295
      %v3728 = vmul.f32 %v3695, %v1297
      %v3729 = vmul.f32 %v3696, %v1299
      %v3730 = vmul.f32 %v3697, %v1301
      %v3731 = vmul.f32 %v3698, %v1303
      %v3732 = vmul.f32 %v3699, %v1305
      %v3733 = vmul.f32 %v3700, %v1307
      %v3734 = vmul.f32 %v3701, %v1309
      %v3735 = vmul.f32 %v3702, %v1311
      %v3736 = vmul.f32 %v3703, %v1313
      %v3737 = vmul.f32 %v3704, %v1315
      %v3738 = vmul.f32 %v3705, %v1317
      %v3739 = vmul.f32 %v3706, %v1319
      %v3740 = vmul.f32 %v3707, %v1321
      %v3741 = vmul.f32 %v3708, %v1323
      %v3742 = vmul.f32 %v3709, %v1325
      %v3743 = vmul.f32 %v3710, %v1327
      %v3744 = vmul.f32 %v3711, %v1329
      %v3745 = vmul.f32 %v3712, %v1331
      %v3746 = vmul.f32 %v3713, %v1333
      %v3747 = vmul.f32 %v3714, %v1335
      %v3748 = vmul.f32 %v3715, %v1337
      %v3749 = vmul.f32 %v3716, %v1339
      %v3750 = vmul.f32 %v3717, %v1341
      %v3751 = vmul.f32 %v3718, %v1343
      %v3752 = vmul.f32 %v3719, %v1345
      %v3753 = vmul.f32 %v3720, %v1347
      %v3754 = vmul.f32 %v3721, %v1349
      %v3755 = vmul.f32 %v3722, %v1351
      %v3756 = vmul.f32 %v3723, %v1353
      %v3757 = vmul.f32 %v3724, %v1355
      %v3758 = vmul.f32 %v3725, %v1357
      %v3759 = vmul.f32 %v3726, %v1356
      %v3760 = vpack.c.bf16 %v3728, %v3727
      %v3761 = vpack.c.bf16 %v3730, %v3729
      %v3762 = vpack.c.bf16 %v3732, %v3731
      %v3763 = vpack.c.bf16 %v3734, %v3733
      %v3764 = vpack.c.bf16 %v3736, %v3735
      %v3765 = vpack.c.bf16 %v3738, %v3737
      %v3766 = vpack.c.bf16 %v3740, %v3739
      %v3767 = vpack.c.bf16 %v3742, %v3741
      %v3768 = vpack.c.bf16 %v3744, %v3743
      %v3769 = vpack.c.bf16 %v3746, %v3745
      %v3770 = vpack.c.bf16 %v3748, %v3747
      %v3771 = vpack.c.bf16 %v3750, %v3749
      %v3772 = vpack.c.bf16 %v3752, %v3751
      %v3773 = vpack.c.bf16 %v3754, %v3753
      %v3774 = vpack.c.bf16 %v3756, %v3755
      %v3775 = vpack.c.bf16 %v3758, %v3757
      %v3776 = vpack.c.bf16 %v3759, %v3759
      %s3777 = scalar_lea.vmem %s1, 24
      %v3778 = vld [vmem:[%s3777] sm:$0x7]
      %v3780 = vshrl.u32 %v3760, 16
      %v3782 = vrot.slane %v3780, 3
      %v3783 = vshll.u32 %v3760, 16
      %v3785 = vrot.slane %v3783, 4
      %v3786 = vor.u32 %v3782, %v3785
      %v3788 = vshrl.u32 %v3761, 16
      %v3790 = vrot.slane %v3788, 3
      %v3791 = vshll.u32 %v3761, 16
      %v3793 = vrot.slane %v3791, 4
      %v3794 = vor.u32 %v3790, %v3793
      %v3795 = vsel %vm1666, %v3786, %v3794
      %v3797 = vshrl.u32 %v3762, 16
      %v3799 = vrot.slane %v3797, 3
      %v3800 = vshll.u32 %v3762, 16
      %v3802 = vrot.slane %v3800, 4
      %v3803 = vor.u32 %v3799, %v3802
      %v3804 = vsel %vm1666, %v3794, %v3803
      %v3806 = vshrl.u32 %v3763, 16
      %v3808 = vrot.slane %v3806, 3
      %v3809 = vshll.u32 %v3763, 16
      %v3811 = vrot.slane %v3809, 4
      %v3812 = vor.u32 %v3808, %v3811
      %v3813 = vsel %vm1666, %v3803, %v3812
      %v3815 = vshrl.u32 %v3764, 16
      %v3817 = vrot.slane %v3815, 3
      %v3818 = vshll.u32 %v3764, 16
      %v3820 = vrot.slane %v3818, 4
      %v3821 = vor.u32 %v3817, %v3820
      %v3822 = vsel %vm1666, %v3812, %v3821
      %v3824 = vshrl.u32 %v3765, 16
      %v3826 = vrot.slane %v3824, 3
      %v3827 = vshll.u32 %v3765, 16
      %v3829 = vrot.slane %v3827, 4
      %v3830 = vor.u32 %v3826, %v3829
      %v3831 = vsel %vm1666, %v3821, %v3830
      %v3833 = vshrl.u32 %v3766, 16
      %v3835 = vrot.slane %v3833, 3
      %v3836 = vshll.u32 %v3766, 16
      %v3838 = vrot.slane %v3836, 4
      %v3839 = vor.u32 %v3835, %v3838
      %v3840 = vsel %vm1666, %v3830, %v3839
      %v3842 = vshrl.u32 %v3767, 16
      %v3844 = vrot.slane %v3842, 3
      %v3845 = vshll.u32 %v3767, 16
      %v3847 = vrot.slane %v3845, 4
      %v3848 = vor.u32 %v3844, %v3847
      %v3849 = vsel %vm1666, %v3839, %v3848
      %v3851 = vshrl.u32 %v3768, 16
      %v3853 = vrot.slane %v3851, 3
      %v3854 = vshll.u32 %v3768, 16
      %v3856 = vrot.slane %v3854, 4
      %v3857 = vor.u32 %v3853, %v3856
      %v3858 = vsel %vm1666, %v3848, %v3857
      %v3860 = vshrl.u32 %v3769, 16
      %v3862 = vrot.slane %v3860, 3
      %v3863 = vshll.u32 %v3769, 16
      %v3865 = vrot.slane %v3863, 4
      %v3866 = vor.u32 %v3862, %v3865
      %v3867 = vsel %vm1666, %v3857, %v3866
      %v3869 = vshrl.u32 %v3770, 16
      %v3871 = vrot.slane %v3869, 3
      %v3872 = vshll.u32 %v3770, 16
      %v3874 = vrot.slane %v3872, 4
      %v3875 = vor.u32 %v3871, %v3874
      %v3876 = vsel %vm1666, %v3866, %v3875
      %v3878 = vshrl.u32 %v3771, 16
      %v3880 = vrot.slane %v3878, 3
      %v3881 = vshll.u32 %v3771, 16
      %v3883 = vrot.slane %v3881, 4
      %v3884 = vor.u32 %v3880, %v3883
      %v3885 = vsel %vm1666, %v3875, %v3884
      %v3887 = vshrl.u32 %v3772, 16
      %v3889 = vrot.slane %v3887, 3
      %v3890 = vshll.u32 %v3772, 16
      %v3892 = vrot.slane %v3890, 4
      %v3893 = vor.u32 %v3889, %v3892
      %v3894 = vsel %vm1666, %v3884, %v3893
      %v3896 = vshrl.u32 %v3773, 16
      %v3898 = vrot.slane %v3896, 3
      %v3899 = vshll.u32 %v3773, 16
      %v3901 = vrot.slane %v3899, 4
      %v3902 = vor.u32 %v3898, %v3901
      %v3903 = vsel %vm1666, %v3893, %v3902
      %v3905 = vshrl.u32 %v3774, 16
      %v3907 = vrot.slane %v3905, 3
      %v3908 = vshll.u32 %v3774, 16
      %v3910 = vrot.slane %v3908, 4
      %v3911 = vor.u32 %v3907, %v3910
      %v3912 = vsel %vm1666, %v3902, %v3911
      %v3914 = vshrl.u32 %v3775, 16
      %v3916 = vrot.slane %v3914, 3
      %v3917 = vshll.u32 %v3775, 16
      %v3919 = vrot.slane %v3917, 4
      %v3920 = vor.u32 %v3916, %v3919
      %v3921 = vsel %vm1666, %v3911, %v3920
      %v3923 = vshrl.u32 %v3776, 16
      %v3925 = vrot.slane %v3923, 3
      %v3926 = vshll.u32 %v3776, 16
      %v3928 = vrot.slane %v3926, 4
      %v3929 = vor.u32 %v3925, %v3928
      %v3930 = vsel %vm1666, %v3920, %v3929
      %v3932 = vsel %vm1524, %v3795, 0
      %v3935 = vsel %vm1524, %v3804, 0
      %v3938 = vsel %vm1524, %v3813, 0
      %v3941 = vsel %vm1524, %v3822, 0
      %v3944 = vsel %vm1524, %v3831, 0
      %v3947 = vsel %vm1524, %v3840, 0
      %v3950 = vsel %vm1524, %v3849, 0
      %v3953 = vsel %vm1524, %v3858, 0
      %v3956 = vsel %vm1524, %v3867, 0
      %v3959 = vsel %vm1524, %v3876, 0
      %v3962 = vsel %vm1524, %v3885, 0
      %v3965 = vsel %vm1524, %v3894, 0
      %v3968 = vsel %vm1524, %v3903, 0
      %v3971 = vsel %vm1524, %v3912, 0
      %v3974 = vsel %vm1524, %v3921, 0
      %v3977 = vsel %vm1524, %v3930, 0
      %v3980 = vsel %vm1573, %v3778, 0
      %3982 = vmatpush.bf16.msra.mxu0 0
      %3983 = vmatpush.bf16.msra.mxu0 0
      %3984 = vmatpush.bf16.msra.mxu0 0
      %3985 = vmatpush.bf16.msra.mxu0 0
      %3986 = vmatpush.bf16.msra.mxu0 0
      %3987 = vmatpush.bf16.msra.mxu0 0
      %3988 = vmatpush.bf16.msra.mxu0 0
      %3989 = vmatpush.bf16.msra.mxu0 %v3980
      %3990 = vmatmul.bf16.gmra.mxu0 %v3932
      %v3991 = vpop.f32.mrf.mxu0
      %v3992 = vadd.f32 0.0, %v3991
      %v3993 = vpop.f32.mrf.mxu0
      %v3994 = vadd.f32 0.0, %v3993
      %3995 = vmatmul.bf16.gmra.mxu0 %v3935
      %v3996 = vpop.f32.mrf.mxu0
      %v3997 = vadd.f32 0.0, %v3996
      %v3998 = vpop.f32.mrf.mxu0
      %v3999 = vadd.f32 0.0, %v3998
      %4000 = vmatmul.bf16.gmra.mxu0 %v3938
      %v4001 = vpop.f32.mrf.mxu0
      %v4002 = vadd.f32 0.0, %v4001
      %v4003 = vpop.f32.mrf.mxu0
      %v4004 = vadd.f32 0.0, %v4003
      %4005 = vmatmul.bf16.gmra.mxu0 %v3941
      %v4006 = vpop.f32.mrf.mxu0
      %v4007 = vadd.f32 0.0, %v4006
      %v4008 = vpop.f32.mrf.mxu0
      %v4009 = vadd.f32 0.0, %v4008
      %4010 = vmatmul.bf16.gmra.mxu0 %v3944
      %v4011 = vpop.f32.mrf.mxu0
      %v4012 = vadd.f32 0.0, %v4011
      %v4013 = vpop.f32.mrf.mxu0
      %v4014 = vadd.f32 0.0, %v4013
      %4015 = vmatmul.bf16.gmra.mxu0 %v3947
      %v4016 = vpop.f32.mrf.mxu0
      %v4017 = vadd.f32 0.0, %v4016
      %v4018 = vpop.f32.mrf.mxu0
      %v4019 = vadd.f32 0.0, %v4018
      %4020 = vmatmul.bf16.gmra.mxu0 %v3950
      %v4021 = vpop.f32.mrf.mxu0
      %v4022 = vadd.f32 0.0, %v4021
      %v4023 = vpop.f32.mrf.mxu0
      %v4024 = vadd.f32 0.0, %v4023
      %4025 = vmatmul.bf16.gmra.mxu0 %v3953
      %v4026 = vpop.f32.mrf.mxu0
      %v4027 = vadd.f32 0.0, %v4026
      %v4028 = vpop.f32.mrf.mxu0
      %v4029 = vadd.f32 0.0, %v4028
      %4030 = vmatmul.bf16.gmra.mxu0 %v3956
      %v4031 = vpop.f32.mrf.mxu0
      %v4032 = vadd.f32 0.0, %v4031
      %v4033 = vpop.f32.mrf.mxu0
      %v4034 = vadd.f32 0.0, %v4033
      %4035 = vmatmul.bf16.gmra.mxu0 %v3959
      %v4036 = vpop.f32.mrf.mxu0
      %v4037 = vadd.f32 0.0, %v4036
      %v4038 = vpop.f32.mrf.mxu0
      %v4039 = vadd.f32 0.0, %v4038
      %4040 = vmatmul.bf16.gmra.mxu0 %v3962
      %v4041 = vpop.f32.mrf.mxu0
      %v4042 = vadd.f32 0.0, %v4041
      %v4043 = vpop.f32.mrf.mxu0
      %v4044 = vadd.f32 0.0, %v4043
      %4045 = vmatmul.bf16.gmra.mxu0 %v3965
      %v4046 = vpop.f32.mrf.mxu0
      %v4047 = vadd.f32 0.0, %v4046
      %v4048 = vpop.f32.mrf.mxu0
      %v4049 = vadd.f32 0.0, %v4048
      %4050 = vmatmul.bf16.gmra.mxu0 %v3968
      %v4051 = vpop.f32.mrf.mxu0
      %v4052 = vadd.f32 0.0, %v4051
      %v4053 = vpop.f32.mrf.mxu0
      %v4054 = vadd.f32 0.0, %v4053
      %4055 = vmatmul.bf16.gmra.mxu0 %v3971
      %v4056 = vpop.f32.mrf.mxu0
      %v4057 = vadd.f32 0.0, %v4056
      %v4058 = vpop.f32.mrf.mxu0
      %v4059 = vadd.f32 0.0, %v4058
      %4060 = vmatmul.bf16.gmra.mxu0 %v3974
      %v4061 = vpop.f32.mrf.mxu0
      %v4062 = vadd.f32 0.0, %v4061
      %v4063 = vpop.f32.mrf.mxu0
      %v4064 = vadd.f32 0.0, %v4063
      %4065 = vmatmul.bf16.gmra.mxu0 %v3977
      %v4066 = vpop.f32.mrf.mxu0
      %v4067 = vadd.f32 0.0, %v4066
      %v4068 = vpop.f32.mrf.mxu0
      %v4069 = vadd.f32 0.0, %v4068
      %4070 = vdwg.mxu0
      %v4071 = vadd.f32 %v3629, %v3992
      %v4072 = vadd.f32 %v3630, %v3994
      %v4073 = vadd.f32 %v3631, %v3997
      %v4074 = vadd.f32 %v3632, %v3999
      %v4075 = vadd.f32 %v3633, %v4002
      %v4076 = vadd.f32 %v3634, %v4004
      %v4077 = vadd.f32 %v3635, %v4007
      %v4078 = vadd.f32 %v3636, %v4009
      %v4079 = vadd.f32 %v3637, %v4012
      %v4080 = vadd.f32 %v3638, %v4014
      %v4081 = vadd.f32 %v3639, %v4017
      %v4082 = vadd.f32 %v3640, %v4019
      %v4083 = vadd.f32 %v3641, %v4022
      %v4084 = vadd.f32 %v3642, %v4024
      %v4085 = vadd.f32 %v3643, %v4027
      %v4086 = vadd.f32 %v3644, %v4029
      %v4087 = vadd.f32 %v3645, %v4032
      %v4088 = vadd.f32 %v3646, %v4034
      %v4089 = vadd.f32 %v3647, %v4037
      %v4090 = vadd.f32 %v3648, %v4039
      %v4091 = vadd.f32 %v3649, %v4042
      %v4092 = vadd.f32 %v3650, %v4044
      %v4093 = vadd.f32 %v3651, %v4047
      %v4094 = vadd.f32 %v3652, %v4049
      %v4095 = vadd.f32 %v3653, %v4052
      %v4096 = vadd.f32 %v3654, %v4054
      %v4097 = vadd.f32 %v3655, %v4057
      %v4098 = vadd.f32 %v3656, %v4059
      %v4099 = vadd.f32 %v3657, %v4062
      %v4100 = vadd.f32 %v3658, %v4064
      %v4101 = vadd.f32 %v3659, %v4067
      %v4102 = vadd.f32 %v3660, %v4069
      %s4103 = scalar_lea.vmem %s1, 28
      %v4104 = vld [vmem:[%s4103] sm:$0x7]
      %v4137 = vunpack.c.l.b16 %v3662
      %v4138 = vunpack.c.l.b16 %v3663
      %v4139 = vunpack.c.l.b16 %v3664
      %v4140 = vunpack.c.l.b16 %v3665
      %v4141 = vunpack.c.l.b16 %v3666
      %v4142 = vunpack.c.l.b16 %v3667
      %v4143 = vunpack.c.l.b16 %v3668
      %v4144 = vunpack.c.l.b16 %v3669
      %v4145 = vunpack.c.l.b16 %v3670
      %v4146 = vunpack.c.l.b16 %v3671
      %v4147 = vunpack.c.l.b16 %v3672
      %v4148 = vunpack.c.l.b16 %v3673
      %v4149 = vunpack.c.l.b16 %v3674
      %v4150 = vunpack.c.l.b16 %v3675
      %v4151 = vunpack.c.l.b16 %v3676
      %v4152 = vunpack.c.l.b16 %v3677
      %v4153 = vunpack.c.l.b16 %v3678
      %v4154 = vunpack.c.l.b16 %v3679
      %v4155 = vunpack.c.l.b16 %v3680
      %v4156 = vunpack.c.l.b16 %v3681
      %v4157 = vunpack.c.l.b16 %v3682
      %v4158 = vunpack.c.l.b16 %v3683
      %v4159 = vunpack.c.l.b16 %v3684
      %v4160 = vunpack.c.l.b16 %v3685
      %v4161 = vunpack.c.l.b16 %v3686
      %v4162 = vunpack.c.l.b16 %v3687
      %v4163 = vunpack.c.l.b16 %v3688
      %v4164 = vunpack.c.l.b16 %v3689
      %v4165 = vunpack.c.l.b16 %v3690
      %v4166 = vunpack.c.l.b16 %v3691
      %v4167 = vunpack.c.l.b16 %v3692
      %v4168 = vunpack.c.l.b16 %v3693
      %v4169 = vpack.c.b16 %v4138, %v4137
      %v4170 = vpack.c.b16 %v4140, %v4139
      %v4171 = vpack.c.b16 %v4142, %v4141
      %v4172 = vpack.c.b16 %v4144, %v4143
      %v4173 = vpack.c.b16 %v4146, %v4145
      %v4174 = vpack.c.b16 %v4148, %v4147
      %v4175 = vpack.c.b16 %v4150, %v4149
      %v4176 = vpack.c.b16 %v4152, %v4151
      %v4177 = vpack.c.b16 %v4154, %v4153
      %v4178 = vpack.c.b16 %v4156, %v4155
      %v4179 = vpack.c.b16 %v4158, %v4157
      %v4180 = vpack.c.b16 %v4160, %v4159
      %v4181 = vpack.c.b16 %v4162, %v4161
      %v4182 = vpack.c.b16 %v4164, %v4163
      %v4183 = vpack.c.b16 %v4166, %v4165
      %v4184 = vpack.c.b16 %v4168, %v4167
      %v4186 = vsel %vm1524, %v4169, 0
      %v4189 = vsel %vm1524, %v4170, 0
      %v4192 = vsel %vm1524, %v4171, 0
      %v4195 = vsel %vm1524, %v4172, 0
      %v4198 = vsel %vm1524, %v4173, 0
      %v4201 = vsel %vm1524, %v4174, 0
      %v4204 = vsel %vm1524, %v4175, 0
      %v4207 = vsel %vm1524, %v4176, 0
      %v4210 = vsel %vm1524, %v4177, 0
      %v4213 = vsel %vm1524, %v4178, 0
      %v4216 = vsel %vm1524, %v4179, 0
      %v4219 = vsel %vm1524, %v4180, 0
      %v4222 = vsel %vm1524, %v4181, 0
      %v4225 = vsel %vm1524, %v4182, 0
      %v4228 = vsel %vm1524, %v4183, 0
      %v4231 = vsel %vm1524, %v4184, 0
      %v4234 = vsel %vm1573, %v4104, 0
      %4236 = vmatpush.bf16.msra.mxu0 0
      %4237 = vmatpush.bf16.msra.mxu0 0
      %4238 = vmatpush.bf16.msra.mxu0 0
      %4239 = vmatpush.bf16.msra.mxu0 0
      %4240 = vmatpush.bf16.msra.mxu0 0
      %4241 = vmatpush.bf16.msra.mxu0 0
      %4242 = vmatpush.bf16.msra.mxu0 0
      %4243 = vmatpush.bf16.msra.mxu0 %v4234
      %4244 = vmatmul.bf16.gmra.mxu0 %v4186
      %v4245 = vpop.f32.mrf.mxu0
      %v4246 = vadd.f32 0.0, %v4245
      %v4247 = vpop.f32.mrf.mxu0
      %v4248 = vadd.f32 0.0, %v4247
      %4249 = vmatmul.bf16.gmra.mxu0 %v4189
      %v4250 = vpop.f32.mrf.mxu0
      %v4251 = vadd.f32 0.0, %v4250
      %v4252 = vpop.f32.mrf.mxu0
      %v4253 = vadd.f32 0.0, %v4252
      %4254 = vmatmul.bf16.gmra.mxu0 %v4192
      %v4255 = vpop.f32.mrf.mxu0
      %v4256 = vadd.f32 0.0, %v4255
      %v4257 = vpop.f32.mrf.mxu0
      %v4258 = vadd.f32 0.0, %v4257
      %4259 = vmatmul.bf16.gmra.mxu0 %v4195
      %v4260 = vpop.f32.mrf.mxu0
      %v4261 = vadd.f32 0.0, %v4260
      %v4262 = vpop.f32.mrf.mxu0
      %v4263 = vadd.f32 0.0, %v4262
      %4264 = vmatmul.bf16.gmra.mxu0 %v4198
      %v4265 = vpop.f32.mrf.mxu0
      %v4266 = vadd.f32 0.0, %v4265
      %v4267 = vpop.f32.mrf.mxu0
      %v4268 = vadd.f32 0.0, %v4267
      %4269 = vmatmul.bf16.gmra.mxu0 %v4201
      %v4270 = vpop.f32.mrf.mxu0
      %v4271 = vadd.f32 0.0, %v4270
      %v4272 = vpop.f32.mrf.mxu0
      %v4273 = vadd.f32 0.0, %v4272
      %4274 = vmatmul.bf16.gmra.mxu0 %v4204
      %v4275 = vpop.f32.mrf.mxu0
      %v4276 = vadd.f32 0.0, %v4275
      %v4277 = vpop.f32.mrf.mxu0
      %v4278 = vadd.f32 0.0, %v4277
      %4279 = vmatmul.bf16.gmra.mxu0 %v4207
      %v4280 = vpop.f32.mrf.mxu0
      %v4281 = vadd.f32 0.0, %v4280
      %v4282 = vpop.f32.mrf.mxu0
      %v4283 = vadd.f32 0.0, %v4282
      %4284 = vmatmul.bf16.gmra.mxu0 %v4210
      %v4285 = vpop.f32.mrf.mxu0
      %v4286 = vadd.f32 0.0, %v4285
      %v4287 = vpop.f32.mrf.mxu0
      %v4288 = vadd.f32 0.0, %v4287
      %4289 = vmatmul.bf16.gmra.mxu0 %v4213
      %v4290 = vpop.f32.mrf.mxu0
      %v4291 = vadd.f32 0.0, %v4290
      %v4292 = vpop.f32.mrf.mxu0
      %v4293 = vadd.f32 0.0, %v4292
      %4294 = vmatmul.bf16.gmra.mxu0 %v4216
      %v4295 = vpop.f32.mrf.mxu0
      %v4296 = vadd.f32 0.0, %v4295
      %v4297 = vpop.f32.mrf.mxu0
      %v4298 = vadd.f32 0.0, %v4297
      %4299 = vmatmul.bf16.gmra.mxu0 %v4219
      %v4300 = vpop.f32.mrf.mxu0
      %v4301 = vadd.f32 0.0, %v4300
      %v4302 = vpop.f32.mrf.mxu0
      %v4303 = vadd.f32 0.0, %v4302
      %4304 = vmatmul.bf16.gmra.mxu0 %v4222
      %v4305 = vpop.f32.mrf.mxu0
      %v4306 = vadd.f32 0.0, %v4305
      %v4307 = vpop.f32.mrf.mxu0
      %v4308 = vadd.f32 0.0, %v4307
      %4309 = vmatmul.bf16.gmra.mxu0 %v4225
      %v4310 = vpop.f32.mrf.mxu0
      %v4311 = vadd.f32 0.0, %v4310
      %v4312 = vpop.f32.mrf.mxu0
      %v4313 = vadd.f32 0.0, %v4312
      %4314 = vmatmul.bf16.gmra.mxu0 %v4228
      %v4315 = vpop.f32.mrf.mxu0
      %v4316 = vadd.f32 0.0, %v4315
      %v4317 = vpop.f32.mrf.mxu0
      %v4318 = vadd.f32 0.0, %v4317
      %4319 = vmatmul.bf16.gmra.mxu0 %v4231
      %v4320 = vpop.f32.mrf.mxu0
      %v4321 = vadd.f32 0.0, %v4320
      %v4322 = vpop.f32.mrf.mxu0
      %v4323 = vadd.f32 0.0, %v4322
      %4324 = vdwg.mxu0
      %v4325 = vadd.f32 %v4071, %v4246
      %v4326 = vadd.f32 %v4072, %v4248
      %v4327 = vadd.f32 %v4073, %v4251
      %v4328 = vadd.f32 %v4074, %v4253
      %v4329 = vadd.f32 %v4075, %v4256
      %v4330 = vadd.f32 %v4076, %v4258
      %v4331 = vadd.f32 %v4077, %v4261
      %v4332 = vadd.f32 %v4078, %v4263
      %v4333 = vadd.f32 %v4079, %v4266
      %v4334 = vadd.f32 %v4080, %v4268
      %v4335 = vadd.f32 %v4081, %v4271
      %v4336 = vadd.f32 %v4082, %v4273
      %v4337 = vadd.f32 %v4083, %v4276
      %v4338 = vadd.f32 %v4084, %v4278
      %v4339 = vadd.f32 %v4085, %v4281
      %v4340 = vadd.f32 %v4086, %v4283
      %v4341 = vadd.f32 %v4087, %v4286
      %v4342 = vadd.f32 %v4088, %v4288
      %v4343 = vadd.f32 %v4089, %v4291
      %v4344 = vadd.f32 %v4090, %v4293
      %v4345 = vadd.f32 %v4091, %v4296
      %v4346 = vadd.f32 %v4092, %v4298
      %v4347 = vadd.f32 %v4093, %v4301
      %v4348 = vadd.f32 %v4094, %v4303
      %v4349 = vadd.f32 %v4095, %v4306
      %v4350 = vadd.f32 %v4096, %v4308
      %v4351 = vadd.f32 %v4097, %v4311
      %v4352 = vadd.f32 %v4098, %v4313
      %v4353 = vadd.f32 %v4099, %v4316
      %v4354 = vadd.f32 %v4100, %v4318
      %v4355 = vadd.f32 %v4101, %v4321
      %v4356 = vadd.f32 %v4102, %v4323
      %v4357 = vld [vmem:[#allocation2 + $0x18] sm:$0xf]
      %v4358 = vld [vmem:[#allocation2 + $0x1c] sm:$0xf]
      %v4359 = vld [vmem:[#allocation2 + $0x20] sm:$0xf]
      %v4360 = vld [vmem:[#allocation2 + $0x24] sm:$0xf]
      %v4361 = vld [vmem:[#allocation2 + $0x28] sm:$0xf]
      %v4362 = vld [vmem:[#allocation2 + $0x2c] sm:$0xf]
      %v4363 = vld [vmem:[#allocation2 + $0x30] sm:$0xf]
      %v4364 = vld [vmem:[#allocation2 + $0x34] sm:$0xf]
      %v4365 = vld [vmem:[#allocation2 + $0x38] sm:$0xf]
      %v4366 = vld [vmem:[#allocation2 + $0x3c] sm:$0xf]
      %v4367 = vld [vmem:[#allocation2 + $0x40] sm:$0xf]
      %v4368 = vld [vmem:[#allocation2 + $0x44] sm:$0xf]
      %v4369 = vld [vmem:[#allocation2 + $0x48] sm:$0xf]
      %v4370 = vld [vmem:[#allocation2 + $0x4c] sm:$0xf]
      %v4371 = vld [vmem:[#allocation2 + $0x50] sm:$0xf]
      %v4372 = vld [vmem:[#allocation2 + $0x54] sm:$0xf]
      %v4373 = vld [vmem:[#allocation2 + $0x58] sm:$0xf]
      %v4374 = vld [vmem:[#allocation2 + $0x5c] sm:$0xf]
      %v4375 = vld [vmem:[#allocation2 + $0x60] sm:$0xf]
      %v4376 = vld [vmem:[#allocation2 + $0x64] sm:$0xf]
      %v4377 = vld [vmem:[#allocation2 + $0x68] sm:$0xf]
      %v4378 = vld [vmem:[#allocation2 + $0x6c] sm:$0xf]
      %v4379 = vld [vmem:[#allocation2 + $0x70] sm:$0xf]
      %v4380 = vld [vmem:[#allocation2 + $0x74] sm:$0xf]
      %v4381 = vld [vmem:[#allocation2 + $0x78] sm:$0xf]
      %v4382 = vld [vmem:[#allocation2 + $0x7c] sm:$0xf]
      %v4383 = vld [vmem:[#allocation2 + $0x80] sm:$0xf]
      %v4384 = vld [vmem:[#allocation2 + $0x84] sm:$0xf]
      %v4385 = vld [vmem:[#allocation2 + $0x88] sm:$0xf]
      %v4386 = vld [vmem:[#allocation2 + $0x8c] sm:$0xf]
      %v4387 = vld [vmem:[#allocation2 + $0x90] sm:$0xf]
      %v4388 = vld [vmem:[#allocation2 + $0x94] sm:$0xf]
      %v4389 = vld [vmem:[#allocation2 + $0x98] sm:$0x1]
      %v4390 = vunpack.c.l.bf16 %v4357
      %v4391 = vunpack.c.l.bf16 %v4358
      %v4392 = vunpack.c.l.bf16 %v4359
      %v4393 = vunpack.c.l.bf16 %v4360
      %v4394 = vunpack.c.l.bf16 %v4361
      %v4395 = vunpack.c.l.bf16 %v4362
      %v4396 = vunpack.c.l.bf16 %v4363
      %v4397 = vunpack.c.l.bf16 %v4364
      %v4398 = vunpack.c.l.bf16 %v4365
      %v4399 = vunpack.c.l.bf16 %v4366
      %v4400 = vunpack.c.l.bf16 %v4367
      %v4401 = vunpack.c.l.bf16 %v4368
      %v4402 = vunpack.c.l.bf16 %v4369
      %v4403 = vunpack.c.l.bf16 %v4370
      %v4404 = vunpack.c.l.bf16 %v4371
      %v4405 = vunpack.c.l.bf16 %v4372
      %v4406 = vunpack.c.l.bf16 %v4373
      %v4407 = vunpack.c.l.bf16 %v4374
      %v4408 = vunpack.c.l.bf16 %v4375
      %v4409 = vunpack.c.l.bf16 %v4376
      %v4410 = vunpack.c.l.bf16 %v4377
      %v4411 = vunpack.c.l.bf16 %v4378
      %v4412 = vunpack.c.l.bf16 %v4379
      %v4413 = vunpack.c.l.bf16 %v4380
      %v4414 = vunpack.c.l.bf16 %v4381
      %v4415 = vunpack.c.l.bf16 %v4382
      %v4416 = vunpack.c.l.bf16 %v4383
      %v4417 = vunpack.c.l.bf16 %v4384
      %v4418 = vunpack.c.l.bf16 %v4385
      %v4419 = vunpack.c.l.bf16 %v4386
      %v4420 = vunpack.c.l.bf16 %v4387
      %v4421 = vunpack.c.l.bf16 %v4388
      %v4422 = vunpack.c.l.bf16 %v4389
      %v4423 = vmul.f32 %v4390, %v2090
      %v4424 = vmul.f32 %v4391, %v2092
      %v4425 = vmul.f32 %v4392, %v2094
      %v4426 = vmul.f32 %v4393, %v2096
      %v4427 = vmul.f32 %v4394, %v2098
      %v4428 = vmul.f32 %v4395, %v2100
      %v4429 = vmul.f32 %v4396, %v2102
      %v4430 = vmul.f32 %v4397, %v2104
      %v4431 = vmul.f32 %v4398, %v2106
      %v4432 = vmul.f32 %v4399, %v2108
      %v4433 = vmul.f32 %v4400, %v2110
      %v4434 = vmul.f32 %v4401, %v2112
      %v4435 = vmul.f32 %v4402, %v2114
      %v4436 = vmul.f32 %v4403, %v2116
      %v4437 = vmul.f32 %v4404, %v2118
      %v4438 = vmul.f32 %v4405, %v2120
      %v4439 = vmul.f32 %v4406, %v2122
      %v4440 = vmul.f32 %v4407, %v2124
      %v4441 = vmul.f32 %v4408, %v2126
      %v4442 = vmul.f32 %v4409, %v2128
      %v4443 = vmul.f32 %v4410, %v2130
      %v4444 = vmul.f32 %v4411, %v2132
      %v4445 = vmul.f32 %v4412, %v2134
      %v4446 = vmul.f32 %v4413, %v2136
      %v4447 = vmul.f32 %v4414, %v2138
      %v4448 = vmul.f32 %v4415, %v2140
      %v4449 = vmul.f32 %v4416, %v2142
      %v4450 = vmul.f32 %v4417, %v2144
      %v4451 = vmul.f32 %v4418, %v2146
      %v4452 = vmul.f32 %v4419, %v2148
      %v4453 = vmul.f32 %v4420, %v2150
      %v4454 = vmul.f32 %v4421, %v2152
      %v4455 = vmul.f32 %v4422, %v2151
      %v4456 = vpack.c.bf16 %v4424, %v4423
      %v4457 = vpack.c.bf16 %v4426, %v4425
      %v4458 = vpack.c.bf16 %v4428, %v4427
      %v4459 = vpack.c.bf16 %v4430, %v4429
      %v4460 = vpack.c.bf16 %v4432, %v4431
      %v4461 = vpack.c.bf16 %v4434, %v4433
      %v4462 = vpack.c.bf16 %v4436, %v4435
      %v4463 = vpack.c.bf16 %v4438, %v4437
      %v4464 = vpack.c.bf16 %v4440, %v4439
      %v4465 = vpack.c.bf16 %v4442, %v4441
      %v4466 = vpack.c.bf16 %v4444, %v4443
      %v4467 = vpack.c.bf16 %v4446, %v4445
      %v4468 = vpack.c.bf16 %v4448, %v4447
      %v4469 = vpack.c.bf16 %v4450, %v4449
      %v4470 = vpack.c.bf16 %v4452, %v4451
      %v4471 = vpack.c.bf16 %v4454, %v4453
      %v4472 = vpack.c.bf16 %v4455, %v4455
      %s4473 = scalar_lea.vmem %s1, 32
      %v4474 = vld [vmem:[%s4473] sm:$0x7]
      %v4476 = vshrl.u32 %v4456, 16
      %v4478 = vshll.u32 %v4456, 16
      %v4480 = vrot.slane %v4478, 1
      %v4481 = vor.u32 %v4476, %v4480
      %v4483 = vshll.u32 %v4457, 16
      %v4485 = vrot.slane %v4483, 1
      %v4486 = vsel %vm2238, %v4481, %v4485
      %v4487 = vshrl.u32 %v4457, 16
      %v4489 = vor.u32 %v4487, %v4485
      %v4491 = vshll.u32 %v4458, 16
      %v4493 = vrot.slane %v4491, 1
      %v4494 = vsel %vm2238, %v4489, %v4493
      %v4495 = vshrl.u32 %v4458, 16
      %v4497 = vor.u32 %v4495, %v4493
      %v4499 = vshll.u32 %v4459, 16
      %v4501 = vrot.slane %v4499, 1
      %v4502 = vsel %vm2238, %v4497, %v4501
      %v4503 = vshrl.u32 %v4459, 16
      %v4505 = vor.u32 %v4503, %v4501
      %v4507 = vshll.u32 %v4460, 16
      %v4509 = vrot.slane %v4507, 1
      %v4510 = vsel %vm2238, %v4505, %v4509
      %v4511 = vshrl.u32 %v4460, 16
      %v4513 = vor.u32 %v4511, %v4509
      %v4515 = vshll.u32 %v4461, 16
      %v4517 = vrot.slane %v4515, 1
      %v4518 = vsel %vm2238, %v4513, %v4517
      %v4519 = vshrl.u32 %v4461, 16
      %v4521 = vor.u32 %v4519, %v4517
      %v4523 = vshll.u32 %v4462, 16
      %v4525 = vrot.slane %v4523, 1
      %v4526 = vsel %vm2238, %v4521, %v4525
      %v4527 = vshrl.u32 %v4462, 16
      %v4529 = vor.u32 %v4527, %v4525
      %v4531 = vshll.u32 %v4463, 16
      %v4533 = vrot.slane %v4531, 1
      %v4534 = vsel %vm2238, %v4529, %v4533
      %v4535 = vshrl.u32 %v4463, 16
      %v4537 = vor.u32 %v4535, %v4533
      %v4539 = vshll.u32 %v4464, 16
      %v4541 = vrot.slane %v4539, 1
      %v4542 = vsel %vm2238, %v4537, %v4541
      %v4543 = vshrl.u32 %v4464, 16
      %v4545 = vor.u32 %v4543, %v4541
      %v4547 = vshll.u32 %v4465, 16
      %v4549 = vrot.slane %v4547, 1
      %v4550 = vsel %vm2238, %v4545, %v4549
      %v4551 = vshrl.u32 %v4465, 16
      %v4553 = vor.u32 %v4551, %v4549
      %v4555 = vshll.u32 %v4466, 16
      %v4557 = vrot.slane %v4555, 1
      %v4558 = vsel %vm2238, %v4553, %v4557
      %v4559 = vshrl.u32 %v4466, 16
      %v4561 = vor.u32 %v4559, %v4557
      %v4563 = vshll.u32 %v4467, 16
      %v4565 = vrot.slane %v4563, 1
      %v4566 = vsel %vm2238, %v4561, %v4565
      %v4567 = vshrl.u32 %v4467, 16
      %v4569 = vor.u32 %v4567, %v4565
      %v4571 = vshll.u32 %v4468, 16
      %v4573 = vrot.slane %v4571, 1
      %v4574 = vsel %vm2238, %v4569, %v4573
      %v4575 = vshrl.u32 %v4468, 16
      %v4577 = vor.u32 %v4575, %v4573
      %v4579 = vshll.u32 %v4469, 16
      %v4581 = vrot.slane %v4579, 1
      %v4582 = vsel %vm2238, %v4577, %v4581
      %v4583 = vshrl.u32 %v4469, 16
      %v4585 = vor.u32 %v4583, %v4581
      %v4587 = vshll.u32 %v4470, 16
      %v4589 = vrot.slane %v4587, 1
      %v4590 = vsel %vm2238, %v4585, %v4589
      %v4591 = vshrl.u32 %v4470, 16
      %v4593 = vor.u32 %v4591, %v4589
      %v4595 = vshll.u32 %v4471, 16
      %v4597 = vrot.slane %v4595, 1
      %v4598 = vsel %vm2238, %v4593, %v4597
      %v4599 = vshrl.u32 %v4471, 16
      %v4601 = vor.u32 %v4599, %v4597
      %v4603 = vshll.u32 %v4472, 16
      %v4605 = vrot.slane %v4603, 1
      %v4606 = vsel %vm2238, %v4601, %v4605
      %v4608 = vsel %vm1524, %v4486, 0
      %v4611 = vsel %vm1524, %v4494, 0
      %v4614 = vsel %vm1524, %v4502, 0
      %v4617 = vsel %vm1524, %v4510, 0
      %v4620 = vsel %vm1524, %v4518, 0
      %v4623 = vsel %vm1524, %v4526, 0
      %v4626 = vsel %vm1524, %v4534, 0
      %v4629 = vsel %vm1524, %v4542, 0
      %v4632 = vsel %vm1524, %v4550, 0
      %v4635 = vsel %vm1524, %v4558, 0
      %v4638 = vsel %vm1524, %v4566, 0
      %v4641 = vsel %vm1524, %v4574, 0
      %v4644 = vsel %vm1524, %v4582, 0
      %v4647 = vsel %vm1524, %v4590, 0
      %v4650 = vsel %vm1524, %v4598, 0
      %v4653 = vsel %vm1524, %v4606, 0
      %v4656 = vsel %vm1573, %v4474, 0
      %4658 = vmatpush.bf16.msra.mxu0 0
      %4659 = vmatpush.bf16.msra.mxu0 0
      %4660 = vmatpush.bf16.msra.mxu0 0
      %4661 = vmatpush.bf16.msra.mxu0 0
      %4662 = vmatpush.bf16.msra.mxu0 0
      %4663 = vmatpush.bf16.msra.mxu0 0
      %4664 = vmatpush.bf16.msra.mxu0 0
      %4665 = vmatpush.bf16.msra.mxu0 %v4656
      %4666 = vmatmul.bf16.gmra.mxu0 %v4608
      %v4667 = vpop.f32.mrf.mxu0
      %v4668 = vadd.f32 0.0, %v4667
      %v4669 = vpop.f32.mrf.mxu0
      %v4670 = vadd.f32 0.0, %v4669
      %4671 = vmatmul.bf16.gmra.mxu0 %v4611
      %v4672 = vpop.f32.mrf.mxu0
      %v4673 = vadd.f32 0.0, %v4672
      %v4674 = vpop.f32.mrf.mxu0
      %v4675 = vadd.f32 0.0, %v4674
      %4676 = vmatmul.bf16.gmra.mxu0 %v4614
      %v4677 = vpop.f32.mrf.mxu0
      %v4678 = vadd.f32 0.0, %v4677
      %v4679 = vpop.f32.mrf.mxu0
      %v4680 = vadd.f32 0.0, %v4679
      %4681 = vmatmul.bf16.gmra.mxu0 %v4617
      %v4682 = vpop.f32.mrf.mxu0
      %v4683 = vadd.f32 0.0, %v4682
      %v4684 = vpop.f32.mrf.mxu0
      %v4685 = vadd.f32 0.0, %v4684
      %4686 = vmatmul.bf16.gmra.mxu0 %v4620
      %v4687 = vpop.f32.mrf.mxu0
      %v4688 = vadd.f32 0.0, %v4687
      %v4689 = vpop.f32.mrf.mxu0
      %v4690 = vadd.f32 0.0, %v4689
      %4691 = vmatmul.bf16.gmra.mxu0 %v4623
      %v4692 = vpop.f32.mrf.mxu0
      %v4693 = vadd.f32 0.0, %v4692
      %v4694 = vpop.f32.mrf.mxu0
      %v4695 = vadd.f32 0.0, %v4694
      %4696 = vmatmul.bf16.gmra.mxu0 %v4626
      %v4697 = vpop.f32.mrf.mxu0
      %v4698 = vadd.f32 0.0, %v4697
      %v4699 = vpop.f32.mrf.mxu0
      %v4700 = vadd.f32 0.0, %v4699
      %4701 = vmatmul.bf16.gmra.mxu0 %v4629
      %v4702 = vpop.f32.mrf.mxu0
      %v4703 = vadd.f32 0.0, %v4702
      %v4704 = vpop.f32.mrf.mxu0
      %v4705 = vadd.f32 0.0, %v4704
      %4706 = vmatmul.bf16.gmra.mxu0 %v4632
      %v4707 = vpop.f32.mrf.mxu0
      %v4708 = vadd.f32 0.0, %v4707
      %v4709 = vpop.f32.mrf.mxu0
      %v4710 = vadd.f32 0.0, %v4709
      %4711 = vmatmul.bf16.gmra.mxu0 %v4635
      %v4712 = vpop.f32.mrf.mxu0
      %v4713 = vadd.f32 0.0, %v4712
      %v4714 = vpop.f32.mrf.mxu0
      %v4715 = vadd.f32 0.0, %v4714
      %4716 = vmatmul.bf16.gmra.mxu0 %v4638
      %v4717 = vpop.f32.mrf.mxu0
      %v4718 = vadd.f32 0.0, %v4717
      %v4719 = vpop.f32.mrf.mxu0
      %v4720 = vadd.f32 0.0, %v4719
      %4721 = vmatmul.bf16.gmra.mxu0 %v4641
      %v4722 = vpop.f32.mrf.mxu0
      %v4723 = vadd.f32 0.0, %v4722
      %v4724 = vpop.f32.mrf.mxu0
      %v4725 = vadd.f32 0.0, %v4724
      %4726 = vmatmul.bf16.gmra.mxu0 %v4644
      %v4727 = vpop.f32.mrf.mxu0
      %v4728 = vadd.f32 0.0, %v4727
      %v4729 = vpop.f32.mrf.mxu0
      %v4730 = vadd.f32 0.0, %v4729
      %4731 = vmatmul.bf16.gmra.mxu0 %v4647
      %v4732 = vpop.f32.mrf.mxu0
      %v4733 = vadd.f32 0.0, %v4732
      %v4734 = vpop.f32.mrf.mxu0
      %v4735 = vadd.f32 0.0, %v4734
      %4736 = vmatmul.bf16.gmra.mxu0 %v4650
      %v4737 = vpop.f32.mrf.mxu0
      %v4738 = vadd.f32 0.0, %v4737
      %v4739 = vpop.f32.mrf.mxu0
      %v4740 = vadd.f32 0.0, %v4739
      %4741 = vmatmul.bf16.gmra.mxu0 %v4653
      %v4742 = vpop.f32.mrf.mxu0
      %v4743 = vadd.f32 0.0, %v4742
      %v4744 = vpop.f32.mrf.mxu0
      %v4745 = vadd.f32 0.0, %v4744
      %4746 = vdwg.mxu0
      %v4747 = vadd.f32 %v4325, %v4668
      %v4748 = vadd.f32 %v4326, %v4670
      %v4749 = vadd.f32 %v4327, %v4673
      %v4750 = vadd.f32 %v4328, %v4675
      %v4751 = vadd.f32 %v4329, %v4678
      %v4752 = vadd.f32 %v4330, %v4680
      %v4753 = vadd.f32 %v4331, %v4683
      %v4754 = vadd.f32 %v4332, %v4685
      %v4755 = vadd.f32 %v4333, %v4688
      %v4756 = vadd.f32 %v4334, %v4690
      %v4757 = vadd.f32 %v4335, %v4693
      %v4758 = vadd.f32 %v4336, %v4695
      %v4759 = vadd.f32 %v4337, %v4698
      %v4760 = vadd.f32 %v4338, %v4700
      %v4761 = vadd.f32 %v4339, %v4703
      %v4762 = vadd.f32 %v4340, %v4705
      %v4763 = vadd.f32 %v4341, %v4708
      %v4764 = vadd.f32 %v4342, %v4710
      %v4765 = vadd.f32 %v4343, %v4713
      %v4766 = vadd.f32 %v4344, %v4715
      %v4767 = vadd.f32 %v4345, %v4718
      %v4768 = vadd.f32 %v4346, %v4720
      %v4769 = vadd.f32 %v4347, %v4723
      %v4770 = vadd.f32 %v4348, %v4725
      %v4771 = vadd.f32 %v4349, %v4728
      %v4772 = vadd.f32 %v4350, %v4730
      %v4773 = vadd.f32 %v4351, %v4733
      %v4774 = vadd.f32 %v4352, %v4735
      %v4775 = vadd.f32 %v4353, %v4738
      %v4776 = vadd.f32 %v4354, %v4740
      %v4777 = vadd.f32 %v4355, %v4743
      %v4778 = vadd.f32 %v4356, %v4745
      %v4779 = vld [vmem:[%s2] sm:$0x1]
      %v4781 = vperm.slane %v4779, 0
      %v4783 = vadd.f32 %v4747, %v4781
      %v4784 = vadd.f32 %v4748, %v4781
      %v4785 = vadd.f32 %v4749, %v4781
      %v4786 = vadd.f32 %v4750, %v4781
      %v4787 = vadd.f32 %v4751, %v4781
      %v4788 = vadd.f32 %v4752, %v4781
      %v4789 = vadd.f32 %v4753, %v4781
      %v4790 = vadd.f32 %v4754, %v4781
      %v4791 = vadd.f32 %v4755, %v4781
      %v4792 = vadd.f32 %v4756, %v4781
      %v4793 = vadd.f32 %v4757, %v4781
      %v4794 = vadd.f32 %v4758, %v4781
      %v4795 = vadd.f32 %v4759, %v4781
      %v4796 = vadd.f32 %v4760, %v4781
      %v4797 = vadd.f32 %v4761, %v4781
      %v4798 = vadd.f32 %v4762, %v4781
      %v4799 = vadd.f32 %v4763, %v4781
      %v4800 = vadd.f32 %v4764, %v4781
      %v4801 = vadd.f32 %v4765, %v4781
      %v4802 = vadd.f32 %v4766, %v4781
      %v4803 = vadd.f32 %v4767, %v4781
      %v4804 = vadd.f32 %v4768, %v4781
      %v4805 = vadd.f32 %v4769, %v4781
      %v4806 = vadd.f32 %v4770, %v4781
      %v4807 = vadd.f32 %v4771, %v4781
      %v4808 = vadd.f32 %v4772, %v4781
      %v4809 = vadd.f32 %v4773, %v4781
      %v4810 = vadd.f32 %v4774, %v4781
      %v4811 = vadd.f32 %v4775, %v4781
      %v4812 = vadd.f32 %v4776, %v4781
      %v4813 = vadd.f32 %v4777, %v4781
      %v4814 = vadd.f32 %v4778, %v4781
      %v4815 = vmax.f32 %v4783, 0.0
      %v4816 = vmax.f32 %v4784, 0.0
      %v4817 = vmax.f32 %v4785, 0.0
      %v4818 = vmax.f32 %v4786, 0.0
      %v4819 = vmax.f32 %v4787, 0.0
      %v4820 = vmax.f32 %v4788, 0.0
      %v4821 = vmax.f32 %v4789, 0.0
      %v4822 = vmax.f32 %v4790, 0.0
      %v4823 = vmax.f32 %v4791, 0.0
      %v4824 = vmax.f32 %v4792, 0.0
      %v4825 = vmax.f32 %v4793, 0.0
      %v4826 = vmax.f32 %v4794, 0.0
      %v4827 = vmax.f32 %v4795, 0.0
      %v4828 = vmax.f32 %v4796, 0.0
      %v4829 = vmax.f32 %v4797, 0.0
      %v4830 = vmax.f32 %v4798, 0.0
      %v4831 = vmax.f32 %v4799, 0.0
      %v4832 = vmax.f32 %v4800, 0.0
      %v4833 = vmax.f32 %v4801, 0.0
      %v4834 = vmax.f32 %v4802, 0.0
      %v4835 = vmax.f32 %v4803, 0.0
      %v4836 = vmax.f32 %v4804, 0.0
      %v4837 = vmax.f32 %v4805, 0.0
      %v4838 = vmax.f32 %v4806, 0.0
      %v4839 = vmax.f32 %v4807, 0.0
      %v4840 = vmax.f32 %v4808, 0.0
      %v4841 = vmax.f32 %v4809, 0.0
      %v4842 = vmax.f32 %v4810, 0.0
      %v4843 = vmax.f32 %v4811, 0.0
      %v4844 = vmax.f32 %v4812, 0.0
      %v4845 = vmax.f32 %v4813, 0.0
      %v4846 = vmax.f32 %v4814, 0.0
      %v4847 = vpack.c.bf16 %v4815, %v4815
      %v4848 = vpack.c.bf16 %v4816, %v4816
      %v4849 = vpack.c.bf16 %v4817, %v4817
      %v4850 = vpack.c.bf16 %v4818, %v4818
      %v4851 = vpack.c.bf16 %v4819, %v4819
      %v4852 = vpack.c.bf16 %v4820, %v4820
      %v4853 = vpack.c.bf16 %v4821, %v4821
      %v4854 = vpack.c.bf16 %v4822, %v4822
      %v4855 = vpack.c.bf16 %v4823, %v4823
      %v4856 = vpack.c.bf16 %v4824, %v4824
      %v4857 = vpack.c.bf16 %v4825, %v4825
      %v4858 = vpack.c.bf16 %v4826, %v4826
      %v4859 = vpack.c.bf16 %v4827, %v4827
      %v4860 = vpack.c.bf16 %v4828, %v4828
      %v4861 = vpack.c.bf16 %v4829, %v4829
      %v4862 = vpack.c.bf16 %v4830, %v4830
      %v4863 = vpack.c.bf16 %v4831, %v4831
      %v4864 = vpack.c.bf16 %v4832, %v4832
      %v4865 = vpack.c.bf16 %v4833, %v4833
      %v4866 = vpack.c.bf16 %v4834, %v4834
      %v4867 = vpack.c.bf16 %v4835, %v4835
      %v4868 = vpack.c.bf16 %v4836, %v4836
      %v4869 = vpack.c.bf16 %v4837, %v4837
      %v4870 = vpack.c.bf16 %v4838, %v4838
      %v4871 = vpack.c.bf16 %v4839, %v4839
      %v4872 = vpack.c.bf16 %v4840, %v4840
      %v4873 = vpack.c.bf16 %v4841, %v4841
      %v4874 = vpack.c.bf16 %v4842, %v4842
      %v4875 = vpack.c.bf16 %v4843, %v4843
      %v4876 = vpack.c.bf16 %v4844, %v4844
      %v4877 = vpack.c.bf16 %v4845, %v4845
      %v4878 = vpack.c.bf16 %v4846, %v4846
      %v4879 = vunpack.c.l.bf16 %v4847
      %v4880 = vunpack.c.l.bf16 %v4848
      %v4881 = vunpack.c.l.bf16 %v4849
      %v4882 = vunpack.c.l.bf16 %v4850
      %v4883 = vunpack.c.l.bf16 %v4851
      %v4884 = vunpack.c.l.bf16 %v4852
      %v4885 = vunpack.c.l.bf16 %v4853
      %v4886 = vunpack.c.l.bf16 %v4854
      %v4887 = vunpack.c.l.bf16 %v4855
      %v4888 = vunpack.c.l.bf16 %v4856
      %v4889 = vunpack.c.l.bf16 %v4857
      %v4890 = vunpack.c.l.bf16 %v4858
      %v4891 = vunpack.c.l.bf16 %v4859
      %v4892 = vunpack.c.l.bf16 %v4860
      %v4893 = vunpack.c.l.bf16 %v4861
      %v4894 = vunpack.c.l.bf16 %v4862
      %v4895 = vunpack.c.l.bf16 %v4863
      %v4896 = vunpack.c.l.bf16 %v4864
      %v4897 = vunpack.c.l.bf16 %v4865
      %v4898 = vunpack.c.l.bf16 %v4866
      %v4899 = vunpack.c.l.bf16 %v4867
      %v4900 = vunpack.c.l.bf16 %v4868
      %v4901 = vunpack.c.l.bf16 %v4869
      %v4902 = vunpack.c.l.bf16 %v4870
      %v4903 = vunpack.c.l.bf16 %v4871
      %v4904 = vunpack.c.l.bf16 %v4872
      %v4905 = vunpack.c.l.bf16 %v4873
      %v4906 = vunpack.c.l.bf16 %v4874
      %v4907 = vunpack.c.l.bf16 %v4875
      %v4908 = vunpack.c.l.bf16 %v4876
      %v4909 = vunpack.c.l.bf16 %v4877
      %v4910 = vunpack.c.l.bf16 %v4878
      %v4911 = vmax.f32 %v4879, %v4881
      %v4912 = vmax.f32 %v4880, %v4882
      %v4913 = vmax.f32 %v4881, %v4883
      %v4914 = vmax.f32 %v4882, %v4884
      %v4915 = vmax.f32 %v4883, %v4885
      %v4916 = vmax.f32 %v4884, %v4886
      %v4917 = vmax.f32 %v4885, %v4887
      %v4918 = vmax.f32 %v4886, %v4888
      %v4919 = vmax.f32 %v4887, %v4889
      %v4920 = vmax.f32 %v4888, %v4890
      %v4921 = vmax.f32 %v4889, %v4891
      %v4922 = vmax.f32 %v4890, %v4892
      %v4923 = vmax.f32 %v4891, %v4893
      %v4924 = vmax.f32 %v4892, %v4894
      %v4925 = vmax.f32 %v4893, %v4895
      %v4926 = vmax.f32 %v4894, %v4896
      %v4927 = vmax.f32 %v4895, %v4897
      %v4928 = vmax.f32 %v4896, %v4898
      %v4929 = vmax.f32 %v4897, %v4899
      %v4930 = vmax.f32 %v4898, %v4900
      %v4931 = vmax.f32 %v4899, %v4901
      %v4932 = vmax.f32 %v4900, %v4902
      %v4933 = vmax.f32 %v4901, %v4903
      %v4934 = vmax.f32 %v4902, %v4904
      %v4935 = vmax.f32 %v4903, %v4905
      %v4936 = vmax.f32 %v4904, %v4906
      %v4937 = vmax.f32 %v4905, %v4907
      %v4938 = vmax.f32 %v4906, %v4908
      %v4939 = vmax.f32 %v4907, %v4909
      %v4940 = vmax.f32 %v4908, %v4910
      %v4941 = vpack.c.bf16 %v4912, %v4911
      %v4942 = vpack.c.bf16 %v4914, %v4913
      %v4943 = vpack.c.bf16 %v4916, %v4915
      %v4944 = vpack.c.bf16 %v4918, %v4917
      %v4945 = vpack.c.bf16 %v4920, %v4919
      %v4946 = vpack.c.bf16 %v4922, %v4921
      %v4947 = vpack.c.bf16 %v4924, %v4923
      %v4948 = vpack.c.bf16 %v4926, %v4925
      %v4949 = vpack.c.bf16 %v4928, %v4927
      %v4950 = vpack.c.bf16 %v4930, %v4929
      %v4951 = vpack.c.bf16 %v4932, %v4931
      %v4952 = vpack.c.bf16 %v4934, %v4933
      %v4953 = vpack.c.bf16 %v4936, %v4935
      %v4954 = vpack.c.bf16 %v4938, %v4937
      %v4955 = vpack.c.bf16 %v4940, %v4939
      %v4956 = vld [vmem:[%s9] sm:$0xff]
      %v4957 = vld [vmem:[%s9 + $0x8] sm:$0xff]
      %v4958 = vld [vmem:[%s9 + $0x10] sm:$0xff]
      %v4959 = vld [vmem:[%s9 + $0x18] sm:$0xff]
      %v4960 = vld [vmem:[%s9 + $0x20] sm:$0xff]
      %v4961 = vld [vmem:[%s9 + $0x28] sm:$0xff]
      %v4962 = vld [vmem:[%s9 + $0x30] sm:$0xff]
      %v4963 = vld [vmem:[%s9 + $0x38] sm:$0xff]
      %v4972 = vunpack.c.l.b16 %v4956
      %v4973 = vunpack.c.h.b16 %v4956
      %v4974 = vunpack.c.l.b16 %v4957
      %v4975 = vunpack.c.h.b16 %v4957
      %v4976 = vunpack.c.l.b16 %v4958
      %v4977 = vunpack.c.h.b16 %v4958
      %v4978 = vunpack.c.l.b16 %v4959
      %v4979 = vunpack.c.h.b16 %v4959
      %v4980 = vunpack.c.l.b16 %v4960
      %v4981 = vunpack.c.h.b16 %v4960
      %v4982 = vunpack.c.l.b16 %v4961
      %v4983 = vunpack.c.h.b16 %v4961
      %v4984 = vunpack.c.l.b16 %v4962
      %v4985 = vunpack.c.h.b16 %v4962
      %v4986 = vunpack.c.l.b16 %v4963
      %v4987 = vunpack.c.h.b16 %v4963
      %v4988 = vpack.c.b16 %v4974, %v4972
      %v4989 = vpack.c.b16 %v4975, %v4973
      %v4990 = vpack.c.b16 %v4978, %v4976
      %v4991 = vpack.c.b16 %v4979, %v4977
      %v4992 = vpack.c.b16 %v4982, %v4980
      %v4993 = vpack.c.b16 %v4983, %v4981
      %v4994 = vpack.c.b16 %v4986, %v4984
      %v4995 = vpack.c.b16 %v4987, %v4985
      %vm5000 = vcmask 916480
      %v5002 = vsel %vm5000, %v4989, 0
      %v5005 = vsel %vm5000, %v4991, 0
      %v5008 = vsel %vm5000, %v4993, 0
      %v5011 = vsel %vm5000, %v4995, 0
      %5013 = vmatpush.bf16.msra.mxu0 %v4948
      %5014 = vmatpush.bf16.msra.mxu0 %v4947
      %5015 = vmatpush.bf16.msra.mxu0 %v4946
      %5016 = vmatpush.bf16.msra.mxu0 %v4945
      %5017 = vmatpush.bf16.msra.mxu0 %v4944
      %5018 = vmatpush.bf16.msra.mxu0 %v4943
      %5019 = vmatpush.bf16.msra.mxu0 %v4942
      %5020 = vmatpush.bf16.msra.mxu0 %v4941
      %5021 = vmatmul.bf16.gmra.mxu0 %v4988
      %v5022 = vpop.f32.mrf.mxu0
      %v5023 = vadd.f32 0.0, %v5022
      %v5024 = vpop.f32.mrf.mxu0
      %v5025 = vadd.f32 0.0, %v5024
      %5026 = vmatmul.bf16.gmra.mxu0 %v4990
      %v5027 = vpop.f32.mrf.mxu0
      %v5028 = vadd.f32 0.0, %v5027
      %v5029 = vpop.f32.mrf.mxu0
      %v5030 = vadd.f32 0.0, %v5029
      %5031 = vmatmul.bf16.gmra.mxu0 %v4992
      %v5032 = vpop.f32.mrf.mxu0
      %v5033 = vadd.f32 0.0, %v5032
      %v5034 = vpop.f32.mrf.mxu0
      %v5035 = vadd.f32 0.0, %v5034
      %5036 = vmatmul.bf16.gmra.mxu0 %v4994
      %v5037 = vpop.f32.mrf.mxu0
      %v5038 = vadd.f32 0.0, %v5037
      %v5039 = vpop.f32.mrf.mxu0
      %v5040 = vadd.f32 0.0, %v5039
      %5041 = vdwg.mxu0
      %5042 = vmatpush.bf16.msra.mxu0 0
      %5043 = vmatpush.bf16.msra.mxu0 %v4955
      %5044 = vmatpush.bf16.msra.mxu0 %v4954
      %5045 = vmatpush.bf16.msra.mxu0 %v4953
      %5046 = vmatpush.bf16.msra.mxu0 %v4952
      %5047 = vmatpush.bf16.msra.mxu0 %v4951
      %5048 = vmatpush.bf16.msra.mxu0 %v4950
      %5049 = vmatpush.bf16.msra.mxu0 %v4949
      %5050 = vmatmul.bf16.gmra.mxu0 %v5002
      %v5051 = vpop.f32.mrf.mxu0
      %v5052 = vadd.f32 %v5023, %v5051
      %v5053 = vpop.f32.mrf.mxu0
      %v5054 = vadd.f32 %v5025, %v5053
      %5055 = vmatmul.bf16.gmra.mxu0 %v5005
      %v5056 = vpop.f32.mrf.mxu0
      %v5057 = vadd.f32 %v5028, %v5056
      %v5058 = vpop.f32.mrf.mxu0
      %v5059 = vadd.f32 %v5030, %v5058
      %5060 = vmatmul.bf16.gmra.mxu0 %v5008
      %v5061 = vpop.f32.mrf.mxu0
      %v5062 = vadd.f32 %v5033, %v5061
      %v5063 = vpop.f32.mrf.mxu0
      %v5064 = vadd.f32 %v5035, %v5063
      %5065 = vmatmul.bf16.gmra.mxu0 %v5011
      %v5066 = vpop.f32.mrf.mxu0
      %v5067 = vadd.f32 %v5038, %v5066
      %v5068 = vpop.f32.mrf.mxu0
      %v5069 = vadd.f32 %v5040, %v5068
      %5070 = vdwg.mxu0
      %s5071 = scalar_lea.vmem %s9, 64
      %v5072 = vld [vmem:[%s5071] sm:$0xff]
      %v5073 = vld [vmem:[%s5071 + $0x8] sm:$0xff]
      %v5074 = vld [vmem:[%s5071 + $0x10] sm:$0xff]
      %v5075 = vld [vmem:[%s5071 + $0x18] sm:$0xff]
      %v5076 = vld [vmem:[%s5071 + $0x20] sm:$0xff]
      %v5077 = vld [vmem:[%s5071 + $0x28] sm:$0xff]
      %v5078 = vld [vmem:[%s5071 + $0x30] sm:$0xff]
      %v5079 = vld [vmem:[%s5071 + $0x38] sm:$0xff]
      %v5088 = vunpack.c.l.b16 %v5072
      %v5089 = vunpack.c.h.b16 %v5072
      %v5090 = vunpack.c.l.b16 %v5073
      %v5091 = vunpack.c.h.b16 %v5073
      %v5092 = vunpack.c.l.b16 %v5074
      %v5093 = vunpack.c.h.b16 %v5074
      %v5094 = vunpack.c.l.b16 %v5075
      %v5095 = vunpack.c.h.b16 %v5075
      %v5096 = vunpack.c.l.b16 %v5076
      %v5097 = vunpack.c.h.b16 %v5076
      %v5098 = vunpack.c.l.b16 %v5077
      %v5099 = vunpack.c.h.b16 %v5077
      %v5100 = vunpack.c.l.b16 %v5078
      %v5101 = vunpack.c.h.b16 %v5078
      %v5102 = vunpack.c.l.b16 %v5079
      %v5103 = vunpack.c.h.b16 %v5079
      %v5104 = vpack.c.b16 %v5090, %v5088
      %v5105 = vpack.c.b16 %v5091, %v5089
      %v5106 = vpack.c.b16 %v5094, %v5092
      %v5107 = vpack.c.b16 %v5095, %v5093
      %v5108 = vpack.c.b16 %v5098, %v5096
      %v5109 = vpack.c.b16 %v5099, %v5097
      %v5110 = vpack.c.b16 %v5102, %v5100
      %v5111 = vpack.c.b16 %v5103, %v5101
      %v5117 = vsel %vm5000, %v5105, 0
      %v5120 = vsel %vm5000, %v5107, 0
      %v5123 = vsel %vm5000, %v5109, 0
      %v5126 = vsel %vm5000, %v5111, 0
      %5128 = vmatpush.bf16.msra.mxu0 %v4948
      %5129 = vmatpush.bf16.msra.mxu0 %v4947
      %5130 = vmatpush.bf16.msra.mxu0 %v4946
      %5131 = vmatpush.bf16.msra.mxu0 %v4945
      %5132 = vmatpush.bf16.msra.mxu0 %v4944
      %5133 = vmatpush.bf16.msra.mxu0 %v4943
      %5134 = vmatpush.bf16.msra.mxu0 %v4942
      %5135 = vmatpush.bf16.msra.mxu0 %v4941
      %5136 = vmatmul.bf16.gmra.mxu0 %v5104
      %v5137 = vpop.f32.mrf.mxu0
      %v5138 = vadd.f32 0.0, %v5137
      %v5139 = vpop.f32.mrf.mxu0
      %v5140 = vadd.f32 0.0, %v5139
      %5141 = vmatmul.bf16.gmra.mxu0 %v5106
      %v5142 = vpop.f32.mrf.mxu0
      %v5143 = vadd.f32 0.0, %v5142
      %v5144 = vpop.f32.mrf.mxu0
      %v5145 = vadd.f32 0.0, %v5144
      %5146 = vmatmul.bf16.gmra.mxu0 %v5108
      %v5147 = vpop.f32.mrf.mxu0
      %v5148 = vadd.f32 0.0, %v5147
      %v5149 = vpop.f32.mrf.mxu0
      %v5150 = vadd.f32 0.0, %v5149
      %5151 = vmatmul.bf16.gmra.mxu0 %v5110
      %v5152 = vpop.f32.mrf.mxu0
      %v5153 = vadd.f32 0.0, %v5152
      %v5154 = vpop.f32.mrf.mxu0
      %v5155 = vadd.f32 0.0, %v5154
      %5156 = vdwg.mxu0
      %5157 = vmatpush.bf16.msra.mxu0 0
      %5158 = vmatpush.bf16.msra.mxu0 %v4955
      %5159 = vmatpush.bf16.msra.mxu0 %v4954
      %5160 = vmatpush.bf16.msra.mxu0 %v4953
      %5161 = vmatpush.bf16.msra.mxu0 %v4952
      %5162 = vmatpush.bf16.msra.mxu0 %v4951
      %5163 = vmatpush.bf16.msra.mxu0 %v4950
      %5164 = vmatpush.bf16.msra.mxu0 %v4949
      %5165 = vmatmul.bf16.gmra.mxu0 %v5117
      %v5166 = vpop.f32.mrf.mxu0
      %v5167 = vadd.f32 %v5138, %v5166
      %v5168 = vpop.f32.mrf.mxu0
      %v5169 = vadd.f32 %v5140, %v5168
      %5170 = vmatmul.bf16.gmra.mxu0 %v5120
      %v5171 = vpop.f32.mrf.mxu0
      %v5172 = vadd.f32 %v5143, %v5171
      %v5173 = vpop.f32.mrf.mxu0
      %v5174 = vadd.f32 %v5145, %v5173
      %5175 = vmatmul.bf16.gmra.mxu0 %v5123
      %v5176 = vpop.f32.mrf.mxu0
      %v5177 = vadd.f32 %v5148, %v5176
      %v5178 = vpop.f32.mrf.mxu0
      %v5179 = vadd.f32 %v5150, %v5178
      %5180 = vmatmul.bf16.gmra.mxu0 %v5126
      %v5181 = vpop.f32.mrf.mxu0
      %v5182 = vadd.f32 %v5153, %v5181
      %v5183 = vpop.f32.mrf.mxu0
      %v5184 = vadd.f32 %v5155, %v5183
      %5185 = vdwg.mxu0
      %v5186 = vmax.f32 %v5052, %v5167
      %v5187 = vmax.f32 %v5054, %v5169
      %v5188 = vmax.f32 %v5057, %v5172
      %v5189 = vmax.f32 %v5059, %v5174
      %v5190 = vmax.f32 %v5062, %v5177
      %v5191 = vmax.f32 %v5064, %v5179
      %v5192 = vmax.f32 %v5067, %v5182
      %v5193 = vmax.f32 %v5069, %v5184
      %v5194 = vpack.c.bf16 %v5186, %v5186
      %v5195 = vpack.c.bf16 %v5187, %v5187
      %v5196 = vpack.c.bf16 %v5188, %v5188
      %v5197 = vpack.c.bf16 %v5189, %v5189
      %v5198 = vpack.c.bf16 %v5190, %v5190
      %v5199 = vpack.c.bf16 %v5191, %v5191
      %v5200 = vpack.c.bf16 %v5192, %v5192
      %v5201 = vpack.c.bf16 %v5193, %v5193
      %vm5202 = vcmask 257024
      %5203 = vst.msk [vmem:[#allocation3] sm:$0xf] %vm5202, 0
      %5204 = vst.msk [vmem:[#allocation3 + $0x4] sm:$0xf] %vm5202, 0
      %5205 = vst.msk [vmem:[#allocation3 + $0x8] sm:$0xf] %vm5202, 0
      %5206 = vst.msk [vmem:[#allocation3 + $0xc] sm:$0xf] %vm5202, 0
      %5207 = vst.msk [vmem:[#allocation3 + $0x10] sm:$0xf] %vm5202, 0
      %5208 = vst.msk [vmem:[#allocation3 + $0x14] sm:$0xf] %vm5202, 0
      %5209 = vst.msk [vmem:[#allocation3 + $0x18] sm:$0xf] %vm5202, 0
      %5210 = vst.msk [vmem:[#allocation3 + $0x1c] sm:$0xf] %vm5202, 0
      %5211 = vst.msk [vmem:[#allocation3 + $0x20] sm:$0xf] %vm5202, 0
      %5212 = vst.msk [vmem:[#allocation3 + $0x24] sm:$0xf] %vm5202, 0
      %5213 = vst.msk [vmem:[#allocation3 + $0x28] sm:$0xf] %vm5202, 0
      %5214 = vst.msk [vmem:[#allocation3 + $0x2c] sm:$0xf] %vm5202, 0
      %5215 = vst.msk [vmem:[#allocation3 + $0x8] sm:$0xf] %vm5202, %v5194
      %5216 = vst.msk [vmem:[#allocation3 + $0xc] sm:$0xf] %vm5202, %v5195
      %5217 = vst.msk [vmem:[#allocation3 + $0x10] sm:$0xf] %vm5202, %v5196
      %5218 = vst.msk [vmem:[#allocation3 + $0x14] sm:$0xf] %vm5202, %v5197
      %5219 = vst.msk [vmem:[#allocation3 + $0x18] sm:$0xf] %vm5202, %v5198
      %5220 = vst.msk [vmem:[#allocation3 + $0x1c] sm:$0xf] %vm5202, %v5199
      %5221 = vst.msk [vmem:[#allocation3 + $0x20] sm:$0xf] %vm5202, %v5200
      %5222 = vst.msk [vmem:[#allocation3 + $0x24] sm:$0xf] %vm5202, %v5201
      %vm5223 = vcmp.lt.s32.totalorder %v492, 0
      %v5224 = vsub.s32 0, %v492
      %v5225 = vsel %vm5223, %v5224, %v492
      %v5226 = vshrl.u32 %v5225, 3
      %v5227 = vand.u32 %v5225, 7
      %v5228 = vsub.s32 0, %v5227
      %v5229 = vsel %vm5223, %v5228, %v5227
      %vm5230 = vcmp.lt.s32.totalorder %v493, 0
      %v5231 = vsub.s32 0, %v493
      %v5232 = vsel %vm5230, %v5231, %v493
      %v5233 = vshrl.u32 %v5232, 3
      %v5234 = vand.u32 %v5232, 7
      %v5235 = vsub.s32 0, %v5234
      %v5236 = vsel %vm5230, %v5235, %v5234
      %vm5237 = vcmp.lt.s32.totalorder %v494, 0
      %v5238 = vsub.s32 0, %v494
      %v5239 = vsel %vm5237, %v5238, %v494
      %v5240 = vshrl.u32 %v5239, 3
      %v5241 = vand.u32 %v5239, 7
      %v5242 = vsub.s32 0, %v5241
      %v5243 = vsel %vm5237, %v5242, %v5241
      %vm5244 = vcmp.lt.s32.totalorder %v495, 0
      %v5245 = vsub.s32 0, %v495
      %v5246 = vsel %vm5244, %v5245, %v495
      %v5247 = vshrl.u32 %v5246, 3
      %v5248 = vand.u32 %v5246, 7
      %v5249 = vsub.s32 0, %v5248
      %v5250 = vsel %vm5244, %v5249, %v5248
      %vm5251 = vcmp.lt.s32.totalorder %v496, 0
      %v5252 = vsub.s32 0, %v496
      %v5253 = vsel %vm5251, %v5252, %v496
      %v5254 = vshrl.u32 %v5253, 3
      %v5255 = vand.u32 %v5253, 7
      %v5256 = vsub.s32 0, %v5255
      %v5257 = vsel %vm5251, %v5256, %v5255
      %vm5258 = vcmp.lt.s32.totalorder %v497, 0
      %v5259 = vsub.s32 0, %v497
      %v5260 = vsel %vm5258, %v5259, %v497
      %v5261 = vshrl.u32 %v5260, 3
      %v5262 = vand.u32 %v5260, 7
      %v5263 = vsub.s32 0, %v5262
      %v5264 = vsel %vm5258, %v5263, %v5262
      %vm5265 = vcmp.lt.s32.totalorder %v498, 0
      %v5266 = vsub.s32 0, %v498
      %v5267 = vsel %vm5265, %v5266, %v498
      %v5268 = vshrl.u32 %v5267, 3
      %v5269 = vand.u32 %v5267, 7
      %v5270 = vsub.s32 0, %v5269
      %v5271 = vsel %vm5265, %v5270, %v5269
      %vm5272 = vcmp.lt.s32.totalorder %v499, 0
      %v5273 = vsub.s32 0, %v499
      %v5274 = vsel %vm5272, %v5273, %v499
      %v5275 = vshrl.u32 %v5274, 3
      %v5276 = vand.u32 %v5274, 7
      %v5277 = vsub.s32 0, %v5276
      %v5278 = vsel %vm5272, %v5277, %v5276
      %vm5279 = vcmp.ne.s32.totalorder %v5229, 0
      %vm5280 = vcmp.ne.s32.totalorder %v5236, 0
      %vm5281 = vcmp.ne.s32.totalorder %v5243, 0
      %vm5282 = vcmp.ne.s32.totalorder %v5250, 0
      %vm5283 = vcmp.ne.s32.totalorder %v5257, 0
      %vm5284 = vcmp.ne.s32.totalorder %v5264, 0
      %vm5285 = vcmp.ne.s32.totalorder %v5271, 0
      %vm5286 = vcmp.ne.s32.totalorder %v5278, 0
      %vm5287 = vcmp.lt.s32.totalorder %v5229, 0
      %vm5288 = vcmp.lt.s32.totalorder %v5236, 0
      %vm5289 = vcmp.lt.s32.totalorder %v5243, 0
      %vm5290 = vcmp.lt.s32.totalorder %v5250, 0
      %vm5291 = vcmp.lt.s32.totalorder %v5257, 0
      %vm5292 = vcmp.lt.s32.totalorder %v5264, 0
      %vm5293 = vcmp.lt.s32.totalorder %v5271, 0
      %vm5294 = vcmp.lt.s32.totalorder %v5278, 0
      %vm5295 = vmand %vm5287, %vm5279
      %vm5296 = vmand %vm5288, %vm5280
      %vm5297 = vmand %vm5289, %vm5281
      %vm5298 = vmand %vm5290, %vm5282
      %vm5299 = vmand %vm5291, %vm5283
      %vm5300 = vmand %vm5292, %vm5284
      %vm5301 = vmand %vm5293, %vm5285
      %vm5302 = vmand %vm5294, %vm5286
      %v5303 = vadd.s32 %v5229, 8
      %v5304 = vadd.s32 %v5236, 8
      %v5305 = vadd.s32 %v5243, 8
      %v5306 = vadd.s32 %v5250, 8
      %v5307 = vadd.s32 %v5257, 8
      %v5308 = vadd.s32 %v5264, 8
      %v5309 = vadd.s32 %v5271, 8
      %v5310 = vadd.s32 %v5278, 8
      %v5311 = vsel %vm5295, %v5303, %v5229
      %v5312 = vsel %vm5296, %v5304, %v5236
      %v5313 = vsel %vm5297, %v5305, %v5243
      %v5314 = vsel %vm5298, %v5306, %v5250
      %v5315 = vsel %vm5299, %v5307, %v5257
      %v5316 = vsel %vm5300, %v5308, %v5264
      %v5317 = vsel %vm5301, %v5309, %v5271
      %v5318 = vsel %vm5302, %v5310, %v5278
      %vm5319 = vcmp.ne.s32.totalorder %v5311, 0
      %vm5320 = vcmp.ne.s32.totalorder %v5312, 0
      %vm5321 = vcmp.ne.s32.totalorder %v5313, 0
      %vm5322 = vcmp.ne.s32.totalorder %v5314, 0
      %vm5323 = vcmp.ne.s32.totalorder %v5315, 0
      %vm5324 = vcmp.ne.s32.totalorder %v5316, 0
      %vm5325 = vcmp.ne.s32.totalorder %v5317, 0
      %vm5326 = vcmp.ne.s32.totalorder %v5318, 0
      %v5327 = vsel %vm5319, 1, 0
      %v5328 = vsel %vm5320, 1, 0
      %v5329 = vsel %vm5321, 1, 0
      %v5330 = vsel %vm5322, 1, 0
      %v5331 = vsel %vm5323, 1, 0
      %v5332 = vsel %vm5324, 1, 0
      %v5333 = vsel %vm5325, 1, 0
      %v5334 = vsel %vm5326, 1, 0
      %v5335 = vcvt.s32.f32 %v5327
      %v5336 = vcvt.s32.f32 %v5328
      %v5337 = vcvt.s32.f32 %v5329
      %v5338 = vcvt.s32.f32 %v5330
      %v5339 = vcvt.s32.f32 %v5331
      %v5340 = vcvt.s32.f32 %v5332
      %v5341 = vcvt.s32.f32 %v5333
      %v5342 = vcvt.s32.f32 %v5334
      %v5343 = vpack.c.bf16 %v5335, %v5335
      %v5344 = vpack.c.bf16 %v5336, %v5336
      %v5345 = vpack.c.bf16 %v5337, %v5337
      %v5346 = vpack.c.bf16 %v5338, %v5338
      %v5347 = vpack.c.bf16 %v5339, %v5339
      %v5348 = vpack.c.bf16 %v5340, %v5340
      %v5349 = vpack.c.bf16 %v5341, %v5341
      %v5350 = vpack.c.bf16 %v5342, %v5342
      %vm5351 = vcmp.ne.s32.totalorder %v5311, 7
      %vm5352 = vcmp.ne.s32.totalorder %v5312, 7
      %vm5353 = vcmp.ne.s32.totalorder %v5313, 7
      %vm5354 = vcmp.ne.s32.totalorder %v5314, 7
      %vm5355 = vcmp.ne.s32.totalorder %v5315, 7
      %vm5356 = vcmp.ne.s32.totalorder %v5316, 7
      %vm5357 = vcmp.ne.s32.totalorder %v5317, 7
      %vm5358 = vcmp.ne.s32.totalorder %v5318, 7
      %v5359 = vsel %vm5351, 1, 0
      %v5360 = vsel %vm5352, 1, 0
      %v5361 = vsel %vm5353, 1, 0
      %v5362 = vsel %vm5354, 1, 0
      %v5363 = vsel %vm5355, 1, 0
      %v5364 = vsel %vm5356, 1, 0
      %v5365 = vsel %vm5357, 1, 0
      %v5366 = vsel %vm5358, 1, 0
      %v5367 = vcvt.s32.f32 %v5359
      %v5368 = vcvt.s32.f32 %v5360
      %v5369 = vcvt.s32.f32 %v5361
      %v5370 = vcvt.s32.f32 %v5362
      %v5371 = vcvt.s32.f32 %v5363
      %v5372 = vcvt.s32.f32 %v5364
      %v5373 = vcvt.s32.f32 %v5365
      %v5374 = vcvt.s32.f32 %v5366
      %v5375 = vpack.c.bf16 %v5367, %v5367
      %v5376 = vpack.c.bf16 %v5368, %v5368
      %v5377 = vpack.c.bf16 %v5369, %v5369
      %v5378 = vpack.c.bf16 %v5370, %v5370
      %v5379 = vpack.c.bf16 %v5371, %v5371
      %v5380 = vpack.c.bf16 %v5372, %v5372
      %v5381 = vpack.c.bf16 %v5373, %v5373
      %v5382 = vpack.c.bf16 %v5374, %v5374
      %v5383 = vld [vmem:[#allocation3] sm:$0x8]
      %v5384 = vld [vmem:[#allocation3 + $0x4] sm:$0xf]
      %v5385 = vld [vmem:[#allocation3 + $0x8] sm:$0xf]
      %v5386 = vld [vmem:[#allocation3 + $0xc] sm:$0xf]
      %v5387 = vld [vmem:[#allocation3 + $0x10] sm:$0xf]
      %v5388 = vld [vmem:[#allocation3 + $0x14] sm:$0xf]
      %v5389 = vld [vmem:[#allocation3 + $0x18] sm:$0xf]
      %v5390 = vld [vmem:[#allocation3 + $0x1c] sm:$0xf]
      %v5391 = vld [vmem:[#allocation3 + $0x20] sm:$0xf]
      %v5392 = vunpack.c.l.bf16 %v5383
      %v5393 = vunpack.c.l.bf16 %v5384
      %v5394 = vunpack.c.l.bf16 %v5385
      %v5395 = vunpack.c.l.bf16 %v5386
      %v5396 = vunpack.c.l.bf16 %v5387
      %v5397 = vunpack.c.l.bf16 %v5388
      %v5398 = vunpack.c.l.bf16 %v5389
      %v5399 = vunpack.c.l.bf16 %v5390
      %v5400 = vunpack.c.l.bf16 %v5391
      %v5401 = vunpack.c.l.bf16 %v5343
      %v5402 = vunpack.c.l.bf16 %v5344
      %v5403 = vunpack.c.l.bf16 %v5345
      %v5404 = vunpack.c.l.bf16 %v5346
      %v5405 = vunpack.c.l.bf16 %v5347
      %v5406 = vunpack.c.l.bf16 %v5348
      %v5407 = vunpack.c.l.bf16 %v5349
      %v5408 = vunpack.c.l.bf16 %v5350
      %v5417 = vrot.slane %v5401, 1
      %v5418 = vrot.slane %v5402, 1
      %v5419 = vsel %vm1294, %v5417, %v5418
      %v5420 = vrot.slane %v5403, 1
      %v5421 = vsel %vm1294, %v5418, %v5420
      %v5422 = vrot.slane %v5404, 1
      %v5423 = vsel %vm1294, %v5420, %v5422
      %v5424 = vrot.slane %v5405, 1
      %v5425 = vsel %vm1294, %v5422, %v5424
      %v5426 = vrot.slane %v5406, 1
      %v5427 = vsel %vm1294, %v5424, %v5426
      %v5428 = vrot.slane %v5407, 1
      %v5429 = vsel %vm1294, %v5426, %v5428
      %v5430 = vrot.slane %v5408, 1
      %v5431 = vsel %vm1294, %v5428, %v5430
      %v5441 = vmul.f32 %v5392, %v5417
      %v5442 = vmul.f32 %v5393, %v5419
      %v5443 = vmul.f32 %v5394, %v5421
      %v5444 = vmul.f32 %v5395, %v5423
      %v5445 = vmul.f32 %v5396, %v5425
      %v5446 = vmul.f32 %v5397, %v5427
      %v5447 = vmul.f32 %v5398, %v5429
      %v5448 = vmul.f32 %v5399, %v5431
      %v5449 = vmul.f32 %v5400, %v5430
      %v5450 = vpack.c.bf16 %v5442, %v5441
      %v5451 = vpack.c.bf16 %v5444, %v5443
      %v5452 = vpack.c.bf16 %v5446, %v5445
      %v5453 = vpack.c.bf16 %v5448, %v5447
      %v5454 = vpack.c.bf16 %v5449, %v5449
      %v5455 = vld [vmem:[%s3] sm:$0xf]
      %v5456 = vld [vmem:[%s3 + $0x4] sm:$0xf]
      %v5457 = vld [vmem:[%s3 + $0x8] sm:$0xf]
      %v5458 = vld [vmem:[%s3 + $0xc] sm:$0xf]
      %s5459 = scalar_lea.vmem %s3, 16
      %v5460 = vld [vmem:[%s5459] sm:$0xf]
      %v5461 = vld [vmem:[%s5459 + $0x4] sm:$0xf]
      %v5462 = vld [vmem:[%s5459 + $0x8] sm:$0xf]
      %v5463 = vld [vmem:[%s5459 + $0xc] sm:$0xf]
      %v5472 = vunpack.c.l.b16 %v5384
      %v5473 = vunpack.c.l.b16 %v5385
      %v5474 = vunpack.c.l.b16 %v5386
      %v5475 = vunpack.c.l.b16 %v5387
      %v5476 = vunpack.c.l.b16 %v5388
      %v5477 = vunpack.c.l.b16 %v5389
      %v5478 = vunpack.c.l.b16 %v5390
      %v5479 = vunpack.c.l.b16 %v5391
      %v5480 = vpack.c.b16 %v5473, %v5472
      %v5481 = vpack.c.b16 %v5475, %v5474
      %v5482 = vpack.c.b16 %v5477, %v5476
      %v5483 = vpack.c.b16 %v5479, %v5478
      %v5488 = vunpack.c.l.b16 %v5460
      %v5489 = vunpack.c.l.b16 %v5461
      %v5490 = vunpack.c.l.b16 %v5462
      %v5491 = vunpack.c.l.b16 %v5463
      %v5492 = vpack.c.b16 %v5489, %v5488
      %v5493 = vpack.c.b16 %v5491, %v5490
      %vm5496 = vcmask 261120
      %v5498 = vsel %vm5496, %v5480, 0
      %v5501 = vsel %vm5496, %v5481, 0
      %v5504 = vsel %vm5496, %v5482, 0
      %v5507 = vsel %vm5496, %v5483, 0
      %5509 = vmatpush.bf16.msra.mxu0 0
      %5510 = vmatpush.bf16.msra.mxu0 0
      %5511 = vmatpush.bf16.msra.mxu0 0
      %5512 = vmatpush.bf16.msra.mxu0 0
      %5513 = vmatpush.bf16.msra.mxu0 0
      %5514 = vmatpush.bf16.msra.mxu0 0
      %5515 = vmatpush.bf16.msra.mxu0 %v5493
      %5516 = vmatpush.bf16.msra.mxu0 %v5492
      %5517 = vmatmul.bf16.gmra.mxu0 %v5498
      %v5518 = vpop.f32.mrf.mxu0
      %v5519 = vadd.f32 0.0, %v5518
      %v5520 = vpop.f32.mrf.mxu0
      %v5521 = vadd.f32 0.0, %v5520
      %5522 = vmatmul.bf16.gmra.mxu0 %v5501
      %v5523 = vpop.f32.mrf.mxu0
      %v5524 = vadd.f32 0.0, %v5523
      %v5525 = vpop.f32.mrf.mxu0
      %v5526 = vadd.f32 0.0, %v5525
      %5527 = vmatmul.bf16.gmra.mxu0 %v5504
      %v5528 = vpop.f32.mrf.mxu0
      %v5529 = vadd.f32 0.0, %v5528
      %v5530 = vpop.f32.mrf.mxu0
      %v5531 = vadd.f32 0.0, %v5530
      %5532 = vmatmul.bf16.gmra.mxu0 %v5507
      %v5533 = vpop.f32.mrf.mxu0
      %v5534 = vadd.f32 0.0, %v5533
      %v5535 = vpop.f32.mrf.mxu0
      %v5536 = vadd.f32 0.0, %v5535
      %5537 = vdwg.mxu0
      %v5539 = vshrl.u32 %v5450, 16
      %v5541 = vrot.slane %v5539, 3
      %v5542 = vshll.u32 %v5450, 16
      %v5544 = vrot.slane %v5542, 4
      %v5545 = vor.u32 %v5541, %v5544
      %v5547 = vshrl.u32 %v5451, 16
      %v5549 = vrot.slane %v5547, 3
      %v5550 = vshll.u32 %v5451, 16
      %v5552 = vrot.slane %v5550, 4
      %v5553 = vor.u32 %v5549, %v5552
      %v5554 = vsel %vm1666, %v5545, %v5553
      %v5556 = vshrl.u32 %v5452, 16
      %v5558 = vrot.slane %v5556, 3
      %v5559 = vshll.u32 %v5452, 16
      %v5561 = vrot.slane %v5559, 4
      %v5562 = vor.u32 %v5558, %v5561
      %v5563 = vsel %vm1666, %v5553, %v5562
      %v5565 = vshrl.u32 %v5453, 16
      %v5567 = vrot.slane %v5565, 3
      %v5568 = vshll.u32 %v5453, 16
      %v5570 = vrot.slane %v5568, 4
      %v5571 = vor.u32 %v5567, %v5570
      %v5572 = vsel %vm1666, %v5562, %v5571
      %v5574 = vshrl.u32 %v5454, 16
      %v5576 = vrot.slane %v5574, 3
      %v5577 = vshll.u32 %v5454, 16
      %v5579 = vrot.slane %v5577, 4
      %v5580 = vor.u32 %v5576, %v5579
      %v5581 = vsel %vm1666, %v5571, %v5580
      %v5586 = vunpack.c.l.b16 %v5455
      %v5587 = vunpack.c.l.b16 %v5456
      %v5588 = vunpack.c.l.b16 %v5457
      %v5589 = vunpack.c.l.b16 %v5458
      %v5590 = vpack.c.b16 %v5587, %v5586
      %v5591 = vpack.c.b16 %v5589, %v5588
      %v5595 = vsel %vm5496, %v5554, 0
      %v5598 = vsel %vm5496, %v5563, 0
      %v5601 = vsel %vm5496, %v5572, 0
      %v5604 = vsel %vm5496, %v5581, 0
      %5606 = vmatpush.bf16.msra.mxu0 0
      %5607 = vmatpush.bf16.msra.mxu0 0
      %5608 = vmatpush.bf16.msra.mxu0 0
      %5609 = vmatpush.bf16.msra.mxu0 0
      %5610 = vmatpush.bf16.msra.mxu0 0
      %5611 = vmatpush.bf16.msra.mxu0 0
      %5612 = vmatpush.bf16.msra.mxu0 %v5591
      %5613 = vmatpush.bf16.msra.mxu0 %v5590
      %5614 = vmatmul.bf16.gmra.mxu0 %v5595
      %v5615 = vpop.f32.mrf.mxu0
      %v5616 = vadd.f32 %v5519, %v5615
      %v5617 = vpop.f32.mrf.mxu0
      %v5618 = vadd.f32 %v5521, %v5617
      %5619 = vmatmul.bf16.gmra.mxu0 %v5598
      %v5620 = vpop.f32.mrf.mxu0
      %v5621 = vadd.f32 %v5524, %v5620
      %v5622 = vpop.f32.mrf.mxu0
      %v5623 = vadd.f32 %v5526, %v5622
      %5624 = vmatmul.bf16.gmra.mxu0 %v5601
      %v5625 = vpop.f32.mrf.mxu0
      %v5626 = vadd.f32 %v5529, %v5625
      %v5627 = vpop.f32.mrf.mxu0
      %v5628 = vadd.f32 %v5531, %v5627
      %5629 = vmatmul.bf16.gmra.mxu0 %v5604
      %v5630 = vpop.f32.mrf.mxu0
      %v5631 = vadd.f32 %v5534, %v5630
      %v5632 = vpop.f32.mrf.mxu0
      %v5633 = vadd.f32 %v5536, %v5632
      %5634 = vdwg.mxu0
      %v5635 = vld [vmem:[#allocation3 + $0x4] sm:$0xf]
      %v5636 = vld [vmem:[#allocation3 + $0x8] sm:$0xf]
      %v5637 = vld [vmem:[#allocation3 + $0xc] sm:$0xf]
      %v5638 = vld [vmem:[#allocation3 + $0x10] sm:$0xf]
      %v5639 = vld [vmem:[#allocation3 + $0x14] sm:$0xf]
      %v5640 = vld [vmem:[#allocation3 + $0x18] sm:$0xf]
      %v5641 = vld [vmem:[#allocation3 + $0x1c] sm:$0xf]
      %v5642 = vld [vmem:[#allocation3 + $0x20] sm:$0xf]
      %v5643 = vld [vmem:[#allocation3 + $0x24] sm:$0x1]
      %v5644 = vunpack.c.l.bf16 %v5635
      %v5645 = vunpack.c.l.bf16 %v5636
      %v5646 = vunpack.c.l.bf16 %v5637
      %v5647 = vunpack.c.l.bf16 %v5638
      %v5648 = vunpack.c.l.bf16 %v5639
      %v5649 = vunpack.c.l.bf16 %v5640
      %v5650 = vunpack.c.l.bf16 %v5641
      %v5651 = vunpack.c.l.bf16 %v5642
      %v5652 = vunpack.c.l.bf16 %v5643
      %v5653 = vunpack.c.l.bf16 %v5375
      %v5654 = vunpack.c.l.bf16 %v5376
      %v5655 = vunpack.c.l.bf16 %v5377
      %v5656 = vunpack.c.l.bf16 %v5378
      %v5657 = vunpack.c.l.bf16 %v5379
      %v5658 = vunpack.c.l.bf16 %v5380
      %v5659 = vunpack.c.l.bf16 %v5381
      %v5660 = vunpack.c.l.bf16 %v5382
      %v5669 = vrot.slane %v5653, 7
      %v5670 = vrot.slane %v5654, 7
      %v5671 = vsel %vm2089, %v5669, %v5670
      %v5672 = vrot.slane %v5655, 7
      %v5673 = vsel %vm2089, %v5670, %v5672
      %v5674 = vrot.slane %v5656, 7
      %v5675 = vsel %vm2089, %v5672, %v5674
      %v5676 = vrot.slane %v5657, 7
      %v5677 = vsel %vm2089, %v5674, %v5676
      %v5678 = vrot.slane %v5658, 7
      %v5679 = vsel %vm2089, %v5676, %v5678
      %v5680 = vrot.slane %v5659, 7
      %v5681 = vsel %vm2089, %v5678, %v5680
      %v5682 = vrot.slane %v5660, 7
      %v5683 = vsel %vm2089, %v5680, %v5682
      %v5693 = vmul.f32 %v5644, %v5669
      %v5694 = vmul.f32 %v5645, %v5671
      %v5695 = vmul.f32 %v5646, %v5673
      %v5696 = vmul.f32 %v5647, %v5675
      %v5697 = vmul.f32 %v5648, %v5677
      %v5698 = vmul.f32 %v5649, %v5679
      %v5699 = vmul.f32 %v5650, %v5681
      %v5700 = vmul.f32 %v5651, %v5683
      %v5701 = vmul.f32 %v5652, %v5682
      %v5702 = vpack.c.bf16 %v5694, %v5693
      %v5703 = vpack.c.bf16 %v5696, %v5695
      %v5704 = vpack.c.bf16 %v5698, %v5697
      %v5705 = vpack.c.bf16 %v5700, %v5699
      %v5706 = vpack.c.bf16 %v5701, %v5701
      %s5707 = scalar_lea.vmem %s3, 32
      %v5708 = vld [vmem:[%s5707] sm:$0xf]
      %v5709 = vld [vmem:[%s5707 + $0x4] sm:$0xf]
      %v5710 = vld [vmem:[%s5707 + $0x8] sm:$0xf]
      %v5711 = vld [vmem:[%s5707 + $0xc] sm:$0xf]
      %v5713 = vshrl.u32 %v5702, 16
      %v5715 = vshll.u32 %v5702, 16
      %v5717 = vrot.slane %v5715, 1
      %v5718 = vor.u32 %v5713, %v5717
      %v5720 = vshll.u32 %v5703, 16
      %v5722 = vrot.slane %v5720, 1
      %v5723 = vsel %vm2238, %v5718, %v5722
      %v5724 = vshrl.u32 %v5703, 16
      %v5726 = vor.u32 %v5724, %v5722
      %v5728 = vshll.u32 %v5704, 16
      %v5730 = vrot.slane %v5728, 1
      %v5731 = vsel %vm2238, %v5726, %v5730
      %v5732 = vshrl.u32 %v5704, 16
      %v5734 = vor.u32 %v5732, %v5730
      %v5736 = vshll.u32 %v5705, 16
      %v5738 = vrot.slane %v5736, 1
      %v5739 = vsel %vm2238, %v5734, %v5738
      %v5740 = vshrl.u32 %v5705, 16
      %v5742 = vor.u32 %v5740, %v5738
      %v5744 = vshll.u32 %v5706, 16
      %v5746 = vrot.slane %v5744, 1
      %v5747 = vsel %vm2238, %v5742, %v5746
      %v5752 = vunpack.c.l.b16 %v5708
      %v5753 = vunpack.c.l.b16 %v5709
      %v5754 = vunpack.c.l.b16 %v5710
      %v5755 = vunpack.c.l.b16 %v5711
      %v5756 = vpack.c.b16 %v5753, %v5752
      %v5757 = vpack.c.b16 %v5755, %v5754
      %v5761 = vsel %vm5496, %v5723, 0
      %v5764 = vsel %vm5496, %v5731, 0
      %v5767 = vsel %vm5496, %v5739, 0
      %v5770 = vsel %vm5496, %v5747, 0
      %5772 = vmatpush.bf16.msra.mxu0 0
      %5773 = vmatpush.bf16.msra.mxu0 0
      %5774 = vmatpush.bf16.msra.mxu0 0
      %5775 = vmatpush.bf16.msra.mxu0 0
      %5776 = vmatpush.bf16.msra.mxu0 0
      %5777 = vmatpush.bf16.msra.mxu0 0
      %5778 = vmatpush.bf16.msra.mxu0 %v5757
      %5779 = vmatpush.bf16.msra.mxu0 %v5756
      %5780 = vmatmul.bf16.gmra.mxu0 %v5761
      %v5781 = vpop.f32.mrf.mxu0
      %v5782 = vadd.f32 0.0, %v5781
      %v5783 = vpop.f32.mrf.mxu0
      %v5784 = vadd.f32 0.0, %v5783
      %5785 = vmatmul.bf16.gmra.mxu0 %v5764
      %v5786 = vpop.f32.mrf.mxu0
      %v5787 = vadd.f32 0.0, %v5786
      %v5788 = vpop.f32.mrf.mxu0
      %v5789 = vadd.f32 0.0, %v5788
      %5790 = vmatmul.bf16.gmra.mxu0 %v5767
      %v5791 = vpop.f32.mrf.mxu0
      %v5792 = vadd.f32 0.0, %v5791
      %v5793 = vpop.f32.mrf.mxu0
      %v5794 = vadd.f32 0.0, %v5793
      %5795 = vmatmul.bf16.gmra.mxu0 %v5770
      %v5796 = vpop.f32.mrf.mxu0
      %v5797 = vadd.f32 0.0, %v5796
      %v5798 = vpop.f32.mrf.mxu0
      %v5799 = vadd.f32 0.0, %v5798
      %5800 = vdwg.mxu0
      %v5801 = vadd.f32 %v5616, %v5782
      %v5802 = vadd.f32 %v5618, %v5784
      %v5803 = vadd.f32 %v5621, %v5787
      %v5804 = vadd.f32 %v5623, %v5789
      %v5805 = vadd.f32 %v5626, %v5792
      %v5806 = vadd.f32 %v5628, %v5794
      %v5807 = vadd.f32 %v5631, %v5797
      %v5808 = vadd.f32 %v5633, %v5799
      %v5809 = vld [vmem:[#allocation3 + $0x4] sm:$0x8]
      %v5810 = vld [vmem:[#allocation3 + $0x24] sm:$0xf]
      %v5811 = vunpack.c.l.bf16 %v5809
      %v5812 = vunpack.c.l.bf16 %v5810
      %v5813 = vmul.f32 %v5811, %v5417
      %v5814 = vmul.f32 %v5645, %v5419
      %v5815 = vmul.f32 %v5646, %v5421
      %v5816 = vmul.f32 %v5647, %v5423
      %v5817 = vmul.f32 %v5648, %v5425
      %v5818 = vmul.f32 %v5649, %v5427
      %v5819 = vmul.f32 %v5650, %v5429
      %v5820 = vmul.f32 %v5651, %v5431
      %v5821 = vmul.f32 %v5812, %v5430
      %v5822 = vpack.c.bf16 %v5814, %v5813
      %v5823 = vpack.c.bf16 %v5816, %v5815
      %v5824 = vpack.c.bf16 %v5818, %v5817
      %v5825 = vpack.c.bf16 %v5820, %v5819
      %v5826 = vpack.c.bf16 %v5821, %v5821
      %s5827 = scalar_lea.vmem %s3, 48
      %v5828 = vld [vmem:[%s5827] sm:$0xf]
      %v5829 = vld [vmem:[%s5827 + $0x4] sm:$0xf]
      %v5830 = vld [vmem:[%s5827 + $0x8] sm:$0xf]
      %v5831 = vld [vmem:[%s5827 + $0xc] sm:$0xf]
      %v5833 = vshrl.u32 %v5822, 16
      %v5835 = vrot.slane %v5833, 3
      %v5836 = vshll.u32 %v5822, 16
      %v5838 = vrot.slane %v5836, 4
      %v5839 = vor.u32 %v5835, %v5838
      %v5841 = vshrl.u32 %v5823, 16
      %v5843 = vrot.slane %v5841, 3
      %v5844 = vshll.u32 %v5823, 16
      %v5846 = vrot.slane %v5844, 4
      %v5847 = vor.u32 %v5843, %v5846
      %v5848 = vsel %vm1666, %v5839, %v5847
      %v5850 = vshrl.u32 %v5824, 16
      %v5852 = vrot.slane %v5850, 3
      %v5853 = vshll.u32 %v5824, 16
      %v5855 = vrot.slane %v5853, 4
      %v5856 = vor.u32 %v5852, %v5855
      %v5857 = vsel %vm1666, %v5847, %v5856
      %v5859 = vshrl.u32 %v5825, 16
      %v5861 = vrot.slane %v5859, 3
      %v5862 = vshll.u32 %v5825, 16
      %v5864 = vrot.slane %v5862, 4
      %v5865 = vor.u32 %v5861, %v5864
      %v5866 = vsel %vm1666, %v5856, %v5865
      %v5868 = vshrl.u32 %v5826, 16
      %v5870 = vrot.slane %v5868, 3
      %v5871 = vshll.u32 %v5826, 16
      %v5873 = vrot.slane %v5871, 4
      %v5874 = vor.u32 %v5870, %v5873
      %v5875 = vsel %vm1666, %v5865, %v5874
      %v5880 = vunpack.c.l.b16 %v5828
      %v5881 = vunpack.c.l.b16 %v5829
      %v5882 = vunpack.c.l.b16 %v5830
      %v5883 = vunpack.c.l.b16 %v5831
      %v5884 = vpack.c.b16 %v5881, %v5880
      %v5885 = vpack.c.b16 %v5883, %v5882
      %v5889 = vsel %vm5496, %v5848, 0
      %v5892 = vsel %vm5496, %v5857, 0
      %v5895 = vsel %vm5496, %v5866, 0
      %v5898 = vsel %vm5496, %v5875, 0
      %5900 = vmatpush.bf16.msra.mxu0 0
      %5901 = vmatpush.bf16.msra.mxu0 0
      %5902 = vmatpush.bf16.msra.mxu0 0
      %5903 = vmatpush.bf16.msra.mxu0 0
      %5904 = vmatpush.bf16.msra.mxu0 0
      %5905 = vmatpush.bf16.msra.mxu0 0
      %5906 = vmatpush.bf16.msra.mxu0 %v5885
      %5907 = vmatpush.bf16.msra.mxu0 %v5884
      %5908 = vmatmul.bf16.gmra.mxu0 %v5889
      %v5909 = vpop.f32.mrf.mxu0
      %v5910 = vadd.f32 0.0, %v5909
      %v5911 = vpop.f32.mrf.mxu0
      %v5912 = vadd.f32 0.0, %v5911
      %5913 = vmatmul.bf16.gmra.mxu0 %v5892
      %v5914 = vpop.f32.mrf.mxu0
      %v5915 = vadd.f32 0.0, %v5914
      %v5916 = vpop.f32.mrf.mxu0
      %v5917 = vadd.f32 0.0, %v5916
      %5918 = vmatmul.bf16.gmra.mxu0 %v5895
      %v5919 = vpop.f32.mrf.mxu0
      %v5920 = vadd.f32 0.0, %v5919
      %v5921 = vpop.f32.mrf.mxu0
      %v5922 = vadd.f32 0.0, %v5921
      %5923 = vmatmul.bf16.gmra.mxu0 %v5898
      %v5924 = vpop.f32.mrf.mxu0
      %v5925 = vadd.f32 0.0, %v5924
      %v5926 = vpop.f32.mrf.mxu0
      %v5927 = vadd.f32 0.0, %v5926
      %5928 = vdwg.mxu0
      %v5929 = vadd.f32 %v5801, %v5910
      %v5930 = vadd.f32 %v5802, %v5912
      %v5931 = vadd.f32 %v5803, %v5915
      %v5932 = vadd.f32 %v5804, %v5917
      %v5933 = vadd.f32 %v5805, %v5920
      %v5934 = vadd.f32 %v5806, %v5922
      %v5935 = vadd.f32 %v5807, %v5925
      %v5936 = vadd.f32 %v5808, %v5927
      %s5937 = scalar_lea.vmem %s3, 64
      %v5938 = vld [vmem:[%s5937] sm:$0xf]
      %v5939 = vld [vmem:[%s5937 + $0x4] sm:$0xf]
      %v5940 = vld [vmem:[%s5937 + $0x8] sm:$0xf]
      %v5941 = vld [vmem:[%s5937 + $0xc] sm:$0xf]
      %v5950 = vunpack.c.l.b16 %v5636
      %v5951 = vunpack.c.l.b16 %v5637
      %v5952 = vunpack.c.l.b16 %v5638
      %v5953 = vunpack.c.l.b16 %v5639
      %v5954 = vunpack.c.l.b16 %v5640
      %v5955 = vunpack.c.l.b16 %v5641
      %v5956 = vunpack.c.l.b16 %v5642
      %v5957 = vunpack.c.l.b16 %v5810
      %v5958 = vpack.c.b16 %v5951, %v5950
      %v5959 = vpack.c.b16 %v5953, %v5952
      %v5960 = vpack.c.b16 %v5955, %v5954
      %v5961 = vpack.c.b16 %v5957, %v5956
      %v5966 = vunpack.c.l.b16 %v5938
      %v5967 = vunpack.c.l.b16 %v5939
      %v5968 = vunpack.c.l.b16 %v5940
      %v5969 = vunpack.c.l.b16 %v5941
      %v5970 = vpack.c.b16 %v5967, %v5966
      %v5971 = vpack.c.b16 %v5969, %v5968
      %v5975 = vsel %vm5496, %v5958, 0
      %v5978 = vsel %vm5496, %v5959, 0
      %v5981 = vsel %vm5496, %v5960, 0
      %v5984 = vsel %vm5496, %v5961, 0
      %5986 = vmatpush.bf16.msra.mxu0 0
      %5987 = vmatpush.bf16.msra.mxu0 0
      %5988 = vmatpush.bf16.msra.mxu0 0
      %5989 = vmatpush.bf16.msra.mxu0 0
      %5990 = vmatpush.bf16.msra.mxu0 0
      %5991 = vmatpush.bf16.msra.mxu0 0
      %5992 = vmatpush.bf16.msra.mxu0 %v5971
      %5993 = vmatpush.bf16.msra.mxu0 %v5970
      %5994 = vmatmul.bf16.gmra.mxu0 %v5975
      %v5995 = vpop.f32.mrf.mxu0
      %v5996 = vadd.f32 0.0, %v5995
      %v5997 = vpop.f32.mrf.mxu0
      %v5998 = vadd.f32 0.0, %v5997
      %5999 = vmatmul.bf16.gmra.mxu0 %v5978
      %v6000 = vpop.f32.mrf.mxu0
      %v6001 = vadd.f32 0.0, %v6000
      %v6002 = vpop.f32.mrf.mxu0
      %v6003 = vadd.f32 0.0, %v6002
      %6004 = vmatmul.bf16.gmra.mxu0 %v5981
      %v6005 = vpop.f32.mrf.mxu0
      %v6006 = vadd.f32 0.0, %v6005
      %v6007 = vpop.f32.mrf.mxu0
      %v6008 = vadd.f32 0.0, %v6007
      %6009 = vmatmul.bf16.gmra.mxu0 %v5984
      %v6010 = vpop.f32.mrf.mxu0
      %v6011 = vadd.f32 0.0, %v6010
      %v6012 = vpop.f32.mrf.mxu0
      %v6013 = vadd.f32 0.0, %v6012
      %6014 = vdwg.mxu0
      %v6015 = vadd.f32 %v5929, %v5996
      %v6016 = vadd.f32 %v5930, %v5998
      %v6017 = vadd.f32 %v5931, %v6001
      %v6018 = vadd.f32 %v5932, %v6003
      %v6019 = vadd.f32 %v5933, %v6006
      %v6020 = vadd.f32 %v5934, %v6008
      %v6021 = vadd.f32 %v5935, %v6011
      %v6022 = vadd.f32 %v5936, %v6013
      %v6023 = vld [vmem:[#allocation3 + $0x8] sm:$0xf]
      %v6024 = vld [vmem:[#allocation3 + $0xc] sm:$0xf]
      %v6025 = vld [vmem:[#allocation3 + $0x10] sm:$0xf]
      %v6026 = vld [vmem:[#allocation3 + $0x14] sm:$0xf]
      %v6027 = vld [vmem:[#allocation3 + $0x18] sm:$0xf]
      %v6028 = vld [vmem:[#allocation3 + $0x1c] sm:$0xf]
      %v6029 = vld [vmem:[#allocation3 + $0x20] sm:$0xf]
      %v6030 = vld [vmem:[#allocation3 + $0x24] sm:$0xf]
      %v6031 = vld [vmem:[#allocation3 + $0x28] sm:$0x1]
      %v6032 = vunpack.c.l.bf16 %v6023
      %v6033 = vunpack.c.l.bf16 %v6024
      %v6034 = vunpack.c.l.bf16 %v6025
      %v6035 = vunpack.c.l.bf16 %v6026
      %v6036 = vunpack.c.l.bf16 %v6027
      %v6037 = vunpack.c.l.bf16 %v6028
      %v6038 = vunpack.c.l.bf16 %v6029
      %v6039 = vunpack.c.l.bf16 %v6030
      %v6040 = vunpack.c.l.bf16 %v6031
      %v6041 = vmul.f32 %v6032, %v5669
      %v6042 = vmul.f32 %v6033, %v5671
      %v6043 = vmul.f32 %v6034, %v5673
      %v6044 = vmul.f32 %v6035, %v5675
      %v6045 = vmul.f32 %v6036, %v5677
      %v6046 = vmul.f32 %v6037, %v5679
      %v6047 = vmul.f32 %v6038, %v5681
      %v6048 = vmul.f32 %v6039, %v5683
      %v6049 = vmul.f32 %v6040, %v5682
      %v6050 = vpack.c.bf16 %v6042, %v6041
      %v6051 = vpack.c.bf16 %v6044, %v6043
      %v6052 = vpack.c.bf16 %v6046, %v6045
      %v6053 = vpack.c.bf16 %v6048, %v6047
      %v6054 = vpack.c.bf16 %v6049, %v6049
      %s6055 = scalar_lea.vmem %s3, 80
      %v6056 = vld [vmem:[%s6055] sm:$0xf]
      %v6057 = vld [vmem:[%s6055 + $0x4] sm:$0xf]
      %v6058 = vld [vmem:[%s6055 + $0x8] sm:$0xf]
      %v6059 = vld [vmem:[%s6055 + $0xc] sm:$0xf]
      %v6061 = vshrl.u32 %v6050, 16
      %v6063 = vshll.u32 %v6050, 16
      %v6065 = vrot.slane %v6063, 1
      %v6066 = vor.u32 %v6061, %v6065
      %v6068 = vshll.u32 %v6051, 16
      %v6070 = vrot.slane %v6068, 1
      %v6071 = vsel %vm2238, %v6066, %v6070
      %v6072 = vshrl.u32 %v6051, 16
      %v6074 = vor.u32 %v6072, %v6070
      %v6076 = vshll.u32 %v6052, 16
      %v6078 = vrot.slane %v6076, 1
      %v6079 = vsel %vm2238, %v6074, %v6078
      %v6080 = vshrl.u32 %v6052, 16
      %v6082 = vor.u32 %v6080, %v6078
      %v6084 = vshll.u32 %v6053, 16
      %v6086 = vrot.slane %v6084, 1
      %v6087 = vsel %vm2238, %v6082, %v6086
      %v6088 = vshrl.u32 %v6053, 16
      %v6090 = vor.u32 %v6088, %v6086
      %v6092 = vshll.u32 %v6054, 16
      %v6094 = vrot.slane %v6092, 1
      %v6095 = vsel %vm2238, %v6090, %v6094
      %v6100 = vunpack.c.l.b16 %v6056
      %v6101 = vunpack.c.l.b16 %v6057
      %v6102 = vunpack.c.l.b16 %v6058
      %v6103 = vunpack.c.l.b16 %v6059
      %v6104 = vpack.c.b16 %v6101, %v6100
      %v6105 = vpack.c.b16 %v6103, %v6102
      %v6109 = vsel %vm5496, %v6071, 0
      %v6112 = vsel %vm5496, %v6079, 0
      %v6115 = vsel %vm5496, %v6087, 0
      %v6118 = vsel %vm5496, %v6095, 0
      %6120 = vmatpush.bf16.msra.mxu0 0
      %6121 = vmatpush.bf16.msra.mxu0 0
      %6122 = vmatpush.bf16.msra.mxu0 0
      %6123 = vmatpush.bf16.msra.mxu0 0
      %6124 = vmatpush.bf16.msra.mxu0 0
      %6125 = vmatpush.bf16.msra.mxu0 0
      %6126 = vmatpush.bf16.msra.mxu0 %v6105
      %6127 = vmatpush.bf16.msra.mxu0 %v6104
      %6128 = vmatmul.bf16.gmra.mxu0 %v6109
      %v6129 = vpop.f32.mrf.mxu0
      %v6130 = vadd.f32 0.0, %v6129
      %v6131 = vpop.f32.mrf.mxu0
      %v6132 = vadd.f32 0.0, %v6131
      %6133 = vmatmul.bf16.gmra.mxu0 %v6112
      %v6134 = vpop.f32.mrf.mxu0
      %v6135 = vadd.f32 0.0, %v6134
      %v6136 = vpop.f32.mrf.mxu0
      %v6137 = vadd.f32 0.0, %v6136
      %6138 = vmatmul.bf16.gmra.mxu0 %v6115
      %v6139 = vpop.f32.mrf.mxu0
      %v6140 = vadd.f32 0.0, %v6139
      %v6141 = vpop.f32.mrf.mxu0
      %v6142 = vadd.f32 0.0, %v6141
      %6143 = vmatmul.bf16.gmra.mxu0 %v6118
      %v6144 = vpop.f32.mrf.mxu0
      %v6145 = vadd.f32 0.0, %v6144
      %v6146 = vpop.f32.mrf.mxu0
      %v6147 = vadd.f32 0.0, %v6146
      %6148 = vdwg.mxu0
      %v6149 = vadd.f32 %v6015, %v6130
      %v6150 = vadd.f32 %v6016, %v6132
      %v6151 = vadd.f32 %v6017, %v6135
      %v6152 = vadd.f32 %v6018, %v6137
      %v6153 = vadd.f32 %v6019, %v6140
      %v6154 = vadd.f32 %v6020, %v6142
      %v6155 = vadd.f32 %v6021, %v6145
      %v6156 = vadd.f32 %v6022, %v6147
      %v6157 = vld [vmem:[#allocation3 + $0x8] sm:$0x8]
      %v6158 = vld [vmem:[#allocation3 + $0x28] sm:$0xf]
      %v6159 = vunpack.c.l.bf16 %v6157
      %v6160 = vunpack.c.l.bf16 %v6158
      %v6161 = vmul.f32 %v6159, %v5417
      %v6162 = vmul.f32 %v6033, %v5419
      %v6163 = vmul.f32 %v6034, %v5421
      %v6164 = vmul.f32 %v6035, %v5423
      %v6165 = vmul.f32 %v6036, %v5425
      %v6166 = vmul.f32 %v6037, %v5427
      %v6167 = vmul.f32 %v6038, %v5429
      %v6168 = vmul.f32 %v6039, %v5431
      %v6169 = vmul.f32 %v6160, %v5430
      %v6170 = vpack.c.bf16 %v6162, %v6161
      %v6171 = vpack.c.bf16 %v6164, %v6163
      %v6172 = vpack.c.bf16 %v6166, %v6165
      %v6173 = vpack.c.bf16 %v6168, %v6167
      %v6174 = vpack.c.bf16 %v6169, %v6169
      %s6175 = scalar_lea.vmem %s3, 96
      %v6176 = vld [vmem:[%s6175] sm:$0xf]
      %v6177 = vld [vmem:[%s6175 + $0x4] sm:$0xf]
      %v6178 = vld [vmem:[%s6175 + $0x8] sm:$0xf]
      %v6179 = vld [vmem:[%s6175 + $0xc] sm:$0xf]
      %v6181 = vshrl.u32 %v6170, 16
      %v6183 = vrot.slane %v6181, 3
      %v6184 = vshll.u32 %v6170, 16
      %v6186 = vrot.slane %v6184, 4
      %v6187 = vor.u32 %v6183, %v6186
      %v6189 = vshrl.u32 %v6171, 16
      %v6191 = vrot.slane %v6189, 3
      %v6192 = vshll.u32 %v6171, 16
      %v6194 = vrot.slane %v6192, 4
      %v6195 = vor.u32 %v6191, %v6194
      %v6196 = vsel %vm1666, %v6187, %v6195
      %v6198 = vshrl.u32 %v6172, 16
      %v6200 = vrot.slane %v6198, 3
      %v6201 = vshll.u32 %v6172, 16
      %v6203 = vrot.slane %v6201, 4
      %v6204 = vor.u32 %v6200, %v6203
      %v6205 = vsel %vm1666, %v6195, %v6204
      %v6207 = vshrl.u32 %v6173, 16
      %v6209 = vrot.slane %v6207, 3
      %v6210 = vshll.u32 %v6173, 16
      %v6212 = vrot.slane %v6210, 4
      %v6213 = vor.u32 %v6209, %v6212
      %v6214 = vsel %vm1666, %v6204, %v6213
      %v6216 = vshrl.u32 %v6174, 16
      %v6218 = vrot.slane %v6216, 3
      %v6219 = vshll.u32 %v6174, 16
      %v6221 = vrot.slane %v6219, 4
      %v6222 = vor.u32 %v6218, %v6221
      %v6223 = vsel %vm1666, %v6213, %v6222
      %v6228 = vunpack.c.l.b16 %v6176
      %v6229 = vunpack.c.l.b16 %v6177
      %v6230 = vunpack.c.l.b16 %v6178
      %v6231 = vunpack.c.l.b16 %v6179
      %v6232 = vpack.c.b16 %v6229, %v6228
      %v6233 = vpack.c.b16 %v6231, %v6230
      %v6237 = vsel %vm5496, %v6196, 0
      %v6240 = vsel %vm5496, %v6205, 0
      %v6243 = vsel %vm5496, %v6214, 0
      %v6246 = vsel %vm5496, %v6223, 0
      %6248 = vmatpush.bf16.msra.mxu0 0
      %6249 = vmatpush.bf16.msra.mxu0 0
      %6250 = vmatpush.bf16.msra.mxu0 0
      %6251 = vmatpush.bf16.msra.mxu0 0
      %6252 = vmatpush.bf16.msra.mxu0 0
      %6253 = vmatpush.bf16.msra.mxu0 0
      %6254 = vmatpush.bf16.msra.mxu0 %v6233
      %6255 = vmatpush.bf16.msra.mxu0 %v6232
      %6256 = vmatmul.bf16.gmra.mxu0 %v6237
      %v6257 = vpop.f32.mrf.mxu0
      %v6258 = vadd.f32 0.0, %v6257
      %v6259 = vpop.f32.mrf.mxu0
      %v6260 = vadd.f32 0.0, %v6259
      %6261 = vmatmul.bf16.gmra.mxu0 %v6240
      %v6262 = vpop.f32.mrf.mxu0
      %v6263 = vadd.f32 0.0, %v6262
      %v6264 = vpop.f32.mrf.mxu0
      %v6265 = vadd.f32 0.0, %v6264
      %6266 = vmatmul.bf16.gmra.mxu0 %v6243
      %v6267 = vpop.f32.mrf.mxu0
      %v6268 = vadd.f32 0.0, %v6267
      %v6269 = vpop.f32.mrf.mxu0
      %v6270 = vadd.f32 0.0, %v6269
      %6271 = vmatmul.bf16.gmra.mxu0 %v6246
      %v6272 = vpop.f32.mrf.mxu0
      %v6273 = vadd.f32 0.0, %v6272
      %v6274 = vpop.f32.mrf.mxu0
      %v6275 = vadd.f32 0.0, %v6274
      %6276 = vdwg.mxu0
      %v6277 = vadd.f32 %v6149, %v6258
      %v6278 = vadd.f32 %v6150, %v6260
      %v6279 = vadd.f32 %v6151, %v6263
      %v6280 = vadd.f32 %v6152, %v6265
      %v6281 = vadd.f32 %v6153, %v6268
      %v6282 = vadd.f32 %v6154, %v6270
      %v6283 = vadd.f32 %v6155, %v6273
      %v6284 = vadd.f32 %v6156, %v6275
      %s6285 = scalar_lea.vmem %s3, 112
      %v6286 = vld [vmem:[%s6285] sm:$0xf]
      %v6287 = vld [vmem:[%s6285 + $0x4] sm:$0xf]
      %v6288 = vld [vmem:[%s6285 + $0x8] sm:$0xf]
      %v6289 = vld [vmem:[%s6285 + $0xc] sm:$0xf]
      %v6298 = vunpack.c.l.b16 %v6024
      %v6299 = vunpack.c.l.b16 %v6025
      %v6300 = vunpack.c.l.b16 %v6026
      %v6301 = vunpack.c.l.b16 %v6027
      %v6302 = vunpack.c.l.b16 %v6028
      %v6303 = vunpack.c.l.b16 %v6029
      %v6304 = vunpack.c.l.b16 %v6030
      %v6305 = vunpack.c.l.b16 %v6158
      %v6306 = vpack.c.b16 %v6299, %v6298
      %v6307 = vpack.c.b16 %v6301, %v6300
      %v6308 = vpack.c.b16 %v6303, %v6302
      %v6309 = vpack.c.b16 %v6305, %v6304
      %v6314 = vunpack.c.l.b16 %v6286
      %v6315 = vunpack.c.l.b16 %v6287
      %v6316 = vunpack.c.l.b16 %v6288
      %v6317 = vunpack.c.l.b16 %v6289
      %v6318 = vpack.c.b16 %v6315, %v6314
      %v6319 = vpack.c.b16 %v6317, %v6316
      %v6323 = vsel %vm5496, %v6306, 0
      %v6326 = vsel %vm5496, %v6307, 0
      %v6329 = vsel %vm5496, %v6308, 0
      %v6332 = vsel %vm5496, %v6309, 0
      %6334 = vmatpush.bf16.msra.mxu0 0
      %6335 = vmatpush.bf16.msra.mxu0 0
      %6336 = vmatpush.bf16.msra.mxu0 0
      %6337 = vmatpush.bf16.msra.mxu0 0
      %6338 = vmatpush.bf16.msra.mxu0 0
      %6339 = vmatpush.bf16.msra.mxu0 0
      %6340 = vmatpush.bf16.msra.mxu0 %v6319
      %6341 = vmatpush.bf16.msra.mxu0 %v6318
      %6342 = vmatmul.bf16.gmra.mxu0 %v6323
      %v6343 = vpop.f32.mrf.mxu0
      %v6344 = vadd.f32 0.0, %v6343
      %v6345 = vpop.f32.mrf.mxu0
      %v6346 = vadd.f32 0.0, %v6345
      %6347 = vmatmul.bf16.gmra.mxu0 %v6326
      %v6348 = vpop.f32.mrf.mxu0
      %v6349 = vadd.f32 0.0, %v6348
      %v6350 = vpop.f32.mrf.mxu0
      %v6351 = vadd.f32 0.0, %v6350
      %6352 = vmatmul.bf16.gmra.mxu0 %v6329
      %v6353 = vpop.f32.mrf.mxu0
      %v6354 = vadd.f32 0.0, %v6353
      %v6355 = vpop.f32.mrf.mxu0
      %v6356 = vadd.f32 0.0, %v6355
      %6357 = vmatmul.bf16.gmra.mxu0 %v6332
      %v6358 = vpop.f32.mrf.mxu0
      %v6359 = vadd.f32 0.0, %v6358
      %v6360 = vpop.f32.mrf.mxu0
      %v6361 = vadd.f32 0.0, %v6360
      %6362 = vdwg.mxu0
      %v6363 = vadd.f32 %v6277, %v6344
      %v6364 = vadd.f32 %v6278, %v6346
      %v6365 = vadd.f32 %v6279, %v6349
      %v6366 = vadd.f32 %v6280, %v6351
      %v6367 = vadd.f32 %v6281, %v6354
      %v6368 = vadd.f32 %v6282, %v6356
      %v6369 = vadd.f32 %v6283, %v6359
      %v6370 = vadd.f32 %v6284, %v6361
      %v6371 = vld [vmem:[#allocation3 + $0xc] sm:$0xf]
      %v6372 = vld [vmem:[#allocation3 + $0x10] sm:$0xf]
      %v6373 = vld [vmem:[#allocation3 + $0x14] sm:$0xf]
      %v6374 = vld [vmem:[#allocation3 + $0x18] sm:$0xf]
      %v6375 = vld [vmem:[#allocation3 + $0x1c] sm:$0xf]
      %v6376 = vld [vmem:[#allocation3 + $0x20] sm:$0xf]
      %v6377 = vld [vmem:[#allocation3 + $0x24] sm:$0xf]
      %v6378 = vld [vmem:[#allocation3 + $0x28] sm:$0xf]
      %v6379 = vld [vmem:[#allocation3 + $0x2c] sm:$0x1]
      %v6380 = vunpack.c.l.bf16 %v6371
      %v6381 = vunpack.c.l.bf16 %v6372
      %v6382 = vunpack.c.l.bf16 %v6373
      %v6383 = vunpack.c.l.bf16 %v6374
      %v6384 = vunpack.c.l.bf16 %v6375
      %v6385 = vunpack.c.l.bf16 %v6376
      %v6386 = vunpack.c.l.bf16 %v6377
      %v6387 = vunpack.c.l.bf16 %v6378
      %v6388 = vunpack.c.l.bf16 %v6379
      %v6389 = vmul.f32 %v6380, %v5669
      %v6390 = vmul.f32 %v6381, %v5671
      %v6391 = vmul.f32 %v6382, %v5673
      %v6392 = vmul.f32 %v6383, %v5675
      %v6393 = vmul.f32 %v6384, %v5677
      %v6394 = vmul.f32 %v6385, %v5679
      %v6395 = vmul.f32 %v6386, %v5681
      %v6396 = vmul.f32 %v6387, %v5683
      %v6397 = vmul.f32 %v6388, %v5682
      %v6398 = vpack.c.bf16 %v6390, %v6389
      %v6399 = vpack.c.bf16 %v6392, %v6391
      %v6400 = vpack.c.bf16 %v6394, %v6393
      %v6401 = vpack.c.bf16 %v6396, %v6395
      %v6402 = vpack.c.bf16 %v6397, %v6397
      %s6403 = scalar_lea.vmem %s3, 128
      %v6404 = vld [vmem:[%s6403] sm:$0xf]
      %v6405 = vld [vmem:[%s6403 + $0x4] sm:$0xf]
      %v6406 = vld [vmem:[%s6403 + $0x8] sm:$0xf]
      %v6407 = vld [vmem:[%s6403 + $0xc] sm:$0xf]
      %v6409 = vshrl.u32 %v6398, 16
      %v6411 = vshll.u32 %v6398, 16
      %v6413 = vrot.slane %v6411, 1
      %v6414 = vor.u32 %v6409, %v6413
      %v6416 = vshll.u32 %v6399, 16
      %v6418 = vrot.slane %v6416, 1
      %v6419 = vsel %vm2238, %v6414, %v6418
      %v6420 = vshrl.u32 %v6399, 16
      %v6422 = vor.u32 %v6420, %v6418
      %v6424 = vshll.u32 %v6400, 16
      %v6426 = vrot.slane %v6424, 1
      %v6427 = vsel %vm2238, %v6422, %v6426
      %v6428 = vshrl.u32 %v6400, 16
      %v6430 = vor.u32 %v6428, %v6426
      %v6432 = vshll.u32 %v6401, 16
      %v6434 = vrot.slane %v6432, 1
      %v6435 = vsel %vm2238, %v6430, %v6434
      %v6436 = vshrl.u32 %v6401, 16
      %v6438 = vor.u32 %v6436, %v6434
      %v6440 = vshll.u32 %v6402, 16
      %v6442 = vrot.slane %v6440, 1
      %v6443 = vsel %vm2238, %v6438, %v6442
      %v6448 = vunpack.c.l.b16 %v6404
      %v6449 = vunpack.c.l.b16 %v6405
      %v6450 = vunpack.c.l.b16 %v6406
      %v6451 = vunpack.c.l.b16 %v6407
      %v6452 = vpack.c.b16 %v6449, %v6448
      %v6453 = vpack.c.b16 %v6451, %v6450
      %v6457 = vsel %vm5496, %v6419, 0
      %v6460 = vsel %vm5496, %v6427, 0
      %v6463 = vsel %vm5496, %v6435, 0
      %v6466 = vsel %vm5496, %v6443, 0
      %6468 = vmatpush.bf16.msra.mxu0 0
      %6469 = vmatpush.bf16.msra.mxu0 0
      %6470 = vmatpush.bf16.msra.mxu0 0
      %6471 = vmatpush.bf16.msra.mxu0 0
      %6472 = vmatpush.bf16.msra.mxu0 0
      %6473 = vmatpush.bf16.msra.mxu0 0
      %6474 = vmatpush.bf16.msra.mxu0 %v6453
      %6475 = vmatpush.bf16.msra.mxu0 %v6452
      %6476 = vmatmul.bf16.gmra.mxu0 %v6457
      %v6477 = vpop.f32.mrf.mxu0
      %v6478 = vadd.f32 0.0, %v6477
      %v6479 = vpop.f32.mrf.mxu0
      %v6480 = vadd.f32 0.0, %v6479
      %6481 = vmatmul.bf16.gmra.mxu0 %v6460
      %v6482 = vpop.f32.mrf.mxu0
      %v6483 = vadd.f32 0.0, %v6482
      %v6484 = vpop.f32.mrf.mxu0
      %v6485 = vadd.f32 0.0, %v6484
      %6486 = vmatmul.bf16.gmra.mxu0 %v6463
      %v6487 = vpop.f32.mrf.mxu0
      %v6488 = vadd.f32 0.0, %v6487
      %v6489 = vpop.f32.mrf.mxu0
      %v6490 = vadd.f32 0.0, %v6489
      %6491 = vmatmul.bf16.gmra.mxu0 %v6466
      %v6492 = vpop.f32.mrf.mxu0
      %v6493 = vadd.f32 0.0, %v6492
      %v6494 = vpop.f32.mrf.mxu0
      %v6495 = vadd.f32 0.0, %v6494
      %6496 = vdwg.mxu0
      %v6497 = vadd.f32 %v6363, %v6478
      %v6498 = vadd.f32 %v6364, %v6480
      %v6499 = vadd.f32 %v6365, %v6483
      %v6500 = vadd.f32 %v6366, %v6485
      %v6501 = vadd.f32 %v6367, %v6488
      %v6502 = vadd.f32 %v6368, %v6490
      %v6503 = vadd.f32 %v6369, %v6493
      %v6504 = vadd.f32 %v6370, %v6495
      %v6505 = vld [vmem:[%s4] sm:$0x1]
      %v6507 = vperm.slane %v6505, 0
      %v6509 = vadd.f32 %v6497, %v6507
      %v6510 = vadd.f32 %v6498, %v6507
      %v6511 = vadd.f32 %v6499, %v6507
      %v6512 = vadd.f32 %v6500, %v6507
      %v6513 = vadd.f32 %v6501, %v6507
      %v6514 = vadd.f32 %v6502, %v6507
      %v6515 = vadd.f32 %v6503, %v6507
      %v6516 = vadd.f32 %v6504, %v6507
      %v6517 = vmax.f32 %v6509, 0.0
      %v6518 = vmax.f32 %v6510, 0.0
      %v6519 = vmax.f32 %v6511, 0.0
      %v6520 = vmax.f32 %v6512, 0.0
      %v6521 = vmax.f32 %v6513, 0.0
      %v6522 = vmax.f32 %v6514, 0.0
      %v6523 = vmax.f32 %v6515, 0.0
      %v6524 = vmax.f32 %v6516, 0.0
      %v6525 = vpack.c.bf16 %v6517, %v6517
      %v6526 = vpack.c.bf16 %v6518, %v6518
      %v6527 = vpack.c.bf16 %v6519, %v6519
      %v6528 = vpack.c.bf16 %v6520, %v6520
      %v6529 = vpack.c.bf16 %v6521, %v6521
      %v6530 = vpack.c.bf16 %v6522, %v6522
      %v6531 = vpack.c.bf16 %v6523, %v6523
      %v6532 = vpack.c.bf16 %v6524, %v6524
      %v6533 = vunpack.c.l.bf16 %v6525
      %v6534 = vunpack.c.l.bf16 %v6526
      %v6535 = vunpack.c.l.bf16 %v6527
      %v6536 = vunpack.c.l.bf16 %v6528
      %v6537 = vunpack.c.l.bf16 %v6529
      %v6538 = vunpack.c.l.bf16 %v6530
      %v6539 = vunpack.c.l.bf16 %v6531
      %v6540 = vunpack.c.l.bf16 %v6532
      %v6541 = vmax.f32 %v6533, %v6534
      %v6542 = vmax.f32 %v6534, %v6535
      %v6543 = vmax.f32 %v6535, %v6536
      %v6544 = vmax.f32 %v6536, %v6537
      %v6545 = vmax.f32 %v6537, %v6538
      %v6546 = vmax.f32 %v6538, %v6539
      %v6547 = vmax.f32 %v6539, %v6540
      %v6548 = vpack.c.bf16 %v6542, %v6541
      %v6549 = vpack.c.bf16 %v6544, %v6543
      %v6550 = vpack.c.bf16 %v6546, %v6545
      %v6551 = vpack.c.bf16 %v6547, %v6547
      %v6552 = vld [vmem:[%s10] sm:$0xf]
      %v6553 = vld [vmem:[%s10 + $0x4] sm:$0xf]
      %v6556 = vunpack.c.l.b16 %v6552
      %v6557 = vunpack.c.l.b16 %v6553
      %v6558 = vpack.c.b16 %v6557, %v6556
      %vm6559 = vcmask 457728
      %v6561 = vsel %vm6559, %v6558, 0
      %vm6563 = vcmask 1043456
      %v6565 = vsel %vm6563, %v6551, 0
      %6567 = vmatpush.bf16.msra.mxu0 0
      %6568 = vmatpush.bf16.msra.mxu0 0
      %6569 = vmatpush.bf16.msra.mxu0 0
      %6570 = vmatpush.bf16.msra.mxu0 0
      %6571 = vmatpush.bf16.msra.mxu0 %v6565
      %6572 = vmatpush.bf16.msra.mxu0 %v6550
      %6573 = vmatpush.bf16.msra.mxu0 %v6549
      %6574 = vmatpush.bf16.msra.mxu0 %v6548
      %6575 = vmatmul.bf16.gmra.mxu0 %v6561
      %v6576 = vpop.f32.mrf.mxu0
      %v6577 = vadd.f32 0.0, %v6576
      %v6578 = vpop.f32.mrf.mxu0
      %v6579 = vadd.f32 0.0, %v6578
      %6580 = vdwg.mxu0
      %s6581 = scalar_lea.vmem %s10, 8
      %v6582 = vld [vmem:[%s6581] sm:$0xf]
      %v6583 = vld [vmem:[%s6581 + $0x4] sm:$0xf]
      %v6586 = vunpack.c.l.b16 %v6582
      %v6587 = vunpack.c.l.b16 %v6583
      %v6588 = vpack.c.b16 %v6587, %v6586
      %v6590 = vsel %vm6559, %v6588, 0
      %6592 = vmatpush.bf16.msra.mxu0 0
      %6593 = vmatpush.bf16.msra.mxu0 0
      %6594 = vmatpush.bf16.msra.mxu0 0
      %6595 = vmatpush.bf16.msra.mxu0 0
      %6596 = vmatpush.bf16.msra.mxu0 %v6565
      %6597 = vmatpush.bf16.msra.mxu0 %v6550
      %6598 = vmatpush.bf16.msra.mxu0 %v6549
      %6599 = vmatpush.bf16.msra.mxu0 %v6548
      %6600 = vmatmul.bf16.gmra.mxu0 %v6590
      %v6601 = vpop.f32.mrf.mxu0
      %v6602 = vadd.f32 0.0, %v6601
      %v6603 = vpop.f32.mrf.mxu0
      %v6604 = vadd.f32 0.0, %v6603
      %6605 = vdwg.mxu0
      %v6606 = vmax.f32 %v6577, %v6602
      %v6607 = vmax.f32 %v6579, %v6604
      %v6608 = vpack.c.bf16 %v6606, %v6606
      %v6609 = vpack.c.bf16 %v6607, %v6607
      %vm6610 = vcmask 519168
      %6611 = vst.msk [vmem:[#allocation4] sm:$0xf] %vm6610, 0
      %6612 = vst.msk [vmem:[#allocation4 + $0x4] sm:$0xf] %vm6610, 0
      %6613 = vst.msk [vmem:[#allocation4 + $0x8] sm:$0xf] %vm6610, 0
      %6614 = vst.msk [vmem:[#allocation4 + $0xc] sm:$0xf] %vm6610, 0
      %6615 = vst.msk [vmem:[#allocation4 + $0x10] sm:$0xf] %vm6610, 0
      %6616 = vst.msk [vmem:[#allocation4 + $0x14] sm:$0xf] %vm6610, 0
      %6617 = vst.msk [vmem:[#allocation4 + $0x8] sm:$0xf] %vm6610, %v6608
      %6618 = vst.msk [vmem:[#allocation4 + $0xc] sm:$0xf] %vm6610, %v6609
      %vm6619 = vcmp.lt.s32.totalorder %v492, 0
      %v6620 = vsub.s32 0, %v492
      %v6621 = vsel %vm6619, %v6620, %v492
      %v6622 = vshrl.u32 %v6621, 2
      %v6623 = vand.u32 %v6621, 3
      %v6624 = vsub.s32 0, %v6623
      %v6625 = vsel %vm6619, %v6624, %v6623
      %vm6626 = vcmp.lt.s32.totalorder %v493, 0
      %v6627 = vsub.s32 0, %v493
      %v6628 = vsel %vm6626, %v6627, %v493
      %v6629 = vshrl.u32 %v6628, 2
      %v6630 = vand.u32 %v6628, 3
      %v6631 = vsub.s32 0, %v6630
      %v6632 = vsel %vm6626, %v6631, %v6630
      %vm6633 = vcmp.ne.s32.totalorder %v6625, 0
      %vm6634 = vcmp.ne.s32.totalorder %v6632, 0
      %vm6635 = vcmp.lt.s32.totalorder %v6625, 0
      %vm6636 = vcmp.lt.s32.totalorder %v6632, 0
      %vm6637 = vmand %vm6635, %vm6633
      %vm6638 = vmand %vm6636, %vm6634
      %v6639 = vadd.s32 %v6625, 4
      %v6640 = vadd.s32 %v6632, 4
      %v6641 = vsel %vm6637, %v6639, %v6625
      %v6642 = vsel %vm6638, %v6640, %v6632
      %vm6643 = vcmp.ne.s32.totalorder %v6641, 0
      %vm6644 = vcmp.ne.s32.totalorder %v6642, 0
      %v6645 = vsel %vm6643, 1, 0
      %v6646 = vsel %vm6644, 1, 0
      %v6647 = vcvt.s32.f32 %v6645
      %v6648 = vcvt.s32.f32 %v6646
      %v6649 = vpack.c.bf16 %v6647, %v6647
      %v6650 = vpack.c.bf16 %v6648, %v6648
      %vm6651 = vcmp.ne.s32.totalorder %v6641, 3
      %vm6652 = vcmp.ne.s32.totalorder %v6642, 3
      %v6653 = vsel %vm6651, 1, 0
      %v6654 = vsel %vm6652, 1, 0
      %v6655 = vcvt.s32.f32 %v6653
      %v6656 = vcvt.s32.f32 %v6654
      %v6657 = vpack.c.bf16 %v6655, %v6655
      %v6658 = vpack.c.bf16 %v6656, %v6656
      %v6659 = vld [vmem:[#allocation4 + $0x4] sm:$0xe]
      %v6660 = vld [vmem:[#allocation4 + $0x8] sm:$0xf]
      %v6661 = vld [vmem:[#allocation4 + $0xc] sm:$0x3]
      %v6662 = vunpack.c.l.bf16 %v6659
      %v6663 = vunpack.c.l.bf16 %v6660
      %v6664 = vunpack.c.l.bf16 %v6661
      %v6665 = vunpack.c.l.bf16 %v6649
      %v6666 = vunpack.c.l.bf16 %v6650
      %v6669 = vrot.slane %v6665, 5
      %v6670 = vrot.slane %v6666, 5
      %v6671 = vsel %vm1573, %v6669, %v6670
      %v6675 = vmul.f32 %v6662, %v6669
      %v6676 = vmul.f32 %v6663, %v6671
      %v6677 = vmul.f32 %v6664, %v6670
      %v6678 = vpack.c.bf16 %v6676, %v6675
      %v6679 = vpack.c.bf16 %v6677, %v6677
      %v6680 = vld [vmem:[%s5] sm:$0xf]
      %v6681 = vld [vmem:[%s5 + $0x4] sm:$0xf]
      %v6682 = vld [vmem:[%s5 + $0x8] sm:$0xf]
      %v6683 = vld [vmem:[%s5 + $0xc] sm:$0xf]
      %v6684 = vld [vmem:[%s5 + $0x10] sm:$0xf]
      %v6685 = vld [vmem:[%s5 + $0x14] sm:$0xf]
      %v6686 = vld [vmem:[%s5 + $0x18] sm:$0xf]
      %v6687 = vld [vmem:[%s5 + $0x1c] sm:$0xf]
      %v6688 = vld [vmem:[#allocation4 + $0x4] sm:$0xc]
      %s6689 = scalar_lea.vmem %s5, 32
      %v6690 = vld [vmem:[%s6689] sm:$0xf]
      %v6691 = vld [vmem:[%s6689 + $0x4] sm:$0xf]
      %v6692 = vld [vmem:[%s6689 + $0x8] sm:$0xf]
      %v6693 = vld [vmem:[%s6689 + $0xc] sm:$0xf]
      %v6694 = vld [vmem:[%s6689 + $0x10] sm:$0xf]
      %v6695 = vld [vmem:[%s6689 + $0x14] sm:$0xf]
      %v6696 = vld [vmem:[%s6689 + $0x18] sm:$0xf]
      %v6697 = vld [vmem:[%s6689 + $0x1c] sm:$0xf]
      %v6701 = vunpack.c.l.b16 %v6688
      %v6702 = vunpack.c.l.b16 %v6660
      %v6703 = vunpack.c.l.b16 %v6661
      %v6704 = vpack.c.b16 %v6702, %v6701
      %v6705 = vpack.c.b16 %v6703, %v6703
      %vm6706 = vcmask 1045504
      %v6707 = vrot.slane %v6704, 2
      %v6708 = vrot.slane %v6705, 2
      %v6709 = vsel %vm6706, %v6707, %v6708
      %v6718 = vunpack.c.l.b16 %v6690
      %v6719 = vunpack.c.l.b16 %v6691
      %v6720 = vunpack.c.l.b16 %v6692
      %v6721 = vunpack.c.l.b16 %v6693
      %v6722 = vunpack.c.l.b16 %v6694
      %v6723 = vunpack.c.l.b16 %v6695
      %v6724 = vunpack.c.l.b16 %v6696
      %v6725 = vunpack.c.l.b16 %v6697
      %v6726 = vpack.c.b16 %v6719, %v6718
      %v6727 = vpack.c.b16 %v6721, %v6720
      %v6728 = vpack.c.b16 %v6723, %v6722
      %v6729 = vpack.c.b16 %v6725, %v6724
      %vm6734 = vcmask 523264
      %v6736 = vsel %vm6734, %v6709, 0
      %6738 = vmatpush.bf16.msra.mxu0 0
      %6739 = vmatpush.bf16.msra.mxu0 0
      %6740 = vmatpush.bf16.msra.mxu0 0
      %6741 = vmatpush.bf16.msra.mxu0 0
      %6742 = vmatpush.bf16.msra.mxu0 %v6729
      %6743 = vmatpush.bf16.msra.mxu0 %v6728
      %6744 = vmatpush.bf16.msra.mxu0 %v6727
      %6745 = vmatpush.bf16.msra.mxu0 %v6726
      %6746 = vmatmul.bf16.gmra.mxu0 %v6736
      %v6747 = vpop.f32.mrf.mxu0
      %v6748 = vadd.f32 0.0, %v6747
      %v6749 = vpop.f32.mrf.mxu0
      %v6750 = vadd.f32 0.0, %v6749
      %6751 = vdwg.mxu0
      %vm6752 = vsmask.f32 6400
      %v6754 = vshrl.u32 %v6678, 16
      %v6756 = vrot.slane %v6754, 1
      %v6757 = vshll.u32 %v6678, 16
      %v6759 = vrot.slane %v6757, 2
      %v6760 = vor.u32 %v6756, %v6759
      %v6762 = vshrl.u32 %v6679, 16
      %v6764 = vrot.slane %v6762, 1
      %v6765 = vshll.u32 %v6679, 16
      %v6767 = vrot.slane %v6765, 2
      %v6768 = vor.u32 %v6764, %v6767
      %v6769 = vsel %vm6752, %v6760, %v6768
      %v6778 = vunpack.c.l.b16 %v6680
      %v6779 = vunpack.c.l.b16 %v6681
      %v6780 = vunpack.c.l.b16 %v6682
      %v6781 = vunpack.c.l.b16 %v6683
      %v6782 = vunpack.c.l.b16 %v6684
      %v6783 = vunpack.c.l.b16 %v6685
      %v6784 = vunpack.c.l.b16 %v6686
      %v6785 = vunpack.c.l.b16 %v6687
      %v6786 = vpack.c.b16 %v6779, %v6778
      %v6787 = vpack.c.b16 %v6781, %v6780
      %v6788 = vpack.c.b16 %v6783, %v6782
      %v6789 = vpack.c.b16 %v6785, %v6784
      %v6795 = vsel %vm6734, %v6769, 0
      %6797 = vmatpush.bf16.msra.mxu0 0
      %6798 = vmatpush.bf16.msra.mxu0 0
      %6799 = vmatpush.bf16.msra.mxu0 0
      %6800 = vmatpush.bf16.msra.mxu0 0
      %6801 = vmatpush.bf16.msra.mxu0 %v6789
      %6802 = vmatpush.bf16.msra.mxu0 %v6788
      %6803 = vmatpush.bf16.msra.mxu0 %v6787
      %6804 = vmatpush.bf16.msra.mxu0 %v6786
      %6805 = vmatmul.bf16.gmra.mxu0 %v6795
      %v6806 = vpop.f32.mrf.mxu0
      %v6807 = vadd.f32 %v6748, %v6806
      %v6808 = vpop.f32.mrf.mxu0
      %v6809 = vadd.f32 %v6750, %v6808
      %6810 = vdwg.mxu0
      %v6811 = vld [vmem:[#allocation4 + $0xc] sm:$0x7]
      %v6812 = vunpack.c.l.bf16 %v6688
      %v6813 = vunpack.c.l.bf16 %v6811
      %v6814 = vunpack.c.l.bf16 %v6657
      %v6815 = vunpack.c.l.bf16 %v6658
      %vm6818 = vcmask 1044480
      %v6819 = vrot.slane %v6814, 3
      %v6820 = vrot.slane %v6815, 3
      %v6821 = vsel %vm6818, %v6819, %v6820
      %v6825 = vmul.f32 %v6812, %v6819
      %v6826 = vmul.f32 %v6663, %v6821
      %v6827 = vmul.f32 %v6813, %v6820
      %v6828 = vpack.c.bf16 %v6826, %v6825
      %v6829 = vpack.c.bf16 %v6827, %v6827
      %s6830 = scalar_lea.vmem %s5, 64
      %v6831 = vld [vmem:[%s6830] sm:$0xf]
      %v6832 = vld [vmem:[%s6830 + $0x4] sm:$0xf]
      %v6833 = vld [vmem:[%s6830 + $0x8] sm:$0xf]
      %v6834 = vld [vmem:[%s6830 + $0xc] sm:$0xf]
      %v6835 = vld [vmem:[%s6830 + $0x10] sm:$0xf]
      %v6836 = vld [vmem:[%s6830 + $0x14] sm:$0xf]
      %v6837 = vld [vmem:[%s6830 + $0x18] sm:$0xf]
      %v6838 = vld [vmem:[%s6830 + $0x1c] sm:$0xf]
      %vm6839 = vsmask.f32 5376
      %v6841 = vshrl.u32 %v6828, 16
      %v6843 = vrot.slane %v6841, 2
      %v6844 = vshll.u32 %v6828, 16
      %v6846 = vrot.slane %v6844, 3
      %v6847 = vor.u32 %v6843, %v6846
      %v6849 = vshrl.u32 %v6829, 16
      %v6851 = vrot.slane %v6849, 2
      %v6852 = vshll.u32 %v6829, 16
      %v6854 = vrot.slane %v6852, 3
      %v6855 = vor.u32 %v6851, %v6854
      %v6856 = vsel %vm6839, %v6847, %v6855
      %v6865 = vunpack.c.l.b16 %v6831
      %v6866 = vunpack.c.l.b16 %v6832
      %v6867 = vunpack.c.l.b16 %v6833
      %v6868 = vunpack.c.l.b16 %v6834
      %v6869 = vunpack.c.l.b16 %v6835
      %v6870 = vunpack.c.l.b16 %v6836
      %v6871 = vunpack.c.l.b16 %v6837
      %v6872 = vunpack.c.l.b16 %v6838
      %v6873 = vpack.c.b16 %v6866, %v6865
      %v6874 = vpack.c.b16 %v6868, %v6867
      %v6875 = vpack.c.b16 %v6870, %v6869
      %v6876 = vpack.c.b16 %v6872, %v6871
      %v6882 = vsel %vm6734, %v6856, 0
      %6884 = vmatpush.bf16.msra.mxu0 0
      %6885 = vmatpush.bf16.msra.mxu0 0
      %6886 = vmatpush.bf16.msra.mxu0 0
      %6887 = vmatpush.bf16.msra.mxu0 0
      %6888 = vmatpush.bf16.msra.mxu0 %v6876
      %6889 = vmatpush.bf16.msra.mxu0 %v6875
      %6890 = vmatpush.bf16.msra.mxu0 %v6874
      %6891 = vmatpush.bf16.msra.mxu0 %v6873
      %6892 = vmatmul.bf16.gmra.mxu0 %v6882
      %v6893 = vpop.f32.mrf.mxu0
      %v6894 = vadd.f32 0.0, %v6893
      %v6895 = vpop.f32.mrf.mxu0
      %v6896 = vadd.f32 0.0, %v6895
      %6897 = vdwg.mxu0
      %v6898 = vadd.f32 %v6807, %v6894
      %v6899 = vadd.f32 %v6809, %v6896
      %v6900 = vld [vmem:[#allocation4 + $0x4] sm:$0x8]
      %v6901 = vld [vmem:[#allocation4 + $0xc] sm:$0xf]
      %v6902 = vunpack.c.l.bf16 %v6900
      %v6903 = vunpack.c.l.bf16 %v6901
      %v6904 = vrot.slane %v6665, 1
      %v6905 = vrot.slane %v6666, 1
      %v6906 = vsel %vm1294, %v6904, %v6905
      %v6910 = vmul.f32 %v6902, %v6904
      %v6911 = vmul.f32 %v6663, %v6906
      %v6912 = vmul.f32 %v6903, %v6905
      %v6913 = vpack.c.bf16 %v6911, %v6910
      %v6914 = vpack.c.bf16 %v6912, %v6912
      %s6915 = scalar_lea.vmem %s5, 96
      %v6916 = vld [vmem:[%s6915] sm:$0xf]
      %v6917 = vld [vmem:[%s6915 + $0x4] sm:$0xf]
      %v6918 = vld [vmem:[%s6915 + $0x8] sm:$0xf]
      %v6919 = vld [vmem:[%s6915 + $0xc] sm:$0xf]
      %v6920 = vld [vmem:[%s6915 + $0x10] sm:$0xf]
      %v6921 = vld [vmem:[%s6915 + $0x14] sm:$0xf]
      %v6922 = vld [vmem:[%s6915 + $0x18] sm:$0xf]
      %v6923 = vld [vmem:[%s6915 + $0x1c] sm:$0xf]
      %v6925 = vshrl.u32 %v6913, 16
      %v6927 = vrot.slane %v6925, 3
      %v6928 = vshll.u32 %v6913, 16
      %v6930 = vrot.slane %v6928, 4
      %v6931 = vor.u32 %v6927, %v6930
      %v6933 = vshrl.u32 %v6914, 16
      %v6935 = vrot.slane %v6933, 3
      %v6936 = vshll.u32 %v6914, 16
      %v6938 = vrot.slane %v6936, 4
      %v6939 = vor.u32 %v6935, %v6938
      %v6940 = vsel %vm1666, %v6931, %v6939
      %v6949 = vunpack.c.l.b16 %v6916
      %v6950 = vunpack.c.l.b16 %v6917
      %v6951 = vunpack.c.l.b16 %v6918
      %v6952 = vunpack.c.l.b16 %v6919
      %v6953 = vunpack.c.l.b16 %v6920
      %v6954 = vunpack.c.l.b16 %v6921
      %v6955 = vunpack.c.l.b16 %v6922
      %v6956 = vunpack.c.l.b16 %v6923
      %v6957 = vpack.c.b16 %v6950, %v6949
      %v6958 = vpack.c.b16 %v6952, %v6951
      %v6959 = vpack.c.b16 %v6954, %v6953
      %v6960 = vpack.c.b16 %v6956, %v6955
      %v6966 = vsel %vm6734, %v6940, 0
      %6968 = vmatpush.bf16.msra.mxu0 0
      %6969 = vmatpush.bf16.msra.mxu0 0
      %6970 = vmatpush.bf16.msra.mxu0 0
      %6971 = vmatpush.bf16.msra.mxu0 0
      %6972 = vmatpush.bf16.msra.mxu0 %v6960
      %6973 = vmatpush.bf16.msra.mxu0 %v6959
      %6974 = vmatpush.bf16.msra.mxu0 %v6958
      %6975 = vmatpush.bf16.msra.mxu0 %v6957
      %6976 = vmatmul.bf16.gmra.mxu0 %v6966
      %v6977 = vpop.f32.mrf.mxu0
      %v6978 = vadd.f32 0.0, %v6977
      %v6979 = vpop.f32.mrf.mxu0
      %v6980 = vadd.f32 0.0, %v6979
      %6981 = vdwg.mxu0
      %v6982 = vadd.f32 %v6898, %v6978
      %v6983 = vadd.f32 %v6899, %v6980
      %s6984 = scalar_lea.vmem %s5, 128
      %v6985 = vld [vmem:[%s6984] sm:$0xf]
      %v6986 = vld [vmem:[%s6984 + $0x4] sm:$0xf]
      %v6987 = vld [vmem:[%s6984 + $0x8] sm:$0xf]
      %v6988 = vld [vmem:[%s6984 + $0xc] sm:$0xf]
      %v6989 = vld [vmem:[%s6984 + $0x10] sm:$0xf]
      %v6990 = vld [vmem:[%s6984 + $0x14] sm:$0xf]
      %v6991 = vld [vmem:[%s6984 + $0x18] sm:$0xf]
      %v6992 = vld [vmem:[%s6984 + $0x1c] sm:$0xf]
      %v6994 = vunpack.c.l.b16 %v6901
      %v6995 = vpack.c.b16 %v6994, %v6702
      %v7004 = vunpack.c.l.b16 %v6985
      %v7005 = vunpack.c.l.b16 %v6986
      %v7006 = vunpack.c.l.b16 %v6987
      %v7007 = vunpack.c.l.b16 %v6988
      %v7008 = vunpack.c.l.b16 %v6989
      %v7009 = vunpack.c.l.b16 %v6990
      %v7010 = vunpack.c.l.b16 %v6991
      %v7011 = vunpack.c.l.b16 %v6992
      %v7012 = vpack.c.b16 %v7005, %v7004
      %v7013 = vpack.c.b16 %v7007, %v7006
      %v7014 = vpack.c.b16 %v7009, %v7008
      %v7015 = vpack.c.b16 %v7011, %v7010
      %v7021 = vsel %vm6734, %v6995, 0
      %7023 = vmatpush.bf16.msra.mxu0 0
      %7024 = vmatpush.bf16.msra.mxu0 0
      %7025 = vmatpush.bf16.msra.mxu0 0
      %7026 = vmatpush.bf16.msra.mxu0 0
      %7027 = vmatpush.bf16.msra.mxu0 %v7015
      %7028 = vmatpush.bf16.msra.mxu0 %v7014
      %7029 = vmatpush.bf16.msra.mxu0 %v7013
      %7030 = vmatpush.bf16.msra.mxu0 %v7012
      %7031 = vmatmul.bf16.gmra.mxu0 %v7021
      %v7032 = vpop.f32.mrf.mxu0
      %v7033 = vadd.f32 0.0, %v7032
      %v7034 = vpop.f32.mrf.mxu0
      %v7035 = vadd.f32 0.0, %v7034
      %7036 = vdwg.mxu0
      %v7037 = vadd.f32 %v6982, %v7033
      %v7038 = vadd.f32 %v6983, %v7035
      %v7039 = vld [vmem:[#allocation4 + $0x8] sm:$0xf]
      %v7040 = vld [vmem:[#allocation4 + $0xc] sm:$0xf]
      %v7041 = vld [vmem:[#allocation4 + $0x10] sm:$0x1]
      %v7042 = vunpack.c.l.bf16 %v7039
      %v7043 = vunpack.c.l.bf16 %v7040
      %v7044 = vunpack.c.l.bf16 %v7041
      %v7045 = vrot.slane %v6814, 7
      %v7046 = vrot.slane %v6815, 7
      %v7047 = vsel %vm2089, %v7045, %v7046
      %v7051 = vmul.f32 %v7042, %v7045
      %v7052 = vmul.f32 %v7043, %v7047
      %v7053 = vmul.f32 %v7044, %v7046
      %v7054 = vpack.c.bf16 %v7052, %v7051
      %v7055 = vpack.c.bf16 %v7053, %v7053
      %s7056 = scalar_lea.vmem %s5, 160
      %v7057 = vld [vmem:[%s7056] sm:$0xf]
      %v7058 = vld [vmem:[%s7056 + $0x4] sm:$0xf]
      %v7059 = vld [vmem:[%s7056 + $0x8] sm:$0xf]
      %v7060 = vld [vmem:[%s7056 + $0xc] sm:$0xf]
      %v7061 = vld [vmem:[%s7056 + $0x10] sm:$0xf]
      %v7062 = vld [vmem:[%s7056 + $0x14] sm:$0xf]
      %v7063 = vld [vmem:[%s7056 + $0x18] sm:$0xf]
      %v7064 = vld [vmem:[%s7056 + $0x1c] sm:$0xf]
      %v7066 = vshrl.u32 %v7054, 16
      %v7068 = vshll.u32 %v7054, 16
      %v7070 = vrot.slane %v7068, 1
      %v7071 = vor.u32 %v7066, %v7070
      %v7073 = vshll.u32 %v7055, 16
      %v7075 = vrot.slane %v7073, 1
      %v7076 = vsel %vm2238, %v7071, %v7075
      %v7085 = vunpack.c.l.b16 %v7057
      %v7086 = vunpack.c.l.b16 %v7058
      %v7087 = vunpack.c.l.b16 %v7059
      %v7088 = vunpack.c.l.b16 %v7060
      %v7089 = vunpack.c.l.b16 %v7061
      %v7090 = vunpack.c.l.b16 %v7062
      %v7091 = vunpack.c.l.b16 %v7063
      %v7092 = vunpack.c.l.b16 %v7064
      %v7093 = vpack.c.b16 %v7086, %v7085
      %v7094 = vpack.c.b16 %v7088, %v7087
      %v7095 = vpack.c.b16 %v7090, %v7089
      %v7096 = vpack.c.b16 %v7092, %v7091
      %v7102 = vsel %vm6734, %v7076, 0
      %7104 = vmatpush.bf16.msra.mxu0 0
      %7105 = vmatpush.bf16.msra.mxu0 0
      %7106 = vmatpush.bf16.msra.mxu0 0
      %7107 = vmatpush.bf16.msra.mxu0 0
      %7108 = vmatpush.bf16.msra.mxu0 %v7096
      %7109 = vmatpush.bf16.msra.mxu0 %v7095
      %7110 = vmatpush.bf16.msra.mxu0 %v7094
      %7111 = vmatpush.bf16.msra.mxu0 %v7093
      %7112 = vmatmul.bf16.gmra.mxu0 %v7102
      %v7113 = vpop.f32.mrf.mxu0
      %v7114 = vadd.f32 0.0, %v7113
      %v7115 = vpop.f32.mrf.mxu0
      %v7116 = vadd.f32 0.0, %v7115
      %7117 = vdwg.mxu0
      %v7118 = vadd.f32 %v7037, %v7114
      %v7119 = vadd.f32 %v7038, %v7116
      %v7120 = vld [vmem:[#allocation4 + $0x8] sm:$0xe]
      %v7121 = vld [vmem:[#allocation4 + $0x10] sm:$0x3]
      %v7122 = vunpack.c.l.bf16 %v7120
      %v7123 = vunpack.c.l.bf16 %v7121
      %v7124 = vmul.f32 %v7122, %v6669
      %v7125 = vmul.f32 %v7043, %v6671
      %v7126 = vmul.f32 %v7123, %v6670
      %v7127 = vpack.c.bf16 %v7125, %v7124
      %v7128 = vpack.c.bf16 %v7126, %v7126
      %s7129 = scalar_lea.vmem %s5, 192
      %v7130 = vld [vmem:[%s7129] sm:$0xf]
      %v7131 = vld [vmem:[%s7129 + $0x4] sm:$0xf]
      %v7132 = vld [vmem:[%s7129 + $0x8] sm:$0xf]
      %v7133 = vld [vmem:[%s7129 + $0xc] sm:$0xf]
      %v7134 = vld [vmem:[%s7129 + $0x10] sm:$0xf]
      %v7135 = vld [vmem:[%s7129 + $0x14] sm:$0xf]
      %v7136 = vld [vmem:[%s7129 + $0x18] sm:$0xf]
      %v7137 = vld [vmem:[%s7129 + $0x1c] sm:$0xf]
      %v7139 = vshrl.u32 %v7127, 16
      %v7141 = vrot.slane %v7139, 1
      %v7142 = vshll.u32 %v7127, 16
      %v7144 = vrot.slane %v7142, 2
      %v7145 = vor.u32 %v7141, %v7144
      %v7147 = vshrl.u32 %v7128, 16
      %v7149 = vrot.slane %v7147, 1
      %v7150 = vshll.u32 %v7128, 16
      %v7152 = vrot.slane %v7150, 2
      %v7153 = vor.u32 %v7149, %v7152
      %v7154 = vsel %vm6752, %v7145, %v7153
      %v7163 = vunpack.c.l.b16 %v7130
      %v7164 = vunpack.c.l.b16 %v7131
      %v7165 = vunpack.c.l.b16 %v7132
      %v7166 = vunpack.c.l.b16 %v7133
      %v7167 = vunpack.c.l.b16 %v7134
      %v7168 = vunpack.c.l.b16 %v7135
      %v7169 = vunpack.c.l.b16 %v7136
      %v7170 = vunpack.c.l.b16 %v7137
      %v7171 = vpack.c.b16 %v7164, %v7163
      %v7172 = vpack.c.b16 %v7166, %v7165
      %v7173 = vpack.c.b16 %v7168, %v7167
      %v7174 = vpack.c.b16 %v7170, %v7169
      %v7180 = vsel %vm6734, %v7154, 0
      %7182 = vmatpush.bf16.msra.mxu0 0
      %7183 = vmatpush.bf16.msra.mxu0 0
      %7184 = vmatpush.bf16.msra.mxu0 0
      %7185 = vmatpush.bf16.msra.mxu0 0
      %7186 = vmatpush.bf16.msra.mxu0 %v7174
      %7187 = vmatpush.bf16.msra.mxu0 %v7173
      %7188 = vmatpush.bf16.msra.mxu0 %v7172
      %7189 = vmatpush.bf16.msra.mxu0 %v7171
      %7190 = vmatmul.bf16.gmra.mxu0 %v7180
      %v7191 = vpop.f32.mrf.mxu0
      %v7192 = vadd.f32 0.0, %v7191
      %v7193 = vpop.f32.mrf.mxu0
      %v7194 = vadd.f32 0.0, %v7193
      %7195 = vdwg.mxu0
      %v7196 = vadd.f32 %v7118, %v7192
      %v7197 = vadd.f32 %v7119, %v7194
      %v7198 = vld [vmem:[#allocation4 + $0x8] sm:$0xc]
      %s7199 = scalar_lea.vmem %s5, 224
      %v7200 = vld [vmem:[%s7199] sm:$0xf]
      %v7201 = vld [vmem:[%s7199 + $0x4] sm:$0xf]
      %v7202 = vld [vmem:[%s7199 + $0x8] sm:$0xf]
      %v7203 = vld [vmem:[%s7199 + $0xc] sm:$0xf]
      %v7204 = vld [vmem:[%s7199 + $0x10] sm:$0xf]
      %v7205 = vld [vmem:[%s7199 + $0x14] sm:$0xf]
      %v7206 = vld [vmem:[%s7199 + $0x18] sm:$0xf]
      %v7207 = vld [vmem:[%s7199 + $0x1c] sm:$0xf]
      %v7211 = vunpack.c.l.b16 %v7198
      %v7212 = vunpack.c.l.b16 %v7040
      %v7213 = vunpack.c.l.b16 %v7121
      %v7214 = vpack.c.b16 %v7212, %v7211
      %v7215 = vpack.c.b16 %v7213, %v7213
      %v7216 = vrot.slane %v7214, 2
      %v7217 = vrot.slane %v7215, 2
      %v7218 = vsel %vm6706, %v7216, %v7217
      %v7227 = vunpack.c.l.b16 %v7200
      %v7228 = vunpack.c.l.b16 %v7201
      %v7229 = vunpack.c.l.b16 %v7202
      %v7230 = vunpack.c.l.b16 %v7203
      %v7231 = vunpack.c.l.b16 %v7204
      %v7232 = vunpack.c.l.b16 %v7205
      %v7233 = vunpack.c.l.b16 %v7206
      %v7234 = vunpack.c.l.b16 %v7207
      %v7235 = vpack.c.b16 %v7228, %v7227
      %v7236 = vpack.c.b16 %v7230, %v7229
      %v7237 = vpack.c.b16 %v7232, %v7231
      %v7238 = vpack.c.b16 %v7234, %v7233
      %v7244 = vsel %vm6734, %v7218, 0
      %7246 = vmatpush.bf16.msra.mxu0 0
      %7247 = vmatpush.bf16.msra.mxu0 0
      %7248 = vmatpush.bf16.msra.mxu0 0
      %7249 = vmatpush.bf16.msra.mxu0 0
      %7250 = vmatpush.bf16.msra.mxu0 %v7238
      %7251 = vmatpush.bf16.msra.mxu0 %v7237
      %7252 = vmatpush.bf16.msra.mxu0 %v7236
      %7253 = vmatpush.bf16.msra.mxu0 %v7235
      %7254 = vmatmul.bf16.gmra.mxu0 %v7244
      %v7255 = vpop.f32.mrf.mxu0
      %v7256 = vadd.f32 0.0, %v7255
      %v7257 = vpop.f32.mrf.mxu0
      %v7258 = vadd.f32 0.0, %v7257
      %7259 = vdwg.mxu0
      %v7260 = vadd.f32 %v7196, %v7256
      %v7261 = vadd.f32 %v7197, %v7258
      %v7262 = vld [vmem:[#allocation4 + $0x10] sm:$0x7]
      %v7263 = vunpack.c.l.bf16 %v7198
      %v7264 = vunpack.c.l.bf16 %v7262
      %v7265 = vmul.f32 %v7263, %v6819
      %v7266 = vmul.f32 %v7043, %v6821
      %v7267 = vmul.f32 %v7264, %v6820
      %v7268 = vpack.c.bf16 %v7266, %v7265
      %v7269 = vpack.c.bf16 %v7267, %v7267
      %s7270 = scalar_lea.vmem %s5, 256
      %v7271 = vld [vmem:[%s7270] sm:$0xf]
      %v7272 = vld [vmem:[%s7270 + $0x4] sm:$0xf]
      %v7273 = vld [vmem:[%s7270 + $0x8] sm:$0xf]
      %v7274 = vld [vmem:[%s7270 + $0xc] sm:$0xf]
      %v7275 = vld [vmem:[%s7270 + $0x10] sm:$0xf]
      %v7276 = vld [vmem:[%s7270 + $0x14] sm:$0xf]
      %v7277 = vld [vmem:[%s7270 + $0x18] sm:$0xf]
      %v7278 = vld [vmem:[%s7270 + $0x1c] sm:$0xf]
      %v7280 = vshrl.u32 %v7268, 16
      %v7282 = vrot.slane %v7280, 2
      %v7283 = vshll.u32 %v7268, 16
      %v7285 = vrot.slane %v7283, 3
      %v7286 = vor.u32 %v7282, %v7285
      %v7288 = vshrl.u32 %v7269, 16
      %v7290 = vrot.slane %v7288, 2
      %v7291 = vshll.u32 %v7269, 16
      %v7293 = vrot.slane %v7291, 3
      %v7294 = vor.u32 %v7290, %v7293
      %v7295 = vsel %vm6839, %v7286, %v7294
      %v7304 = vunpack.c.l.b16 %v7271
      %v7305 = vunpack.c.l.b16 %v7272
      %v7306 = vunpack.c.l.b16 %v7273
      %v7307 = vunpack.c.l.b16 %v7274
      %v7308 = vunpack.c.l.b16 %v7275
      %v7309 = vunpack.c.l.b16 %v7276
      %v7310 = vunpack.c.l.b16 %v7277
      %v7311 = vunpack.c.l.b16 %v7278
      %v7312 = vpack.c.b16 %v7305, %v7304
      %v7313 = vpack.c.b16 %v7307, %v7306
      %v7314 = vpack.c.b16 %v7309, %v7308
      %v7315 = vpack.c.b16 %v7311, %v7310
      %v7321 = vsel %vm6734, %v7295, 0
      %7323 = vmatpush.bf16.msra.mxu0 0
      %7324 = vmatpush.bf16.msra.mxu0 0
      %7325 = vmatpush.bf16.msra.mxu0 0
      %7326 = vmatpush.bf16.msra.mxu0 0
      %7327 = vmatpush.bf16.msra.mxu0 %v7315
      %7328 = vmatpush.bf16.msra.mxu0 %v7314
      %7329 = vmatpush.bf16.msra.mxu0 %v7313
      %7330 = vmatpush.bf16.msra.mxu0 %v7312
      %7331 = vmatmul.bf16.gmra.mxu0 %v7321
      %v7332 = vpop.f32.mrf.mxu0
      %v7333 = vadd.f32 0.0, %v7332
      %v7334 = vpop.f32.mrf.mxu0
      %v7335 = vadd.f32 0.0, %v7334
      %7336 = vdwg.mxu0
      %v7337 = vadd.f32 %v7260, %v7333
      %v7338 = vadd.f32 %v7261, %v7335
      %v7339 = vld [vmem:[%s6] sm:$0x1]
      %v7341 = vperm.slane %v7339, 0
      %v7343 = vadd.f32 %v7337, %v7341
      %v7344 = vadd.f32 %v7338, %v7341
      %v7345 = vmax.f32 %v7343, 0.0
      %v7346 = vmax.f32 %v7344, 0.0
      %v7347 = vadd.f32 %v7345, %v7346
      %v7348 = vrot.slane %v7347, 4
      %v7349 = vadd.f32 %v7347, %v7348
      %v7350 = vrot.slane %v7349, 2
      %v7351 = vadd.f32 %v7349, %v7350
      %v7352 = vrot.slane %v7351, 1
      %v7353 = vadd.f32 %v7351, %v7352
      %v7354 = vmul.f32 %v7353, 0.0625
      %v7355 = vld [vmem:[%s7] sm:$0xff]
      %v7356 = vld [vmem:[%s7 + $0x8] sm:$0xff]
      %v7357 = vld [vmem:[%s7 + $0x10] sm:$0xff]
      %v7358 = vld [vmem:[%s7 + $0x18] sm:$0xff]
      %v7359 = vld [vmem:[%s7 + $0x20] sm:$0xff]
      %v7360 = vld [vmem:[%s7 + $0x28] sm:$0xff]
      %v7361 = vld [vmem:[%s7 + $0x30] sm:$0xff]
      %v7362 = vld [vmem:[%s7 + $0x38] sm:$0xff]
      %v7363 = vld [vmem:[%s7 + $0x40] sm:$0xff]
      %v7364 = vld [vmem:[%s7 + $0x48] sm:$0xff]
      %v7365 = vld [vmem:[%s7 + $0x50] sm:$0xff]
      %v7366 = vld [vmem:[%s7 + $0x58] sm:$0xff]
      %v7367 = vld [vmem:[%s7 + $0x60] sm:$0xff]
      %v7368 = vld [vmem:[%s7 + $0x68] sm:$0xff]
      %v7369 = vld [vmem:[%s7 + $0x70] sm:$0xff]
      %v7370 = vld [vmem:[%s7 + $0x78] sm:$0xff]
      %v7371 = vld [vmem:[#allocation5] sm:$0x1]
      %7372 = vmatpush.msra.mxu0 %v7370
      %7373 = vmatpush.msra.mxu0 %v7369
      %7374 = vmatpush.msra.mxu0 %v7368
      %7375 = vmatpush.msra.mxu0 %v7367
      %7376 = vmatpush.msra.mxu0 %v7366
      %7377 = vmatpush.msra.mxu0 %v7365
      %7378 = vmatpush.msra.mxu0 %v7364
      %7379 = vmatpush.msra.mxu0 %v7363
      %7380 = vmatpush.msra.mxu0 %v7362
      %7381 = vmatpush.msra.mxu0 %v7361
      %7382 = vmatpush.msra.mxu0 %v7360
      %7383 = vmatpush.msra.mxu0 %v7359
      %7384 = vmatpush.msra.mxu0 %v7358
      %7385 = vmatpush.msra.mxu0 %v7357
      %7386 = vmatpush.msra.mxu0 %v7356
      %7387 = vmatpush.msra.mxu0 %v7355
      %7388 = vmatmul.f32.gmra.mxu0 %v7354
      %v7389 = vpop.f32.mrf.mxu0
      %v7390 = vadd.f32 %v7371, %v7389
      %7391 = vdwg.mxu0
      %vm7392 = vcmask 0
      %7393 = vst.msk [vmem:[%s384] sm:$0x1] %vm7392, %v7390
      %p7394 = scmp.lt.s32.totalorder %s24, 1
      %s7395 = scalar_select %p7394, %s24, 1
      %s7396 = scalar_lea.vmem %s11, %s7395
      // Predicated region
      $region65: #{gafnet_forward.1} parent=63 // pred_check
        %p7397 = pneg %p278
      $region66: #{gafnet_forward.1} parent=63 // pred_check_branch
        %7399 = sbr.rel (%p7397) target = $region68
      $region67: #{gafnet_forward.1} parent=63 // pred_region
        _
      $region68: #{gafnet_forward.1} parent=63 // pred_fallthru
        _
    $region64: #{gafnet_forward.1} parent=5 // pred_fallthru
      _
    %p7400 = scmp.le.s32.totalorder 2, %s19
    // Predicated region
    $region69: #{gafnet_forward.1} parent=5 // pred_check
      %p7401 = pneg %p7400
    $region70: #{gafnet_forward.1} parent=5 // pred_check_branch
      %7403 = sbr.rel (%p7401) target = $region72
    $region71: #{gafnet_forward.1} parent=5 // pred_region
      %s7404 = ssub.s32 %s19, 2
      // Predicated region
      $region73: #{gafnet_forward.1} parent=71 // pred_check
        %p7405 = pneg %p284
      $region74: #{gafnet_forward.1} parent=71 // pred_check_branch
        %7407 = sbr.rel (%p7405) target = $region76
      $region75: #{gafnet_forward.1} parent=71 // pred_region
        %p7408 = scmp.lt.s32.totalorder %s25, 1
        %s7409 = scalar_select %p7408, %s25, 1
        %s7410 = scalar_lea.vmem %s11, %s7409
      $region76: #{gafnet_forward.1} parent=71 // pred_fallthru
        _
    $region72: #{gafnet_forward.1} parent=5 // pred_fallthru
      _
  $region6: #{gafnet_forward.1} parent=0 // loop_footer
    %s23 = sadd.s32 1, %s19
  $region7: #{gafnet_forward.1} parent=0 // loop_footer_branch
    %18 = sbr.rel target = $region3
  $region8: #{gafnet_forward.1} parent=0 // loop_exit
    _

</llo_original>
